<compile_context>
chip_gen: v5e
topology: v5e:2x2
jax: 0.10.0
libtpu: 0.0.40
codegen_flags: <defaults>
</compile_context>

<pallas_src>
import functools

import jax
import jax.numpy as jnp
import numpy as np
from jax import lax
from jax.experimental import pallas as pl
from jax.experimental.pallas import tpu as pltpu

CIN = 3          # RGB input channels
C1 = 8           # encoder stage-1 channels
C2 = 16          # encoder stage-2 channels
NUM_CLASSES = 13 # seg-head classes (the script indexes torch_predictions[12, ...])

_TAPS = tuple((dh, dw) for dh in range(3) for dw in range(3))


# -----------------------------------------------------------------------------
# Fused forward kernel: one (batch, row-tile) grid step per invocation.
# -----------------------------------------------------------------------------
def _fused_kernel(w1_ref, b1_ref, w2_ref, b2_ref, wh_ref, bh_ref,   # SMEM (scalar prefetch)
                  x_ref,                                            # (1,1,CIN,TH+6,W+2) VMEM
                  res_ref, feat_ref,                                # outputs (NCHW row tiles)
                  e1_ref, up_ref,                                   # VMEM scratch
                  *, img_h, tile_h, cin, c1, c2, k):
    t = pl.program_id(1)              # row-tile index
    th = tile_h
    w = res_ref.shape[3]
    r1 = th + 4                       # e1 rows kept: output rows +/- 2-row halo

    x_all = x_ref[0, 0]               # (cin, th+6, w+2), already zero-padded on W

    # ---------------- conv1: 3x3 "same" + ReLU (VPU scalar FMA) ----------------
    x_taps = [x_all[:, dh:dh + r1, dw:dw + w] for (dh, dw) in _TAPS]   # 9 x (cin, r1, w)

    def conv1_body(co, carry):
        acc = jnp.zeros((r1, w), jnp.float32) + b1_ref[co]
        for tap in range(9):
            for ci in range(cin):
                acc = acc + w1_ref[(tap * cin + ci) * c1 + co] * x_taps[tap][ci]
        e1_ref[co] = jnp.maximum(acc, 0.0)
        return carry

    lax.fori_loop(0, c1, conv1_body, 0)

    # ------------- 2x2 / stride-2 maxpool, kept at full resolution -------------
    # pool[c, r, w] = p1[c, r//2, w//2]  (each pooled value replicated in its window)
    e1_all = e1_ref[...]                                         # (c1, r1, w)
    row_ids = lax.broadcasted_iota(jnp.int32, (r1, w), 0)
    col_ids = lax.broadcasted_iota(jnp.int32, (r1, w), 1)
    row_even = (row_ids & 1) == 0
    col_even = (col_ids & 1) == 0

    nxt = jnp.concatenate([e1_all[:, 1:, :], e1_all[:, r1 - 1:r1, :]], axis=1)
    prv = jnp.concatenate([e1_all[:, 0:1, :], e1_all[:, :r1 - 1, :]], axis=1)
    vmax = jnp.maximum(e1_all, jnp.where(row_even, nxt, prv))    # vertical pair max

    rgt = jnp.concatenate([vmax[:, :, 1:], vmax[:, :, w - 1:w]], axis=2)
    lft = jnp.concatenate([vmax[:, :, 0:1], vmax[:, :, :w - 1]], axis=2)
    pool = jnp.maximum(vmax, jnp.where(col_even, rgt, lft))      # horizontal pair max

    # pooled rows outside the image are conv2's zero padding (top / bottom tiles)
    g_row = row_ids + (t * th - 2)
    pool = jnp.where((g_row >= 0) & (g_row < img_h), pool, 0.0)
    # 2 zero cols each side == p1's 1-column zero padding at half resolution
    zcol = jnp.zeros((c1, r1, 2), jnp.float32)
    pool = jnp.concatenate([zcol, pool, zcol], axis=2)           # (c1, r1, w+4)

    # ------ conv2 (3x3 "same" on p1) + ReLU + nearest 2x upsample, fused --------
    # evaluated as a dilation-2 conv on the replicated pooled map -> `up` directly.
    p_taps = [pool[:, 2 * dh:2 * dh + th, 2 * dw:2 * dw + w] for (dh, dw) in _TAPS]

    def conv2_body(co, carry):
        acc = jnp.zeros((th, w), jnp.float32) + b2_ref[co]
        for tap in range(9):
            for ci in range(c1):
                acc = acc + w2_ref[(tap * c1 + ci) * c2 + co] * p_taps[tap][ci]
        up_ref[co] = jnp.maximum(acc, 0.0)
        return carry

    lax.fori_loop(0, c2, conv2_body, 0)

    # ----------------- head: 1x1 conv over concat([up, e1]) --------------------
    up_all = up_ref[...]                    # (c2, th, w)
    e1_cen = e1_ref[:, 2:2 + th, :]         # (c1, th, w): rows of this output tile

    for co in range(k):                     # static unroll (k=13) -> static stores
        acc = jnp.zeros((th, w), jnp.float32) + bh_ref[co]
        for c in range(c2):
            acc = acc + wh_ref[c * k + co] * up_all[c]
        for c in range(c1):
            acc = acc + wh_ref[(c2 + c) * k + co] * e1_cen[c]
        res_ref[0, co] = acc.astype(res_ref.dtype)

    # -------------- features = concat([up, e1]) written in place ---------------
    feat_ref[0, 0:c2] = up_all.astype(feat_ref.dtype)
    feat_ref[0, c2:c2 + c1] = e1_cen.astype(feat_ref.dtype)


# -----------------------------------------------------------------------------
# Wrapper: halo re-tiling (layout glue on the 3-channel input only) + pallas_call.
# -----------------------------------------------------------------------------
def _pick_tile_h(h):
    for cand in (32, 16, 8):            # keep per-step VMEM modest (v7x: 64 MiB)
        if h % cand == 0:
            return cand
    return h


def wrapped_segmenter_forward(params, x_nchw, *, tile_h=None):
    n, cin, h, w = x_nchw.shape
    assert cin == CIN
    assert h % 2 == 0 and w % 2 == 0, "2x2 maxpool assumes even spatial dims"
    if tile_h is None:
        tile_h = _pick_tile_h(h)
    assert h % tile_h == 0 and tile_h % 2 == 0
    assert tile_h % 8 == 0 or tile_h == h   # (8,128) sublane rule on output blocks
    n_tiles = h // tile_h

    # Zero-pad for the 3x3 "same" convs and re-tile rows with a 3-row halo so each
    # (batch, row-tile) grid step is fully independent.  This touches only the
    # 3-channel input (the smallest tensor in the network).
    xp = jnp.pad(x_nchw, ((0, 0), (0, 0), (3, 3), (1, 1)))
    x_tiles = jnp.stack(
        [xp[:, :, i * tile_h:i * tile_h + tile_h + 6, :] for i in range(n_tiles)],
        axis=1)                                    # (n, n_tiles, cin, tile_h+6, w+2)

    kernel = functools.partial(
        _fused_kernel, img_h=h, tile_h=tile_h, cin=cin, c1=C1, c2=C2, k=NUM_CLASSES)

    res, feat = pl.pallas_call(
        kernel,
        out_shape=(
            jax.ShapeDtypeStruct((n, NUM_CLASSES, h, w), x_nchw.dtype),
            jax.ShapeDtypeStruct((n, C2 + C1, h, w), x_nchw.dtype),
        ),
        grid_spec=pltpu.PrefetchScalarGridSpec(
            num_scalar_prefetch=6,                # weights + biases live in SMEM
            grid=(n, n_tiles),
            in_specs=[
                pl.BlockSpec((1, 1, cin, tile_h + 6, w + 2),
                             lambda ni, ti, *_: (ni, ti, 0, 0, 0)),
            ],
            out_specs=[
                pl.BlockSpec((1, NUM_CLASSES, tile_h, w),
                             lambda ni, ti, *_: (ni, 0, ti, 0)),
                pl.BlockSpec((1, C2 + C1, tile_h, w),
                             lambda ni, ti, *_: (ni, 0, ti, 0)),
            ],
            scratch_shapes=[
                pltpu.VMEM((C1, tile_h + 4, w), jnp.float32),   # e1 (+2-row halo)
                pltpu.VMEM((C2, tile_h, w), jnp.float32),       # up (= upsampled e2)
            ],
        ),
        compiler_params=pltpu.CompilerParams(
            dimension_semantics=("parallel", "parallel")),      # v7x: 2 TCs split rows
    )(
        params["w1"].reshape(-1), params["b1"],
        params["w2"].reshape(-1), params["b2"],
        params["w_head"].reshape(-1), params["b_head"],
        x_tiles,
    )
    return res, feat


# -----------------------------------------------------------------------------
# Parameter init (deterministic, synthetic -- stands in for the .pth checkpoint).
# -----------------------------------------------------------------------------
def init_params(key):
    k1, k2, k3, k4, k5, k6 = jax.random.split(key, 6)
    return {
        "w1": 0.1 * jax.random.normal(k1, (3, 3, CIN, C1), jnp.float32),
        "b1": 0.05 * jax.random.normal(k2, (C1,), jnp.float32),
        "w2": 0.1 * jax.random.normal(k3, (3, 3, C1, C2), jnp.float32),
        "b2": 0.05 * jax.random.normal(k4, (C2,), jnp.float32),
        "w_head": 0.1 * jax.random.normal(k5, (C2 + C1, NUM_CLASSES), jnp.float32),
        "b_head": 0.05 * jax.random.normal(k6, (NUM_CLASSES,), jnp.float32),
    }


# Pure-JAX reference of the same UNet-lite forward (for a correctness check only).
def _reference_forward(params, x):
    dn = ("NCHW", "HWIO", "NCHW")
    e1 = jax.nn.relu(
        lax.conv_general_dilated(x, params["w1"], (1, 1), "SAME", dimension_numbers=dn)
        + params["b1"][None, :, None, None])
    n, c, h, w = e1.shape
    p1 = e1.reshape(n, c, h // 2, 2, w // 2, 2).max(axis=(3, 5))
    e2 = jax.nn.relu(
        lax.conv_general_dilated(p1, params["w2"], (1, 1), "SAME", dimension_numbers=dn)
        + params["b2"][None, :, None, None])
    up = jnp.repeat(jnp.repeat(e2, 2, axis=2), 2, axis=3)
    feats = jnp.concatenate([up, e1], axis=1)
    res = jnp.einsum("nchw,ck->nkhw", feats, params["w_head"]) \
        + params["b_head"][None, :, None, None]
    return res, feats


if __name__ == "__main__":
    key = jax.random.PRNGKey(0)
    k_param, k_input = jax.random.split(key)

    params = init_params(k_param)
    # Small stand-in for the (1, 3, 512, 512) traced image; tile_h=8 -> 2 row tiles
    # per image so the halo / masking paths are exercised.
    x = jax.random.uniform(k_input, (2, CIN, 16, 16), dtype=jnp.float32)

    fwd = jax.jit(functools.partial(wrapped_segmenter_forward, tile_h=8))
    res, features = fwd(params, x)
    jax.block_until_ready((res, features))

    assert res.shape == (2, NUM_CLASSES, 16, 16)
    assert features.shape == (2, C2 + C1, 16, 16)

    ref_res, ref_feat = jax.jit(_reference_forward)(params, x)
    np.testing.assert_allclose(np.asarray(res), np.asarray(ref_res), rtol=2e-4, atol=2e-4)
    np.testing.assert_allclose(np.asarray(features), np.asarray(ref_feat), rtol=2e-4, atol=2e-4)

    print("KERNEL_OK")
</pallas_src>

<mosaic_0001>
module attributes {stable_mosaic.version = 11 : i64} {
  func.func @_fused_kernel(%arg0: i32, %arg1: i32, %arg2: memref<216xf32, #tpu.memory_space<smem>>, %arg3: memref<8xf32, #tpu.memory_space<smem>>, %arg4: memref<1152xf32, #tpu.memory_space<smem>>, %arg5: memref<16xf32, #tpu.memory_space<smem>>, %arg6: memref<312xf32, #tpu.memory_space<smem>>, %arg7: memref<13xf32, #tpu.memory_space<smem>>, %arg8: memref<1x1x3x14x18xf32, #tpu.memory_space<vmem>>, %arg9: memref<1x13x8x16xf32, #tpu.memory_space<vmem>>, %arg10: memref<1x24x8x16xf32, #tpu.memory_space<vmem>>, %arg11: memref<8x12x16xf32, #tpu.memory_space<vmem>>, %arg12: memref<16x8x16xf32, #tpu.memory_space<vmem>>) attributes {dimension_semantics = [#tpu.dimension_semantics<parallel>, #tpu.dimension_semantics<parallel>], iteration_bounds = array<i64: 2, 2>, scalar_prefetch = 6 : i64, scratch_operands = 2 : i64, tpu.core_type = #tpu.core_type<tc>, window_params = [{transform_indices = @transform_0, window_bounds = array<i64: 1, 1, 3, 14, 18>}, {transform_indices = @transform_1, window_bounds = array<i64: 1, 13, 8, 16>}, {transform_indices = @transform_2, window_bounds = array<i64: 1, 24, 8, 16>}]} {
    %c0 = arith.constant 0 : index
    %c0_0 = arith.constant 0 : index
    %c0_1 = arith.constant 0 : index
    %c0_2 = arith.constant 0 : index
    %c0_3 = arith.constant 0 : index
    %0 = vector.load %arg8[%c0, %c0_0, %c0_1, %c0_2, %c0_3] : memref<1x1x3x14x18xf32, #tpu.memory_space<vmem>>, vector<1x1x3x14x18xf32>
    %1 = vector.shape_cast %0 : vector<1x1x3x14x18xf32> to vector<3x14x18xf32>
    %2 = vector.extract_strided_slice %1 {offsets = [0, 0, 0], sizes = [3, 12, 16], strides = [1, 1, 1]} : vector<3x14x18xf32> to vector<3x12x16xf32>
    %3 = vector.extract_strided_slice %1 {offsets = [0, 0, 1], sizes = [3, 12, 16], strides = [1, 1, 1]} : vector<3x14x18xf32> to vector<3x12x16xf32>
    %4 = vector.extract_strided_slice %1 {offsets = [0, 0, 2], sizes = [3, 12, 16], strides = [1, 1, 1]} : vector<3x14x18xf32> to vector<3x12x16xf32>
    %5 = vector.extract_strided_slice %1 {offsets = [0, 1, 0], sizes = [3, 12, 16], strides = [1, 1, 1]} : vector<3x14x18xf32> to vector<3x12x16xf32>
    %6 = vector.extract_strided_slice %1 {offsets = [0, 1, 1], sizes = [3, 12, 16], strides = [1, 1, 1]} : vector<3x14x18xf32> to vector<3x12x16xf32>
    %7 = vector.extract_strided_slice %1 {offsets = [0, 1, 2], sizes = [3, 12, 16], strides = [1, 1, 1]} : vector<3x14x18xf32> to vector<3x12x16xf32>
    %8 = vector.extract_strided_slice %1 {offsets = [0, 2, 0], sizes = [3, 12, 16], strides = [1, 1, 1]} : vector<3x14x18xf32> to vector<3x12x16xf32>
    %9 = vector.extract_strided_slice %1 {offsets = [0, 2, 1], sizes = [3, 12, 16], strides = [1, 1, 1]} : vector<3x14x18xf32> to vector<3x12x16xf32>
    %10 = vector.extract_strided_slice %1 {offsets = [0, 2, 2], sizes = [3, 12, 16], strides = [1, 1, 1]} : vector<3x14x18xf32> to vector<3x12x16xf32>
    %c0_i32 = arith.constant 0 : i32
    %c8_i32 = arith.constant 8 : i32
    %11 = arith.addi %c0_i32, %c8_i32 : i32
    %c1_i32 = arith.constant 1 : i32
    scf.for %arg13 = %c0_i32 to %11 step %c1_i32  : i32 {
      %cst_112 = arith.constant 0.000000e+00 : f32
      %2039 = vector.broadcast %cst_112 : f32 to vector<12x16xf32>
      %2040 = arith.index_cast %arg13 : i32 to index
      %2041 = memref.load %arg3[%2040] : memref<8xf32, #tpu.memory_space<smem>>
      %2042 = vector.broadcast %2041 : f32 to vector<12x16xf32>
      %2043 = arith.addf %2039, %2042 : vector<12x16xf32>
      %c0_i32_113 = arith.constant 0 : i32
      %2044 = arith.addi %c0_i32_113, %arg13 : i32
      %2045 = arith.index_cast %2044 : i32 to index
      %2046 = memref.load %arg2[%2045] : memref<216xf32, #tpu.memory_space<smem>>
      %2047 = vector.extract_strided_slice %2 {offsets = [0, 0, 0], sizes = [1, 12, 16], strides = [1, 1, 1]} : vector<3x12x16xf32> to vector<1x12x16xf32>
      %2048 = vector.shape_cast %2047 : vector<1x12x16xf32> to vector<12x16xf32>
      %2049 = vector.broadcast %2046 : f32 to vector<12x16xf32>
      %2050 = arith.mulf %2049, %2048 : vector<12x16xf32>
      %2051 = arith.addf %2043, %2050 : vector<12x16xf32>
      %c8_i32_114 = arith.constant 8 : i32
      %2052 = arith.addi %c8_i32_114, %arg13 : i32
      %2053 = arith.index_cast %2052 : i32 to index
      %2054 = memref.load %arg2[%2053] : memref<216xf32, #tpu.memory_space<smem>>
      %2055 = vector.extract_strided_slice %2 {offsets = [1, 0, 0], sizes = [1, 12, 16], strides = [1, 1, 1]} : vector<3x12x16xf32> to vector<1x12x16xf32>
      %2056 = vector.shape_cast %2055 : vector<1x12x16xf32> to vector<12x16xf32>
      %2057 = vector.broadcast %2054 : f32 to vector<12x16xf32>
      %2058 = arith.mulf %2057, %2056 : vector<12x16xf32>
      %2059 = arith.addf %2051, %2058 : vector<12x16xf32>
      %c16_i32_115 = arith.constant 16 : i32
      %2060 = arith.addi %c16_i32_115, %arg13 : i32
      %2061 = arith.index_cast %2060 : i32 to index
      %2062 = memref.load %arg2[%2061] : memref<216xf32, #tpu.memory_space<smem>>
      %2063 = vector.extract_strided_slice %2 {offsets = [2, 0, 0], sizes = [1, 12, 16], strides = [1, 1, 1]} : vector<3x12x16xf32> to vector<1x12x16xf32>
      %2064 = vector.shape_cast %2063 : vector<1x12x16xf32> to vector<12x16xf32>
      %2065 = vector.broadcast %2062 : f32 to vector<12x16xf32>
      %2066 = arith.mulf %2065, %2064 : vector<12x16xf32>
      %2067 = arith.addf %2059, %2066 : vector<12x16xf32>
      %c24_i32 = arith.constant 24 : i32
      %2068 = arith.addi %c24_i32, %arg13 : i32
      %2069 = arith.index_cast %2068 : i32 to index
      %2070 = memref.load %arg2[%2069] : memref<216xf32, #tpu.memory_space<smem>>
      %2071 = vector.extract_strided_slice %3 {offsets = [0, 0, 0], sizes = [1, 12, 16], strides = [1, 1, 1]} : vector<3x12x16xf32> to vector<1x12x16xf32>
      %2072 = vector.shape_cast %2071 : vector<1x12x16xf32> to vector<12x16xf32>
      %2073 = vector.broadcast %2070 : f32 to vector<12x16xf32>
      %2074 = arith.mulf %2073, %2072 : vector<12x16xf32>
      %2075 = arith.addf %2067, %2074 : vector<12x16xf32>
      %c32_i32 = arith.constant 32 : i32
      %2076 = arith.addi %c32_i32, %arg13 : i32
      %2077 = arith.index_cast %2076 : i32 to index
      %2078 = memref.load %arg2[%2077] : memref<216xf32, #tpu.memory_space<smem>>
      %2079 = vector.extract_strided_slice %3 {offsets = [1, 0, 0], sizes = [1, 12, 16], strides = [1, 1, 1]} : vector<3x12x16xf32> to vector<1x12x16xf32>
      %2080 = vector.shape_cast %2079 : vector<1x12x16xf32> to vector<12x16xf32>
      %2081 = vector.broadcast %2078 : f32 to vector<12x16xf32>
      %2082 = arith.mulf %2081, %2080 : vector<12x16xf32>
      %2083 = arith.addf %2075, %2082 : vector<12x16xf32>
      %c40_i32 = arith.constant 40 : i32
      %2084 = arith.addi %c40_i32, %arg13 : i32
      %2085 = arith.index_cast %2084 : i32 to index
      %2086 = memref.load %arg2[%2085] : memref<216xf32, #tpu.memory_space<smem>>
      %2087 = vector.extract_strided_slice %3 {offsets = [2, 0, 0], sizes = [1, 12, 16], strides = [1, 1, 1]} : vector<3x12x16xf32> to vector<1x12x16xf32>
      %2088 = vector.shape_cast %2087 : vector<1x12x16xf32> to vector<12x16xf32>
      %2089 = vector.broadcast %2086 : f32 to vector<12x16xf32>
      %2090 = arith.mulf %2089, %2088 : vector<12x16xf32>
      %2091 = arith.addf %2083, %2090 : vector<12x16xf32>
      %c48_i32 = arith.constant 48 : i32
      %2092 = arith.addi %c48_i32, %arg13 : i32
      %2093 = arith.index_cast %2092 : i32 to index
      %2094 = memref.load %arg2[%2093] : memref<216xf32, #tpu.memory_space<smem>>
      %2095 = vector.extract_strided_slice %4 {offsets = [0, 0, 0], sizes = [1, 12, 16], strides = [1, 1, 1]} : vector<3x12x16xf32> to vector<1x12x16xf32>
      %2096 = vector.shape_cast %2095 : vector<1x12x16xf32> to vector<12x16xf32>
      %2097 = vector.broadcast %2094 : f32 to vector<12x16xf32>
      %2098 = arith.mulf %2097, %2096 : vector<12x16xf32>
      %2099 = arith.addf %2091, %2098 : vector<12x16xf32>
      %c56_i32 = arith.constant 56 : i32
      %2100 = arith.addi %c56_i32, %arg13 : i32
      %2101 = arith.index_cast %2100 : i32 to index
      %2102 = memref.load %arg2[%2101] : memref<216xf32, #tpu.memory_space<smem>>
      %2103 = vector.extract_strided_slice %4 {offsets = [1, 0, 0], sizes = [1, 12, 16], strides = [1, 1, 1]} : vector<3x12x16xf32> to vector<1x12x16xf32>
      %2104 = vector.shape_cast %2103 : vector<1x12x16xf32> to vector<12x16xf32>
      %2105 = vector.broadcast %2102 : f32 to vector<12x16xf32>
      %2106 = arith.mulf %2105, %2104 : vector<12x16xf32>
      %2107 = arith.addf %2099, %2106 : vector<12x16xf32>
      %c64_i32 = arith.constant 64 : i32
      %2108 = arith.addi %c64_i32, %arg13 : i32
      %2109 = arith.index_cast %2108 : i32 to index
      %2110 = memref.load %arg2[%2109] : memref<216xf32, #tpu.memory_space<smem>>
      %2111 = vector.extract_strided_slice %4 {offsets = [2, 0, 0], sizes = [1, 12, 16], strides = [1, 1, 1]} : vector<3x12x16xf32> to vector<1x12x16xf32>
      %2112 = vector.shape_cast %2111 : vector<1x12x16xf32> to vector<12x16xf32>
      %2113 = vector.broadcast %2110 : f32 to vector<12x16xf32>
      %2114 = arith.mulf %2113, %2112 : vector<12x16xf32>
      %2115 = arith.addf %2107, %2114 : vector<12x16xf32>
      %c72_i32 = arith.constant 72 : i32
      %2116 = arith.addi %c72_i32, %arg13 : i32
      %2117 = arith.index_cast %2116 : i32 to index
      %2118 = memref.load %arg2[%2117] : memref<216xf32, #tpu.memory_space<smem>>
      %2119 = vector.extract_strided_slice %5 {offsets = [0, 0, 0], sizes = [1, 12, 16], strides = [1, 1, 1]} : vector<3x12x16xf32> to vector<1x12x16xf32>
      %2120 = vector.shape_cast %2119 : vector<1x12x16xf32> to vector<12x16xf32>
      %2121 = vector.broadcast %2118 : f32 to vector<12x16xf32>
      %2122 = arith.mulf %2121, %2120 : vector<12x16xf32>
      %2123 = arith.addf %2115, %2122 : vector<12x16xf32>
      %c80_i32 = arith.constant 80 : i32
      %2124 = arith.addi %c80_i32, %arg13 : i32
      %2125 = arith.index_cast %2124 : i32 to index
      %2126 = memref.load %arg2[%2125] : memref<216xf32, #tpu.memory_space<smem>>
      %2127 = vector.extract_strided_slice %5 {offsets = [1, 0, 0], sizes = [1, 12, 16], strides = [1, 1, 1]} : vector<3x12x16xf32> to vector<1x12x16xf32>
      %2128 = vector.shape_cast %2127 : vector<1x12x16xf32> to vector<12x16xf32>
      %2129 = vector.broadcast %2126 : f32 to vector<12x16xf32>
      %2130 = arith.mulf %2129, %2128 : vector<12x16xf32>
      %2131 = arith.addf %2123, %2130 : vector<12x16xf32>
      %c88_i32 = arith.constant 88 : i32
      %2132 = arith.addi %c88_i32, %arg13 : i32
      %2133 = arith.index_cast %2132 : i32 to index
      %2134 = memref.load %arg2[%2133] : memref<216xf32, #tpu.memory_space<smem>>
      %2135 = vector.extract_strided_slice %5 {offsets = [2, 0, 0], sizes = [1, 12, 16], strides = [1, 1, 1]} : vector<3x12x16xf32> to vector<1x12x16xf32>
      %2136 = vector.shape_cast %2135 : vector<1x12x16xf32> to vector<12x16xf32>
      %2137 = vector.broadcast %2134 : f32 to vector<12x16xf32>
      %2138 = arith.mulf %2137, %2136 : vector<12x16xf32>
      %2139 = arith.addf %2131, %2138 : vector<12x16xf32>
      %c96_i32 = arith.constant 96 : i32
      %2140 = arith.addi %c96_i32, %arg13 : i32
      %2141 = arith.index_cast %2140 : i32 to index
      %2142 = memref.load %arg2[%2141] : memref<216xf32, #tpu.memory_space<smem>>
      %2143 = vector.extract_strided_slice %6 {offsets = [0, 0, 0], sizes = [1, 12, 16], strides = [1, 1, 1]} : vector<3x12x16xf32> to vector<1x12x16xf32>
      %2144 = vector.shape_cast %2143 : vector<1x12x16xf32> to vector<12x16xf32>
      %2145 = vector.broadcast %2142 : f32 to vector<12x16xf32>
      %2146 = arith.mulf %2145, %2144 : vector<12x16xf32>
      %2147 = arith.addf %2139, %2146 : vector<12x16xf32>
      %c104_i32 = arith.constant 104 : i32
      %2148 = arith.addi %c104_i32, %arg13 : i32
      %2149 = arith.index_cast %2148 : i32 to index
      %2150 = memref.load %arg2[%2149] : memref<216xf32, #tpu.memory_space<smem>>
      %2151 = vector.extract_strided_slice %6 {offsets = [1, 0, 0], sizes = [1, 12, 16], strides = [1, 1, 1]} : vector<3x12x16xf32> to vector<1x12x16xf32>
      %2152 = vector.shape_cast %2151 : vector<1x12x16xf32> to vector<12x16xf32>
      %2153 = vector.broadcast %2150 : f32 to vector<12x16xf32>
      %2154 = arith.mulf %2153, %2152 : vector<12x16xf32>
      %2155 = arith.addf %2147, %2154 : vector<12x16xf32>
      %c112_i32 = arith.constant 112 : i32
      %2156 = arith.addi %c112_i32, %arg13 : i32
      %2157 = arith.index_cast %2156 : i32 to index
      %2158 = memref.load %arg2[%2157] : memref<216xf32, #tpu.memory_space<smem>>
      %2159 = vector.extract_strided_slice %6 {offsets = [2, 0, 0], sizes = [1, 12, 16], strides = [1, 1, 1]} : vector<3x12x16xf32> to vector<1x12x16xf32>
      %2160 = vector.shape_cast %2159 : vector<1x12x16xf32> to vector<12x16xf32>
      %2161 = vector.broadcast %2158 : f32 to vector<12x16xf32>
      %2162 = arith.mulf %2161, %2160 : vector<12x16xf32>
      %2163 = arith.addf %2155, %2162 : vector<12x16xf32>
      %c120_i32 = arith.constant 120 : i32
      %2164 = arith.addi %c120_i32, %arg13 : i32
      %2165 = arith.index_cast %2164 : i32 to index
      %2166 = memref.load %arg2[%2165] : memref<216xf32, #tpu.memory_space<smem>>
      %2167 = vector.extract_strided_slice %7 {offsets = [0, 0, 0], sizes = [1, 12, 16], strides = [1, 1, 1]} : vector<3x12x16xf32> to vector<1x12x16xf32>
      %2168 = vector.shape_cast %2167 : vector<1x12x16xf32> to vector<12x16xf32>
      %2169 = vector.broadcast %2166 : f32 to vector<12x16xf32>
      %2170 = arith.mulf %2169, %2168 : vector<12x16xf32>
      %2171 = arith.addf %2163, %2170 : vector<12x16xf32>
      %c128_i32 = arith.constant 128 : i32
      %2172 = arith.addi %c128_i32, %arg13 : i32
      %2173 = arith.index_cast %2172 : i32 to index
      %2174 = memref.load %arg2[%2173] : memref<216xf32, #tpu.memory_space<smem>>
      %2175 = vector.extract_strided_slice %7 {offsets = [1, 0, 0], sizes = [1, 12, 16], strides = [1, 1, 1]} : vector<3x12x16xf32> to vector<1x12x16xf32>
      %2176 = vector.shape_cast %2175 : vector<1x12x16xf32> to vector<12x16xf32>
      %2177 = vector.broadcast %2174 : f32 to vector<12x16xf32>
      %2178 = arith.mulf %2177, %2176 : vector<12x16xf32>
      %2179 = arith.addf %2171, %2178 : vector<12x16xf32>
      %c136_i32 = arith.constant 136 : i32
      %2180 = arith.addi %c136_i32, %arg13 : i32
      %2181 = arith.index_cast %2180 : i32 to index
      %2182 = memref.load %arg2[%2181] : memref<216xf32, #tpu.memory_space<smem>>
      %2183 = vector.extract_strided_slice %7 {offsets = [2, 0, 0], sizes = [1, 12, 16], strides = [1, 1, 1]} : vector<3x12x16xf32> to vector<1x12x16xf32>
      %2184 = vector.shape_cast %2183 : vector<1x12x16xf32> to vector<12x16xf32>
      %2185 = vector.broadcast %2182 : f32 to vector<12x16xf32>
      %2186 = arith.mulf %2185, %2184 : vector<12x16xf32>
      %2187 = arith.addf %2179, %2186 : vector<12x16xf32>
      %c144_i32 = arith.constant 144 : i32
      %2188 = arith.addi %c144_i32, %arg13 : i32
      %2189 = arith.index_cast %2188 : i32 to index
      %2190 = memref.load %arg2[%2189] : memref<216xf32, #tpu.memory_space<smem>>
      %2191 = vector.extract_strided_slice %8 {offsets = [0, 0, 0], sizes = [1, 12, 16], strides = [1, 1, 1]} : vector<3x12x16xf32> to vector<1x12x16xf32>
      %2192 = vector.shape_cast %2191 : vector<1x12x16xf32> to vector<12x16xf32>
      %2193 = vector.broadcast %2190 : f32 to vector<12x16xf32>
      %2194 = arith.mulf %2193, %2192 : vector<12x16xf32>
      %2195 = arith.addf %2187, %2194 : vector<12x16xf32>
      %c152_i32 = arith.constant 152 : i32
      %2196 = arith.addi %c152_i32, %arg13 : i32
      %2197 = arith.index_cast %2196 : i32 to index
      %2198 = memref.load %arg2[%2197] : memref<216xf32, #tpu.memory_space<smem>>
      %2199 = vector.extract_strided_slice %8 {offsets = [1, 0, 0], sizes = [1, 12, 16], strides = [1, 1, 1]} : vector<3x12x16xf32> to vector<1x12x16xf32>
      %2200 = vector.shape_cast %2199 : vector<1x12x16xf32> to vector<12x16xf32>
      %2201 = vector.broadcast %2198 : f32 to vector<12x16xf32>
      %2202 = arith.mulf %2201, %2200 : vector<12x16xf32>
      %2203 = arith.addf %2195, %2202 : vector<12x16xf32>
      %c160_i32 = arith.constant 160 : i32
      %2204 = arith.addi %c160_i32, %arg13 : i32
      %2205 = arith.index_cast %2204 : i32 to index
      %2206 = memref.load %arg2[%2205] : memref<216xf32, #tpu.memory_space<smem>>
      %2207 = vector.extract_strided_slice %8 {offsets = [2, 0, 0], sizes = [1, 12, 16], strides = [1, 1, 1]} : vector<3x12x16xf32> to vector<1x12x16xf32>
      %2208 = vector.shape_cast %2207 : vector<1x12x16xf32> to vector<12x16xf32>
      %2209 = vector.broadcast %2206 : f32 to vector<12x16xf32>
      %2210 = arith.mulf %2209, %2208 : vector<12x16xf32>
      %2211 = arith.addf %2203, %2210 : vector<12x16xf32>
      %c168_i32 = arith.constant 168 : i32
      %2212 = arith.addi %c168_i32, %arg13 : i32
      %2213 = arith.index_cast %2212 : i32 to index
      %2214 = memref.load %arg2[%2213] : memref<216xf32, #tpu.memory_space<smem>>
      %2215 = vector.extract_strided_slice %9 {offsets = [0, 0, 0], sizes = [1, 12, 16], strides = [1, 1, 1]} : vector<3x12x16xf32> to vector<1x12x16xf32>
      %2216 = vector.shape_cast %2215 : vector<1x12x16xf32> to vector<12x16xf32>
      %2217 = vector.broadcast %2214 : f32 to vector<12x16xf32>
      %2218 = arith.mulf %2217, %2216 : vector<12x16xf32>
      %2219 = arith.addf %2211, %2218 : vector<12x16xf32>
      %c176_i32 = arith.constant 176 : i32
      %2220 = arith.addi %c176_i32, %arg13 : i32
      %2221 = arith.index_cast %2220 : i32 to index
      %2222 = memref.load %arg2[%2221] : memref<216xf32, #tpu.memory_space<smem>>
      %2223 = vector.extract_strided_slice %9 {offsets = [1, 0, 0], sizes = [1, 12, 16], strides = [1, 1, 1]} : vector<3x12x16xf32> to vector<1x12x16xf32>
      %2224 = vector.shape_cast %2223 : vector<1x12x16xf32> to vector<12x16xf32>
      %2225 = vector.broadcast %2222 : f32 to vector<12x16xf32>
      %2226 = arith.mulf %2225, %2224 : vector<12x16xf32>
      %2227 = arith.addf %2219, %2226 : vector<12x16xf32>
      %c184_i32 = arith.constant 184 : i32
      %2228 = arith.addi %c184_i32, %arg13 : i32
      %2229 = arith.index_cast %2228 : i32 to index
      %2230 = memref.load %arg2[%2229] : memref<216xf32, #tpu.memory_space<smem>>
      %2231 = vector.extract_strided_slice %9 {offsets = [2, 0, 0], sizes = [1, 12, 16], strides = [1, 1, 1]} : vector<3x12x16xf32> to vector<1x12x16xf32>
      %2232 = vector.shape_cast %2231 : vector<1x12x16xf32> to vector<12x16xf32>
      %2233 = vector.broadcast %2230 : f32 to vector<12x16xf32>
      %2234 = arith.mulf %2233, %2232 : vector<12x16xf32>
      %2235 = arith.addf %2227, %2234 : vector<12x16xf32>
      %c192_i32 = arith.constant 192 : i32
      %2236 = arith.addi %c192_i32, %arg13 : i32
      %2237 = arith.index_cast %2236 : i32 to index
      %2238 = memref.load %arg2[%2237] : memref<216xf32, #tpu.memory_space<smem>>
      %2239 = vector.extract_strided_slice %10 {offsets = [0, 0, 0], sizes = [1, 12, 16], strides = [1, 1, 1]} : vector<3x12x16xf32> to vector<1x12x16xf32>
      %2240 = vector.shape_cast %2239 : vector<1x12x16xf32> to vector<12x16xf32>
      %2241 = vector.broadcast %2238 : f32 to vector<12x16xf32>
      %2242 = arith.mulf %2241, %2240 : vector<12x16xf32>
      %2243 = arith.addf %2235, %2242 : vector<12x16xf32>
      %c200_i32 = arith.constant 200 : i32
      %2244 = arith.addi %c200_i32, %arg13 : i32
      %2245 = arith.index_cast %2244 : i32 to index
      %2246 = memref.load %arg2[%2245] : memref<216xf32, #tpu.memory_space<smem>>
      %2247 = vector.extract_strided_slice %10 {offsets = [1, 0, 0], sizes = [1, 12, 16], strides = [1, 1, 1]} : vector<3x12x16xf32> to vector<1x12x16xf32>
      %2248 = vector.shape_cast %2247 : vector<1x12x16xf32> to vector<12x16xf32>
      %2249 = vector.broadcast %2246 : f32 to vector<12x16xf32>
      %2250 = arith.mulf %2249, %2248 : vector<12x16xf32>
      %2251 = arith.addf %2243, %2250 : vector<12x16xf32>
      %c208_i32 = arith.constant 208 : i32
      %2252 = arith.addi %c208_i32, %arg13 : i32
      %2253 = arith.index_cast %2252 : i32 to index
      %2254 = memref.load %arg2[%2253] : memref<216xf32, #tpu.memory_space<smem>>
      %2255 = vector.extract_strided_slice %10 {offsets = [2, 0, 0], sizes = [1, 12, 16], strides = [1, 1, 1]} : vector<3x12x16xf32> to vector<1x12x16xf32>
      %2256 = vector.shape_cast %2255 : vector<1x12x16xf32> to vector<12x16xf32>
      %2257 = vector.broadcast %2254 : f32 to vector<12x16xf32>
      %2258 = arith.mulf %2257, %2256 : vector<12x16xf32>
      %2259 = arith.addf %2251, %2258 : vector<12x16xf32>
      %cst_116 = arith.constant 0.000000e+00 : f32
      %2260 = vector.broadcast %cst_116 : f32 to vector<12x16xf32>
      %2261 = arith.maximumf %2259, %2260 : vector<12x16xf32>
      %2262 = arith.index_cast %arg13 : i32 to index
      %c0_117 = arith.constant 0 : index
      %c0_118 = arith.constant 0 : index
      %2263 = vector.load %arg11[%2262, %c0_117, %c0_118] : memref<8x12x16xf32, #tpu.memory_space<vmem>>, vector<1x12x16xf32>
      %2264 = vector.shape_cast %2263 : vector<1x12x16xf32> to vector<12x16xf32>
      %2265 = vector.shape_cast %2261 : vector<12x16xf32> to vector<1x12x16xf32>
      tpu.vector_store %arg11[%2262, %c0_117, %c0_118], %2265 {strides = array<i32>} : memref<8x12x16xf32, #tpu.memory_space<vmem>>, vector<1x12x16xf32>,
    }
    %c8_i32_4 = arith.constant 8 : i32
    %c0_5 = arith.constant 0 : index
    %c0_6 = arith.constant 0 : index
    %c0_7 = arith.constant 0 : index
    %12 = vector.load %arg11[%c0_5, %c0_6, %c0_7] : memref<8x12x16xf32, #tpu.memory_space<vmem>>, vector<8x12x16xf32>
    %13 = tpu.iota {dimensions = array<i32: 0>} : vector<12x16xi32>
    %14 = tpu.iota {dimensions = array<i32: 1>} : vector<12x16xi32>
    %c1_i32_8 = arith.constant 1 : i32
    %15 = vector.broadcast %c1_i32_8 : i32 to vector<12x16xi32>
    %16 = arith.andi %13, %15 : vector<12x16xi32>
    %c0_i32_9 = arith.constant 0 : i32
    %17 = vector.broadcast %c0_i32_9 : i32 to vector<12x16xi32>
    %18 = arith.cmpi eq, %16, %17 : vector<12x16xi32>
    %c1_i32_10 = arith.constant 1 : i32
    %19 = vector.broadcast %c1_i32_10 : i32 to vector<12x16xi32>
    %20 = arith.andi %14, %19 : vector<12x16xi32>
    %c0_i32_11 = arith.constant 0 : i32
    %21 = vector.broadcast %c0_i32_11 : i32 to vector<12x16xi32>
    %22 = arith.cmpi eq, %20, %21 : vector<12x16xi32>
    %23 = vector.extract_strided_slice %12 {offsets = [0, 1, 0], sizes = [8, 11, 16], strides = [1, 1, 1]} : vector<8x12x16xf32> to vector<8x11x16xf32>
    %24 = vector.extract_strided_slice %12 {offsets = [0, 11, 0], sizes = [8, 1, 16], strides = [1, 1, 1]} : vector<8x12x16xf32> to vector<8x1x16xf32>
    %25 = tpu.concatenate %23, %24 in 1 : vector<8x11x16xf32>, vector<8x1x16xf32> -> vector<8x12x16xf32>
    %26 = vector.extract_strided_slice %12 {offsets = [0, 0, 0], sizes = [8, 1, 16], strides = [1, 1, 1]} : vector<8x12x16xf32> to vector<8x1x16xf32>
    %27 = vector.extract_strided_slice %12 {offsets = [0, 0, 0], sizes = [8, 11, 16], strides = [1, 1, 1]} : vector<8x12x16xf32> to vector<8x11x16xf32>
    %28 = tpu.concatenate %26, %27 in 1 : vector<8x1x16xf32>, vector<8x11x16xf32> -> vector<8x12x16xf32>
    %29 = vector.shape_cast %18 : vector<12x16xi1> to vector<1x12x16xi1>
    %30 = vector.broadcast %29 : vector<1x12x16xi1> to vector<8x12x16xi1>
    %31 = arith.select %30, %25, %28 : vector<8x12x16xi1>, vector<8x12x16xf32>
    %32 = arith.maximumf %12, %31 : vector<8x12x16xf32>
    %33 = vector.extract_strided_slice %32 {offsets = [0, 0, 1], sizes = [8, 12, 15], strides = [1, 1, 1]} : vector<8x12x16xf32> to vector<8x12x15xf32>
    %34 = vector.extract_strided_slice %32 {offsets = [0, 0, 15], sizes = [8, 12, 1], strides = [1, 1, 1]} : vector<8x12x16xf32> to vector<8x12x1xf32>
    %35 = tpu.concatenate %33, %34 in 2 : vector<8x12x15xf32>, vector<8x12x1xf32> -> vector<8x12x16xf32>
    %36 = vector.extract_strided_slice %32 {offsets = [0, 0, 0], sizes = [8, 12, 1], strides = [1, 1, 1]} : vector<8x12x16xf32> to vector<8x12x1xf32>
    %37 = vector.extract_strided_slice %32 {offsets = [0, 0, 0], sizes = [8, 12, 15], strides = [1, 1, 1]} : vector<8x12x16xf32> to vector<8x12x15xf32>
    %38 = tpu.concatenate %36, %37 in 2 : vector<8x12x1xf32>, vector<8x12x15xf32> -> vector<8x12x16xf32>
    %39 = vector.shape_cast %22 : vector<12x16xi1> to vector<1x12x16xi1>
    %40 = vector.broadcast %39 : vector<1x12x16xi1> to vector<8x12x16xi1>
    %41 = arith.select %40, %35, %38 : vector<8x12x16xi1>, vector<8x12x16xf32>
    %42 = arith.maximumf %32, %41 : vector<8x12x16xf32>
    %c8_i32_12 = arith.constant 8 : i32
    %43 = arith.muli %arg1, %c8_i32_12 : i32
    %c2_i32 = arith.constant 2 : i32
    %44 = arith.subi %43, %c2_i32 : i32
    %45 = vector.broadcast %44 : i32 to vector<12x16xi32>
    %46 = arith.addi %13, %45 : vector<12x16xi32>
    %c0_i32_13 = arith.constant 0 : i32
    %47 = vector.broadcast %c0_i32_13 : i32 to vector<12x16xi32>
    %48 = arith.cmpi sge, %46, %47 : vector<12x16xi32>
    %c16_i32 = arith.constant 16 : i32
    %49 = vector.broadcast %c16_i32 : i32 to vector<12x16xi32>
    %50 = arith.cmpi slt, %46, %49 : vector<12x16xi32>
    %51 = arith.andi %48, %50 : vector<12x16xi1>
    %cst = arith.constant 0.000000e+00 : f32
    %52 = vector.shape_cast %51 : vector<12x16xi1> to vector<1x12x16xi1>
    %53 = vector.broadcast %52 : vector<1x12x16xi1> to vector<8x12x16xi1>
    %54 = vector.broadcast %cst : f32 to vector<8x12x16xf32>
    %55 = arith.select %53, %42, %54 : vector<8x12x16xi1>, vector<8x12x16xf32>
    %cst_14 = arith.constant 0.000000e+00 : f32
    %56 = vector.broadcast %cst_14 : f32 to vector<8x12x2xf32>
    %57 = tpu.concatenate %56, %55, %56 in 2 : vector<8x12x2xf32>, vector<8x12x16xf32>, vector<8x12x2xf32> -> vector<8x12x20xf32>
    %58 = vector.extract_strided_slice %57 {offsets = [0, 0, 0], sizes = [8, 8, 16], strides = [1, 1, 1]} : vector<8x12x20xf32> to vector<8x8x16xf32>
    %59 = vector.extract_strided_slice %57 {offsets = [0, 0, 2], sizes = [8, 8, 16], strides = [1, 1, 1]} : vector<8x12x20xf32> to vector<8x8x16xf32>
    %60 = vector.extract_strided_slice %57 {offsets = [0, 0, 4], sizes = [8, 8, 16], strides = [1, 1, 1]} : vector<8x12x20xf32> to vector<8x8x16xf32>
    %61 = vector.extract_strided_slice %57 {offsets = [0, 2, 0], sizes = [8, 8, 16], strides = [1, 1, 1]} : vector<8x12x20xf32> to vector<8x8x16xf32>
    %62 = vector.extract_strided_slice %57 {offsets = [0, 2, 2], sizes = [8, 8, 16], strides = [1, 1, 1]} : vector<8x12x20xf32> to vector<8x8x16xf32>
    %63 = vector.extract_strided_slice %57 {offsets = [0, 2, 4], sizes = [8, 8, 16], strides = [1, 1, 1]} : vector<8x12x20xf32> to vector<8x8x16xf32>
    %64 = vector.extract_strided_slice %57 {offsets = [0, 4, 0], sizes = [8, 8, 16], strides = [1, 1, 1]} : vector<8x12x20xf32> to vector<8x8x16xf32>
    %65 = vector.extract_strided_slice %57 {offsets = [0, 4, 2], sizes = [8, 8, 16], strides = [1, 1, 1]} : vector<8x12x20xf32> to vector<8x8x16xf32>
    %66 = vector.extract_strided_slice %57 {offsets = [0, 4, 4], sizes = [8, 8, 16], strides = [1, 1, 1]} : vector<8x12x20xf32> to vector<8x8x16xf32>
    %c0_i32_15 = arith.constant 0 : i32
    %c16_i32_16 = arith.constant 16 : i32
    %67 = arith.addi %c0_i32_15, %c16_i32_16 : i32
    %c1_i32_17 = arith.constant 1 : i32
    scf.for %arg13 = %c0_i32_15 to %67 step %c1_i32_17  : i32 {
      %cst_112 = arith.constant 0.000000e+00 : f32
      %2039 = vector.broadcast %cst_112 : f32 to vector<8x16xf32>
      %2040 = arith.index_cast %arg13 : i32 to index
      %2041 = memref.load %arg5[%2040] : memref<16xf32, #tpu.memory_space<smem>>
      %2042 = vector.broadcast %2041 : f32 to vector<8x16xf32>
      %2043 = arith.addf %2039, %2042 : vector<8x16xf32>
      %c0_i32_113 = arith.constant 0 : i32
      %2044 = arith.addi %c0_i32_113, %arg13 : i32
      %2045 = arith.index_cast %2044 : i32 to index
      %2046 = memref.load %arg4[%2045] : memref<1152xf32, #tpu.memory_space<smem>>
      %2047 = vector.extract_strided_slice %58 {offsets = [0, 0, 0], sizes = [1, 8, 16], strides = [1, 1, 1]} : vector<8x8x16xf32> to vector<1x8x16xf32>
      %2048 = vector.shape_cast %2047 : vector<1x8x16xf32> to vector<8x16xf32>
      %2049 = vector.broadcast %2046 : f32 to vector<8x16xf32>
      %2050 = arith.mulf %2049, %2048 : vector<8x16xf32>
      %2051 = arith.addf %2043, %2050 : vector<8x16xf32>
      %c16_i32_114 = arith.constant 16 : i32
      %2052 = arith.addi %c16_i32_114, %arg13 : i32
      %2053 = arith.index_cast %2052 : i32 to index
      %2054 = memref.load %arg4[%2053] : memref<1152xf32, #tpu.memory_space<smem>>
      %2055 = vector.extract_strided_slice %58 {offsets = [1, 0, 0], sizes = [1, 8, 16], strides = [1, 1, 1]} : vector<8x8x16xf32> to vector<1x8x16xf32>
      %2056 = vector.shape_cast %2055 : vector<1x8x16xf32> to vector<8x16xf32>
      %2057 = vector.broadcast %2054 : f32 to vector<8x16xf32>
      %2058 = arith.mulf %2057, %2056 : vector<8x16xf32>
      %2059 = arith.addf %2051, %2058 : vector<8x16xf32>
      %c32_i32 = arith.constant 32 : i32
      %2060 = arith.addi %c32_i32, %arg13 : i32
      %2061 = arith.index_cast %2060 : i32 to index
      %2062 = memref.load %arg4[%2061] : memref<1152xf32, #tpu.memory_space<smem>>
      %2063 = vector.extract_strided_slice %58 {offsets = [2, 0, 0], sizes = [1, 8, 16], strides = [1, 1, 1]} : vector<8x8x16xf32> to vector<1x8x16xf32>
      %2064 = vector.shape_cast %2063 : vector<1x8x16xf32> to vector<8x16xf32>
      %2065 = vector.broadcast %2062 : f32 to vector<8x16xf32>
      %2066 = arith.mulf %2065, %2064 : vector<8x16xf32>
      %2067 = arith.addf %2059, %2066 : vector<8x16xf32>
      %c48_i32 = arith.constant 48 : i32
      %2068 = arith.addi %c48_i32, %arg13 : i32
      %2069 = arith.index_cast %2068 : i32 to index
      %2070 = memref.load %arg4[%2069] : memref<1152xf32, #tpu.memory_space<smem>>
      %2071 = vector.extract_strided_slice %58 {offsets = [3, 0, 0], sizes = [1, 8, 16], strides = [1, 1, 1]} : vector<8x8x16xf32> to vector<1x8x16xf32>
      %2072 = vector.shape_cast %2071 : vector<1x8x16xf32> to vector<8x16xf32>
      %2073 = vector.broadcast %2070 : f32 to vector<8x16xf32>
      %2074 = arith.mulf %2073, %2072 : vector<8x16xf32>
      %2075 = arith.addf %2067, %2074 : vector<8x16xf32>
      %c64_i32 = arith.constant 64 : i32
      %2076 = arith.addi %c64_i32, %arg13 : i32
      %2077 = arith.index_cast %2076 : i32 to index
      %2078 = memref.load %arg4[%2077] : memref<1152xf32, #tpu.memory_space<smem>>
      %2079 = vector.extract_strided_slice %58 {offsets = [4, 0, 0], sizes = [1, 8, 16], strides = [1, 1, 1]} : vector<8x8x16xf32> to vector<1x8x16xf32>
      %2080 = vector.shape_cast %2079 : vector<1x8x16xf32> to vector<8x16xf32>
      %2081 = vector.broadcast %2078 : f32 to vector<8x16xf32>
      %2082 = arith.mulf %2081, %2080 : vector<8x16xf32>
      %2083 = arith.addf %2075, %2082 : vector<8x16xf32>
      %c80_i32 = arith.constant 80 : i32
      %2084 = arith.addi %c80_i32, %arg13 : i32
      %2085 = arith.index_cast %2084 : i32 to index
      %2086 = memref.load %arg4[%2085] : memref<1152xf32, #tpu.memory_space<smem>>
      %2087 = vector.extract_strided_slice %58 {offsets = [5, 0, 0], sizes = [1, 8, 16], strides = [1, 1, 1]} : vector<8x8x16xf32> to vector<1x8x16xf32>
      %2088 = vector.shape_cast %2087 : vector<1x8x16xf32> to vector<8x16xf32>
      %2089 = vector.broadcast %2086 : f32 to vector<8x16xf32>
      %2090 = arith.mulf %2089, %2088 : vector<8x16xf32>
      %2091 = arith.addf %2083, %2090 : vector<8x16xf32>
      %c96_i32 = arith.constant 96 : i32
      %2092 = arith.addi %c96_i32, %arg13 : i32
      %2093 = arith.index_cast %2092 : i32 to index
      %2094 = memref.load %arg4[%2093] : memref<1152xf32, #tpu.memory_space<smem>>
      %2095 = vector.extract_strided_slice %58 {offsets = [6, 0, 0], sizes = [1, 8, 16], strides = [1, 1, 1]} : vector<8x8x16xf32> to vector<1x8x16xf32>
      %2096 = vector.shape_cast %2095 : vector<1x8x16xf32> to vector<8x16xf32>
      %2097 = vector.broadcast %2094 : f32 to vector<8x16xf32>
      %2098 = arith.mulf %2097, %2096 : vector<8x16xf32>
      %2099 = arith.addf %2091, %2098 : vector<8x16xf32>
      %c112_i32 = arith.constant 112 : i32
      %2100 = arith.addi %c112_i32, %arg13 : i32
      %2101 = arith.index_cast %2100 : i32 to index
      %2102 = memref.load %arg4[%2101] : memref<1152xf32, #tpu.memory_space<smem>>
      %2103 = vector.extract_strided_slice %58 {offsets = [7, 0, 0], sizes = [1, 8, 16], strides = [1, 1, 1]} : vector<8x8x16xf32> to vector<1x8x16xf32>
      %2104 = vector.shape_cast %2103 : vector<1x8x16xf32> to vector<8x16xf32>
      %2105 = vector.broadcast %2102 : f32 to vector<8x16xf32>
      %2106 = arith.mulf %2105, %2104 : vector<8x16xf32>
      %2107 = arith.addf %2099, %2106 : vector<8x16xf32>
      %c128_i32 = arith.constant 128 : i32
      %2108 = arith.addi %c128_i32, %arg13 : i32
      %2109 = arith.index_cast %2108 : i32 to index
      %2110 = memref.load %arg4[%2109] : memref<1152xf32, #tpu.memory_space<smem>>
      %2111 = vector.extract_strided_slice %59 {offsets = [0, 0, 0], sizes = [1, 8, 16], strides = [1, 1, 1]} : vector<8x8x16xf32> to vector<1x8x16xf32>
      %2112 = vector.shape_cast %2111 : vector<1x8x16xf32> to vector<8x16xf32>
      %2113 = vector.broadcast %2110 : f32 to vector<8x16xf32>
      %2114 = arith.mulf %2113, %2112 : vector<8x16xf32>
      %2115 = arith.addf %2107, %2114 : vector<8x16xf32>
      %c144_i32 = arith.constant 144 : i32
      %2116 = arith.addi %c144_i32, %arg13 : i32
      %2117 = arith.index_cast %2116 : i32 to index
      %2118 = memref.load %arg4[%2117] : memref<1152xf32, #tpu.memory_space<smem>>
      %2119 = vector.extract_strided_slice %59 {offsets = [1, 0, 0], sizes = [1, 8, 16], strides = [1, 1, 1]} : vector<8x8x16xf32> to vector<1x8x16xf32>
      %2120 = vector.shape_cast %2119 : vector<1x8x16xf32> to vector<8x16xf32>
      %2121 = vector.broadcast %2118 : f32 to vector<8x16xf32>
      %2122 = arith.mulf %2121, %2120 : vector<8x16xf32>
      %2123 = arith.addf %2115, %2122 : vector<8x16xf32>
      %c160_i32 = arith.constant 160 : i32
      %2124 = arith.addi %c160_i32, %arg13 : i32
      %2125 = arith.index_cast %2124 : i32 to index
      %2126 = memref.load %arg4[%2125] : memref<1152xf32, #tpu.memory_space<smem>>
      %2127 = vector.extract_strided_slice %59 {offsets = [2, 0, 0], sizes = [1, 8, 16], strides = [1, 1, 1]} : vector<8x8x16xf32> to vector<1x8x16xf32>
      %2128 = vector.shape_cast %2127 : vector<1x8x16xf32> to vector<8x16xf32>
      %2129 = vector.broadcast %2126 : f32 to vector<8x16xf32>
      %2130 = arith.mulf %2129, %2128 : vector<8x16xf32>
      %2131 = arith.addf %2123, %2130 : vector<8x16xf32>
      %c176_i32 = arith.constant 176 : i32
      %2132 = arith.addi %c176_i32, %arg13 : i32
      %2133 = arith.index_cast %2132 : i32 to index
      %2134 = memref.load %arg4[%2133] : memref<1152xf32, #tpu.memory_space<smem>>
      %2135 = vector.extract_strided_slice %59 {offsets = [3, 0, 0], sizes = [1, 8, 16], strides = [1, 1, 1]} : vector<8x8x16xf32> to vector<1x8x16xf32>
      %2136 = vector.shape_cast %2135 : vector<1x8x16xf32> to vector<8x16xf32>
      %2137 = vector.broadcast %2134 : f32 to vector<8x16xf32>
      %2138 = arith.mulf %2137, %2136 : vector<8x16xf32>
      %2139 = arith.addf %2131, %2138 : vector<8x16xf32>
      %c192_i32 = arith.constant 192 : i32
      %2140 = arith.addi %c192_i32, %arg13 : i32
      %2141 = arith.index_cast %2140 : i32 to index
      %2142 = memref.load %arg4[%2141] : memref<1152xf32, #tpu.memory_space<smem>>
      %2143 = vector.extract_strided_slice %59 {offsets = [4, 0, 0], sizes = [1, 8, 16], strides = [1, 1, 1]} : vector<8x8x16xf32> to vector<1x8x16xf32>
      %2144 = vector.shape_cast %2143 : vector<1x8x16xf32> to vector<8x16xf32>
      %2145 = vector.broadcast %2142 : f32 to vector<8x16xf32>
      %2146 = arith.mulf %2145, %2144 : vector<8x16xf32>
      %2147 = arith.addf %2139, %2146 : vector<8x16xf32>
      %c208_i32 = arith.constant 208 : i32
      %2148 = arith.addi %c208_i32, %arg13 : i32
      %2149 = arith.index_cast %2148 : i32 to index
      %2150 = memref.load %arg4[%2149] : memref<1152xf32, #tpu.memory_space<smem>>
      %2151 = vector.extract_strided_slice %59 {offsets = [5, 0, 0], sizes = [1, 8, 16], strides = [1, 1, 1]} : vector<8x8x16xf32> to vector<1x8x16xf32>
      %2152 = vector.shape_cast %2151 : vector<1x8x16xf32> to vector<8x16xf32>
      %2153 = vector.broadcast %2150 : f32 to vector<8x16xf32>
      %2154 = arith.mulf %2153, %2152 : vector<8x16xf32>
      %2155 = arith.addf %2147, %2154 : vector<8x16xf32>
      %c224_i32 = arith.constant 224 : i32
      %2156 = arith.addi %c224_i32, %arg13 : i32
      %2157 = arith.index_cast %2156 : i32 to index
      %2158 = memref.load %arg4[%2157] : memref<1152xf32, #tpu.memory_space<smem>>
      %2159 = vector.extract_strided_slice %59 {offsets = [6, 0, 0], sizes = [1, 8, 16], strides = [1, 1, 1]} : vector<8x8x16xf32> to vector<1x8x16xf32>
      %2160 = vector.shape_cast %2159 : vector<1x8x16xf32> to vector<8x16xf32>
      %2161 = vector.broadcast %2158 : f32 to vector<8x16xf32>
      %2162 = arith.mulf %2161, %2160 : vector<8x16xf32>
      %2163 = arith.addf %2155, %2162 : vector<8x16xf32>
      %c240_i32 = arith.constant 240 : i32
      %2164 = arith.addi %c240_i32, %arg13 : i32
      %2165 = arith.index_cast %2164 : i32 to index
      %2166 = memref.load %arg4[%2165] : memref<1152xf32, #tpu.memory_space<smem>>
      %2167 = vector.extract_strided_slice %59 {offsets = [7, 0, 0], sizes = [1, 8, 16], strides = [1, 1, 1]} : vector<8x8x16xf32> to vector<1x8x16xf32>
      %2168 = vector.shape_cast %2167 : vector<1x8x16xf32> to vector<8x16xf32>
      %2169 = vector.broadcast %2166 : f32 to vector<8x16xf32>
      %2170 = arith.mulf %2169, %2168 : vector<8x16xf32>
      %2171 = arith.addf %2163, %2170 : vector<8x16xf32>
      %c256_i32 = arith.constant 256 : i32
      %2172 = arith.addi %c256_i32, %arg13 : i32
      %2173 = arith.index_cast %2172 : i32 to index
      %2174 = memref.load %arg4[%2173] : memref<1152xf32, #tpu.memory_space<smem>>
      %2175 = vector.extract_strided_slice %60 {offsets = [0, 0, 0], sizes = [1, 8, 16], strides = [1, 1, 1]} : vector<8x8x16xf32> to vector<1x8x16xf32>
      %2176 = vector.shape_cast %2175 : vector<1x8x16xf32> to vector<8x16xf32>
      %2177 = vector.broadcast %2174 : f32 to vector<8x16xf32>
      %2178 = arith.mulf %2177, %2176 : vector<8x16xf32>
      %2179 = arith.addf %2171, %2178 : vector<8x16xf32>
      %c272_i32 = arith.constant 272 : i32
      %2180 = arith.addi %c272_i32, %arg13 : i32
      %2181 = arith.index_cast %2180 : i32 to index
      %2182 = memref.load %arg4[%2181] : memref<1152xf32, #tpu.memory_space<smem>>
      %2183 = vector.extract_strided_slice %60 {offsets = [1, 0, 0], sizes = [1, 8, 16], strides = [1, 1, 1]} : vector<8x8x16xf32> to vector<1x8x16xf32>
      %2184 = vector.shape_cast %2183 : vector<1x8x16xf32> to vector<8x16xf32>
      %2185 = vector.broadcast %2182 : f32 to vector<8x16xf32>
      %2186 = arith.mulf %2185, %2184 : vector<8x16xf32>
      %2187 = arith.addf %2179, %2186 : vector<8x16xf32>
      %c288_i32 = arith.constant 288 : i32
      %2188 = arith.addi %c288_i32, %arg13 : i32
      %2189 = arith.index_cast %2188 : i32 to index
      %2190 = memref.load %arg4[%2189] : memref<1152xf32, #tpu.memory_space<smem>>
      %2191 = vector.extract_strided_slice %60 {offsets = [2, 0, 0], sizes = [1, 8, 16], strides = [1, 1, 1]} : vector<8x8x16xf32> to vector<1x8x16xf32>
      %2192 = vector.shape_cast %2191 : vector<1x8x16xf32> to vector<8x16xf32>
      %2193 = vector.broadcast %2190 : f32 to vector<8x16xf32>
      %2194 = arith.mulf %2193, %2192 : vector<8x16xf32>
      %2195 = arith.addf %2187, %2194 : vector<8x16xf32>
      %c304_i32 = arith.constant 304 : i32
      %2196 = arith.addi %c304_i32, %arg13 : i32
      %2197 = arith.index_cast %2196 : i32 to index
      %2198 = memref.load %arg4[%2197] : memref<1152xf32, #tpu.memory_space<smem>>
      %2199 = vector.extract_strided_slice %60 {offsets = [3, 0, 0], sizes = [1, 8, 16], strides = [1, 1, 1]} : vector<8x8x16xf32> to vector<1x8x16xf32>
      %2200 = vector.shape_cast %2199 : vector<1x8x16xf32> to vector<8x16xf32>
      %2201 = vector.broadcast %2198 : f32 to vector<8x16xf32>
      %2202 = arith.mulf %2201, %2200 : vector<8x16xf32>
      %2203 = arith.addf %2195, %2202 : vector<8x16xf32>
      %c320_i32 = arith.constant 320 : i32
      %2204 = arith.addi %c320_i32, %arg13 : i32
      %2205 = arith.index_cast %2204 : i32 to index
      %2206 = memref.load %arg4[%2205] : memref<1152xf32, #tpu.memory_space<smem>>
      %2207 = vector.extract_strided_slice %60 {offsets = [4, 0, 0], sizes = [1, 8, 16], strides = [1, 1, 1]} : vector<8x8x16xf32> to vector<1x8x16xf32>
      %2208 = vector.shape_cast %2207 : vector<1x8x16xf32> to vector<8x16xf32>
      %2209 = vector.broadcast %2206 : f32 to vector<8x16xf32>
      %2210 = arith.mulf %2209, %2208 : vector<8x16xf32>
      %2211 = arith.addf %2203, %2210 : vector<8x16xf32>
      %c336_i32 = arith.constant 336 : i32
      %2212 = arith.addi %c336_i32, %arg13 : i32
      %2213 = arith.index_cast %2212 : i32 to index
      %2214 = memref.load %arg4[%2213] : memref<1152xf32, #tpu.memory_space<smem>>
      %2215 = vector.extract_strided_slice %60 {offsets = [5, 0, 0], sizes = [1, 8, 16], strides = [1, 1, 1]} : vector<8x8x16xf32> to vector<1x8x16xf32>
      %2216 = vector.shape_cast %2215 : vector<1x8x16xf32> to vector<8x16xf32>
      %2217 = vector.broadcast %2214 : f32 to vector<8x16xf32>
      %2218 = arith.mulf %2217, %2216 : vector<8x16xf32>
      %2219 = arith.addf %2211, %2218 : vector<8x16xf32>
      %c352_i32 = arith.constant 352 : i32
      %2220 = arith.addi %c352_i32, %arg13 : i32
      %2221 = arith.index_cast %2220 : i32 to index
      %2222 = memref.load %arg4[%2221] : memref<1152xf32, #tpu.memory_space<smem>>
      %2223 = vector.extract_strided_slice %60 {offsets = [6, 0, 0], sizes = [1, 8, 16], strides = [1, 1, 1]} : vector<8x8x16xf32> to vector<1x8x16xf32>
      %2224 = vector.shape_cast %2223 : vector<1x8x16xf32> to vector<8x16xf32>
      %2225 = vector.broadcast %2222 : f32 to vector<8x16xf32>
      %2226 = arith.mulf %2225, %2224 : vector<8x16xf32>
      %2227 = arith.addf %2219, %2226 : vector<8x16xf32>
      %c368_i32 = arith.constant 368 : i32
      %2228 = arith.addi %c368_i32, %arg13 : i32
      %2229 = arith.index_cast %2228 : i32 to index
      %2230 = memref.load %arg4[%2229] : memref<1152xf32, #tpu.memory_space<smem>>
      %2231 = vector.extract_strided_slice %60 {offsets = [7, 0, 0], sizes = [1, 8, 16], strides = [1, 1, 1]} : vector<8x8x16xf32> to vector<1x8x16xf32>
      %2232 = vector.shape_cast %2231 : vector<1x8x16xf32> to vector<8x16xf32>
      %2233 = vector.broadcast %2230 : f32 to vector<8x16xf32>
      %2234 = arith.mulf %2233, %2232 : vector<8x16xf32>
      %2235 = arith.addf %2227, %2234 : vector<8x16xf32>
      %c384_i32 = arith.constant 384 : i32
      %2236 = arith.addi %c384_i32, %arg13 : i32
      %2237 = arith.index_cast %2236 : i32 to index
      %2238 = memref.load %arg4[%2237] : memref<1152xf32, #tpu.memory_space<smem>>
      %2239 = vector.extract_strided_slice %61 {offsets = [0, 0, 0], sizes = [1, 8, 16], strides = [1, 1, 1]} : vector<8x8x16xf32> to vector<1x8x16xf32>
      %2240 = vector.shape_cast %2239 : vector<1x8x16xf32> to vector<8x16xf32>
      %2241 = vector.broadcast %2238 : f32 to vector<8x16xf32>
      %2242 = arith.mulf %2241, %2240 : vector<8x16xf32>
      %2243 = arith.addf %2235, %2242 : vector<8x16xf32>
      %c400_i32 = arith.constant 400 : i32
      %2244 = arith.addi %c400_i32, %arg13 : i32
      %2245 = arith.index_cast %2244 : i32 to index
      %2246 = memref.load %arg4[%2245] : memref<1152xf32, #tpu.memory_space<smem>>
      %2247 = vector.extract_strided_slice %61 {offsets = [1, 0, 0], sizes = [1, 8, 16], strides = [1, 1, 1]} : vector<8x8x16xf32> to vector<1x8x16xf32>
      %2248 = vector.shape_cast %2247 : vector<1x8x16xf32> to vector<8x16xf32>
      %2249 = vector.broadcast %2246 : f32 to vector<8x16xf32>
      %2250 = arith.mulf %2249, %2248 : vector<8x16xf32>
      %2251 = arith.addf %2243, %2250 : vector<8x16xf32>
      %c416_i32 = arith.constant 416 : i32
      %2252 = arith.addi %c416_i32, %arg13 : i32
      %2253 = arith.index_cast %2252 : i32 to index
      %2254 = memref.load %arg4[%2253] : memref<1152xf32, #tpu.memory_space<smem>>
      %2255 = vector.extract_strided_slice %61 {offsets = [2, 0, 0], sizes = [1, 8, 16], strides = [1, 1, 1]} : vector<8x8x16xf32> to vector<1x8x16xf32>
      %2256 = vector.shape_cast %2255 : vector<1x8x16xf32> to vector<8x16xf32>
      %2257 = vector.broadcast %2254 : f32 to vector<8x16xf32>
      %2258 = arith.mulf %2257, %2256 : vector<8x16xf32>
      %2259 = arith.addf %2251, %2258 : vector<8x16xf32>
      %c432_i32 = arith.constant 432 : i32
      %2260 = arith.addi %c432_i32, %arg13 : i32
      %2261 = arith.index_cast %2260 : i32 to index
      %2262 = memref.load %arg4[%2261] : memref<1152xf32, #tpu.memory_space<smem>>
      %2263 = vector.extract_strided_slice %61 {offsets = [3, 0, 0], sizes = [1, 8, 16], strides = [1, 1, 1]} : vector<8x8x16xf32> to vector<1x8x16xf32>
      %2264 = vector.shape_cast %2263 : vector<1x8x16xf32> to vector<8x16xf32>
      %2265 = vector.broadcast %2262 : f32 to vector<8x16xf32>
      %2266 = arith.mulf %2265, %2264 : vector<8x16xf32>
      %2267 = arith.addf %2259, %2266 : vector<8x16xf32>
      %c448_i32 = arith.constant 448 : i32
      %2268 = arith.addi %c448_i32, %arg13 : i32
      %2269 = arith.index_cast %2268 : i32 to index
      %2270 = memref.load %arg4[%2269] : memref<1152xf32, #tpu.memory_space<smem>>
      %2271 = vector.extract_strided_slice %61 {offsets = [4, 0, 0], sizes = [1, 8, 16], strides = [1, 1, 1]} : vector<8x8x16xf32> to vector<1x8x16xf32>
      %2272 = vector.shape_cast %2271 : vector<1x8x16xf32> to vector<8x16xf32>
      %2273 = vector.broadcast %2270 : f32 to vector<8x16xf32>
      %2274 = arith.mulf %2273, %2272 : vector<8x16xf32>
      %2275 = arith.addf %2267, %2274 : vector<8x16xf32>
      %c464_i32 = arith.constant 464 : i32
      %2276 = arith.addi %c464_i32, %arg13 : i32
      %2277 = arith.index_cast %2276 : i32 to index
      %2278 = memref.load %arg4[%2277] : memref<1152xf32, #tpu.memory_space<smem>>
      %2279 = vector.extract_strided_slice %61 {offsets = [5, 0, 0], sizes = [1, 8, 16], strides = [1, 1, 1]} : vector<8x8x16xf32> to vector<1x8x16xf32>
      %2280 = vector.shape_cast %2279 : vector<1x8x16xf32> to vector<8x16xf32>
      %2281 = vector.broadcast %2278 : f32 to vector<8x16xf32>
      %2282 = arith.mulf %2281, %2280 : vector<8x16xf32>
      %2283 = arith.addf %2275, %2282 : vector<8x16xf32>
      %c480_i32 = arith.constant 480 : i32
      %2284 = arith.addi %c480_i32, %arg13 : i32
      %2285 = arith.index_cast %2284 : i32 to index
      %2286 = memref.load %arg4[%2285] : memref<1152xf32, #tpu.memory_space<smem>>
      %2287 = vector.extract_strided_slice %61 {offsets = [6, 0, 0], sizes = [1, 8, 16], strides = [1, 1, 1]} : vector<8x8x16xf32> to vector<1x8x16xf32>
      %2288 = vector.shape_cast %2287 : vector<1x8x16xf32> to vector<8x16xf32>
      %2289 = vector.broadcast %2286 : f32 to vector<8x16xf32>
      %2290 = arith.mulf %2289, %2288 : vector<8x16xf32>
      %2291 = arith.addf %2283, %2290 : vector<8x16xf32>
      %c496_i32 = arith.constant 496 : i32
      %2292 = arith.addi %c496_i32, %arg13 : i32
      %2293 = arith.index_cast %2292 : i32 to index
      %2294 = memref.load %arg4[%2293] : memref<1152xf32, #tpu.memory_space<smem>>
      %2295 = vector.extract_strided_slice %61 {offsets = [7, 0, 0], sizes = [1, 8, 16], strides = [1, 1, 1]} : vector<8x8x16xf32> to vector<1x8x16xf32>
      %2296 = vector.shape_cast %2295 : vector<1x8x16xf32> to vector<8x16xf32>
      %2297 = vector.broadcast %2294 : f32 to vector<8x16xf32>
      %2298 = arith.mulf %2297, %2296 : vector<8x16xf32>
      %2299 = arith.addf %2291, %2298 : vector<8x16xf32>
      %c512_i32 = arith.constant 512 : i32
      %2300 = arith.addi %c512_i32, %arg13 : i32
      %2301 = arith.index_cast %2300 : i32 to index
      %2302 = memref.load %arg4[%2301] : memref<1152xf32, #tpu.memory_space<smem>>
      %2303 = vector.extract_strided_slice %62 {offsets = [0, 0, 0], sizes = [1, 8, 16], strides = [1, 1, 1]} : vector<8x8x16xf32> to vector<1x8x16xf32>
      %2304 = vector.shape_cast %2303 : vector<1x8x16xf32> to vector<8x16xf32>
      %2305 = vector.broadcast %2302 : f32 to vector<8x16xf32>
      %2306 = arith.mulf %2305, %2304 : vector<8x16xf32>
      %2307 = arith.addf %2299, %2306 : vector<8x16xf32>
      %c528_i32 = arith.constant 528 : i32
      %2308 = arith.addi %c528_i32, %arg13 : i32
      %2309 = arith.index_cast %2308 : i32 to index
      %2310 = memref.load %arg4[%2309] : memref<1152xf32, #tpu.memory_space<smem>>
      %2311 = vector.extract_strided_slice %62 {offsets = [1, 0, 0], sizes = [1, 8, 16], strides = [1, 1, 1]} : vector<8x8x16xf32> to vector<1x8x16xf32>
      %2312 = vector.shape_cast %2311 : vector<1x8x16xf32> to vector<8x16xf32>
      %2313 = vector.broadcast %2310 : f32 to vector<8x16xf32>
      %2314 = arith.mulf %2313, %2312 : vector<8x16xf32>
      %2315 = arith.addf %2307, %2314 : vector<8x16xf32>
      %c544_i32 = arith.constant 544 : i32
      %2316 = arith.addi %c544_i32, %arg13 : i32
      %2317 = arith.index_cast %2316 : i32 to index
      %2318 = memref.load %arg4[%2317] : memref<1152xf32, #tpu.memory_space<smem>>
      %2319 = vector.extract_strided_slice %62 {offsets = [2, 0, 0], sizes = [1, 8, 16], strides = [1, 1, 1]} : vector<8x8x16xf32> to vector<1x8x16xf32>
      %2320 = vector.shape_cast %2319 : vector<1x8x16xf32> to vector<8x16xf32>
      %2321 = vector.broadcast %2318 : f32 to vector<8x16xf32>
      %2322 = arith.mulf %2321, %2320 : vector<8x16xf32>
      %2323 = arith.addf %2315, %2322 : vector<8x16xf32>
      %c560_i32 = arith.constant 560 : i32
      %2324 = arith.addi %c560_i32, %arg13 : i32
      %2325 = arith.index_cast %2324 : i32 to index
      %2326 = memref.load %arg4[%2325] : memref<1152xf32, #tpu.memory_space<smem>>
      %2327 = vector.extract_strided_slice %62 {offsets = [3, 0, 0], sizes = [1, 8, 16], strides = [1, 1, 1]} : vector<8x8x16xf32> to vector<1x8x16xf32>
      %2328 = vector.shape_cast %2327 : vector<1x8x16xf32> to vector<8x16xf32>
      %2329 = vector.broadcast %2326 : f32 to vector<8x16xf32>
      %2330 = arith.mulf %2329, %2328 : vector<8x16xf32>
      %2331 = arith.addf %2323, %2330 : vector<8x16xf32>
      %c576_i32 = arith.constant 576 : i32
      %2332 = arith.addi %c576_i32, %arg13 : i32
      %2333 = arith.index_cast %2332 : i32 to index
      %2334 = memref.load %arg4[%2333] : memref<1152xf32, #tpu.memory_space<smem>>
      %2335 = vector.extract_strided_slice %62 {offsets = [4, 0, 0], sizes = [1, 8, 16], strides = [1, 1, 1]} : vector<8x8x16xf32> to vector<1x8x16xf32>
      %2336 = vector.shape_cast %2335 : vector<1x8x16xf32> to vector<8x16xf32>
      %2337 = vector.broadcast %2334 : f32 to vector<8x16xf32>
      %2338 = arith.mulf %2337, %2336 : vector<8x16xf32>
      %2339 = arith.addf %2331, %2338 : vector<8x16xf32>
      %c592_i32 = arith.constant 592 : i32
      %2340 = arith.addi %c592_i32, %arg13 : i32
      %2341 = arith.index_cast %2340 : i32 to index
      %2342 = memref.load %arg4[%2341] : memref<1152xf32, #tpu.memory_space<smem>>
      %2343 = vector.extract_strided_slice %62 {offsets = [5, 0, 0], sizes = [1, 8, 16], strides = [1, 1, 1]} : vector<8x8x16xf32> to vector<1x8x16xf32>
      %2344 = vector.shape_cast %2343 : vector<1x8x16xf32> to vector<8x16xf32>
      %2345 = vector.broadcast %2342 : f32 to vector<8x16xf32>
      %2346 = arith.mulf %2345, %2344 : vector<8x16xf32>
      %2347 = arith.addf %2339, %2346 : vector<8x16xf32>
      %c608_i32 = arith.constant 608 : i32
      %2348 = arith.addi %c608_i32, %arg13 : i32
      %2349 = arith.index_cast %2348 : i32 to index
      %2350 = memref.load %arg4[%2349] : memref<1152xf32, #tpu.memory_space<smem>>
      %2351 = vector.extract_strided_slice %62 {offsets = [6, 0, 0], sizes = [1, 8, 16], strides = [1, 1, 1]} : vector<8x8x16xf32> to vector<1x8x16xf32>
      %2352 = vector.shape_cast %2351 : vector<1x8x16xf32> to vector<8x16xf32>
      %2353 = vector.broadcast %2350 : f32 to vector<8x16xf32>
      %2354 = arith.mulf %2353, %2352 : vector<8x16xf32>
      %2355 = arith.addf %2347, %2354 : vector<8x16xf32>
      %c624_i32 = arith.constant 624 : i32
      %2356 = arith.addi %c624_i32, %arg13 : i32
      %2357 = arith.index_cast %2356 : i32 to index
      %2358 = memref.load %arg4[%2357] : memref<1152xf32, #tpu.memory_space<smem>>
      %2359 = vector.extract_strided_slice %62 {offsets = [7, 0, 0], sizes = [1, 8, 16], strides = [1, 1, 1]} : vector<8x8x16xf32> to vector<1x8x16xf32>
      %2360 = vector.shape_cast %2359 : vector<1x8x16xf32> to vector<8x16xf32>
      %2361 = vector.broadcast %2358 : f32 to vector<8x16xf32>
      %2362 = arith.mulf %2361, %2360 : vector<8x16xf32>
      %2363 = arith.addf %2355, %2362 : vector<8x16xf32>
      %c640_i32 = arith.constant 640 : i32
      %2364 = arith.addi %c640_i32, %arg13 : i32
      %2365 = arith.index_cast %2364 : i32 to index
      %2366 = memref.load %arg4[%2365] : memref<1152xf32, #tpu.memory_space<smem>>
      %2367 = vector.extract_strided_slice %63 {offsets = [0, 0, 0], sizes = [1, 8, 16], strides = [1, 1, 1]} : vector<8x8x16xf32> to vector<1x8x16xf32>
      %2368 = vector.shape_cast %2367 : vector<1x8x16xf32> to vector<8x16xf32>
      %2369 = vector.broadcast %2366 : f32 to vector<8x16xf32>
      %2370 = arith.mulf %2369, %2368 : vector<8x16xf32>
      %2371 = arith.addf %2363, %2370 : vector<8x16xf32>
      %c656_i32 = arith.constant 656 : i32
      %2372 = arith.addi %c656_i32, %arg13 : i32
      %2373 = arith.index_cast %2372 : i32 to index
      %2374 = memref.load %arg4[%2373] : memref<1152xf32, #tpu.memory_space<smem>>
      %2375 = vector.extract_strided_slice %63 {offsets = [1, 0, 0], sizes = [1, 8, 16], strides = [1, 1, 1]} : vector<8x8x16xf32> to vector<1x8x16xf32>
      %2376 = vector.shape_cast %2375 : vector<1x8x16xf32> to vector<8x16xf32>
      %2377 = vector.broadcast %2374 : f32 to vector<8x16xf32>
      %2378 = arith.mulf %2377, %2376 : vector<8x16xf32>
      %2379 = arith.addf %2371, %2378 : vector<8x16xf32>
      %c672_i32 = arith.constant 672 : i32
      %2380 = arith.addi %c672_i32, %arg13 : i32
      %2381 = arith.index_cast %2380 : i32 to index
      %2382 = memref.load %arg4[%2381] : memref<1152xf32, #tpu.memory_space<smem>>
      %2383 = vector.extract_strided_slice %63 {offsets = [2, 0, 0], sizes = [1, 8, 16], strides = [1, 1, 1]} : vector<8x8x16xf32> to vector<1x8x16xf32>
      %2384 = vector.shape_cast %2383 : vector<1x8x16xf32> to vector<8x16xf32>
      %2385 = vector.broadcast %2382 : f32 to vector<8x16xf32>
      %2386 = arith.mulf %2385, %2384 : vector<8x16xf32>
      %2387 = arith.addf %2379, %2386 : vector<8x16xf32>
      %c688_i32 = arith.constant 688 : i32
      %2388 = arith.addi %c688_i32, %arg13 : i32
      %2389 = arith.index_cast %2388 : i32 to index
      %2390 = memref.load %arg4[%2389] : memref<1152xf32, #tpu.memory_space<smem>>
      %2391 = vector.extract_strided_slice %63 {offsets = [3, 0, 0], sizes = [1, 8, 16], strides = [1, 1, 1]} : vector<8x8x16xf32> to vector<1x8x16xf32>
      %2392 = vector.shape_cast %2391 : vector<1x8x16xf32> to vector<8x16xf32>
      %2393 = vector.broadcast %2390 : f32 to vector<8x16xf32>
      %2394 = arith.mulf %2393, %2392 : vector<8x16xf32>
      %2395 = arith.addf %2387, %2394 : vector<8x16xf32>
      %c704_i32 = arith.constant 704 : i32
      %2396 = arith.addi %c704_i32, %arg13 : i32
      %2397 = arith.index_cast %2396 : i32 to index
      %2398 = memref.load %arg4[%2397] : memref<1152xf32, #tpu.memory_space<smem>>
      %2399 = vector.extract_strided_slice %63 {offsets = [4, 0, 0], sizes = [1, 8, 16], strides = [1, 1, 1]} : vector<8x8x16xf32> to vector<1x8x16xf32>
      %2400 = vector.shape_cast %2399 : vector<1x8x16xf32> to vector<8x16xf32>
      %2401 = vector.broadcast %2398 : f32 to vector<8x16xf32>
      %2402 = arith.mulf %2401, %2400 : vector<8x16xf32>
      %2403 = arith.addf %2395, %2402 : vector<8x16xf32>
      %c720_i32 = arith.constant 720 : i32
      %2404 = arith.addi %c720_i32, %arg13 : i32
      %2405 = arith.index_cast %2404 : i32 to index
      %2406 = memref.load %arg4[%2405] : memref<1152xf32, #tpu.memory_space<smem>>
      %2407 = vector.extract_strided_slice %63 {offsets = [5, 0, 0], sizes = [1, 8, 16], strides = [1, 1, 1]} : vector<8x8x16xf32> to vector<1x8x16xf32>
      %2408 = vector.shape_cast %2407 : vector<1x8x16xf32> to vector<8x16xf32>
      %2409 = vector.broadcast %2406 : f32 to vector<8x16xf32>
      %2410 = arith.mulf %2409, %2408 : vector<8x16xf32>
      %2411 = arith.addf %2403, %2410 : vector<8x16xf32>
      %c736_i32 = arith.constant 736 : i32
      %2412 = arith.addi %c736_i32, %arg13 : i32
      %2413 = arith.index_cast %2412 : i32 to index
      %2414 = memref.load %arg4[%2413] : memref<1152xf32, #tpu.memory_space<smem>>
      %2415 = vector.extract_strided_slice %63 {offsets = [6, 0, 0], sizes = [1, 8, 16], strides = [1, 1, 1]} : vector<8x8x16xf32> to vector<1x8x16xf32>
      %2416 = vector.shape_cast %2415 : vector<1x8x16xf32> to vector<8x16xf32>
      %2417 = vector.broadcast %2414 : f32 to vector<8x16xf32>
      %2418 = arith.mulf %2417, %2416 : vector<8x16xf32>
      %2419 = arith.addf %2411, %2418 : vector<8x16xf32>
      %c752_i32 = arith.constant 752 : i32
      %2420 = arith.addi %c752_i32, %arg13 : i32
      %2421 = arith.index_cast %2420 : i32 to index
      %2422 = memref.load %arg4[%2421] : memref<1152xf32, #tpu.memory_space<smem>>
      %2423 = vector.extract_strided_slice %63 {offsets = [7, 0, 0], sizes = [1, 8, 16], strides = [1, 1, 1]} : vector<8x8x16xf32> to vector<1x8x16xf32>
      %2424 = vector.shape_cast %2423 : vector<1x8x16xf32> to vector<8x16xf32>
      %2425 = vector.broadcast %2422 : f32 to vector<8x16xf32>
      %2426 = arith.mulf %2425, %2424 : vector<8x16xf32>
      %2427 = arith.addf %2419, %2426 : vector<8x16xf32>
      %c768_i32 = arith.constant 768 : i32
      %2428 = arith.addi %c768_i32, %arg13 : i32
      %2429 = arith.index_cast %2428 : i32 to index
      %2430 = memref.load %arg4[%2429] : memref<1152xf32, #tpu.memory_space<smem>>
      %2431 = vector.extract_strided_slice %64 {offsets = [0, 0, 0], sizes = [1, 8, 16], strides = [1, 1, 1]} : vector<8x8x16xf32> to vector<1x8x16xf32>
      %2432 = vector.shape_cast %2431 : vector<1x8x16xf32> to vector<8x16xf32>
      %2433 = vector.broadcast %2430 : f32 to vector<8x16xf32>
      %2434 = arith.mulf %2433, %2432 : vector<8x16xf32>
      %2435 = arith.addf %2427, %2434 : vector<8x16xf32>
      %c784_i32 = arith.constant 784 : i32
      %2436 = arith.addi %c784_i32, %arg13 : i32
      %2437 = arith.index_cast %2436 : i32 to index
      %2438 = memref.load %arg4[%2437] : memref<1152xf32, #tpu.memory_space<smem>>
      %2439 = vector.extract_strided_slice %64 {offsets = [1, 0, 0], sizes = [1, 8, 16], strides = [1, 1, 1]} : vector<8x8x16xf32> to vector<1x8x16xf32>
      %2440 = vector.shape_cast %2439 : vector<1x8x16xf32> to vector<8x16xf32>
      %2441 = vector.broadcast %2438 : f32 to vector<8x16xf32>
      %2442 = arith.mulf %2441, %2440 : vector<8x16xf32>
      %2443 = arith.addf %2435, %2442 : vector<8x16xf32>
      %c800_i32 = arith.constant 800 : i32
      %2444 = arith.addi %c800_i32, %arg13 : i32
      %2445 = arith.index_cast %2444 : i32 to index
      %2446 = memref.load %arg4[%2445] : memref<1152xf32, #tpu.memory_space<smem>>
      %2447 = vector.extract_strided_slice %64 {offsets = [2, 0, 0], sizes = [1, 8, 16], strides = [1, 1, 1]} : vector<8x8x16xf32> to vector<1x8x16xf32>
      %2448 = vector.shape_cast %2447 : vector<1x8x16xf32> to vector<8x16xf32>
      %2449 = vector.broadcast %2446 : f32 to vector<8x16xf32>
      %2450 = arith.mulf %2449, %2448 : vector<8x16xf32>
      %2451 = arith.addf %2443, %2450 : vector<8x16xf32>
      %c816_i32 = arith.constant 816 : i32
      %2452 = arith.addi %c816_i32, %arg13 : i32
      %2453 = arith.index_cast %2452 : i32 to index
      %2454 = memref.load %arg4[%2453] : memref<1152xf32, #tpu.memory_space<smem>>
      %2455 = vector.extract_strided_slice %64 {offsets = [3, 0, 0], sizes = [1, 8, 16], strides = [1, 1, 1]} : vector<8x8x16xf32> to vector<1x8x16xf32>
      %2456 = vector.shape_cast %2455 : vector<1x8x16xf32> to vector<8x16xf32>
      %2457 = vector.broadcast %2454 : f32 to vector<8x16xf32>
      %2458 = arith.mulf %2457, %2456 : vector<8x16xf32>
      %2459 = arith.addf %2451, %2458 : vector<8x16xf32>
      %c832_i32 = arith.constant 832 : i32
      %2460 = arith.addi %c832_i32, %arg13 : i32
      %2461 = arith.index_cast %2460 : i32 to index
      %2462 = memref.load %arg4[%2461] : memref<1152xf32, #tpu.memory_space<smem>>
      %2463 = vector.extract_strided_slice %64 {offsets = [4, 0, 0], sizes = [1, 8, 16], strides = [1, 1, 1]} : vector<8x8x16xf32> to vector<1x8x16xf32>
      %2464 = vector.shape_cast %2463 : vector<1x8x16xf32> to vector<8x16xf32>
      %2465 = vector.broadcast %2462 : f32 to vector<8x16xf32>
      %2466 = arith.mulf %2465, %2464 : vector<8x16xf32>
      %2467 = arith.addf %2459, %2466 : vector<8x16xf32>
      %c848_i32 = arith.constant 848 : i32
      %2468 = arith.addi %c848_i32, %arg13 : i32
      %2469 = arith.index_cast %2468 : i32 to index
      %2470 = memref.load %arg4[%2469] : memref<1152xf32, #tpu.memory_space<smem>>
      %2471 = vector.extract_strided_slice %64 {offsets = [5, 0, 0], sizes = [1, 8, 16], strides = [1, 1, 1]} : vector<8x8x16xf32> to vector<1x8x16xf32>
      %2472 = vector.shape_cast %2471 : vector<1x8x16xf32> to vector<8x16xf32>
      %2473 = vector.broadcast %2470 : f32 to vector<8x16xf32>
      %2474 = arith.mulf %2473, %2472 : vector<8x16xf32>
      %2475 = arith.addf %2467, %2474 : vector<8x16xf32>
      %c864_i32 = arith.constant 864 : i32
      %2476 = arith.addi %c864_i32, %arg13 : i32
      %2477 = arith.index_cast %2476 : i32 to index
      %2478 = memref.load %arg4[%2477] : memref<1152xf32, #tpu.memory_space<smem>>
      %2479 = vector.extract_strided_slice %64 {offsets = [6, 0, 0], sizes = [1, 8, 16], strides = [1, 1, 1]} : vector<8x8x16xf32> to vector<1x8x16xf32>
      %2480 = vector.shape_cast %2479 : vector<1x8x16xf32> to vector<8x16xf32>
      %2481 = vector.broadcast %2478 : f32 to vector<8x16xf32>
      %2482 = arith.mulf %2481, %2480 : vector<8x16xf32>
      %2483 = arith.addf %2475, %2482 : vector<8x16xf32>
      %c880_i32 = arith.constant 880 : i32
      %2484 = arith.addi %c880_i32, %arg13 : i32
      %2485 = arith.index_cast %2484 : i32 to index
      %2486 = memref.load %arg4[%2485] : memref<1152xf32, #tpu.memory_space<smem>>
      %2487 = vector.extract_strided_slice %64 {offsets = [7, 0, 0], sizes = [1, 8, 16], strides = [1, 1, 1]} : vector<8x8x16xf32> to vector<1x8x16xf32>
      %2488 = vector.shape_cast %2487 : vector<1x8x16xf32> to vector<8x16xf32>
      %2489 = vector.broadcast %2486 : f32 to vector<8x16xf32>
      %2490 = arith.mulf %2489, %2488 : vector<8x16xf32>
      %2491 = arith.addf %2483, %2490 : vector<8x16xf32>
      %c896_i32 = arith.constant 896 : i32
      %2492 = arith.addi %c896_i32, %arg13 : i32
      %2493 = arith.index_cast %2492 : i32 to index
      %2494 = memref.load %arg4[%2493] : memref<1152xf32, #tpu.memory_space<smem>>
      %2495 = vector.extract_strided_slice %65 {offsets = [0, 0, 0], sizes = [1, 8, 16], strides = [1, 1, 1]} : vector<8x8x16xf32> to vector<1x8x16xf32>
      %2496 = vector.shape_cast %2495 : vector<1x8x16xf32> to vector<8x16xf32>
      %2497 = vector.broadcast %2494 : f32 to vector<8x16xf32>
      %2498 = arith.mulf %2497, %2496 : vector<8x16xf32>
      %2499 = arith.addf %2491, %2498 : vector<8x16xf32>
      %c912_i32 = arith.constant 912 : i32
      %2500 = arith.addi %c912_i32, %arg13 : i32
      %2501 = arith.index_cast %2500 : i32 to index
      %2502 = memref.load %arg4[%2501] : memref<1152xf32, #tpu.memory_space<smem>>
      %2503 = vector.extract_strided_slice %65 {offsets = [1, 0, 0], sizes = [1, 8, 16], strides = [1, 1, 1]} : vector<8x8x16xf32> to vector<1x8x16xf32>
      %2504 = vector.shape_cast %2503 : vector<1x8x16xf32> to vector<8x16xf32>
      %2505 = vector.broadcast %2502 : f32 to vector<8x16xf32>
      %2506 = arith.mulf %2505, %2504 : vector<8x16xf32>
      %2507 = arith.addf %2499, %2506 : vector<8x16xf32>
      %c928_i32 = arith.constant 928 : i32
      %2508 = arith.addi %c928_i32, %arg13 : i32
      %2509 = arith.index_cast %2508 : i32 to index
      %2510 = memref.load %arg4[%2509] : memref<1152xf32, #tpu.memory_space<smem>>
      %2511 = vector.extract_strided_slice %65 {offsets = [2, 0, 0], sizes = [1, 8, 16], strides = [1, 1, 1]} : vector<8x8x16xf32> to vector<1x8x16xf32>
      %2512 = vector.shape_cast %2511 : vector<1x8x16xf32> to vector<8x16xf32>
      %2513 = vector.broadcast %2510 : f32 to vector<8x16xf32>
      %2514 = arith.mulf %2513, %2512 : vector<8x16xf32>
      %2515 = arith.addf %2507, %2514 : vector<8x16xf32>
      %c944_i32 = arith.constant 944 : i32
      %2516 = arith.addi %c944_i32, %arg13 : i32
      %2517 = arith.index_cast %2516 : i32 to index
      %2518 = memref.load %arg4[%2517] : memref<1152xf32, #tpu.memory_space<smem>>
      %2519 = vector.extract_strided_slice %65 {offsets = [3, 0, 0], sizes = [1, 8, 16], strides = [1, 1, 1]} : vector<8x8x16xf32> to vector<1x8x16xf32>
      %2520 = vector.shape_cast %2519 : vector<1x8x16xf32> to vector<8x16xf32>
      %2521 = vector.broadcast %2518 : f32 to vector<8x16xf32>
      %2522 = arith.mulf %2521, %2520 : vector<8x16xf32>
      %2523 = arith.addf %2515, %2522 : vector<8x16xf32>
      %c960_i32 = arith.constant 960 : i32
      %2524 = arith.addi %c960_i32, %arg13 : i32
      %2525 = arith.index_cast %2524 : i32 to index
      %2526 = memref.load %arg4[%2525] : memref<1152xf32, #tpu.memory_space<smem>>
      %2527 = vector.extract_strided_slice %65 {offsets = [4, 0, 0], sizes = [1, 8, 16], strides = [1, 1, 1]} : vector<8x8x16xf32> to vector<1x8x16xf32>
      %2528 = vector.shape_cast %2527 : vector<1x8x16xf32> to vector<8x16xf32>
      %2529 = vector.broadcast %2526 : f32 to vector<8x16xf32>
      %2530 = arith.mulf %2529, %2528 : vector<8x16xf32>
      %2531 = arith.addf %2523, %2530 : vector<8x16xf32>
      %c976_i32 = arith.constant 976 : i32
      %2532 = arith.addi %c976_i32, %arg13 : i32
      %2533 = arith.index_cast %2532 : i32 to index
      %2534 = memref.load %arg4[%2533] : memref<1152xf32, #tpu.memory_space<smem>>
      %2535 = vector.extract_strided_slice %65 {offsets = [5, 0, 0], sizes = [1, 8, 16], strides = [1, 1, 1]} : vector<8x8x16xf32> to vector<1x8x16xf32>
      %2536 = vector.shape_cast %2535 : vector<1x8x16xf32> to vector<8x16xf32>
      %2537 = vector.broadcast %2534 : f32 to vector<8x16xf32>
      %2538 = arith.mulf %2537, %2536 : vector<8x16xf32>
      %2539 = arith.addf %2531, %2538 : vector<8x16xf32>
      %c992_i32 = arith.constant 992 : i32
      %2540 = arith.addi %c992_i32, %arg13 : i32
      %2541 = arith.index_cast %2540 : i32 to index
      %2542 = memref.load %arg4[%2541] : memref<1152xf32, #tpu.memory_space<smem>>
      %2543 = vector.extract_strided_slice %65 {offsets = [6, 0, 0], sizes = [1, 8, 16], strides = [1, 1, 1]} : vector<8x8x16xf32> to vector<1x8x16xf32>
      %2544 = vector.shape_cast %2543 : vector<1x8x16xf32> to vector<8x16xf32>
      %2545 = vector.broadcast %2542 : f32 to vector<8x16xf32>
      %2546 = arith.mulf %2545, %2544 : vector<8x16xf32>
      %2547 = arith.addf %2539, %2546 : vector<8x16xf32>
      %c1008_i32 = arith.constant 1008 : i32
      %2548 = arith.addi %c1008_i32, %arg13 : i32
      %2549 = arith.index_cast %2548 : i32 to index
      %2550 = memref.load %arg4[%2549] : memref<1152xf32, #tpu.memory_space<smem>>
      %2551 = vector.extract_strided_slice %65 {offsets = [7, 0, 0], sizes = [1, 8, 16], strides = [1, 1, 1]} : vector<8x8x16xf32> to vector<1x8x16xf32>
      %2552 = vector.shape_cast %2551 : vector<1x8x16xf32> to vector<8x16xf32>
      %2553 = vector.broadcast %2550 : f32 to vector<8x16xf32>
      %2554 = arith.mulf %2553, %2552 : vector<8x16xf32>
      %2555 = arith.addf %2547, %2554 : vector<8x16xf32>
      %c1024_i32 = arith.constant 1024 : i32
      %2556 = arith.addi %c1024_i32, %arg13 : i32
      %2557 = arith.index_cast %2556 : i32 to index
      %2558 = memref.load %arg4[%2557] : memref<1152xf32, #tpu.memory_space<smem>>
      %2559 = vector.extract_strided_slice %66 {offsets = [0, 0, 0], sizes = [1, 8, 16], strides = [1, 1, 1]} : vector<8x8x16xf32> to vector<1x8x16xf32>
      %2560 = vector.shape_cast %2559 : vector<1x8x16xf32> to vector<8x16xf32>
      %2561 = vector.broadcast %2558 : f32 to vector<8x16xf32>
      %2562 = arith.mulf %2561, %2560 : vector<8x16xf32>
      %2563 = arith.addf %2555, %2562 : vector<8x16xf32>
      %c1040_i32 = arith.constant 1040 : i32
      %2564 = arith.addi %c1040_i32, %arg13 : i32
      %2565 = arith.index_cast %2564 : i32 to index
      %2566 = memref.load %arg4[%2565] : memref<1152xf32, #tpu.memory_space<smem>>
      %2567 = vector.extract_strided_slice %66 {offsets = [1, 0, 0], sizes = [1, 8, 16], strides = [1, 1, 1]} : vector<8x8x16xf32> to vector<1x8x16xf32>
      %2568 = vector.shape_cast %2567 : vector<1x8x16xf32> to vector<8x16xf32>
      %2569 = vector.broadcast %2566 : f32 to vector<8x16xf32>
      %2570 = arith.mulf %2569, %2568 : vector<8x16xf32>
      %2571 = arith.addf %2563, %2570 : vector<8x16xf32>
      %c1056_i32 = arith.constant 1056 : i32
      %2572 = arith.addi %c1056_i32, %arg13 : i32
      %2573 = arith.index_cast %2572 : i32 to index
      %2574 = memref.load %arg4[%2573] : memref<1152xf32, #tpu.memory_space<smem>>
      %2575 = vector.extract_strided_slice %66 {offsets = [2, 0, 0], sizes = [1, 8, 16], strides = [1, 1, 1]} : vector<8x8x16xf32> to vector<1x8x16xf32>
      %2576 = vector.shape_cast %2575 : vector<1x8x16xf32> to vector<8x16xf32>
      %2577 = vector.broadcast %2574 : f32 to vector<8x16xf32>
      %2578 = arith.mulf %2577, %2576 : vector<8x16xf32>
      %2579 = arith.addf %2571, %2578 : vector<8x16xf32>
      %c1072_i32 = arith.constant 1072 : i32
      %2580 = arith.addi %c1072_i32, %arg13 : i32
      %2581 = arith.index_cast %2580 : i32 to index
      %2582 = memref.load %arg4[%2581] : memref<1152xf32, #tpu.memory_space<smem>>
      %2583 = vector.extract_strided_slice %66 {offsets = [3, 0, 0], sizes = [1, 8, 16], strides = [1, 1, 1]} : vector<8x8x16xf32> to vector<1x8x16xf32>
      %2584 = vector.shape_cast %2583 : vector<1x8x16xf32> to vector<8x16xf32>
      %2585 = vector.broadcast %2582 : f32 to vector<8x16xf32>
      %2586 = arith.mulf %2585, %2584 : vector<8x16xf32>
      %2587 = arith.addf %2579, %2586 : vector<8x16xf32>
      %c1088_i32 = arith.constant 1088 : i32
      %2588 = arith.addi %c1088_i32, %arg13 : i32
      %2589 = arith.index_cast %2588 : i32 to index
      %2590 = memref.load %arg4[%2589] : memref<1152xf32, #tpu.memory_space<smem>>
      %2591 = vector.extract_strided_slice %66 {offsets = [4, 0, 0], sizes = [1, 8, 16], strides = [1, 1, 1]} : vector<8x8x16xf32> to vector<1x8x16xf32>
      %2592 = vector.shape_cast %2591 : vector<1x8x16xf32> to vector<8x16xf32>
      %2593 = vector.broadcast %2590 : f32 to vector<8x16xf32>
      %2594 = arith.mulf %2593, %2592 : vector<8x16xf32>
      %2595 = arith.addf %2587, %2594 : vector<8x16xf32>
      %c1104_i32 = arith.constant 1104 : i32
      %2596 = arith.addi %c1104_i32, %arg13 : i32
      %2597 = arith.index_cast %2596 : i32 to index
      %2598 = memref.load %arg4[%2597] : memref<1152xf32, #tpu.memory_space<smem>>
      %2599 = vector.extract_strided_slice %66 {offsets = [5, 0, 0], sizes = [1, 8, 16], strides = [1, 1, 1]} : vector<8x8x16xf32> to vector<1x8x16xf32>
      %2600 = vector.shape_cast %2599 : vector<1x8x16xf32> to vector<8x16xf32>
      %2601 = vector.broadcast %2598 : f32 to vector<8x16xf32>
      %2602 = arith.mulf %2601, %2600 : vector<8x16xf32>
      %2603 = arith.addf %2595, %2602 : vector<8x16xf32>
      %c1120_i32 = arith.constant 1120 : i32
      %2604 = arith.addi %c1120_i32, %arg13 : i32
      %2605 = arith.index_cast %2604 : i32 to index
      %2606 = memref.load %arg4[%2605] : memref<1152xf32, #tpu.memory_space<smem>>
      %2607 = vector.extract_strided_slice %66 {offsets = [6, 0, 0], sizes = [1, 8, 16], strides = [1, 1, 1]} : vector<8x8x16xf32> to vector<1x8x16xf32>
      %2608 = vector.shape_cast %2607 : vector<1x8x16xf32> to vector<8x16xf32>
      %2609 = vector.broadcast %2606 : f32 to vector<8x16xf32>
      %2610 = arith.mulf %2609, %2608 : vector<8x16xf32>
      %2611 = arith.addf %2603, %2610 : vector<8x16xf32>
      %c1136_i32 = arith.constant 1136 : i32
      %2612 = arith.addi %c1136_i32, %arg13 : i32
      %2613 = arith.index_cast %2612 : i32 to index
      %2614 = memref.load %arg4[%2613] : memref<1152xf32, #tpu.memory_space<smem>>
      %2615 = vector.extract_strided_slice %66 {offsets = [7, 0, 0], sizes = [1, 8, 16], strides = [1, 1, 1]} : vector<8x8x16xf32> to vector<1x8x16xf32>
      %2616 = vector.shape_cast %2615 : vector<1x8x16xf32> to vector<8x16xf32>
      %2617 = vector.broadcast %2614 : f32 to vector<8x16xf32>
      %2618 = arith.mulf %2617, %2616 : vector<8x16xf32>
      %2619 = arith.addf %2611, %2618 : vector<8x16xf32>
      %cst_115 = arith.constant 0.000000e+00 : f32
      %2620 = vector.broadcast %cst_115 : f32 to vector<8x16xf32>
      %2621 = arith.maximumf %2619, %2620 : vector<8x16xf32>
      %2622 = arith.index_cast %arg13 : i32 to index
      %c0_116 = arith.constant 0 : index
      %c0_117 = arith.constant 0 : index
      %2623 = vector.load %arg12[%2622, %c0_116, %c0_117] : memref<16x8x16xf32, #tpu.memory_space<vmem>>, vector<1x8x16xf32>
      %2624 = vector.shape_cast %2623 : vector<1x8x16xf32> to vector<8x16xf32>
      %2625 = vector.shape_cast %2621 : vector<8x16xf32> to vector<1x8x16xf32>
      tpu.vector_store %arg12[%2622, %c0_116, %c0_117], %2625 {strides = array<i32>} : memref<16x8x16xf32, #tpu.memory_space<vmem>>, vector<1x8x16xf32>,
    }
    %c16_i32_18 = arith.constant 16 : i32
    %c0_19 = arith.constant 0 : index
    %c0_20 = arith.constant 0 : index
    %c0_21 = arith.constant 0 : index
    %68 = vector.load %arg12[%c0_19, %c0_20, %c0_21] : memref<16x8x16xf32, #tpu.memory_space<vmem>>, vector<16x8x16xf32>
    %c0_22 = arith.constant 0 : index
    %c2 = arith.constant 2 : index
    %c0_23 = arith.constant 0 : index
    %69 = vector.load %arg11[%c0_22, %c2, %c0_23] : memref<8x12x16xf32, #tpu.memory_space<vmem>>, vector<8x8x16xf32>
    %cst_24 = arith.constant 0.000000e+00 : f32
    %70 = vector.broadcast %cst_24 : f32 to vector<8x16xf32>
    %c0_25 = arith.constant 0 : index
    %71 = memref.load %arg7[%c0_25] : memref<13xf32, #tpu.memory_space<smem>>
    %72 = vector.broadcast %71 : f32 to vector<8x16xf32>
    %73 = arith.addf %70, %72 : vector<8x16xf32>
    %c0_26 = arith.constant 0 : index
    %74 = memref.load %arg6[%c0_26] : memref<312xf32, #tpu.memory_space<smem>>
    %75 = vector.extract_strided_slice %68 {offsets = [0, 0, 0], sizes = [1, 8, 16], strides = [1, 1, 1]} : vector<16x8x16xf32> to vector<1x8x16xf32>
    %76 = vector.shape_cast %75 : vector<1x8x16xf32> to vector<8x16xf32>
    %77 = vector.broadcast %74 : f32 to vector<8x16xf32>
    %78 = arith.mulf %77, %76 : vector<8x16xf32>
    %79 = arith.addf %73, %78 : vector<8x16xf32>
    %c13 = arith.constant 13 : index
    %80 = memref.load %arg6[%c13] : memref<312xf32, #tpu.memory_space<smem>>
    %81 = vector.extract_strided_slice %68 {offsets = [1, 0, 0], sizes = [1, 8, 16], strides = [1, 1, 1]} : vector<16x8x16xf32> to vector<1x8x16xf32>
    %82 = vector.shape_cast %81 : vector<1x8x16xf32> to vector<8x16xf32>
    %83 = vector.broadcast %80 : f32 to vector<8x16xf32>
    %84 = arith.mulf %83, %82 : vector<8x16xf32>
    %85 = arith.addf %79, %84 : vector<8x16xf32>
    %c26 = arith.constant 26 : index
    %86 = memref.load %arg6[%c26] : memref<312xf32, #tpu.memory_space<smem>>
    %87 = vector.extract_strided_slice %68 {offsets = [2, 0, 0], sizes = [1, 8, 16], strides = [1, 1, 1]} : vector<16x8x16xf32> to vector<1x8x16xf32>
    %88 = vector.shape_cast %87 : vector<1x8x16xf32> to vector<8x16xf32>
    %89 = vector.broadcast %86 : f32 to vector<8x16xf32>
    %90 = arith.mulf %89, %88 : vector<8x16xf32>
    %91 = arith.addf %85, %90 : vector<8x16xf32>
    %c39 = arith.constant 39 : index
    %92 = memref.load %arg6[%c39] : memref<312xf32, #tpu.memory_space<smem>>
    %93 = vector.extract_strided_slice %68 {offsets = [3, 0, 0], sizes = [1, 8, 16], strides = [1, 1, 1]} : vector<16x8x16xf32> to vector<1x8x16xf32>
    %94 = vector.shape_cast %93 : vector<1x8x16xf32> to vector<8x16xf32>
    %95 = vector.broadcast %92 : f32 to vector<8x16xf32>
    %96 = arith.mulf %95, %94 : vector<8x16xf32>
    %97 = arith.addf %91, %96 : vector<8x16xf32>
    %c52 = arith.constant 52 : index
    %98 = memref.load %arg6[%c52] : memref<312xf32, #tpu.memory_space<smem>>
    %99 = vector.extract_strided_slice %68 {offsets = [4, 0, 0], sizes = [1, 8, 16], strides = [1, 1, 1]} : vector<16x8x16xf32> to vector<1x8x16xf32>
    %100 = vector.shape_cast %99 : vector<1x8x16xf32> to vector<8x16xf32>
    %101 = vector.broadcast %98 : f32 to vector<8x16xf32>
    %102 = arith.mulf %101, %100 : vector<8x16xf32>
    %103 = arith.addf %97, %102 : vector<8x16xf32>
    %c65 = arith.constant 65 : index
    %104 = memref.load %arg6[%c65] : memref<312xf32, #tpu.memory_space<smem>>
    %105 = vector.extract_strided_slice %68 {offsets = [5, 0, 0], sizes = [1, 8, 16], strides = [1, 1, 1]} : vector<16x8x16xf32> to vector<1x8x16xf32>
    %106 = vector.shape_cast %105 : vector<1x8x16xf32> to vector<8x16xf32>
    %107 = vector.broadcast %104 : f32 to vector<8x16xf32>
    %108 = arith.mulf %107, %106 : vector<8x16xf32>
    %109 = arith.addf %103, %108 : vector<8x16xf32>
    %c78 = arith.constant 78 : index
    %110 = memref.load %arg6[%c78] : memref<312xf32, #tpu.memory_space<smem>>
    %111 = vector.extract_strided_slice %68 {offsets = [6, 0, 0], sizes = [1, 8, 16], strides = [1, 1, 1]} : vector<16x8x16xf32> to vector<1x8x16xf32>
    %112 = vector.shape_cast %111 : vector<1x8x16xf32> to vector<8x16xf32>
    %113 = vector.broadcast %110 : f32 to vector<8x16xf32>
    %114 = arith.mulf %113, %112 : vector<8x16xf32>
    %115 = arith.addf %109, %114 : vector<8x16xf32>
    %c91 = arith.constant 91 : index
    %116 = memref.load %arg6[%c91] : memref<312xf32, #tpu.memory_space<smem>>
    %117 = vector.extract_strided_slice %68 {offsets = [7, 0, 0], sizes = [1, 8, 16], strides = [1, 1, 1]} : vector<16x8x16xf32> to vector<1x8x16xf32>
    %118 = vector.shape_cast %117 : vector<1x8x16xf32> to vector<8x16xf32>
    %119 = vector.broadcast %116 : f32 to vector<8x16xf32>
    %120 = arith.mulf %119, %118 : vector<8x16xf32>
    %121 = arith.addf %115, %120 : vector<8x16xf32>
    %c104 = arith.constant 104 : index
    %122 = memref.load %arg6[%c104] : memref<312xf32, #tpu.memory_space<smem>>
    %123 = vector.extract_strided_slice %68 {offsets = [8, 0, 0], sizes = [1, 8, 16], strides = [1, 1, 1]} : vector<16x8x16xf32> to vector<1x8x16xf32>
    %124 = vector.shape_cast %123 : vector<1x8x16xf32> to vector<8x16xf32>
    %125 = vector.broadcast %122 : f32 to vector<8x16xf32>
    %126 = arith.mulf %125, %124 : vector<8x16xf32>
    %127 = arith.addf %121, %126 : vector<8x16xf32>
    %c117 = arith.constant 117 : index
    %128 = memref.load %arg6[%c117] : memref<312xf32, #tpu.memory_space<smem>>
    %129 = vector.extract_strided_slice %68 {offsets = [9, 0, 0], sizes = [1, 8, 16], strides = [1, 1, 1]} : vector<16x8x16xf32> to vector<1x8x16xf32>
    %130 = vector.shape_cast %129 : vector<1x8x16xf32> to vector<8x16xf32>
    %131 = vector.broadcast %128 : f32 to vector<8x16xf32>
    %132 = arith.mulf %131, %130 : vector<8x16xf32>
    %133 = arith.addf %127, %132 : vector<8x16xf32>
    %c130 = arith.constant 130 : index
    %134 = memref.load %arg6[%c130] : memref<312xf32, #tpu.memory_space<smem>>
    %135 = vector.extract_strided_slice %68 {offsets = [10, 0, 0], sizes = [1, 8, 16], strides = [1, 1, 1]} : vector<16x8x16xf32> to vector<1x8x16xf32>
    %136 = vector.shape_cast %135 : vector<1x8x16xf32> to vector<8x16xf32>
    %137 = vector.broadcast %134 : f32 to vector<8x16xf32>
    %138 = arith.mulf %137, %136 : vector<8x16xf32>
    %139 = arith.addf %133, %138 : vector<8x16xf32>
    %c143 = arith.constant 143 : index
    %140 = memref.load %arg6[%c143] : memref<312xf32, #tpu.memory_space<smem>>
    %141 = vector.extract_strided_slice %68 {offsets = [11, 0, 0], sizes = [1, 8, 16], strides = [1, 1, 1]} : vector<16x8x16xf32> to vector<1x8x16xf32>
    %142 = vector.shape_cast %141 : vector<1x8x16xf32> to vector<8x16xf32>
    %143 = vector.broadcast %140 : f32 to vector<8x16xf32>
    %144 = arith.mulf %143, %142 : vector<8x16xf32>
    %145 = arith.addf %139, %144 : vector<8x16xf32>
    %c156 = arith.constant 156 : index
    %146 = memref.load %arg6[%c156] : memref<312xf32, #tpu.memory_space<smem>>
    %147 = vector.extract_strided_slice %68 {offsets = [12, 0, 0], sizes = [1, 8, 16], strides = [1, 1, 1]} : vector<16x8x16xf32> to vector<1x8x16xf32>
    %148 = vector.shape_cast %147 : vector<1x8x16xf32> to vector<8x16xf32>
    %149 = vector.broadcast %146 : f32 to vector<8x16xf32>
    %150 = arith.mulf %149, %148 : vector<8x16xf32>
    %151 = arith.addf %145, %150 : vector<8x16xf32>
    %c169 = arith.constant 169 : index
    %152 = memref.load %arg6[%c169] : memref<312xf32, #tpu.memory_space<smem>>
    %153 = vector.extract_strided_slice %68 {offsets = [13, 0, 0], sizes = [1, 8, 16], strides = [1, 1, 1]} : vector<16x8x16xf32> to vector<1x8x16xf32>
    %154 = vector.shape_cast %153 : vector<1x8x16xf32> to vector<8x16xf32>
    %155 = vector.broadcast %152 : f32 to vector<8x16xf32>
    %156 = arith.mulf %155, %154 : vector<8x16xf32>
    %157 = arith.addf %151, %156 : vector<8x16xf32>
    %c182 = arith.constant 182 : index
    %158 = memref.load %arg6[%c182] : memref<312xf32, #tpu.memory_space<smem>>
    %159 = vector.extract_strided_slice %68 {offsets = [14, 0, 0], sizes = [1, 8, 16], strides = [1, 1, 1]} : vector<16x8x16xf32> to vector<1x8x16xf32>
    %160 = vector.shape_cast %159 : vector<1x8x16xf32> to vector<8x16xf32>
    %161 = vector.broadcast %158 : f32 to vector<8x16xf32>
    %162 = arith.mulf %161, %160 : vector<8x16xf32>
    %163 = arith.addf %157, %162 : vector<8x16xf32>
    %c195 = arith.constant 195 : index
    %164 = memref.load %arg6[%c195] : memref<312xf32, #tpu.memory_space<smem>>
    %165 = vector.extract_strided_slice %68 {offsets = [15, 0, 0], sizes = [1, 8, 16], strides = [1, 1, 1]} : vector<16x8x16xf32> to vector<1x8x16xf32>
    %166 = vector.shape_cast %165 : vector<1x8x16xf32> to vector<8x16xf32>
    %167 = vector.broadcast %164 : f32 to vector<8x16xf32>
    %168 = arith.mulf %167, %166 : vector<8x16xf32>
    %169 = arith.addf %163, %168 : vector<8x16xf32>
    %c208 = arith.constant 208 : index
    %170 = memref.load %arg6[%c208] : memref<312xf32, #tpu.memory_space<smem>>
    %171 = vector.extract_strided_slice %69 {offsets = [0, 0, 0], sizes = [1, 8, 16], strides = [1, 1, 1]} : vector<8x8x16xf32> to vector<1x8x16xf32>
    %172 = vector.shape_cast %171 : vector<1x8x16xf32> to vector<8x16xf32>
    %173 = vector.broadcast %170 : f32 to vector<8x16xf32>
    %174 = arith.mulf %173, %172 : vector<8x16xf32>
    %175 = arith.addf %169, %174 : vector<8x16xf32>
    %c221 = arith.constant 221 : index
    %176 = memref.load %arg6[%c221] : memref<312xf32, #tpu.memory_space<smem>>
    %177 = vector.extract_strided_slice %69 {offsets = [1, 0, 0], sizes = [1, 8, 16], strides = [1, 1, 1]} : vector<8x8x16xf32> to vector<1x8x16xf32>
    %178 = vector.shape_cast %177 : vector<1x8x16xf32> to vector<8x16xf32>
    %179 = vector.broadcast %176 : f32 to vector<8x16xf32>
    %180 = arith.mulf %179, %178 : vector<8x16xf32>
    %181 = arith.addf %175, %180 : vector<8x16xf32>
    %c234 = arith.constant 234 : index
    %182 = memref.load %arg6[%c234] : memref<312xf32, #tpu.memory_space<smem>>
    %183 = vector.extract_strided_slice %69 {offsets = [2, 0, 0], sizes = [1, 8, 16], strides = [1, 1, 1]} : vector<8x8x16xf32> to vector<1x8x16xf32>
    %184 = vector.shape_cast %183 : vector<1x8x16xf32> to vector<8x16xf32>
    %185 = vector.broadcast %182 : f32 to vector<8x16xf32>
    %186 = arith.mulf %185, %184 : vector<8x16xf32>
    %187 = arith.addf %181, %186 : vector<8x16xf32>
    %c247 = arith.constant 247 : index
    %188 = memref.load %arg6[%c247] : memref<312xf32, #tpu.memory_space<smem>>
    %189 = vector.extract_strided_slice %69 {offsets = [3, 0, 0], sizes = [1, 8, 16], strides = [1, 1, 1]} : vector<8x8x16xf32> to vector<1x8x16xf32>
    %190 = vector.shape_cast %189 : vector<1x8x16xf32> to vector<8x16xf32>
    %191 = vector.broadcast %188 : f32 to vector<8x16xf32>
    %192 = arith.mulf %191, %190 : vector<8x16xf32>
    %193 = arith.addf %187, %192 : vector<8x16xf32>
    %c260 = arith.constant 260 : index
    %194 = memref.load %arg6[%c260] : memref<312xf32, #tpu.memory_space<smem>>
    %195 = vector.extract_strided_slice %69 {offsets = [4, 0, 0], sizes = [1, 8, 16], strides = [1, 1, 1]} : vector<8x8x16xf32> to vector<1x8x16xf32>
    %196 = vector.shape_cast %195 : vector<1x8x16xf32> to vector<8x16xf32>
    %197 = vector.broadcast %194 : f32 to vector<8x16xf32>
    %198 = arith.mulf %197, %196 : vector<8x16xf32>
    %199 = arith.addf %193, %198 : vector<8x16xf32>
    %c273 = arith.constant 273 : index
    %200 = memref.load %arg6[%c273] : memref<312xf32, #tpu.memory_space<smem>>
    %201 = vector.extract_strided_slice %69 {offsets = [5, 0, 0], sizes = [1, 8, 16], strides = [1, 1, 1]} : vector<8x8x16xf32> to vector<1x8x16xf32>
    %202 = vector.shape_cast %201 : vector<1x8x16xf32> to vector<8x16xf32>
    %203 = vector.broadcast %200 : f32 to vector<8x16xf32>
    %204 = arith.mulf %203, %202 : vector<8x16xf32>
    %205 = arith.addf %199, %204 : vector<8x16xf32>
    %c286 = arith.constant 286 : index
    %206 = memref.load %arg6[%c286] : memref<312xf32, #tpu.memory_space<smem>>
    %207 = vector.extract_strided_slice %69 {offsets = [6, 0, 0], sizes = [1, 8, 16], strides = [1, 1, 1]} : vector<8x8x16xf32> to vector<1x8x16xf32>
    %208 = vector.shape_cast %207 : vector<1x8x16xf32> to vector<8x16xf32>
    %209 = vector.broadcast %206 : f32 to vector<8x16xf32>
    %210 = arith.mulf %209, %208 : vector<8x16xf32>
    %211 = arith.addf %205, %210 : vector<8x16xf32>
    %c299 = arith.constant 299 : index
    %212 = memref.load %arg6[%c299] : memref<312xf32, #tpu.memory_space<smem>>
    %213 = vector.extract_strided_slice %69 {offsets = [7, 0, 0], sizes = [1, 8, 16], strides = [1, 1, 1]} : vector<8x8x16xf32> to vector<1x8x16xf32>
    %214 = vector.shape_cast %213 : vector<1x8x16xf32> to vector<8x16xf32>
    %215 = vector.broadcast %212 : f32 to vector<8x16xf32>
    %216 = arith.mulf %215, %214 : vector<8x16xf32>
    %217 = arith.addf %211, %216 : vector<8x16xf32>
    %c0_27 = arith.constant 0 : index
    %c0_28 = arith.constant 0 : index
    %c0_29 = arith.constant 0 : index
    %c0_30 = arith.constant 0 : index
    %218 = vector.load %arg9[%c0_27, %c0_28, %c0_29, %c0_30] : memref<1x13x8x16xf32, #tpu.memory_space<vmem>>, vector<1x1x8x16xf32>
    %219 = vector.shape_cast %218 : vector<1x1x8x16xf32> to vector<8x16xf32>
    %220 = vector.shape_cast %217 : vector<8x16xf32> to vector<1x1x8x16xf32>
    tpu.vector_store %arg9[%c0_27, %c0_28, %c0_29, %c0_30], %220 {strides = array<i32>} : memref<1x13x8x16xf32, #tpu.memory_space<vmem>>, vector<1x1x8x16xf32>,
    %cst_31 = arith.constant 0.000000e+00 : f32
    %221 = vector.broadcast %cst_31 : f32 to vector<8x16xf32>
    %c1 = arith.constant 1 : index
    %222 = memref.load %arg7[%c1] : memref<13xf32, #tpu.memory_space<smem>>
    %223 = vector.broadcast %222 : f32 to vector<8x16xf32>
    %224 = arith.addf %221, %223 : vector<8x16xf32>
    %c1_32 = arith.constant 1 : index
    %225 = memref.load %arg6[%c1_32] : memref<312xf32, #tpu.memory_space<smem>>
    %226 = vector.extract_strided_slice %68 {offsets = [0, 0, 0], sizes = [1, 8, 16], strides = [1, 1, 1]} : vector<16x8x16xf32> to vector<1x8x16xf32>
    %227 = vector.shape_cast %226 : vector<1x8x16xf32> to vector<8x16xf32>
    %228 = vector.broadcast %225 : f32 to vector<8x16xf32>
    %229 = arith.mulf %228, %227 : vector<8x16xf32>
    %230 = arith.addf %224, %229 : vector<8x16xf32>
    %c14 = arith.constant 14 : index
    %231 = memref.load %arg6[%c14] : memref<312xf32, #tpu.memory_space<smem>>
    %232 = vector.extract_strided_slice %68 {offsets = [1, 0, 0], sizes = [1, 8, 16], strides = [1, 1, 1]} : vector<16x8x16xf32> to vector<1x8x16xf32>
    %233 = vector.shape_cast %232 : vector<1x8x16xf32> to vector<8x16xf32>
    %234 = vector.broadcast %231 : f32 to vector<8x16xf32>
    %235 = arith.mulf %234, %233 : vector<8x16xf32>
    %236 = arith.addf %230, %235 : vector<8x16xf32>
    %c27 = arith.constant 27 : index
    %237 = memref.load %arg6[%c27] : memref<312xf32, #tpu.memory_space<smem>>
    %238 = vector.extract_strided_slice %68 {offsets = [2, 0, 0], sizes = [1, 8, 16], strides = [1, 1, 1]} : vector<16x8x16xf32> to vector<1x8x16xf32>
    %239 = vector.shape_cast %238 : vector<1x8x16xf32> to vector<8x16xf32>
    %240 = vector.broadcast %237 : f32 to vector<8x16xf32>
    %241 = arith.mulf %240, %239 : vector<8x16xf32>
    %242 = arith.addf %236, %241 : vector<8x16xf32>
    %c40 = arith.constant 40 : index
    %243 = memref.load %arg6[%c40] : memref<312xf32, #tpu.memory_space<smem>>
    %244 = vector.extract_strided_slice %68 {offsets = [3, 0, 0], sizes = [1, 8, 16], strides = [1, 1, 1]} : vector<16x8x16xf32> to vector<1x8x16xf32>
    %245 = vector.shape_cast %244 : vector<1x8x16xf32> to vector<8x16xf32>
    %246 = vector.broadcast %243 : f32 to vector<8x16xf32>
    %247 = arith.mulf %246, %245 : vector<8x16xf32>
    %248 = arith.addf %242, %247 : vector<8x16xf32>
    %c53 = arith.constant 53 : index
    %249 = memref.load %arg6[%c53] : memref<312xf32, #tpu.memory_space<smem>>
    %250 = vector.extract_strided_slice %68 {offsets = [4, 0, 0], sizes = [1, 8, 16], strides = [1, 1, 1]} : vector<16x8x16xf32> to vector<1x8x16xf32>
    %251 = vector.shape_cast %250 : vector<1x8x16xf32> to vector<8x16xf32>
    %252 = vector.broadcast %249 : f32 to vector<8x16xf32>
    %253 = arith.mulf %252, %251 : vector<8x16xf32>
    %254 = arith.addf %248, %253 : vector<8x16xf32>
    %c66 = arith.constant 66 : index
    %255 = memref.load %arg6[%c66] : memref<312xf32, #tpu.memory_space<smem>>
    %256 = vector.extract_strided_slice %68 {offsets = [5, 0, 0], sizes = [1, 8, 16], strides = [1, 1, 1]} : vector<16x8x16xf32> to vector<1x8x16xf32>
    %257 = vector.shape_cast %256 : vector<1x8x16xf32> to vector<8x16xf32>
    %258 = vector.broadcast %255 : f32 to vector<8x16xf32>
    %259 = arith.mulf %258, %257 : vector<8x16xf32>
    %260 = arith.addf %254, %259 : vector<8x16xf32>
    %c79 = arith.constant 79 : index
    %261 = memref.load %arg6[%c79] : memref<312xf32, #tpu.memory_space<smem>>
    %262 = vector.extract_strided_slice %68 {offsets = [6, 0, 0], sizes = [1, 8, 16], strides = [1, 1, 1]} : vector<16x8x16xf32> to vector<1x8x16xf32>
    %263 = vector.shape_cast %262 : vector<1x8x16xf32> to vector<8x16xf32>
    %264 = vector.broadcast %261 : f32 to vector<8x16xf32>
    %265 = arith.mulf %264, %263 : vector<8x16xf32>
    %266 = arith.addf %260, %265 : vector<8x16xf32>
    %c92 = arith.constant 92 : index
    %267 = memref.load %arg6[%c92] : memref<312xf32, #tpu.memory_space<smem>>
    %268 = vector.extract_strided_slice %68 {offsets = [7, 0, 0], sizes = [1, 8, 16], strides = [1, 1, 1]} : vector<16x8x16xf32> to vector<1x8x16xf32>
    %269 = vector.shape_cast %268 : vector<1x8x16xf32> to vector<8x16xf32>
    %270 = vector.broadcast %267 : f32 to vector<8x16xf32>
    %271 = arith.mulf %270, %269 : vector<8x16xf32>
    %272 = arith.addf %266, %271 : vector<8x16xf32>
    %c105 = arith.constant 105 : index
    %273 = memref.load %arg6[%c105] : memref<312xf32, #tpu.memory_space<smem>>
    %274 = vector.extract_strided_slice %68 {offsets = [8, 0, 0], sizes = [1, 8, 16], strides = [1, 1, 1]} : vector<16x8x16xf32> to vector<1x8x16xf32>
    %275 = vector.shape_cast %274 : vector<1x8x16xf32> to vector<8x16xf32>
    %276 = vector.broadcast %273 : f32 to vector<8x16xf32>
    %277 = arith.mulf %276, %275 : vector<8x16xf32>
    %278 = arith.addf %272, %277 : vector<8x16xf32>
    %c118 = arith.constant 118 : index
    %279 = memref.load %arg6[%c118] : memref<312xf32, #tpu.memory_space<smem>>
    %280 = vector.extract_strided_slice %68 {offsets = [9, 0, 0], sizes = [1, 8, 16], strides = [1, 1, 1]} : vector<16x8x16xf32> to vector<1x8x16xf32>
    %281 = vector.shape_cast %280 : vector<1x8x16xf32> to vector<8x16xf32>
    %282 = vector.broadcast %279 : f32 to vector<8x16xf32>
    %283 = arith.mulf %282, %281 : vector<8x16xf32>
    %284 = arith.addf %278, %283 : vector<8x16xf32>
    %c131 = arith.constant 131 : index
    %285 = memref.load %arg6[%c131] : memref<312xf32, #tpu.memory_space<smem>>
    %286 = vector.extract_strided_slice %68 {offsets = [10, 0, 0], sizes = [1, 8, 16], strides = [1, 1, 1]} : vector<16x8x16xf32> to vector<1x8x16xf32>
    %287 = vector.shape_cast %286 : vector<1x8x16xf32> to vector<8x16xf32>
    %288 = vector.broadcast %285 : f32 to vector<8x16xf32>
    %289 = arith.mulf %288, %287 : vector<8x16xf32>
    %290 = arith.addf %284, %289 : vector<8x16xf32>
    %c144 = arith.constant 144 : index
    %291 = memref.load %arg6[%c144] : memref<312xf32, #tpu.memory_space<smem>>
    %292 = vector.extract_strided_slice %68 {offsets = [11, 0, 0], sizes = [1, 8, 16], strides = [1, 1, 1]} : vector<16x8x16xf32> to vector<1x8x16xf32>
    %293 = vector.shape_cast %292 : vector<1x8x16xf32> to vector<8x16xf32>
    %294 = vector.broadcast %291 : f32 to vector<8x16xf32>
    %295 = arith.mulf %294, %293 : vector<8x16xf32>
    %296 = arith.addf %290, %295 : vector<8x16xf32>
    %c157 = arith.constant 157 : index
    %297 = memref.load %arg6[%c157] : memref<312xf32, #tpu.memory_space<smem>>
    %298 = vector.extract_strided_slice %68 {offsets = [12, 0, 0], sizes = [1, 8, 16], strides = [1, 1, 1]} : vector<16x8x16xf32> to vector<1x8x16xf32>
    %299 = vector.shape_cast %298 : vector<1x8x16xf32> to vector<8x16xf32>
    %300 = vector.broadcast %297 : f32 to vector<8x16xf32>
    %301 = arith.mulf %300, %299 : vector<8x16xf32>
    %302 = arith.addf %296, %301 : vector<8x16xf32>
    %c170 = arith.constant 170 : index
    %303 = memref.load %arg6[%c170] : memref<312xf32, #tpu.memory_space<smem>>
    %304 = vector.extract_strided_slice %68 {offsets = [13, 0, 0], sizes = [1, 8, 16], strides = [1, 1, 1]} : vector<16x8x16xf32> to vector<1x8x16xf32>
    %305 = vector.shape_cast %304 : vector<1x8x16xf32> to vector<8x16xf32>
    %306 = vector.broadcast %303 : f32 to vector<8x16xf32>
    %307 = arith.mulf %306, %305 : vector<8x16xf32>
    %308 = arith.addf %302, %307 : vector<8x16xf32>
    %c183 = arith.constant 183 : index
    %309 = memref.load %arg6[%c183] : memref<312xf32, #tpu.memory_space<smem>>
    %310 = vector.extract_strided_slice %68 {offsets = [14, 0, 0], sizes = [1, 8, 16], strides = [1, 1, 1]} : vector<16x8x16xf32> to vector<1x8x16xf32>
    %311 = vector.shape_cast %310 : vector<1x8x16xf32> to vector<8x16xf32>
    %312 = vector.broadcast %309 : f32 to vector<8x16xf32>
    %313 = arith.mulf %312, %311 : vector<8x16xf32>
    %314 = arith.addf %308, %313 : vector<8x16xf32>
    %c196 = arith.constant 196 : index
    %315 = memref.load %arg6[%c196] : memref<312xf32, #tpu.memory_space<smem>>
    %316 = vector.extract_strided_slice %68 {offsets = [15, 0, 0], sizes = [1, 8, 16], strides = [1, 1, 1]} : vector<16x8x16xf32> to vector<1x8x16xf32>
    %317 = vector.shape_cast %316 : vector<1x8x16xf32> to vector<8x16xf32>
    %318 = vector.broadcast %315 : f32 to vector<8x16xf32>
    %319 = arith.mulf %318, %317 : vector<8x16xf32>
    %320 = arith.addf %314, %319 : vector<8x16xf32>
    %c209 = arith.constant 209 : index
    %321 = memref.load %arg6[%c209] : memref<312xf32, #tpu.memory_space<smem>>
    %322 = vector.extract_strided_slice %69 {offsets = [0, 0, 0], sizes = [1, 8, 16], strides = [1, 1, 1]} : vector<8x8x16xf32> to vector<1x8x16xf32>
    %323 = vector.shape_cast %322 : vector<1x8x16xf32> to vector<8x16xf32>
    %324 = vector.broadcast %321 : f32 to vector<8x16xf32>
    %325 = arith.mulf %324, %323 : vector<8x16xf32>
    %326 = arith.addf %320, %325 : vector<8x16xf32>
    %c222 = arith.constant 222 : index
    %327 = memref.load %arg6[%c222] : memref<312xf32, #tpu.memory_space<smem>>
    %328 = vector.extract_strided_slice %69 {offsets = [1, 0, 0], sizes = [1, 8, 16], strides = [1, 1, 1]} : vector<8x8x16xf32> to vector<1x8x16xf32>
    %329 = vector.shape_cast %328 : vector<1x8x16xf32> to vector<8x16xf32>
    %330 = vector.broadcast %327 : f32 to vector<8x16xf32>
    %331 = arith.mulf %330, %329 : vector<8x16xf32>
    %332 = arith.addf %326, %331 : vector<8x16xf32>
    %c235 = arith.constant 235 : index
    %333 = memref.load %arg6[%c235] : memref<312xf32, #tpu.memory_space<smem>>
    %334 = vector.extract_strided_slice %69 {offsets = [2, 0, 0], sizes = [1, 8, 16], strides = [1, 1, 1]} : vector<8x8x16xf32> to vector<1x8x16xf32>
    %335 = vector.shape_cast %334 : vector<1x8x16xf32> to vector<8x16xf32>
    %336 = vector.broadcast %333 : f32 to vector<8x16xf32>
    %337 = arith.mulf %336, %335 : vector<8x16xf32>
    %338 = arith.addf %332, %337 : vector<8x16xf32>
    %c248 = arith.constant 248 : index
    %339 = memref.load %arg6[%c248] : memref<312xf32, #tpu.memory_space<smem>>
    %340 = vector.extract_strided_slice %69 {offsets = [3, 0, 0], sizes = [1, 8, 16], strides = [1, 1, 1]} : vector<8x8x16xf32> to vector<1x8x16xf32>
    %341 = vector.shape_cast %340 : vector<1x8x16xf32> to vector<8x16xf32>
    %342 = vector.broadcast %339 : f32 to vector<8x16xf32>
    %343 = arith.mulf %342, %341 : vector<8x16xf32>
    %344 = arith.addf %338, %343 : vector<8x16xf32>
    %c261 = arith.constant 261 : index
    %345 = memref.load %arg6[%c261] : memref<312xf32, #tpu.memory_space<smem>>
    %346 = vector.extract_strided_slice %69 {offsets = [4, 0, 0], sizes = [1, 8, 16], strides = [1, 1, 1]} : vector<8x8x16xf32> to vector<1x8x16xf32>
    %347 = vector.shape_cast %346 : vector<1x8x16xf32> to vector<8x16xf32>
    %348 = vector.broadcast %345 : f32 to vector<8x16xf32>
    %349 = arith.mulf %348, %347 : vector<8x16xf32>
    %350 = arith.addf %344, %349 : vector<8x16xf32>
    %c274 = arith.constant 274 : index
    %351 = memref.load %arg6[%c274] : memref<312xf32, #tpu.memory_space<smem>>
    %352 = vector.extract_strided_slice %69 {offsets = [5, 0, 0], sizes = [1, 8, 16], strides = [1, 1, 1]} : vector<8x8x16xf32> to vector<1x8x16xf32>
    %353 = vector.shape_cast %352 : vector<1x8x16xf32> to vector<8x16xf32>
    %354 = vector.broadcast %351 : f32 to vector<8x16xf32>
    %355 = arith.mulf %354, %353 : vector<8x16xf32>
    %356 = arith.addf %350, %355 : vector<8x16xf32>
    %c287 = arith.constant 287 : index
    %357 = memref.load %arg6[%c287] : memref<312xf32, #tpu.memory_space<smem>>
    %358 = vector.extract_strided_slice %69 {offsets = [6, 0, 0], sizes = [1, 8, 16], strides = [1, 1, 1]} : vector<8x8x16xf32> to vector<1x8x16xf32>
    %359 = vector.shape_cast %358 : vector<1x8x16xf32> to vector<8x16xf32>
    %360 = vector.broadcast %357 : f32 to vector<8x16xf32>
    %361 = arith.mulf %360, %359 : vector<8x16xf32>
    %362 = arith.addf %356, %361 : vector<8x16xf32>
    %c300 = arith.constant 300 : index
    %363 = memref.load %arg6[%c300] : memref<312xf32, #tpu.memory_space<smem>>
    %364 = vector.extract_strided_slice %69 {offsets = [7, 0, 0], sizes = [1, 8, 16], strides = [1, 1, 1]} : vector<8x8x16xf32> to vector<1x8x16xf32>
    %365 = vector.shape_cast %364 : vector<1x8x16xf32> to vector<8x16xf32>
    %366 = vector.broadcast %363 : f32 to vector<8x16xf32>
    %367 = arith.mulf %366, %365 : vector<8x16xf32>
    %368 = arith.addf %362, %367 : vector<8x16xf32>
    %c0_33 = arith.constant 0 : index
    %c1_34 = arith.constant 1 : index
    %c0_35 = arith.constant 0 : index
    %c0_36 = arith.constant 0 : index
    %369 = vector.load %arg9[%c0_33, %c1_34, %c0_35, %c0_36] : memref<1x13x8x16xf32, #tpu.memory_space<vmem>>, vector<1x1x8x16xf32>
    %370 = vector.shape_cast %369 : vector<1x1x8x16xf32> to vector<8x16xf32>
    %371 = vector.shape_cast %368 : vector<8x16xf32> to vector<1x1x8x16xf32>
    tpu.vector_store %arg9[%c0_33, %c1_34, %c0_35, %c0_36], %371 {strides = array<i32>} : memref<1x13x8x16xf32, #tpu.memory_space<vmem>>, vector<1x1x8x16xf32>,
    %cst_37 = arith.constant 0.000000e+00 : f32
    %372 = vector.broadcast %cst_37 : f32 to vector<8x16xf32>
    %c2_38 = arith.constant 2 : index
    %373 = memref.load %arg7[%c2_38] : memref<13xf32, #tpu.memory_space<smem>>
    %374 = vector.broadcast %373 : f32 to vector<8x16xf32>
    %375 = arith.addf %372, %374 : vector<8x16xf32>
    %c2_39 = arith.constant 2 : index
    %376 = memref.load %arg6[%c2_39] : memref<312xf32, #tpu.memory_space<smem>>
    %377 = vector.extract_strided_slice %68 {offsets = [0, 0, 0], sizes = [1, 8, 16], strides = [1, 1, 1]} : vector<16x8x16xf32> to vector<1x8x16xf32>
    %378 = vector.shape_cast %377 : vector<1x8x16xf32> to vector<8x16xf32>
    %379 = vector.broadcast %376 : f32 to vector<8x16xf32>
    %380 = arith.mulf %379, %378 : vector<8x16xf32>
    %381 = arith.addf %375, %380 : vector<8x16xf32>
    %c15 = arith.constant 15 : index
    %382 = memref.load %arg6[%c15] : memref<312xf32, #tpu.memory_space<smem>>
    %383 = vector.extract_strided_slice %68 {offsets = [1, 0, 0], sizes = [1, 8, 16], strides = [1, 1, 1]} : vector<16x8x16xf32> to vector<1x8x16xf32>
    %384 = vector.shape_cast %383 : vector<1x8x16xf32> to vector<8x16xf32>
    %385 = vector.broadcast %382 : f32 to vector<8x16xf32>
    %386 = arith.mulf %385, %384 : vector<8x16xf32>
    %387 = arith.addf %381, %386 : vector<8x16xf32>
    %c28 = arith.constant 28 : index
    %388 = memref.load %arg6[%c28] : memref<312xf32, #tpu.memory_space<smem>>
    %389 = vector.extract_strided_slice %68 {offsets = [2, 0, 0], sizes = [1, 8, 16], strides = [1, 1, 1]} : vector<16x8x16xf32> to vector<1x8x16xf32>
    %390 = vector.shape_cast %389 : vector<1x8x16xf32> to vector<8x16xf32>
    %391 = vector.broadcast %388 : f32 to vector<8x16xf32>
    %392 = arith.mulf %391, %390 : vector<8x16xf32>
    %393 = arith.addf %387, %392 : vector<8x16xf32>
    %c41 = arith.constant 41 : index
    %394 = memref.load %arg6[%c41] : memref<312xf32, #tpu.memory_space<smem>>
    %395 = vector.extract_strided_slice %68 {offsets = [3, 0, 0], sizes = [1, 8, 16], strides = [1, 1, 1]} : vector<16x8x16xf32> to vector<1x8x16xf32>
    %396 = vector.shape_cast %395 : vector<1x8x16xf32> to vector<8x16xf32>
    %397 = vector.broadcast %394 : f32 to vector<8x16xf32>
    %398 = arith.mulf %397, %396 : vector<8x16xf32>
    %399 = arith.addf %393, %398 : vector<8x16xf32>
    %c54 = arith.constant 54 : index
    %400 = memref.load %arg6[%c54] : memref<312xf32, #tpu.memory_space<smem>>
    %401 = vector.extract_strided_slice %68 {offsets = [4, 0, 0], sizes = [1, 8, 16], strides = [1, 1, 1]} : vector<16x8x16xf32> to vector<1x8x16xf32>
    %402 = vector.shape_cast %401 : vector<1x8x16xf32> to vector<8x16xf32>
    %403 = vector.broadcast %400 : f32 to vector<8x16xf32>
    %404 = arith.mulf %403, %402 : vector<8x16xf32>
    %405 = arith.addf %399, %404 : vector<8x16xf32>
    %c67 = arith.constant 67 : index
    %406 = memref.load %arg6[%c67] : memref<312xf32, #tpu.memory_space<smem>>
    %407 = vector.extract_strided_slice %68 {offsets = [5, 0, 0], sizes = [1, 8, 16], strides = [1, 1, 1]} : vector<16x8x16xf32> to vector<1x8x16xf32>
    %408 = vector.shape_cast %407 : vector<1x8x16xf32> to vector<8x16xf32>
    %409 = vector.broadcast %406 : f32 to vector<8x16xf32>
    %410 = arith.mulf %409, %408 : vector<8x16xf32>
    %411 = arith.addf %405, %410 : vector<8x16xf32>
    %c80 = arith.constant 80 : index
    %412 = memref.load %arg6[%c80] : memref<312xf32, #tpu.memory_space<smem>>
    %413 = vector.extract_strided_slice %68 {offsets = [6, 0, 0], sizes = [1, 8, 16], strides = [1, 1, 1]} : vector<16x8x16xf32> to vector<1x8x16xf32>
    %414 = vector.shape_cast %413 : vector<1x8x16xf32> to vector<8x16xf32>
    %415 = vector.broadcast %412 : f32 to vector<8x16xf32>
    %416 = arith.mulf %415, %414 : vector<8x16xf32>
    %417 = arith.addf %411, %416 : vector<8x16xf32>
    %c93 = arith.constant 93 : index
    %418 = memref.load %arg6[%c93] : memref<312xf32, #tpu.memory_space<smem>>
    %419 = vector.extract_strided_slice %68 {offsets = [7, 0, 0], sizes = [1, 8, 16], strides = [1, 1, 1]} : vector<16x8x16xf32> to vector<1x8x16xf32>
    %420 = vector.shape_cast %419 : vector<1x8x16xf32> to vector<8x16xf32>
    %421 = vector.broadcast %418 : f32 to vector<8x16xf32>
    %422 = arith.mulf %421, %420 : vector<8x16xf32>
    %423 = arith.addf %417, %422 : vector<8x16xf32>
    %c106 = arith.constant 106 : index
    %424 = memref.load %arg6[%c106] : memref<312xf32, #tpu.memory_space<smem>>
    %425 = vector.extract_strided_slice %68 {offsets = [8, 0, 0], sizes = [1, 8, 16], strides = [1, 1, 1]} : vector<16x8x16xf32> to vector<1x8x16xf32>
    %426 = vector.shape_cast %425 : vector<1x8x16xf32> to vector<8x16xf32>
    %427 = vector.broadcast %424 : f32 to vector<8x16xf32>
    %428 = arith.mulf %427, %426 : vector<8x16xf32>
    %429 = arith.addf %423, %428 : vector<8x16xf32>
    %c119 = arith.constant 119 : index
    %430 = memref.load %arg6[%c119] : memref<312xf32, #tpu.memory_space<smem>>
    %431 = vector.extract_strided_slice %68 {offsets = [9, 0, 0], sizes = [1, 8, 16], strides = [1, 1, 1]} : vector<16x8x16xf32> to vector<1x8x16xf32>
    %432 = vector.shape_cast %431 : vector<1x8x16xf32> to vector<8x16xf32>
    %433 = vector.broadcast %430 : f32 to vector<8x16xf32>
    %434 = arith.mulf %433, %432 : vector<8x16xf32>
    %435 = arith.addf %429, %434 : vector<8x16xf32>
    %c132 = arith.constant 132 : index
    %436 = memref.load %arg6[%c132] : memref<312xf32, #tpu.memory_space<smem>>
    %437 = vector.extract_strided_slice %68 {offsets = [10, 0, 0], sizes = [1, 8, 16], strides = [1, 1, 1]} : vector<16x8x16xf32> to vector<1x8x16xf32>
    %438 = vector.shape_cast %437 : vector<1x8x16xf32> to vector<8x16xf32>
    %439 = vector.broadcast %436 : f32 to vector<8x16xf32>
    %440 = arith.mulf %439, %438 : vector<8x16xf32>
    %441 = arith.addf %435, %440 : vector<8x16xf32>
    %c145 = arith.constant 145 : index
    %442 = memref.load %arg6[%c145] : memref<312xf32, #tpu.memory_space<smem>>
    %443 = vector.extract_strided_slice %68 {offsets = [11, 0, 0], sizes = [1, 8, 16], strides = [1, 1, 1]} : vector<16x8x16xf32> to vector<1x8x16xf32>
    %444 = vector.shape_cast %443 : vector<1x8x16xf32> to vector<8x16xf32>
    %445 = vector.broadcast %442 : f32 to vector<8x16xf32>
    %446 = arith.mulf %445, %444 : vector<8x16xf32>
    %447 = arith.addf %441, %446 : vector<8x16xf32>
    %c158 = arith.constant 158 : index
    %448 = memref.load %arg6[%c158] : memref<312xf32, #tpu.memory_space<smem>>
    %449 = vector.extract_strided_slice %68 {offsets = [12, 0, 0], sizes = [1, 8, 16], strides = [1, 1, 1]} : vector<16x8x16xf32> to vector<1x8x16xf32>
    %450 = vector.shape_cast %449 : vector<1x8x16xf32> to vector<8x16xf32>
    %451 = vector.broadcast %448 : f32 to vector<8x16xf32>
    %452 = arith.mulf %451, %450 : vector<8x16xf32>
    %453 = arith.addf %447, %452 : vector<8x16xf32>
    %c171 = arith.constant 171 : index
    %454 = memref.load %arg6[%c171] : memref<312xf32, #tpu.memory_space<smem>>
    %455 = vector.extract_strided_slice %68 {offsets = [13, 0, 0], sizes = [1, 8, 16], strides = [1, 1, 1]} : vector<16x8x16xf32> to vector<1x8x16xf32>
    %456 = vector.shape_cast %455 : vector<1x8x16xf32> to vector<8x16xf32>
    %457 = vector.broadcast %454 : f32 to vector<8x16xf32>
    %458 = arith.mulf %457, %456 : vector<8x16xf32>
    %459 = arith.addf %453, %458 : vector<8x16xf32>
    %c184 = arith.constant 184 : index
    %460 = memref.load %arg6[%c184] : memref<312xf32, #tpu.memory_space<smem>>
    %461 = vector.extract_strided_slice %68 {offsets = [14, 0, 0], sizes = [1, 8, 16], strides = [1, 1, 1]} : vector<16x8x16xf32> to vector<1x8x16xf32>
    %462 = vector.shape_cast %461 : vector<1x8x16xf32> to vector<8x16xf32>
    %463 = vector.broadcast %460 : f32 to vector<8x16xf32>
    %464 = arith.mulf %463, %462 : vector<8x16xf32>
    %465 = arith.addf %459, %464 : vector<8x16xf32>
    %c197 = arith.constant 197 : index
    %466 = memref.load %arg6[%c197] : memref<312xf32, #tpu.memory_space<smem>>
    %467 = vector.extract_strided_slice %68 {offsets = [15, 0, 0], sizes = [1, 8, 16], strides = [1, 1, 1]} : vector<16x8x16xf32> to vector<1x8x16xf32>
    %468 = vector.shape_cast %467 : vector<1x8x16xf32> to vector<8x16xf32>
    %469 = vector.broadcast %466 : f32 to vector<8x16xf32>
    %470 = arith.mulf %469, %468 : vector<8x16xf32>
    %471 = arith.addf %465, %470 : vector<8x16xf32>
    %c210 = arith.constant 210 : index
    %472 = memref.load %arg6[%c210] : memref<312xf32, #tpu.memory_space<smem>>
    %473 = vector.extract_strided_slice %69 {offsets = [0, 0, 0], sizes = [1, 8, 16], strides = [1, 1, 1]} : vector<8x8x16xf32> to vector<1x8x16xf32>
    %474 = vector.shape_cast %473 : vector<1x8x16xf32> to vector<8x16xf32>
    %475 = vector.broadcast %472 : f32 to vector<8x16xf32>
    %476 = arith.mulf %475, %474 : vector<8x16xf32>
    %477 = arith.addf %471, %476 : vector<8x16xf32>
    %c223 = arith.constant 223 : index
    %478 = memref.load %arg6[%c223] : memref<312xf32, #tpu.memory_space<smem>>
    %479 = vector.extract_strided_slice %69 {offsets = [1, 0, 0], sizes = [1, 8, 16], strides = [1, 1, 1]} : vector<8x8x16xf32> to vector<1x8x16xf32>
    %480 = vector.shape_cast %479 : vector<1x8x16xf32> to vector<8x16xf32>
    %481 = vector.broadcast %478 : f32 to vector<8x16xf32>
    %482 = arith.mulf %481, %480 : vector<8x16xf32>
    %483 = arith.addf %477, %482 : vector<8x16xf32>
    %c236 = arith.constant 236 : index
    %484 = memref.load %arg6[%c236] : memref<312xf32, #tpu.memory_space<smem>>
    %485 = vector.extract_strided_slice %69 {offsets = [2, 0, 0], sizes = [1, 8, 16], strides = [1, 1, 1]} : vector<8x8x16xf32> to vector<1x8x16xf32>
    %486 = vector.shape_cast %485 : vector<1x8x16xf32> to vector<8x16xf32>
    %487 = vector.broadcast %484 : f32 to vector<8x16xf32>
    %488 = arith.mulf %487, %486 : vector<8x16xf32>
    %489 = arith.addf %483, %488 : vector<8x16xf32>
    %c249 = arith.constant 249 : index
    %490 = memref.load %arg6[%c249] : memref<312xf32, #tpu.memory_space<smem>>
    %491 = vector.extract_strided_slice %69 {offsets = [3, 0, 0], sizes = [1, 8, 16], strides = [1, 1, 1]} : vector<8x8x16xf32> to vector<1x8x16xf32>
    %492 = vector.shape_cast %491 : vector<1x8x16xf32> to vector<8x16xf32>
    %493 = vector.broadcast %490 : f32 to vector<8x16xf32>
    %494 = arith.mulf %493, %492 : vector<8x16xf32>
    %495 = arith.addf %489, %494 : vector<8x16xf32>
    %c262 = arith.constant 262 : index
    %496 = memref.load %arg6[%c262] : memref<312xf32, #tpu.memory_space<smem>>
    %497 = vector.extract_strided_slice %69 {offsets = [4, 0, 0], sizes = [1, 8, 16], strides = [1, 1, 1]} : vector<8x8x16xf32> to vector<1x8x16xf32>
    %498 = vector.shape_cast %497 : vector<1x8x16xf32> to vector<8x16xf32>
    %499 = vector.broadcast %496 : f32 to vector<8x16xf32>
    %500 = arith.mulf %499, %498 : vector<8x16xf32>
    %501 = arith.addf %495, %500 : vector<8x16xf32>
    %c275 = arith.constant 275 : index
    %502 = memref.load %arg6[%c275] : memref<312xf32, #tpu.memory_space<smem>>
    %503 = vector.extract_strided_slice %69 {offsets = [5, 0, 0], sizes = [1, 8, 16], strides = [1, 1, 1]} : vector<8x8x16xf32> to vector<1x8x16xf32>
    %504 = vector.shape_cast %503 : vector<1x8x16xf32> to vector<8x16xf32>
    %505 = vector.broadcast %502 : f32 to vector<8x16xf32>
    %506 = arith.mulf %505, %504 : vector<8x16xf32>
    %507 = arith.addf %501, %506 : vector<8x16xf32>
    %c288 = arith.constant 288 : index
    %508 = memref.load %arg6[%c288] : memref<312xf32, #tpu.memory_space<smem>>
    %509 = vector.extract_strided_slice %69 {offsets = [6, 0, 0], sizes = [1, 8, 16], strides = [1, 1, 1]} : vector<8x8x16xf32> to vector<1x8x16xf32>
    %510 = vector.shape_cast %509 : vector<1x8x16xf32> to vector<8x16xf32>
    %511 = vector.broadcast %508 : f32 to vector<8x16xf32>
    %512 = arith.mulf %511, %510 : vector<8x16xf32>
    %513 = arith.addf %507, %512 : vector<8x16xf32>
    %c301 = arith.constant 301 : index
    %514 = memref.load %arg6[%c301] : memref<312xf32, #tpu.memory_space<smem>>
    %515 = vector.extract_strided_slice %69 {offsets = [7, 0, 0], sizes = [1, 8, 16], strides = [1, 1, 1]} : vector<8x8x16xf32> to vector<1x8x16xf32>
    %516 = vector.shape_cast %515 : vector<1x8x16xf32> to vector<8x16xf32>
    %517 = vector.broadcast %514 : f32 to vector<8x16xf32>
    %518 = arith.mulf %517, %516 : vector<8x16xf32>
    %519 = arith.addf %513, %518 : vector<8x16xf32>
    %c0_40 = arith.constant 0 : index
    %c2_41 = arith.constant 2 : index
    %c0_42 = arith.constant 0 : index
    %c0_43 = arith.constant 0 : index
    %520 = vector.load %arg9[%c0_40, %c2_41, %c0_42, %c0_43] : memref<1x13x8x16xf32, #tpu.memory_space<vmem>>, vector<1x1x8x16xf32>
    %521 = vector.shape_cast %520 : vector<1x1x8x16xf32> to vector<8x16xf32>
    %522 = vector.shape_cast %519 : vector<8x16xf32> to vector<1x1x8x16xf32>
    tpu.vector_store %arg9[%c0_40, %c2_41, %c0_42, %c0_43], %522 {strides = array<i32>} : memref<1x13x8x16xf32, #tpu.memory_space<vmem>>, vector<1x1x8x16xf32>,
    %cst_44 = arith.constant 0.000000e+00 : f32
    %523 = vector.broadcast %cst_44 : f32 to vector<8x16xf32>
    %c3 = arith.constant 3 : index
    %524 = memref.load %arg7[%c3] : memref<13xf32, #tpu.memory_space<smem>>
    %525 = vector.broadcast %524 : f32 to vector<8x16xf32>
    %526 = arith.addf %523, %525 : vector<8x16xf32>
    %c3_45 = arith.constant 3 : index
    %527 = memref.load %arg6[%c3_45] : memref<312xf32, #tpu.memory_space<smem>>
    %528 = vector.extract_strided_slice %68 {offsets = [0, 0, 0], sizes = [1, 8, 16], strides = [1, 1, 1]} : vector<16x8x16xf32> to vector<1x8x16xf32>
    %529 = vector.shape_cast %528 : vector<1x8x16xf32> to vector<8x16xf32>
    %530 = vector.broadcast %527 : f32 to vector<8x16xf32>
    %531 = arith.mulf %530, %529 : vector<8x16xf32>
    %532 = arith.addf %526, %531 : vector<8x16xf32>
    %c16 = arith.constant 16 : index
    %533 = memref.load %arg6[%c16] : memref<312xf32, #tpu.memory_space<smem>>
    %534 = vector.extract_strided_slice %68 {offsets = [1, 0, 0], sizes = [1, 8, 16], strides = [1, 1, 1]} : vector<16x8x16xf32> to vector<1x8x16xf32>
    %535 = vector.shape_cast %534 : vector<1x8x16xf32> to vector<8x16xf32>
    %536 = vector.broadcast %533 : f32 to vector<8x16xf32>
    %537 = arith.mulf %536, %535 : vector<8x16xf32>
    %538 = arith.addf %532, %537 : vector<8x16xf32>
    %c29 = arith.constant 29 : index
    %539 = memref.load %arg6[%c29] : memref<312xf32, #tpu.memory_space<smem>>
    %540 = vector.extract_strided_slice %68 {offsets = [2, 0, 0], sizes = [1, 8, 16], strides = [1, 1, 1]} : vector<16x8x16xf32> to vector<1x8x16xf32>
    %541 = vector.shape_cast %540 : vector<1x8x16xf32> to vector<8x16xf32>
    %542 = vector.broadcast %539 : f32 to vector<8x16xf32>
    %543 = arith.mulf %542, %541 : vector<8x16xf32>
    %544 = arith.addf %538, %543 : vector<8x16xf32>
    %c42 = arith.constant 42 : index
    %545 = memref.load %arg6[%c42] : memref<312xf32, #tpu.memory_space<smem>>
    %546 = vector.extract_strided_slice %68 {offsets = [3, 0, 0], sizes = [1, 8, 16], strides = [1, 1, 1]} : vector<16x8x16xf32> to vector<1x8x16xf32>
    %547 = vector.shape_cast %546 : vector<1x8x16xf32> to vector<8x16xf32>
    %548 = vector.broadcast %545 : f32 to vector<8x16xf32>
    %549 = arith.mulf %548, %547 : vector<8x16xf32>
    %550 = arith.addf %544, %549 : vector<8x16xf32>
    %c55 = arith.constant 55 : index
    %551 = memref.load %arg6[%c55] : memref<312xf32, #tpu.memory_space<smem>>
    %552 = vector.extract_strided_slice %68 {offsets = [4, 0, 0], sizes = [1, 8, 16], strides = [1, 1, 1]} : vector<16x8x16xf32> to vector<1x8x16xf32>
    %553 = vector.shape_cast %552 : vector<1x8x16xf32> to vector<8x16xf32>
    %554 = vector.broadcast %551 : f32 to vector<8x16xf32>
    %555 = arith.mulf %554, %553 : vector<8x16xf32>
    %556 = arith.addf %550, %555 : vector<8x16xf32>
    %c68 = arith.constant 68 : index
    %557 = memref.load %arg6[%c68] : memref<312xf32, #tpu.memory_space<smem>>
    %558 = vector.extract_strided_slice %68 {offsets = [5, 0, 0], sizes = [1, 8, 16], strides = [1, 1, 1]} : vector<16x8x16xf32> to vector<1x8x16xf32>
    %559 = vector.shape_cast %558 : vector<1x8x16xf32> to vector<8x16xf32>
    %560 = vector.broadcast %557 : f32 to vector<8x16xf32>
    %561 = arith.mulf %560, %559 : vector<8x16xf32>
    %562 = arith.addf %556, %561 : vector<8x16xf32>
    %c81 = arith.constant 81 : index
    %563 = memref.load %arg6[%c81] : memref<312xf32, #tpu.memory_space<smem>>
    %564 = vector.extract_strided_slice %68 {offsets = [6, 0, 0], sizes = [1, 8, 16], strides = [1, 1, 1]} : vector<16x8x16xf32> to vector<1x8x16xf32>
    %565 = vector.shape_cast %564 : vector<1x8x16xf32> to vector<8x16xf32>
    %566 = vector.broadcast %563 : f32 to vector<8x16xf32>
    %567 = arith.mulf %566, %565 : vector<8x16xf32>
    %568 = arith.addf %562, %567 : vector<8x16xf32>
    %c94 = arith.constant 94 : index
    %569 = memref.load %arg6[%c94] : memref<312xf32, #tpu.memory_space<smem>>
    %570 = vector.extract_strided_slice %68 {offsets = [7, 0, 0], sizes = [1, 8, 16], strides = [1, 1, 1]} : vector<16x8x16xf32> to vector<1x8x16xf32>
    %571 = vector.shape_cast %570 : vector<1x8x16xf32> to vector<8x16xf32>
    %572 = vector.broadcast %569 : f32 to vector<8x16xf32>
    %573 = arith.mulf %572, %571 : vector<8x16xf32>
    %574 = arith.addf %568, %573 : vector<8x16xf32>
    %c107 = arith.constant 107 : index
    %575 = memref.load %arg6[%c107] : memref<312xf32, #tpu.memory_space<smem>>
    %576 = vector.extract_strided_slice %68 {offsets = [8, 0, 0], sizes = [1, 8, 16], strides = [1, 1, 1]} : vector<16x8x16xf32> to vector<1x8x16xf32>
    %577 = vector.shape_cast %576 : vector<1x8x16xf32> to vector<8x16xf32>
    %578 = vector.broadcast %575 : f32 to vector<8x16xf32>
    %579 = arith.mulf %578, %577 : vector<8x16xf32>
    %580 = arith.addf %574, %579 : vector<8x16xf32>
    %c120 = arith.constant 120 : index
    %581 = memref.load %arg6[%c120] : memref<312xf32, #tpu.memory_space<smem>>
    %582 = vector.extract_strided_slice %68 {offsets = [9, 0, 0], sizes = [1, 8, 16], strides = [1, 1, 1]} : vector<16x8x16xf32> to vector<1x8x16xf32>
    %583 = vector.shape_cast %582 : vector<1x8x16xf32> to vector<8x16xf32>
    %584 = vector.broadcast %581 : f32 to vector<8x16xf32>
    %585 = arith.mulf %584, %583 : vector<8x16xf32>
    %586 = arith.addf %580, %585 : vector<8x16xf32>
    %c133 = arith.constant 133 : index
    %587 = memref.load %arg6[%c133] : memref<312xf32, #tpu.memory_space<smem>>
    %588 = vector.extract_strided_slice %68 {offsets = [10, 0, 0], sizes = [1, 8, 16], strides = [1, 1, 1]} : vector<16x8x16xf32> to vector<1x8x16xf32>
    %589 = vector.shape_cast %588 : vector<1x8x16xf32> to vector<8x16xf32>
    %590 = vector.broadcast %587 : f32 to vector<8x16xf32>
    %591 = arith.mulf %590, %589 : vector<8x16xf32>
    %592 = arith.addf %586, %591 : vector<8x16xf32>
    %c146 = arith.constant 146 : index
    %593 = memref.load %arg6[%c146] : memref<312xf32, #tpu.memory_space<smem>>
    %594 = vector.extract_strided_slice %68 {offsets = [11, 0, 0], sizes = [1, 8, 16], strides = [1, 1, 1]} : vector<16x8x16xf32> to vector<1x8x16xf32>
    %595 = vector.shape_cast %594 : vector<1x8x16xf32> to vector<8x16xf32>
    %596 = vector.broadcast %593 : f32 to vector<8x16xf32>
    %597 = arith.mulf %596, %595 : vector<8x16xf32>
    %598 = arith.addf %592, %597 : vector<8x16xf32>
    %c159 = arith.constant 159 : index
    %599 = memref.load %arg6[%c159] : memref<312xf32, #tpu.memory_space<smem>>
    %600 = vector.extract_strided_slice %68 {offsets = [12, 0, 0], sizes = [1, 8, 16], strides = [1, 1, 1]} : vector<16x8x16xf32> to vector<1x8x16xf32>
    %601 = vector.shape_cast %600 : vector<1x8x16xf32> to vector<8x16xf32>
    %602 = vector.broadcast %599 : f32 to vector<8x16xf32>
    %603 = arith.mulf %602, %601 : vector<8x16xf32>
    %604 = arith.addf %598, %603 : vector<8x16xf32>
    %c172 = arith.constant 172 : index
    %605 = memref.load %arg6[%c172] : memref<312xf32, #tpu.memory_space<smem>>
    %606 = vector.extract_strided_slice %68 {offsets = [13, 0, 0], sizes = [1, 8, 16], strides = [1, 1, 1]} : vector<16x8x16xf32> to vector<1x8x16xf32>
    %607 = vector.shape_cast %606 : vector<1x8x16xf32> to vector<8x16xf32>
    %608 = vector.broadcast %605 : f32 to vector<8x16xf32>
    %609 = arith.mulf %608, %607 : vector<8x16xf32>
    %610 = arith.addf %604, %609 : vector<8x16xf32>
    %c185 = arith.constant 185 : index
    %611 = memref.load %arg6[%c185] : memref<312xf32, #tpu.memory_space<smem>>
    %612 = vector.extract_strided_slice %68 {offsets = [14, 0, 0], sizes = [1, 8, 16], strides = [1, 1, 1]} : vector<16x8x16xf32> to vector<1x8x16xf32>
    %613 = vector.shape_cast %612 : vector<1x8x16xf32> to vector<8x16xf32>
    %614 = vector.broadcast %611 : f32 to vector<8x16xf32>
    %615 = arith.mulf %614, %613 : vector<8x16xf32>
    %616 = arith.addf %610, %615 : vector<8x16xf32>
    %c198 = arith.constant 198 : index
    %617 = memref.load %arg6[%c198] : memref<312xf32, #tpu.memory_space<smem>>
    %618 = vector.extract_strided_slice %68 {offsets = [15, 0, 0], sizes = [1, 8, 16], strides = [1, 1, 1]} : vector<16x8x16xf32> to vector<1x8x16xf32>
    %619 = vector.shape_cast %618 : vector<1x8x16xf32> to vector<8x16xf32>
    %620 = vector.broadcast %617 : f32 to vector<8x16xf32>
    %621 = arith.mulf %620, %619 : vector<8x16xf32>
    %622 = arith.addf %616, %621 : vector<8x16xf32>
    %c211 = arith.constant 211 : index
    %623 = memref.load %arg6[%c211] : memref<312xf32, #tpu.memory_space<smem>>
    %624 = vector.extract_strided_slice %69 {offsets = [0, 0, 0], sizes = [1, 8, 16], strides = [1, 1, 1]} : vector<8x8x16xf32> to vector<1x8x16xf32>
    %625 = vector.shape_cast %624 : vector<1x8x16xf32> to vector<8x16xf32>
    %626 = vector.broadcast %623 : f32 to vector<8x16xf32>
    %627 = arith.mulf %626, %625 : vector<8x16xf32>
    %628 = arith.addf %622, %627 : vector<8x16xf32>
    %c224 = arith.constant 224 : index
    %629 = memref.load %arg6[%c224] : memref<312xf32, #tpu.memory_space<smem>>
    %630 = vector.extract_strided_slice %69 {offsets = [1, 0, 0], sizes = [1, 8, 16], strides = [1, 1, 1]} : vector<8x8x16xf32> to vector<1x8x16xf32>
    %631 = vector.shape_cast %630 : vector<1x8x16xf32> to vector<8x16xf32>
    %632 = vector.broadcast %629 : f32 to vector<8x16xf32>
    %633 = arith.mulf %632, %631 : vector<8x16xf32>
    %634 = arith.addf %628, %633 : vector<8x16xf32>
    %c237 = arith.constant 237 : index
    %635 = memref.load %arg6[%c237] : memref<312xf32, #tpu.memory_space<smem>>
    %636 = vector.extract_strided_slice %69 {offsets = [2, 0, 0], sizes = [1, 8, 16], strides = [1, 1, 1]} : vector<8x8x16xf32> to vector<1x8x16xf32>
    %637 = vector.shape_cast %636 : vector<1x8x16xf32> to vector<8x16xf32>
    %638 = vector.broadcast %635 : f32 to vector<8x16xf32>
    %639 = arith.mulf %638, %637 : vector<8x16xf32>
    %640 = arith.addf %634, %639 : vector<8x16xf32>
    %c250 = arith.constant 250 : index
    %641 = memref.load %arg6[%c250] : memref<312xf32, #tpu.memory_space<smem>>
    %642 = vector.extract_strided_slice %69 {offsets = [3, 0, 0], sizes = [1, 8, 16], strides = [1, 1, 1]} : vector<8x8x16xf32> to vector<1x8x16xf32>
    %643 = vector.shape_cast %642 : vector<1x8x16xf32> to vector<8x16xf32>
    %644 = vector.broadcast %641 : f32 to vector<8x16xf32>
    %645 = arith.mulf %644, %643 : vector<8x16xf32>
    %646 = arith.addf %640, %645 : vector<8x16xf32>
    %c263 = arith.constant 263 : index
    %647 = memref.load %arg6[%c263] : memref<312xf32, #tpu.memory_space<smem>>
    %648 = vector.extract_strided_slice %69 {offsets = [4, 0, 0], sizes = [1, 8, 16], strides = [1, 1, 1]} : vector<8x8x16xf32> to vector<1x8x16xf32>
    %649 = vector.shape_cast %648 : vector<1x8x16xf32> to vector<8x16xf32>
    %650 = vector.broadcast %647 : f32 to vector<8x16xf32>
    %651 = arith.mulf %650, %649 : vector<8x16xf32>
    %652 = arith.addf %646, %651 : vector<8x16xf32>
    %c276 = arith.constant 276 : index
    %653 = memref.load %arg6[%c276] : memref<312xf32, #tpu.memory_space<smem>>
    %654 = vector.extract_strided_slice %69 {offsets = [5, 0, 0], sizes = [1, 8, 16], strides = [1, 1, 1]} : vector<8x8x16xf32> to vector<1x8x16xf32>
    %655 = vector.shape_cast %654 : vector<1x8x16xf32> to vector<8x16xf32>
    %656 = vector.broadcast %653 : f32 to vector<8x16xf32>
    %657 = arith.mulf %656, %655 : vector<8x16xf32>
    %658 = arith.addf %652, %657 : vector<8x16xf32>
    %c289 = arith.constant 289 : index
    %659 = memref.load %arg6[%c289] : memref<312xf32, #tpu.memory_space<smem>>
    %660 = vector.extract_strided_slice %69 {offsets = [6, 0, 0], sizes = [1, 8, 16], strides = [1, 1, 1]} : vector<8x8x16xf32> to vector<1x8x16xf32>
    %661 = vector.shape_cast %660 : vector<1x8x16xf32> to vector<8x16xf32>
    %662 = vector.broadcast %659 : f32 to vector<8x16xf32>
    %663 = arith.mulf %662, %661 : vector<8x16xf32>
    %664 = arith.addf %658, %663 : vector<8x16xf32>
    %c302 = arith.constant 302 : index
    %665 = memref.load %arg6[%c302] : memref<312xf32, #tpu.memory_space<smem>>
    %666 = vector.extract_strided_slice %69 {offsets = [7, 0, 0], sizes = [1, 8, 16], strides = [1, 1, 1]} : vector<8x8x16xf32> to vector<1x8x16xf32>
    %667 = vector.shape_cast %666 : vector<1x8x16xf32> to vector<8x16xf32>
    %668 = vector.broadcast %665 : f32 to vector<8x16xf32>
    %669 = arith.mulf %668, %667 : vector<8x16xf32>
    %670 = arith.addf %664, %669 : vector<8x16xf32>
    %c0_46 = arith.constant 0 : index
    %c3_47 = arith.constant 3 : index
    %c0_48 = arith.constant 0 : index
    %c0_49 = arith.constant 0 : index
    %671 = vector.load %arg9[%c0_46, %c3_47, %c0_48, %c0_49] : memref<1x13x8x16xf32, #tpu.memory_space<vmem>>, vector<1x1x8x16xf32>
    %672 = vector.shape_cast %671 : vector<1x1x8x16xf32> to vector<8x16xf32>
    %673 = vector.shape_cast %670 : vector<8x16xf32> to vector<1x1x8x16xf32>
    tpu.vector_store %arg9[%c0_46, %c3_47, %c0_48, %c0_49], %673 {strides = array<i32>} : memref<1x13x8x16xf32, #tpu.memory_space<vmem>>, vector<1x1x8x16xf32>,
    %cst_50 = arith.constant 0.000000e+00 : f32
    %674 = vector.broadcast %cst_50 : f32 to vector<8x16xf32>
    %c4 = arith.constant 4 : index
    %675 = memref.load %arg7[%c4] : memref<13xf32, #tpu.memory_space<smem>>
    %676 = vector.broadcast %675 : f32 to vector<8x16xf32>
    %677 = arith.addf %674, %676 : vector<8x16xf32>
    %c4_51 = arith.constant 4 : index
    %678 = memref.load %arg6[%c4_51] : memref<312xf32, #tpu.memory_space<smem>>
    %679 = vector.extract_strided_slice %68 {offsets = [0, 0, 0], sizes = [1, 8, 16], strides = [1, 1, 1]} : vector<16x8x16xf32> to vector<1x8x16xf32>
    %680 = vector.shape_cast %679 : vector<1x8x16xf32> to vector<8x16xf32>
    %681 = vector.broadcast %678 : f32 to vector<8x16xf32>
    %682 = arith.mulf %681, %680 : vector<8x16xf32>
    %683 = arith.addf %677, %682 : vector<8x16xf32>
    %c17 = arith.constant 17 : index
    %684 = memref.load %arg6[%c17] : memref<312xf32, #tpu.memory_space<smem>>
    %685 = vector.extract_strided_slice %68 {offsets = [1, 0, 0], sizes = [1, 8, 16], strides = [1, 1, 1]} : vector<16x8x16xf32> to vector<1x8x16xf32>
    %686 = vector.shape_cast %685 : vector<1x8x16xf32> to vector<8x16xf32>
    %687 = vector.broadcast %684 : f32 to vector<8x16xf32>
    %688 = arith.mulf %687, %686 : vector<8x16xf32>
    %689 = arith.addf %683, %688 : vector<8x16xf32>
    %c30 = arith.constant 30 : index
    %690 = memref.load %arg6[%c30] : memref<312xf32, #tpu.memory_space<smem>>
    %691 = vector.extract_strided_slice %68 {offsets = [2, 0, 0], sizes = [1, 8, 16], strides = [1, 1, 1]} : vector<16x8x16xf32> to vector<1x8x16xf32>
    %692 = vector.shape_cast %691 : vector<1x8x16xf32> to vector<8x16xf32>
    %693 = vector.broadcast %690 : f32 to vector<8x16xf32>
    %694 = arith.mulf %693, %692 : vector<8x16xf32>
    %695 = arith.addf %689, %694 : vector<8x16xf32>
    %c43 = arith.constant 43 : index
    %696 = memref.load %arg6[%c43] : memref<312xf32, #tpu.memory_space<smem>>
    %697 = vector.extract_strided_slice %68 {offsets = [3, 0, 0], sizes = [1, 8, 16], strides = [1, 1, 1]} : vector<16x8x16xf32> to vector<1x8x16xf32>
    %698 = vector.shape_cast %697 : vector<1x8x16xf32> to vector<8x16xf32>
    %699 = vector.broadcast %696 : f32 to vector<8x16xf32>
    %700 = arith.mulf %699, %698 : vector<8x16xf32>
    %701 = arith.addf %695, %700 : vector<8x16xf32>
    %c56 = arith.constant 56 : index
    %702 = memref.load %arg6[%c56] : memref<312xf32, #tpu.memory_space<smem>>
    %703 = vector.extract_strided_slice %68 {offsets = [4, 0, 0], sizes = [1, 8, 16], strides = [1, 1, 1]} : vector<16x8x16xf32> to vector<1x8x16xf32>
    %704 = vector.shape_cast %703 : vector<1x8x16xf32> to vector<8x16xf32>
    %705 = vector.broadcast %702 : f32 to vector<8x16xf32>
    %706 = arith.mulf %705, %704 : vector<8x16xf32>
    %707 = arith.addf %701, %706 : vector<8x16xf32>
    %c69 = arith.constant 69 : index
    %708 = memref.load %arg6[%c69] : memref<312xf32, #tpu.memory_space<smem>>
    %709 = vector.extract_strided_slice %68 {offsets = [5, 0, 0], sizes = [1, 8, 16], strides = [1, 1, 1]} : vector<16x8x16xf32> to vector<1x8x16xf32>
    %710 = vector.shape_cast %709 : vector<1x8x16xf32> to vector<8x16xf32>
    %711 = vector.broadcast %708 : f32 to vector<8x16xf32>
    %712 = arith.mulf %711, %710 : vector<8x16xf32>
    %713 = arith.addf %707, %712 : vector<8x16xf32>
    %c82 = arith.constant 82 : index
    %714 = memref.load %arg6[%c82] : memref<312xf32, #tpu.memory_space<smem>>
    %715 = vector.extract_strided_slice %68 {offsets = [6, 0, 0], sizes = [1, 8, 16], strides = [1, 1, 1]} : vector<16x8x16xf32> to vector<1x8x16xf32>
    %716 = vector.shape_cast %715 : vector<1x8x16xf32> to vector<8x16xf32>
    %717 = vector.broadcast %714 : f32 to vector<8x16xf32>
    %718 = arith.mulf %717, %716 : vector<8x16xf32>
    %719 = arith.addf %713, %718 : vector<8x16xf32>
    %c95 = arith.constant 95 : index
    %720 = memref.load %arg6[%c95] : memref<312xf32, #tpu.memory_space<smem>>
    %721 = vector.extract_strided_slice %68 {offsets = [7, 0, 0], sizes = [1, 8, 16], strides = [1, 1, 1]} : vector<16x8x16xf32> to vector<1x8x16xf32>
    %722 = vector.shape_cast %721 : vector<1x8x16xf32> to vector<8x16xf32>
    %723 = vector.broadcast %720 : f32 to vector<8x16xf32>
    %724 = arith.mulf %723, %722 : vector<8x16xf32>
    %725 = arith.addf %719, %724 : vector<8x16xf32>
    %c108 = arith.constant 108 : index
    %726 = memref.load %arg6[%c108] : memref<312xf32, #tpu.memory_space<smem>>
    %727 = vector.extract_strided_slice %68 {offsets = [8, 0, 0], sizes = [1, 8, 16], strides = [1, 1, 1]} : vector<16x8x16xf32> to vector<1x8x16xf32>
    %728 = vector.shape_cast %727 : vector<1x8x16xf32> to vector<8x16xf32>
    %729 = vector.broadcast %726 : f32 to vector<8x16xf32>
    %730 = arith.mulf %729, %728 : vector<8x16xf32>
    %731 = arith.addf %725, %730 : vector<8x16xf32>
    %c121 = arith.constant 121 : index
    %732 = memref.load %arg6[%c121] : memref<312xf32, #tpu.memory_space<smem>>
    %733 = vector.extract_strided_slice %68 {offsets = [9, 0, 0], sizes = [1, 8, 16], strides = [1, 1, 1]} : vector<16x8x16xf32> to vector<1x8x16xf32>
    %734 = vector.shape_cast %733 : vector<1x8x16xf32> to vector<8x16xf32>
    %735 = vector.broadcast %732 : f32 to vector<8x16xf32>
    %736 = arith.mulf %735, %734 : vector<8x16xf32>
    %737 = arith.addf %731, %736 : vector<8x16xf32>
    %c134 = arith.constant 134 : index
    %738 = memref.load %arg6[%c134] : memref<312xf32, #tpu.memory_space<smem>>
    %739 = vector.extract_strided_slice %68 {offsets = [10, 0, 0], sizes = [1, 8, 16], strides = [1, 1, 1]} : vector<16x8x16xf32> to vector<1x8x16xf32>
    %740 = vector.shape_cast %739 : vector<1x8x16xf32> to vector<8x16xf32>
    %741 = vector.broadcast %738 : f32 to vector<8x16xf32>
    %742 = arith.mulf %741, %740 : vector<8x16xf32>
    %743 = arith.addf %737, %742 : vector<8x16xf32>
    %c147 = arith.constant 147 : index
    %744 = memref.load %arg6[%c147] : memref<312xf32, #tpu.memory_space<smem>>
    %745 = vector.extract_strided_slice %68 {offsets = [11, 0, 0], sizes = [1, 8, 16], strides = [1, 1, 1]} : vector<16x8x16xf32> to vector<1x8x16xf32>
    %746 = vector.shape_cast %745 : vector<1x8x16xf32> to vector<8x16xf32>
    %747 = vector.broadcast %744 : f32 to vector<8x16xf32>
    %748 = arith.mulf %747, %746 : vector<8x16xf32>
    %749 = arith.addf %743, %748 : vector<8x16xf32>
    %c160 = arith.constant 160 : index
    %750 = memref.load %arg6[%c160] : memref<312xf32, #tpu.memory_space<smem>>
    %751 = vector.extract_strided_slice %68 {offsets = [12, 0, 0], sizes = [1, 8, 16], strides = [1, 1, 1]} : vector<16x8x16xf32> to vector<1x8x16xf32>
    %752 = vector.shape_cast %751 : vector<1x8x16xf32> to vector<8x16xf32>
    %753 = vector.broadcast %750 : f32 to vector<8x16xf32>
    %754 = arith.mulf %753, %752 : vector<8x16xf32>
    %755 = arith.addf %749, %754 : vector<8x16xf32>
    %c173 = arith.constant 173 : index
    %756 = memref.load %arg6[%c173] : memref<312xf32, #tpu.memory_space<smem>>
    %757 = vector.extract_strided_slice %68 {offsets = [13, 0, 0], sizes = [1, 8, 16], strides = [1, 1, 1]} : vector<16x8x16xf32> to vector<1x8x16xf32>
    %758 = vector.shape_cast %757 : vector<1x8x16xf32> to vector<8x16xf32>
    %759 = vector.broadcast %756 : f32 to vector<8x16xf32>
    %760 = arith.mulf %759, %758 : vector<8x16xf32>
    %761 = arith.addf %755, %760 : vector<8x16xf32>
    %c186 = arith.constant 186 : index
    %762 = memref.load %arg6[%c186] : memref<312xf32, #tpu.memory_space<smem>>
    %763 = vector.extract_strided_slice %68 {offsets = [14, 0, 0], sizes = [1, 8, 16], strides = [1, 1, 1]} : vector<16x8x16xf32> to vector<1x8x16xf32>
    %764 = vector.shape_cast %763 : vector<1x8x16xf32> to vector<8x16xf32>
    %765 = vector.broadcast %762 : f32 to vector<8x16xf32>
    %766 = arith.mulf %765, %764 : vector<8x16xf32>
    %767 = arith.addf %761, %766 : vector<8x16xf32>
    %c199 = arith.constant 199 : index
    %768 = memref.load %arg6[%c199] : memref<312xf32, #tpu.memory_space<smem>>
    %769 = vector.extract_strided_slice %68 {offsets = [15, 0, 0], sizes = [1, 8, 16], strides = [1, 1, 1]} : vector<16x8x16xf32> to vector<1x8x16xf32>
    %770 = vector.shape_cast %769 : vector<1x8x16xf32> to vector<8x16xf32>
    %771 = vector.broadcast %768 : f32 to vector<8x16xf32>
    %772 = arith.mulf %771, %770 : vector<8x16xf32>
    %773 = arith.addf %767, %772 : vector<8x16xf32>
    %c212 = arith.constant 212 : index
    %774 = memref.load %arg6[%c212] : memref<312xf32, #tpu.memory_space<smem>>
    %775 = vector.extract_strided_slice %69 {offsets = [0, 0, 0], sizes = [1, 8, 16], strides = [1, 1, 1]} : vector<8x8x16xf32> to vector<1x8x16xf32>
    %776 = vector.shape_cast %775 : vector<1x8x16xf32> to vector<8x16xf32>
    %777 = vector.broadcast %774 : f32 to vector<8x16xf32>
    %778 = arith.mulf %777, %776 : vector<8x16xf32>
    %779 = arith.addf %773, %778 : vector<8x16xf32>
    %c225 = arith.constant 225 : index
    %780 = memref.load %arg6[%c225] : memref<312xf32, #tpu.memory_space<smem>>
    %781 = vector.extract_strided_slice %69 {offsets = [1, 0, 0], sizes = [1, 8, 16], strides = [1, 1, 1]} : vector<8x8x16xf32> to vector<1x8x16xf32>
    %782 = vector.shape_cast %781 : vector<1x8x16xf32> to vector<8x16xf32>
    %783 = vector.broadcast %780 : f32 to vector<8x16xf32>
    %784 = arith.mulf %783, %782 : vector<8x16xf32>
    %785 = arith.addf %779, %784 : vector<8x16xf32>
    %c238 = arith.constant 238 : index
    %786 = memref.load %arg6[%c238] : memref<312xf32, #tpu.memory_space<smem>>
    %787 = vector.extract_strided_slice %69 {offsets = [2, 0, 0], sizes = [1, 8, 16], strides = [1, 1, 1]} : vector<8x8x16xf32> to vector<1x8x16xf32>
    %788 = vector.shape_cast %787 : vector<1x8x16xf32> to vector<8x16xf32>
    %789 = vector.broadcast %786 : f32 to vector<8x16xf32>
    %790 = arith.mulf %789, %788 : vector<8x16xf32>
    %791 = arith.addf %785, %790 : vector<8x16xf32>
    %c251 = arith.constant 251 : index
    %792 = memref.load %arg6[%c251] : memref<312xf32, #tpu.memory_space<smem>>
    %793 = vector.extract_strided_slice %69 {offsets = [3, 0, 0], sizes = [1, 8, 16], strides = [1, 1, 1]} : vector<8x8x16xf32> to vector<1x8x16xf32>
    %794 = vector.shape_cast %793 : vector<1x8x16xf32> to vector<8x16xf32>
    %795 = vector.broadcast %792 : f32 to vector<8x16xf32>
    %796 = arith.mulf %795, %794 : vector<8x16xf32>
    %797 = arith.addf %791, %796 : vector<8x16xf32>
    %c264 = arith.constant 264 : index
    %798 = memref.load %arg6[%c264] : memref<312xf32, #tpu.memory_space<smem>>
    %799 = vector.extract_strided_slice %69 {offsets = [4, 0, 0], sizes = [1, 8, 16], strides = [1, 1, 1]} : vector<8x8x16xf32> to vector<1x8x16xf32>
    %800 = vector.shape_cast %799 : vector<1x8x16xf32> to vector<8x16xf32>
    %801 = vector.broadcast %798 : f32 to vector<8x16xf32>
    %802 = arith.mulf %801, %800 : vector<8x16xf32>
    %803 = arith.addf %797, %802 : vector<8x16xf32>
    %c277 = arith.constant 277 : index
    %804 = memref.load %arg6[%c277] : memref<312xf32, #tpu.memory_space<smem>>
    %805 = vector.extract_strided_slice %69 {offsets = [5, 0, 0], sizes = [1, 8, 16], strides = [1, 1, 1]} : vector<8x8x16xf32> to vector<1x8x16xf32>
    %806 = vector.shape_cast %805 : vector<1x8x16xf32> to vector<8x16xf32>
    %807 = vector.broadcast %804 : f32 to vector<8x16xf32>
    %808 = arith.mulf %807, %806 : vector<8x16xf32>
    %809 = arith.addf %803, %808 : vector<8x16xf32>
    %c290 = arith.constant 290 : index
    %810 = memref.load %arg6[%c290] : memref<312xf32, #tpu.memory_space<smem>>
    %811 = vector.extract_strided_slice %69 {offsets = [6, 0, 0], sizes = [1, 8, 16], strides = [1, 1, 1]} : vector<8x8x16xf32> to vector<1x8x16xf32>
    %812 = vector.shape_cast %811 : vector<1x8x16xf32> to vector<8x16xf32>
    %813 = vector.broadcast %810 : f32 to vector<8x16xf32>
    %814 = arith.mulf %813, %812 : vector<8x16xf32>
    %815 = arith.addf %809, %814 : vector<8x16xf32>
    %c303 = arith.constant 303 : index
    %816 = memref.load %arg6[%c303] : memref<312xf32, #tpu.memory_space<smem>>
    %817 = vector.extract_strided_slice %69 {offsets = [7, 0, 0], sizes = [1, 8, 16], strides = [1, 1, 1]} : vector<8x8x16xf32> to vector<1x8x16xf32>
    %818 = vector.shape_cast %817 : vector<1x8x16xf32> to vector<8x16xf32>
    %819 = vector.broadcast %816 : f32 to vector<8x16xf32>
    %820 = arith.mulf %819, %818 : vector<8x16xf32>
    %821 = arith.addf %815, %820 : vector<8x16xf32>
    %c0_52 = arith.constant 0 : index
    %c4_53 = arith.constant 4 : index
    %c0_54 = arith.constant 0 : index
    %c0_55 = arith.constant 0 : index
    %822 = vector.load %arg9[%c0_52, %c4_53, %c0_54, %c0_55] : memref<1x13x8x16xf32, #tpu.memory_space<vmem>>, vector<1x1x8x16xf32>
    %823 = vector.shape_cast %822 : vector<1x1x8x16xf32> to vector<8x16xf32>
    %824 = vector.shape_cast %821 : vector<8x16xf32> to vector<1x1x8x16xf32>
    tpu.vector_store %arg9[%c0_52, %c4_53, %c0_54, %c0_55], %824 {strides = array<i32>} : memref<1x13x8x16xf32, #tpu.memory_space<vmem>>, vector<1x1x8x16xf32>,
    %cst_56 = arith.constant 0.000000e+00 : f32
    %825 = vector.broadcast %cst_56 : f32 to vector<8x16xf32>
    %c5 = arith.constant 5 : index
    %826 = memref.load %arg7[%c5] : memref<13xf32, #tpu.memory_space<smem>>
    %827 = vector.broadcast %826 : f32 to vector<8x16xf32>
    %828 = arith.addf %825, %827 : vector<8x16xf32>
    %c5_57 = arith.constant 5 : index
    %829 = memref.load %arg6[%c5_57] : memref<312xf32, #tpu.memory_space<smem>>
    %830 = vector.extract_strided_slice %68 {offsets = [0, 0, 0], sizes = [1, 8, 16], strides = [1, 1, 1]} : vector<16x8x16xf32> to vector<1x8x16xf32>
    %831 = vector.shape_cast %830 : vector<1x8x16xf32> to vector<8x16xf32>
    %832 = vector.broadcast %829 : f32 to vector<8x16xf32>
    %833 = arith.mulf %832, %831 : vector<8x16xf32>
    %834 = arith.addf %828, %833 : vector<8x16xf32>
    %c18 = arith.constant 18 : index
    %835 = memref.load %arg6[%c18] : memref<312xf32, #tpu.memory_space<smem>>
    %836 = vector.extract_strided_slice %68 {offsets = [1, 0, 0], sizes = [1, 8, 16], strides = [1, 1, 1]} : vector<16x8x16xf32> to vector<1x8x16xf32>
    %837 = vector.shape_cast %836 : vector<1x8x16xf32> to vector<8x16xf32>
    %838 = vector.broadcast %835 : f32 to vector<8x16xf32>
    %839 = arith.mulf %838, %837 : vector<8x16xf32>
    %840 = arith.addf %834, %839 : vector<8x16xf32>
    %c31 = arith.constant 31 : index
    %841 = memref.load %arg6[%c31] : memref<312xf32, #tpu.memory_space<smem>>
    %842 = vector.extract_strided_slice %68 {offsets = [2, 0, 0], sizes = [1, 8, 16], strides = [1, 1, 1]} : vector<16x8x16xf32> to vector<1x8x16xf32>
    %843 = vector.shape_cast %842 : vector<1x8x16xf32> to vector<8x16xf32>
    %844 = vector.broadcast %841 : f32 to vector<8x16xf32>
    %845 = arith.mulf %844, %843 : vector<8x16xf32>
    %846 = arith.addf %840, %845 : vector<8x16xf32>
    %c44 = arith.constant 44 : index
    %847 = memref.load %arg6[%c44] : memref<312xf32, #tpu.memory_space<smem>>
    %848 = vector.extract_strided_slice %68 {offsets = [3, 0, 0], sizes = [1, 8, 16], strides = [1, 1, 1]} : vector<16x8x16xf32> to vector<1x8x16xf32>
    %849 = vector.shape_cast %848 : vector<1x8x16xf32> to vector<8x16xf32>
    %850 = vector.broadcast %847 : f32 to vector<8x16xf32>
    %851 = arith.mulf %850, %849 : vector<8x16xf32>
    %852 = arith.addf %846, %851 : vector<8x16xf32>
    %c57 = arith.constant 57 : index
    %853 = memref.load %arg6[%c57] : memref<312xf32, #tpu.memory_space<smem>>
    %854 = vector.extract_strided_slice %68 {offsets = [4, 0, 0], sizes = [1, 8, 16], strides = [1, 1, 1]} : vector<16x8x16xf32> to vector<1x8x16xf32>
    %855 = vector.shape_cast %854 : vector<1x8x16xf32> to vector<8x16xf32>
    %856 = vector.broadcast %853 : f32 to vector<8x16xf32>
    %857 = arith.mulf %856, %855 : vector<8x16xf32>
    %858 = arith.addf %852, %857 : vector<8x16xf32>
    %c70 = arith.constant 70 : index
    %859 = memref.load %arg6[%c70] : memref<312xf32, #tpu.memory_space<smem>>
    %860 = vector.extract_strided_slice %68 {offsets = [5, 0, 0], sizes = [1, 8, 16], strides = [1, 1, 1]} : vector<16x8x16xf32> to vector<1x8x16xf32>
    %861 = vector.shape_cast %860 : vector<1x8x16xf32> to vector<8x16xf32>
    %862 = vector.broadcast %859 : f32 to vector<8x16xf32>
    %863 = arith.mulf %862, %861 : vector<8x16xf32>
    %864 = arith.addf %858, %863 : vector<8x16xf32>
    %c83 = arith.constant 83 : index
    %865 = memref.load %arg6[%c83] : memref<312xf32, #tpu.memory_space<smem>>
    %866 = vector.extract_strided_slice %68 {offsets = [6, 0, 0], sizes = [1, 8, 16], strides = [1, 1, 1]} : vector<16x8x16xf32> to vector<1x8x16xf32>
    %867 = vector.shape_cast %866 : vector<1x8x16xf32> to vector<8x16xf32>
    %868 = vector.broadcast %865 : f32 to vector<8x16xf32>
    %869 = arith.mulf %868, %867 : vector<8x16xf32>
    %870 = arith.addf %864, %869 : vector<8x16xf32>
    %c96 = arith.constant 96 : index
    %871 = memref.load %arg6[%c96] : memref<312xf32, #tpu.memory_space<smem>>
    %872 = vector.extract_strided_slice %68 {offsets = [7, 0, 0], sizes = [1, 8, 16], strides = [1, 1, 1]} : vector<16x8x16xf32> to vector<1x8x16xf32>
    %873 = vector.shape_cast %872 : vector<1x8x16xf32> to vector<8x16xf32>
    %874 = vector.broadcast %871 : f32 to vector<8x16xf32>
    %875 = arith.mulf %874, %873 : vector<8x16xf32>
    %876 = arith.addf %870, %875 : vector<8x16xf32>
    %c109 = arith.constant 109 : index
    %877 = memref.load %arg6[%c109] : memref<312xf32, #tpu.memory_space<smem>>
    %878 = vector.extract_strided_slice %68 {offsets = [8, 0, 0], sizes = [1, 8, 16], strides = [1, 1, 1]} : vector<16x8x16xf32> to vector<1x8x16xf32>
    %879 = vector.shape_cast %878 : vector<1x8x16xf32> to vector<8x16xf32>
    %880 = vector.broadcast %877 : f32 to vector<8x16xf32>
    %881 = arith.mulf %880, %879 : vector<8x16xf32>
    %882 = arith.addf %876, %881 : vector<8x16xf32>
    %c122 = arith.constant 122 : index
    %883 = memref.load %arg6[%c122] : memref<312xf32, #tpu.memory_space<smem>>
    %884 = vector.extract_strided_slice %68 {offsets = [9, 0, 0], sizes = [1, 8, 16], strides = [1, 1, 1]} : vector<16x8x16xf32> to vector<1x8x16xf32>
    %885 = vector.shape_cast %884 : vector<1x8x16xf32> to vector<8x16xf32>
    %886 = vector.broadcast %883 : f32 to vector<8x16xf32>
    %887 = arith.mulf %886, %885 : vector<8x16xf32>
    %888 = arith.addf %882, %887 : vector<8x16xf32>
    %c135 = arith.constant 135 : index
    %889 = memref.load %arg6[%c135] : memref<312xf32, #tpu.memory_space<smem>>
    %890 = vector.extract_strided_slice %68 {offsets = [10, 0, 0], sizes = [1, 8, 16], strides = [1, 1, 1]} : vector<16x8x16xf32> to vector<1x8x16xf32>
    %891 = vector.shape_cast %890 : vector<1x8x16xf32> to vector<8x16xf32>
    %892 = vector.broadcast %889 : f32 to vector<8x16xf32>
    %893 = arith.mulf %892, %891 : vector<8x16xf32>
    %894 = arith.addf %888, %893 : vector<8x16xf32>
    %c148 = arith.constant 148 : index
    %895 = memref.load %arg6[%c148] : memref<312xf32, #tpu.memory_space<smem>>
    %896 = vector.extract_strided_slice %68 {offsets = [11, 0, 0], sizes = [1, 8, 16], strides = [1, 1, 1]} : vector<16x8x16xf32> to vector<1x8x16xf32>
    %897 = vector.shape_cast %896 : vector<1x8x16xf32> to vector<8x16xf32>
    %898 = vector.broadcast %895 : f32 to vector<8x16xf32>
    %899 = arith.mulf %898, %897 : vector<8x16xf32>
    %900 = arith.addf %894, %899 : vector<8x16xf32>
    %c161 = arith.constant 161 : index
    %901 = memref.load %arg6[%c161] : memref<312xf32, #tpu.memory_space<smem>>
    %902 = vector.extract_strided_slice %68 {offsets = [12, 0, 0], sizes = [1, 8, 16], strides = [1, 1, 1]} : vector<16x8x16xf32> to vector<1x8x16xf32>
    %903 = vector.shape_cast %902 : vector<1x8x16xf32> to vector<8x16xf32>
    %904 = vector.broadcast %901 : f32 to vector<8x16xf32>
    %905 = arith.mulf %904, %903 : vector<8x16xf32>
    %906 = arith.addf %900, %905 : vector<8x16xf32>
    %c174 = arith.constant 174 : index
    %907 = memref.load %arg6[%c174] : memref<312xf32, #tpu.memory_space<smem>>
    %908 = vector.extract_strided_slice %68 {offsets = [13, 0, 0], sizes = [1, 8, 16], strides = [1, 1, 1]} : vector<16x8x16xf32> to vector<1x8x16xf32>
    %909 = vector.shape_cast %908 : vector<1x8x16xf32> to vector<8x16xf32>
    %910 = vector.broadcast %907 : f32 to vector<8x16xf32>
    %911 = arith.mulf %910, %909 : vector<8x16xf32>
    %912 = arith.addf %906, %911 : vector<8x16xf32>
    %c187 = arith.constant 187 : index
    %913 = memref.load %arg6[%c187] : memref<312xf32, #tpu.memory_space<smem>>
    %914 = vector.extract_strided_slice %68 {offsets = [14, 0, 0], sizes = [1, 8, 16], strides = [1, 1, 1]} : vector<16x8x16xf32> to vector<1x8x16xf32>
    %915 = vector.shape_cast %914 : vector<1x8x16xf32> to vector<8x16xf32>
    %916 = vector.broadcast %913 : f32 to vector<8x16xf32>
    %917 = arith.mulf %916, %915 : vector<8x16xf32>
    %918 = arith.addf %912, %917 : vector<8x16xf32>
    %c200 = arith.constant 200 : index
    %919 = memref.load %arg6[%c200] : memref<312xf32, #tpu.memory_space<smem>>
    %920 = vector.extract_strided_slice %68 {offsets = [15, 0, 0], sizes = [1, 8, 16], strides = [1, 1, 1]} : vector<16x8x16xf32> to vector<1x8x16xf32>
    %921 = vector.shape_cast %920 : vector<1x8x16xf32> to vector<8x16xf32>
    %922 = vector.broadcast %919 : f32 to vector<8x16xf32>
    %923 = arith.mulf %922, %921 : vector<8x16xf32>
    %924 = arith.addf %918, %923 : vector<8x16xf32>
    %c213 = arith.constant 213 : index
    %925 = memref.load %arg6[%c213] : memref<312xf32, #tpu.memory_space<smem>>
    %926 = vector.extract_strided_slice %69 {offsets = [0, 0, 0], sizes = [1, 8, 16], strides = [1, 1, 1]} : vector<8x8x16xf32> to vector<1x8x16xf32>
    %927 = vector.shape_cast %926 : vector<1x8x16xf32> to vector<8x16xf32>
    %928 = vector.broadcast %925 : f32 to vector<8x16xf32>
    %929 = arith.mulf %928, %927 : vector<8x16xf32>
    %930 = arith.addf %924, %929 : vector<8x16xf32>
    %c226 = arith.constant 226 : index
    %931 = memref.load %arg6[%c226] : memref<312xf32, #tpu.memory_space<smem>>
    %932 = vector.extract_strided_slice %69 {offsets = [1, 0, 0], sizes = [1, 8, 16], strides = [1, 1, 1]} : vector<8x8x16xf32> to vector<1x8x16xf32>
    %933 = vector.shape_cast %932 : vector<1x8x16xf32> to vector<8x16xf32>
    %934 = vector.broadcast %931 : f32 to vector<8x16xf32>
    %935 = arith.mulf %934, %933 : vector<8x16xf32>
    %936 = arith.addf %930, %935 : vector<8x16xf32>
    %c239 = arith.constant 239 : index
    %937 = memref.load %arg6[%c239] : memref<312xf32, #tpu.memory_space<smem>>
    %938 = vector.extract_strided_slice %69 {offsets = [2, 0, 0], sizes = [1, 8, 16], strides = [1, 1, 1]} : vector<8x8x16xf32> to vector<1x8x16xf32>
    %939 = vector.shape_cast %938 : vector<1x8x16xf32> to vector<8x16xf32>
    %940 = vector.broadcast %937 : f32 to vector<8x16xf32>
    %941 = arith.mulf %940, %939 : vector<8x16xf32>
    %942 = arith.addf %936, %941 : vector<8x16xf32>
    %c252 = arith.constant 252 : index
    %943 = memref.load %arg6[%c252] : memref<312xf32, #tpu.memory_space<smem>>
    %944 = vector.extract_strided_slice %69 {offsets = [3, 0, 0], sizes = [1, 8, 16], strides = [1, 1, 1]} : vector<8x8x16xf32> to vector<1x8x16xf32>
    %945 = vector.shape_cast %944 : vector<1x8x16xf32> to vector<8x16xf32>
    %946 = vector.broadcast %943 : f32 to vector<8x16xf32>
    %947 = arith.mulf %946, %945 : vector<8x16xf32>
    %948 = arith.addf %942, %947 : vector<8x16xf32>
    %c265 = arith.constant 265 : index
    %949 = memref.load %arg6[%c265] : memref<312xf32, #tpu.memory_space<smem>>
    %950 = vector.extract_strided_slice %69 {offsets = [4, 0, 0], sizes = [1, 8, 16], strides = [1, 1, 1]} : vector<8x8x16xf32> to vector<1x8x16xf32>
    %951 = vector.shape_cast %950 : vector<1x8x16xf32> to vector<8x16xf32>
    %952 = vector.broadcast %949 : f32 to vector<8x16xf32>
    %953 = arith.mulf %952, %951 : vector<8x16xf32>
    %954 = arith.addf %948, %953 : vector<8x16xf32>
    %c278 = arith.constant 278 : index
    %955 = memref.load %arg6[%c278] : memref<312xf32, #tpu.memory_space<smem>>
    %956 = vector.extract_strided_slice %69 {offsets = [5, 0, 0], sizes = [1, 8, 16], strides = [1, 1, 1]} : vector<8x8x16xf32> to vector<1x8x16xf32>
    %957 = vector.shape_cast %956 : vector<1x8x16xf32> to vector<8x16xf32>
    %958 = vector.broadcast %955 : f32 to vector<8x16xf32>
    %959 = arith.mulf %958, %957 : vector<8x16xf32>
    %960 = arith.addf %954, %959 : vector<8x16xf32>
    %c291 = arith.constant 291 : index
    %961 = memref.load %arg6[%c291] : memref<312xf32, #tpu.memory_space<smem>>
    %962 = vector.extract_strided_slice %69 {offsets = [6, 0, 0], sizes = [1, 8, 16], strides = [1, 1, 1]} : vector<8x8x16xf32> to vector<1x8x16xf32>
    %963 = vector.shape_cast %962 : vector<1x8x16xf32> to vector<8x16xf32>
    %964 = vector.broadcast %961 : f32 to vector<8x16xf32>
    %965 = arith.mulf %964, %963 : vector<8x16xf32>
    %966 = arith.addf %960, %965 : vector<8x16xf32>
    %c304 = arith.constant 304 : index
    %967 = memref.load %arg6[%c304] : memref<312xf32, #tpu.memory_space<smem>>
    %968 = vector.extract_strided_slice %69 {offsets = [7, 0, 0], sizes = [1, 8, 16], strides = [1, 1, 1]} : vector<8x8x16xf32> to vector<1x8x16xf32>
    %969 = vector.shape_cast %968 : vector<1x8x16xf32> to vector<8x16xf32>
    %970 = vector.broadcast %967 : f32 to vector<8x16xf32>
    %971 = arith.mulf %970, %969 : vector<8x16xf32>
    %972 = arith.addf %966, %971 : vector<8x16xf32>
    %c0_58 = arith.constant 0 : index
    %c5_59 = arith.constant 5 : index
    %c0_60 = arith.constant 0 : index
    %c0_61 = arith.constant 0 : index
    %973 = vector.load %arg9[%c0_58, %c5_59, %c0_60, %c0_61] : memref<1x13x8x16xf32, #tpu.memory_space<vmem>>, vector<1x1x8x16xf32>
    %974 = vector.shape_cast %973 : vector<1x1x8x16xf32> to vector<8x16xf32>
    %975 = vector.shape_cast %972 : vector<8x16xf32> to vector<1x1x8x16xf32>
    tpu.vector_store %arg9[%c0_58, %c5_59, %c0_60, %c0_61], %975 {strides = array<i32>} : memref<1x13x8x16xf32, #tpu.memory_space<vmem>>, vector<1x1x8x16xf32>,
    %cst_62 = arith.constant 0.000000e+00 : f32
    %976 = vector.broadcast %cst_62 : f32 to vector<8x16xf32>
    %c6 = arith.constant 6 : index
    %977 = memref.load %arg7[%c6] : memref<13xf32, #tpu.memory_space<smem>>
    %978 = vector.broadcast %977 : f32 to vector<8x16xf32>
    %979 = arith.addf %976, %978 : vector<8x16xf32>
    %c6_63 = arith.constant 6 : index
    %980 = memref.load %arg6[%c6_63] : memref<312xf32, #tpu.memory_space<smem>>
    %981 = vector.extract_strided_slice %68 {offsets = [0, 0, 0], sizes = [1, 8, 16], strides = [1, 1, 1]} : vector<16x8x16xf32> to vector<1x8x16xf32>
    %982 = vector.shape_cast %981 : vector<1x8x16xf32> to vector<8x16xf32>
    %983 = vector.broadcast %980 : f32 to vector<8x16xf32>
    %984 = arith.mulf %983, %982 : vector<8x16xf32>
    %985 = arith.addf %979, %984 : vector<8x16xf32>
    %c19 = arith.constant 19 : index
    %986 = memref.load %arg6[%c19] : memref<312xf32, #tpu.memory_space<smem>>
    %987 = vector.extract_strided_slice %68 {offsets = [1, 0, 0], sizes = [1, 8, 16], strides = [1, 1, 1]} : vector<16x8x16xf32> to vector<1x8x16xf32>
    %988 = vector.shape_cast %987 : vector<1x8x16xf32> to vector<8x16xf32>
    %989 = vector.broadcast %986 : f32 to vector<8x16xf32>
    %990 = arith.mulf %989, %988 : vector<8x16xf32>
    %991 = arith.addf %985, %990 : vector<8x16xf32>
    %c32 = arith.constant 32 : index
    %992 = memref.load %arg6[%c32] : memref<312xf32, #tpu.memory_space<smem>>
    %993 = vector.extract_strided_slice %68 {offsets = [2, 0, 0], sizes = [1, 8, 16], strides = [1, 1, 1]} : vector<16x8x16xf32> to vector<1x8x16xf32>
    %994 = vector.shape_cast %993 : vector<1x8x16xf32> to vector<8x16xf32>
    %995 = vector.broadcast %992 : f32 to vector<8x16xf32>
    %996 = arith.mulf %995, %994 : vector<8x16xf32>
    %997 = arith.addf %991, %996 : vector<8x16xf32>
    %c45 = arith.constant 45 : index
    %998 = memref.load %arg6[%c45] : memref<312xf32, #tpu.memory_space<smem>>
    %999 = vector.extract_strided_slice %68 {offsets = [3, 0, 0], sizes = [1, 8, 16], strides = [1, 1, 1]} : vector<16x8x16xf32> to vector<1x8x16xf32>
    %1000 = vector.shape_cast %999 : vector<1x8x16xf32> to vector<8x16xf32>
    %1001 = vector.broadcast %998 : f32 to vector<8x16xf32>
    %1002 = arith.mulf %1001, %1000 : vector<8x16xf32>
    %1003 = arith.addf %997, %1002 : vector<8x16xf32>
    %c58 = arith.constant 58 : index
    %1004 = memref.load %arg6[%c58] : memref<312xf32, #tpu.memory_space<smem>>
    %1005 = vector.extract_strided_slice %68 {offsets = [4, 0, 0], sizes = [1, 8, 16], strides = [1, 1, 1]} : vector<16x8x16xf32> to vector<1x8x16xf32>
    %1006 = vector.shape_cast %1005 : vector<1x8x16xf32> to vector<8x16xf32>
    %1007 = vector.broadcast %1004 : f32 to vector<8x16xf32>
    %1008 = arith.mulf %1007, %1006 : vector<8x16xf32>
    %1009 = arith.addf %1003, %1008 : vector<8x16xf32>
    %c71 = arith.constant 71 : index
    %1010 = memref.load %arg6[%c71] : memref<312xf32, #tpu.memory_space<smem>>
    %1011 = vector.extract_strided_slice %68 {offsets = [5, 0, 0], sizes = [1, 8, 16], strides = [1, 1, 1]} : vector<16x8x16xf32> to vector<1x8x16xf32>
    %1012 = vector.shape_cast %1011 : vector<1x8x16xf32> to vector<8x16xf32>
    %1013 = vector.broadcast %1010 : f32 to vector<8x16xf32>
    %1014 = arith.mulf %1013, %1012 : vector<8x16xf32>
    %1015 = arith.addf %1009, %1014 : vector<8x16xf32>
    %c84 = arith.constant 84 : index
    %1016 = memref.load %arg6[%c84] : memref<312xf32, #tpu.memory_space<smem>>
    %1017 = vector.extract_strided_slice %68 {offsets = [6, 0, 0], sizes = [1, 8, 16], strides = [1, 1, 1]} : vector<16x8x16xf32> to vector<1x8x16xf32>
    %1018 = vector.shape_cast %1017 : vector<1x8x16xf32> to vector<8x16xf32>
    %1019 = vector.broadcast %1016 : f32 to vector<8x16xf32>
    %1020 = arith.mulf %1019, %1018 : vector<8x16xf32>
    %1021 = arith.addf %1015, %1020 : vector<8x16xf32>
    %c97 = arith.constant 97 : index
    %1022 = memref.load %arg6[%c97] : memref<312xf32, #tpu.memory_space<smem>>
    %1023 = vector.extract_strided_slice %68 {offsets = [7, 0, 0], sizes = [1, 8, 16], strides = [1, 1, 1]} : vector<16x8x16xf32> to vector<1x8x16xf32>
    %1024 = vector.shape_cast %1023 : vector<1x8x16xf32> to vector<8x16xf32>
    %1025 = vector.broadcast %1022 : f32 to vector<8x16xf32>
    %1026 = arith.mulf %1025, %1024 : vector<8x16xf32>
    %1027 = arith.addf %1021, %1026 : vector<8x16xf32>
    %c110 = arith.constant 110 : index
    %1028 = memref.load %arg6[%c110] : memref<312xf32, #tpu.memory_space<smem>>
    %1029 = vector.extract_strided_slice %68 {offsets = [8, 0, 0], sizes = [1, 8, 16], strides = [1, 1, 1]} : vector<16x8x16xf32> to vector<1x8x16xf32>
    %1030 = vector.shape_cast %1029 : vector<1x8x16xf32> to vector<8x16xf32>
    %1031 = vector.broadcast %1028 : f32 to vector<8x16xf32>
    %1032 = arith.mulf %1031, %1030 : vector<8x16xf32>
    %1033 = arith.addf %1027, %1032 : vector<8x16xf32>
    %c123 = arith.constant 123 : index
    %1034 = memref.load %arg6[%c123] : memref<312xf32, #tpu.memory_space<smem>>
    %1035 = vector.extract_strided_slice %68 {offsets = [9, 0, 0], sizes = [1, 8, 16], strides = [1, 1, 1]} : vector<16x8x16xf32> to vector<1x8x16xf32>
    %1036 = vector.shape_cast %1035 : vector<1x8x16xf32> to vector<8x16xf32>
    %1037 = vector.broadcast %1034 : f32 to vector<8x16xf32>
    %1038 = arith.mulf %1037, %1036 : vector<8x16xf32>
    %1039 = arith.addf %1033, %1038 : vector<8x16xf32>
    %c136 = arith.constant 136 : index
    %1040 = memref.load %arg6[%c136] : memref<312xf32, #tpu.memory_space<smem>>
    %1041 = vector.extract_strided_slice %68 {offsets = [10, 0, 0], sizes = [1, 8, 16], strides = [1, 1, 1]} : vector<16x8x16xf32> to vector<1x8x16xf32>
    %1042 = vector.shape_cast %1041 : vector<1x8x16xf32> to vector<8x16xf32>
    %1043 = vector.broadcast %1040 : f32 to vector<8x16xf32>
    %1044 = arith.mulf %1043, %1042 : vector<8x16xf32>
    %1045 = arith.addf %1039, %1044 : vector<8x16xf32>
    %c149 = arith.constant 149 : index
    %1046 = memref.load %arg6[%c149] : memref<312xf32, #tpu.memory_space<smem>>
    %1047 = vector.extract_strided_slice %68 {offsets = [11, 0, 0], sizes = [1, 8, 16], strides = [1, 1, 1]} : vector<16x8x16xf32> to vector<1x8x16xf32>
    %1048 = vector.shape_cast %1047 : vector<1x8x16xf32> to vector<8x16xf32>
    %1049 = vector.broadcast %1046 : f32 to vector<8x16xf32>
    %1050 = arith.mulf %1049, %1048 : vector<8x16xf32>
    %1051 = arith.addf %1045, %1050 : vector<8x16xf32>
    %c162 = arith.constant 162 : index
    %1052 = memref.load %arg6[%c162] : memref<312xf32, #tpu.memory_space<smem>>
    %1053 = vector.extract_strided_slice %68 {offsets = [12, 0, 0], sizes = [1, 8, 16], strides = [1, 1, 1]} : vector<16x8x16xf32> to vector<1x8x16xf32>
    %1054 = vector.shape_cast %1053 : vector<1x8x16xf32> to vector<8x16xf32>
    %1055 = vector.broadcast %1052 : f32 to vector<8x16xf32>
    %1056 = arith.mulf %1055, %1054 : vector<8x16xf32>
    %1057 = arith.addf %1051, %1056 : vector<8x16xf32>
    %c175 = arith.constant 175 : index
    %1058 = memref.load %arg6[%c175] : memref<312xf32, #tpu.memory_space<smem>>
    %1059 = vector.extract_strided_slice %68 {offsets = [13, 0, 0], sizes = [1, 8, 16], strides = [1, 1, 1]} : vector<16x8x16xf32> to vector<1x8x16xf32>
    %1060 = vector.shape_cast %1059 : vector<1x8x16xf32> to vector<8x16xf32>
    %1061 = vector.broadcast %1058 : f32 to vector<8x16xf32>
    %1062 = arith.mulf %1061, %1060 : vector<8x16xf32>
    %1063 = arith.addf %1057, %1062 : vector<8x16xf32>
    %c188 = arith.constant 188 : index
    %1064 = memref.load %arg6[%c188] : memref<312xf32, #tpu.memory_space<smem>>
    %1065 = vector.extract_strided_slice %68 {offsets = [14, 0, 0], sizes = [1, 8, 16], strides = [1, 1, 1]} : vector<16x8x16xf32> to vector<1x8x16xf32>
    %1066 = vector.shape_cast %1065 : vector<1x8x16xf32> to vector<8x16xf32>
    %1067 = vector.broadcast %1064 : f32 to vector<8x16xf32>
    %1068 = arith.mulf %1067, %1066 : vector<8x16xf32>
    %1069 = arith.addf %1063, %1068 : vector<8x16xf32>
    %c201 = arith.constant 201 : index
    %1070 = memref.load %arg6[%c201] : memref<312xf32, #tpu.memory_space<smem>>
    %1071 = vector.extract_strided_slice %68 {offsets = [15, 0, 0], sizes = [1, 8, 16], strides = [1, 1, 1]} : vector<16x8x16xf32> to vector<1x8x16xf32>
    %1072 = vector.shape_cast %1071 : vector<1x8x16xf32> to vector<8x16xf32>
    %1073 = vector.broadcast %1070 : f32 to vector<8x16xf32>
    %1074 = arith.mulf %1073, %1072 : vector<8x16xf32>
    %1075 = arith.addf %1069, %1074 : vector<8x16xf32>
    %c214 = arith.constant 214 : index
    %1076 = memref.load %arg6[%c214] : memref<312xf32, #tpu.memory_space<smem>>
    %1077 = vector.extract_strided_slice %69 {offsets = [0, 0, 0], sizes = [1, 8, 16], strides = [1, 1, 1]} : vector<8x8x16xf32> to vector<1x8x16xf32>
    %1078 = vector.shape_cast %1077 : vector<1x8x16xf32> to vector<8x16xf32>
    %1079 = vector.broadcast %1076 : f32 to vector<8x16xf32>
    %1080 = arith.mulf %1079, %1078 : vector<8x16xf32>
    %1081 = arith.addf %1075, %1080 : vector<8x16xf32>
    %c227 = arith.constant 227 : index
    %1082 = memref.load %arg6[%c227] : memref<312xf32, #tpu.memory_space<smem>>
    %1083 = vector.extract_strided_slice %69 {offsets = [1, 0, 0], sizes = [1, 8, 16], strides = [1, 1, 1]} : vector<8x8x16xf32> to vector<1x8x16xf32>
    %1084 = vector.shape_cast %1083 : vector<1x8x16xf32> to vector<8x16xf32>
    %1085 = vector.broadcast %1082 : f32 to vector<8x16xf32>
    %1086 = arith.mulf %1085, %1084 : vector<8x16xf32>
    %1087 = arith.addf %1081, %1086 : vector<8x16xf32>
    %c240 = arith.constant 240 : index
    %1088 = memref.load %arg6[%c240] : memref<312xf32, #tpu.memory_space<smem>>
    %1089 = vector.extract_strided_slice %69 {offsets = [2, 0, 0], sizes = [1, 8, 16], strides = [1, 1, 1]} : vector<8x8x16xf32> to vector<1x8x16xf32>
    %1090 = vector.shape_cast %1089 : vector<1x8x16xf32> to vector<8x16xf32>
    %1091 = vector.broadcast %1088 : f32 to vector<8x16xf32>
    %1092 = arith.mulf %1091, %1090 : vector<8x16xf32>
    %1093 = arith.addf %1087, %1092 : vector<8x16xf32>
    %c253 = arith.constant 253 : index
    %1094 = memref.load %arg6[%c253] : memref<312xf32, #tpu.memory_space<smem>>
    %1095 = vector.extract_strided_slice %69 {offsets = [3, 0, 0], sizes = [1, 8, 16], strides = [1, 1, 1]} : vector<8x8x16xf32> to vector<1x8x16xf32>
    %1096 = vector.shape_cast %1095 : vector<1x8x16xf32> to vector<8x16xf32>
    %1097 = vector.broadcast %1094 : f32 to vector<8x16xf32>
    %1098 = arith.mulf %1097, %1096 : vector<8x16xf32>
    %1099 = arith.addf %1093, %1098 : vector<8x16xf32>
    %c266 = arith.constant 266 : index
    %1100 = memref.load %arg6[%c266] : memref<312xf32, #tpu.memory_space<smem>>
    %1101 = vector.extract_strided_slice %69 {offsets = [4, 0, 0], sizes = [1, 8, 16], strides = [1, 1, 1]} : vector<8x8x16xf32> to vector<1x8x16xf32>
    %1102 = vector.shape_cast %1101 : vector<1x8x16xf32> to vector<8x16xf32>
    %1103 = vector.broadcast %1100 : f32 to vector<8x16xf32>
    %1104 = arith.mulf %1103, %1102 : vector<8x16xf32>
    %1105 = arith.addf %1099, %1104 : vector<8x16xf32>
    %c279 = arith.constant 279 : index
    %1106 = memref.load %arg6[%c279] : memref<312xf32, #tpu.memory_space<smem>>
    %1107 = vector.extract_strided_slice %69 {offsets = [5, 0, 0], sizes = [1, 8, 16], strides = [1, 1, 1]} : vector<8x8x16xf32> to vector<1x8x16xf32>
    %1108 = vector.shape_cast %1107 : vector<1x8x16xf32> to vector<8x16xf32>
    %1109 = vector.broadcast %1106 : f32 to vector<8x16xf32>
    %1110 = arith.mulf %1109, %1108 : vector<8x16xf32>
    %1111 = arith.addf %1105, %1110 : vector<8x16xf32>
    %c292 = arith.constant 292 : index
    %1112 = memref.load %arg6[%c292] : memref<312xf32, #tpu.memory_space<smem>>
    %1113 = vector.extract_strided_slice %69 {offsets = [6, 0, 0], sizes = [1, 8, 16], strides = [1, 1, 1]} : vector<8x8x16xf32> to vector<1x8x16xf32>
    %1114 = vector.shape_cast %1113 : vector<1x8x16xf32> to vector<8x16xf32>
    %1115 = vector.broadcast %1112 : f32 to vector<8x16xf32>
    %1116 = arith.mulf %1115, %1114 : vector<8x16xf32>
    %1117 = arith.addf %1111, %1116 : vector<8x16xf32>
    %c305 = arith.constant 305 : index
    %1118 = memref.load %arg6[%c305] : memref<312xf32, #tpu.memory_space<smem>>
    %1119 = vector.extract_strided_slice %69 {offsets = [7, 0, 0], sizes = [1, 8, 16], strides = [1, 1, 1]} : vector<8x8x16xf32> to vector<1x8x16xf32>
    %1120 = vector.shape_cast %1119 : vector<1x8x16xf32> to vector<8x16xf32>
    %1121 = vector.broadcast %1118 : f32 to vector<8x16xf32>
    %1122 = arith.mulf %1121, %1120 : vector<8x16xf32>
    %1123 = arith.addf %1117, %1122 : vector<8x16xf32>
    %c0_64 = arith.constant 0 : index
    %c6_65 = arith.constant 6 : index
    %c0_66 = arith.constant 0 : index
    %c0_67 = arith.constant 0 : index
    %1124 = vector.load %arg9[%c0_64, %c6_65, %c0_66, %c0_67] : memref<1x13x8x16xf32, #tpu.memory_space<vmem>>, vector<1x1x8x16xf32>
    %1125 = vector.shape_cast %1124 : vector<1x1x8x16xf32> to vector<8x16xf32>
    %1126 = vector.shape_cast %1123 : vector<8x16xf32> to vector<1x1x8x16xf32>
    tpu.vector_store %arg9[%c0_64, %c6_65, %c0_66, %c0_67], %1126 {strides = array<i32>} : memref<1x13x8x16xf32, #tpu.memory_space<vmem>>, vector<1x1x8x16xf32>,
    %cst_68 = arith.constant 0.000000e+00 : f32
    %1127 = vector.broadcast %cst_68 : f32 to vector<8x16xf32>
    %c7 = arith.constant 7 : index
    %1128 = memref.load %arg7[%c7] : memref<13xf32, #tpu.memory_space<smem>>
    %1129 = vector.broadcast %1128 : f32 to vector<8x16xf32>
    %1130 = arith.addf %1127, %1129 : vector<8x16xf32>
    %c7_69 = arith.constant 7 : index
    %1131 = memref.load %arg6[%c7_69] : memref<312xf32, #tpu.memory_space<smem>>
    %1132 = vector.extract_strided_slice %68 {offsets = [0, 0, 0], sizes = [1, 8, 16], strides = [1, 1, 1]} : vector<16x8x16xf32> to vector<1x8x16xf32>
    %1133 = vector.shape_cast %1132 : vector<1x8x16xf32> to vector<8x16xf32>
    %1134 = vector.broadcast %1131 : f32 to vector<8x16xf32>
    %1135 = arith.mulf %1134, %1133 : vector<8x16xf32>
    %1136 = arith.addf %1130, %1135 : vector<8x16xf32>
    %c20 = arith.constant 20 : index
    %1137 = memref.load %arg6[%c20] : memref<312xf32, #tpu.memory_space<smem>>
    %1138 = vector.extract_strided_slice %68 {offsets = [1, 0, 0], sizes = [1, 8, 16], strides = [1, 1, 1]} : vector<16x8x16xf32> to vector<1x8x16xf32>
    %1139 = vector.shape_cast %1138 : vector<1x8x16xf32> to vector<8x16xf32>
    %1140 = vector.broadcast %1137 : f32 to vector<8x16xf32>
    %1141 = arith.mulf %1140, %1139 : vector<8x16xf32>
    %1142 = arith.addf %1136, %1141 : vector<8x16xf32>
    %c33 = arith.constant 33 : index
    %1143 = memref.load %arg6[%c33] : memref<312xf32, #tpu.memory_space<smem>>
    %1144 = vector.extract_strided_slice %68 {offsets = [2, 0, 0], sizes = [1, 8, 16], strides = [1, 1, 1]} : vector<16x8x16xf32> to vector<1x8x16xf32>
    %1145 = vector.shape_cast %1144 : vector<1x8x16xf32> to vector<8x16xf32>
    %1146 = vector.broadcast %1143 : f32 to vector<8x16xf32>
    %1147 = arith.mulf %1146, %1145 : vector<8x16xf32>
    %1148 = arith.addf %1142, %1147 : vector<8x16xf32>
    %c46 = arith.constant 46 : index
    %1149 = memref.load %arg6[%c46] : memref<312xf32, #tpu.memory_space<smem>>
    %1150 = vector.extract_strided_slice %68 {offsets = [3, 0, 0], sizes = [1, 8, 16], strides = [1, 1, 1]} : vector<16x8x16xf32> to vector<1x8x16xf32>
    %1151 = vector.shape_cast %1150 : vector<1x8x16xf32> to vector<8x16xf32>
    %1152 = vector.broadcast %1149 : f32 to vector<8x16xf32>
    %1153 = arith.mulf %1152, %1151 : vector<8x16xf32>
    %1154 = arith.addf %1148, %1153 : vector<8x16xf32>
    %c59 = arith.constant 59 : index
    %1155 = memref.load %arg6[%c59] : memref<312xf32, #tpu.memory_space<smem>>
    %1156 = vector.extract_strided_slice %68 {offsets = [4, 0, 0], sizes = [1, 8, 16], strides = [1, 1, 1]} : vector<16x8x16xf32> to vector<1x8x16xf32>
    %1157 = vector.shape_cast %1156 : vector<1x8x16xf32> to vector<8x16xf32>
    %1158 = vector.broadcast %1155 : f32 to vector<8x16xf32>
    %1159 = arith.mulf %1158, %1157 : vector<8x16xf32>
    %1160 = arith.addf %1154, %1159 : vector<8x16xf32>
    %c72 = arith.constant 72 : index
    %1161 = memref.load %arg6[%c72] : memref<312xf32, #tpu.memory_space<smem>>
    %1162 = vector.extract_strided_slice %68 {offsets = [5, 0, 0], sizes = [1, 8, 16], strides = [1, 1, 1]} : vector<16x8x16xf32> to vector<1x8x16xf32>
    %1163 = vector.shape_cast %1162 : vector<1x8x16xf32> to vector<8x16xf32>
    %1164 = vector.broadcast %1161 : f32 to vector<8x16xf32>
    %1165 = arith.mulf %1164, %1163 : vector<8x16xf32>
    %1166 = arith.addf %1160, %1165 : vector<8x16xf32>
    %c85 = arith.constant 85 : index
    %1167 = memref.load %arg6[%c85] : memref<312xf32, #tpu.memory_space<smem>>
    %1168 = vector.extract_strided_slice %68 {offsets = [6, 0, 0], sizes = [1, 8, 16], strides = [1, 1, 1]} : vector<16x8x16xf32> to vector<1x8x16xf32>
    %1169 = vector.shape_cast %1168 : vector<1x8x16xf32> to vector<8x16xf32>
    %1170 = vector.broadcast %1167 : f32 to vector<8x16xf32>
    %1171 = arith.mulf %1170, %1169 : vector<8x16xf32>
    %1172 = arith.addf %1166, %1171 : vector<8x16xf32>
    %c98 = arith.constant 98 : index
    %1173 = memref.load %arg6[%c98] : memref<312xf32, #tpu.memory_space<smem>>
    %1174 = vector.extract_strided_slice %68 {offsets = [7, 0, 0], sizes = [1, 8, 16], strides = [1, 1, 1]} : vector<16x8x16xf32> to vector<1x8x16xf32>
    %1175 = vector.shape_cast %1174 : vector<1x8x16xf32> to vector<8x16xf32>
    %1176 = vector.broadcast %1173 : f32 to vector<8x16xf32>
    %1177 = arith.mulf %1176, %1175 : vector<8x16xf32>
    %1178 = arith.addf %1172, %1177 : vector<8x16xf32>
    %c111 = arith.constant 111 : index
    %1179 = memref.load %arg6[%c111] : memref<312xf32, #tpu.memory_space<smem>>
    %1180 = vector.extract_strided_slice %68 {offsets = [8, 0, 0], sizes = [1, 8, 16], strides = [1, 1, 1]} : vector<16x8x16xf32> to vector<1x8x16xf32>
    %1181 = vector.shape_cast %1180 : vector<1x8x16xf32> to vector<8x16xf32>
    %1182 = vector.broadcast %1179 : f32 to vector<8x16xf32>
    %1183 = arith.mulf %1182, %1181 : vector<8x16xf32>
    %1184 = arith.addf %1178, %1183 : vector<8x16xf32>
    %c124 = arith.constant 124 : index
    %1185 = memref.load %arg6[%c124] : memref<312xf32, #tpu.memory_space<smem>>
    %1186 = vector.extract_strided_slice %68 {offsets = [9, 0, 0], sizes = [1, 8, 16], strides = [1, 1, 1]} : vector<16x8x16xf32> to vector<1x8x16xf32>
    %1187 = vector.shape_cast %1186 : vector<1x8x16xf32> to vector<8x16xf32>
    %1188 = vector.broadcast %1185 : f32 to vector<8x16xf32>
    %1189 = arith.mulf %1188, %1187 : vector<8x16xf32>
    %1190 = arith.addf %1184, %1189 : vector<8x16xf32>
    %c137 = arith.constant 137 : index
    %1191 = memref.load %arg6[%c137] : memref<312xf32, #tpu.memory_space<smem>>
    %1192 = vector.extract_strided_slice %68 {offsets = [10, 0, 0], sizes = [1, 8, 16], strides = [1, 1, 1]} : vector<16x8x16xf32> to vector<1x8x16xf32>
    %1193 = vector.shape_cast %1192 : vector<1x8x16xf32> to vector<8x16xf32>
    %1194 = vector.broadcast %1191 : f32 to vector<8x16xf32>
    %1195 = arith.mulf %1194, %1193 : vector<8x16xf32>
    %1196 = arith.addf %1190, %1195 : vector<8x16xf32>
    %c150 = arith.constant 150 : index
    %1197 = memref.load %arg6[%c150] : memref<312xf32, #tpu.memory_space<smem>>
    %1198 = vector.extract_strided_slice %68 {offsets = [11, 0, 0], sizes = [1, 8, 16], strides = [1, 1, 1]} : vector<16x8x16xf32> to vector<1x8x16xf32>
    %1199 = vector.shape_cast %1198 : vector<1x8x16xf32> to vector<8x16xf32>
    %1200 = vector.broadcast %1197 : f32 to vector<8x16xf32>
    %1201 = arith.mulf %1200, %1199 : vector<8x16xf32>
    %1202 = arith.addf %1196, %1201 : vector<8x16xf32>
    %c163 = arith.constant 163 : index
    %1203 = memref.load %arg6[%c163] : memref<312xf32, #tpu.memory_space<smem>>
    %1204 = vector.extract_strided_slice %68 {offsets = [12, 0, 0], sizes = [1, 8, 16], strides = [1, 1, 1]} : vector<16x8x16xf32> to vector<1x8x16xf32>
    %1205 = vector.shape_cast %1204 : vector<1x8x16xf32> to vector<8x16xf32>
    %1206 = vector.broadcast %1203 : f32 to vector<8x16xf32>
    %1207 = arith.mulf %1206, %1205 : vector<8x16xf32>
    %1208 = arith.addf %1202, %1207 : vector<8x16xf32>
    %c176 = arith.constant 176 : index
    %1209 = memref.load %arg6[%c176] : memref<312xf32, #tpu.memory_space<smem>>
    %1210 = vector.extract_strided_slice %68 {offsets = [13, 0, 0], sizes = [1, 8, 16], strides = [1, 1, 1]} : vector<16x8x16xf32> to vector<1x8x16xf32>
    %1211 = vector.shape_cast %1210 : vector<1x8x16xf32> to vector<8x16xf32>
    %1212 = vector.broadcast %1209 : f32 to vector<8x16xf32>
    %1213 = arith.mulf %1212, %1211 : vector<8x16xf32>
    %1214 = arith.addf %1208, %1213 : vector<8x16xf32>
    %c189 = arith.constant 189 : index
    %1215 = memref.load %arg6[%c189] : memref<312xf32, #tpu.memory_space<smem>>
    %1216 = vector.extract_strided_slice %68 {offsets = [14, 0, 0], sizes = [1, 8, 16], strides = [1, 1, 1]} : vector<16x8x16xf32> to vector<1x8x16xf32>
    %1217 = vector.shape_cast %1216 : vector<1x8x16xf32> to vector<8x16xf32>
    %1218 = vector.broadcast %1215 : f32 to vector<8x16xf32>
    %1219 = arith.mulf %1218, %1217 : vector<8x16xf32>
    %1220 = arith.addf %1214, %1219 : vector<8x16xf32>
    %c202 = arith.constant 202 : index
    %1221 = memref.load %arg6[%c202] : memref<312xf32, #tpu.memory_space<smem>>
    %1222 = vector.extract_strided_slice %68 {offsets = [15, 0, 0], sizes = [1, 8, 16], strides = [1, 1, 1]} : vector<16x8x16xf32> to vector<1x8x16xf32>
    %1223 = vector.shape_cast %1222 : vector<1x8x16xf32> to vector<8x16xf32>
    %1224 = vector.broadcast %1221 : f32 to vector<8x16xf32>
    %1225 = arith.mulf %1224, %1223 : vector<8x16xf32>
    %1226 = arith.addf %1220, %1225 : vector<8x16xf32>
    %c215 = arith.constant 215 : index
    %1227 = memref.load %arg6[%c215] : memref<312xf32, #tpu.memory_space<smem>>
    %1228 = vector.extract_strided_slice %69 {offsets = [0, 0, 0], sizes = [1, 8, 16], strides = [1, 1, 1]} : vector<8x8x16xf32> to vector<1x8x16xf32>
    %1229 = vector.shape_cast %1228 : vector<1x8x16xf32> to vector<8x16xf32>
    %1230 = vector.broadcast %1227 : f32 to vector<8x16xf32>
    %1231 = arith.mulf %1230, %1229 : vector<8x16xf32>
    %1232 = arith.addf %1226, %1231 : vector<8x16xf32>
    %c228 = arith.constant 228 : index
    %1233 = memref.load %arg6[%c228] : memref<312xf32, #tpu.memory_space<smem>>
    %1234 = vector.extract_strided_slice %69 {offsets = [1, 0, 0], sizes = [1, 8, 16], strides = [1, 1, 1]} : vector<8x8x16xf32> to vector<1x8x16xf32>
    %1235 = vector.shape_cast %1234 : vector<1x8x16xf32> to vector<8x16xf32>
    %1236 = vector.broadcast %1233 : f32 to vector<8x16xf32>
    %1237 = arith.mulf %1236, %1235 : vector<8x16xf32>
    %1238 = arith.addf %1232, %1237 : vector<8x16xf32>
    %c241 = arith.constant 241 : index
    %1239 = memref.load %arg6[%c241] : memref<312xf32, #tpu.memory_space<smem>>
    %1240 = vector.extract_strided_slice %69 {offsets = [2, 0, 0], sizes = [1, 8, 16], strides = [1, 1, 1]} : vector<8x8x16xf32> to vector<1x8x16xf32>
    %1241 = vector.shape_cast %1240 : vector<1x8x16xf32> to vector<8x16xf32>
    %1242 = vector.broadcast %1239 : f32 to vector<8x16xf32>
    %1243 = arith.mulf %1242, %1241 : vector<8x16xf32>
    %1244 = arith.addf %1238, %1243 : vector<8x16xf32>
    %c254 = arith.constant 254 : index
    %1245 = memref.load %arg6[%c254] : memref<312xf32, #tpu.memory_space<smem>>
    %1246 = vector.extract_strided_slice %69 {offsets = [3, 0, 0], sizes = [1, 8, 16], strides = [1, 1, 1]} : vector<8x8x16xf32> to vector<1x8x16xf32>
    %1247 = vector.shape_cast %1246 : vector<1x8x16xf32> to vector<8x16xf32>
    %1248 = vector.broadcast %1245 : f32 to vector<8x16xf32>
    %1249 = arith.mulf %1248, %1247 : vector<8x16xf32>
    %1250 = arith.addf %1244, %1249 : vector<8x16xf32>
    %c267 = arith.constant 267 : index
    %1251 = memref.load %arg6[%c267] : memref<312xf32, #tpu.memory_space<smem>>
    %1252 = vector.extract_strided_slice %69 {offsets = [4, 0, 0], sizes = [1, 8, 16], strides = [1, 1, 1]} : vector<8x8x16xf32> to vector<1x8x16xf32>
    %1253 = vector.shape_cast %1252 : vector<1x8x16xf32> to vector<8x16xf32>
    %1254 = vector.broadcast %1251 : f32 to vector<8x16xf32>
    %1255 = arith.mulf %1254, %1253 : vector<8x16xf32>
    %1256 = arith.addf %1250, %1255 : vector<8x16xf32>
    %c280 = arith.constant 280 : index
    %1257 = memref.load %arg6[%c280] : memref<312xf32, #tpu.memory_space<smem>>
    %1258 = vector.extract_strided_slice %69 {offsets = [5, 0, 0], sizes = [1, 8, 16], strides = [1, 1, 1]} : vector<8x8x16xf32> to vector<1x8x16xf32>
    %1259 = vector.shape_cast %1258 : vector<1x8x16xf32> to vector<8x16xf32>
    %1260 = vector.broadcast %1257 : f32 to vector<8x16xf32>
    %1261 = arith.mulf %1260, %1259 : vector<8x16xf32>
    %1262 = arith.addf %1256, %1261 : vector<8x16xf32>
    %c293 = arith.constant 293 : index
    %1263 = memref.load %arg6[%c293] : memref<312xf32, #tpu.memory_space<smem>>
    %1264 = vector.extract_strided_slice %69 {offsets = [6, 0, 0], sizes = [1, 8, 16], strides = [1, 1, 1]} : vector<8x8x16xf32> to vector<1x8x16xf32>
    %1265 = vector.shape_cast %1264 : vector<1x8x16xf32> to vector<8x16xf32>
    %1266 = vector.broadcast %1263 : f32 to vector<8x16xf32>
    %1267 = arith.mulf %1266, %1265 : vector<8x16xf32>
    %1268 = arith.addf %1262, %1267 : vector<8x16xf32>
    %c306 = arith.constant 306 : index
    %1269 = memref.load %arg6[%c306] : memref<312xf32, #tpu.memory_space<smem>>
    %1270 = vector.extract_strided_slice %69 {offsets = [7, 0, 0], sizes = [1, 8, 16], strides = [1, 1, 1]} : vector<8x8x16xf32> to vector<1x8x16xf32>
    %1271 = vector.shape_cast %1270 : vector<1x8x16xf32> to vector<8x16xf32>
    %1272 = vector.broadcast %1269 : f32 to vector<8x16xf32>
    %1273 = arith.mulf %1272, %1271 : vector<8x16xf32>
    %1274 = arith.addf %1268, %1273 : vector<8x16xf32>
    %c0_70 = arith.constant 0 : index
    %c7_71 = arith.constant 7 : index
    %c0_72 = arith.constant 0 : index
    %c0_73 = arith.constant 0 : index
    %1275 = vector.load %arg9[%c0_70, %c7_71, %c0_72, %c0_73] : memref<1x13x8x16xf32, #tpu.memory_space<vmem>>, vector<1x1x8x16xf32>
    %1276 = vector.shape_cast %1275 : vector<1x1x8x16xf32> to vector<8x16xf32>
    %1277 = vector.shape_cast %1274 : vector<8x16xf32> to vector<1x1x8x16xf32>
    tpu.vector_store %arg9[%c0_70, %c7_71, %c0_72, %c0_73], %1277 {strides = array<i32>} : memref<1x13x8x16xf32, #tpu.memory_space<vmem>>, vector<1x1x8x16xf32>,
    %cst_74 = arith.constant 0.000000e+00 : f32
    %1278 = vector.broadcast %cst_74 : f32 to vector<8x16xf32>
    %c8 = arith.constant 8 : index
    %1279 = memref.load %arg7[%c8] : memref<13xf32, #tpu.memory_space<smem>>
    %1280 = vector.broadcast %1279 : f32 to vector<8x16xf32>
    %1281 = arith.addf %1278, %1280 : vector<8x16xf32>
    %c8_75 = arith.constant 8 : index
    %1282 = memref.load %arg6[%c8_75] : memref<312xf32, #tpu.memory_space<smem>>
    %1283 = vector.extract_strided_slice %68 {offsets = [0, 0, 0], sizes = [1, 8, 16], strides = [1, 1, 1]} : vector<16x8x16xf32> to vector<1x8x16xf32>
    %1284 = vector.shape_cast %1283 : vector<1x8x16xf32> to vector<8x16xf32>
    %1285 = vector.broadcast %1282 : f32 to vector<8x16xf32>
    %1286 = arith.mulf %1285, %1284 : vector<8x16xf32>
    %1287 = arith.addf %1281, %1286 : vector<8x16xf32>
    %c21 = arith.constant 21 : index
    %1288 = memref.load %arg6[%c21] : memref<312xf32, #tpu.memory_space<smem>>
    %1289 = vector.extract_strided_slice %68 {offsets = [1, 0, 0], sizes = [1, 8, 16], strides = [1, 1, 1]} : vector<16x8x16xf32> to vector<1x8x16xf32>
    %1290 = vector.shape_cast %1289 : vector<1x8x16xf32> to vector<8x16xf32>
    %1291 = vector.broadcast %1288 : f32 to vector<8x16xf32>
    %1292 = arith.mulf %1291, %1290 : vector<8x16xf32>
    %1293 = arith.addf %1287, %1292 : vector<8x16xf32>
    %c34 = arith.constant 34 : index
    %1294 = memref.load %arg6[%c34] : memref<312xf32, #tpu.memory_space<smem>>
    %1295 = vector.extract_strided_slice %68 {offsets = [2, 0, 0], sizes = [1, 8, 16], strides = [1, 1, 1]} : vector<16x8x16xf32> to vector<1x8x16xf32>
    %1296 = vector.shape_cast %1295 : vector<1x8x16xf32> to vector<8x16xf32>
    %1297 = vector.broadcast %1294 : f32 to vector<8x16xf32>
    %1298 = arith.mulf %1297, %1296 : vector<8x16xf32>
    %1299 = arith.addf %1293, %1298 : vector<8x16xf32>
    %c47 = arith.constant 47 : index
    %1300 = memref.load %arg6[%c47] : memref<312xf32, #tpu.memory_space<smem>>
    %1301 = vector.extract_strided_slice %68 {offsets = [3, 0, 0], sizes = [1, 8, 16], strides = [1, 1, 1]} : vector<16x8x16xf32> to vector<1x8x16xf32>
    %1302 = vector.shape_cast %1301 : vector<1x8x16xf32> to vector<8x16xf32>
    %1303 = vector.broadcast %1300 : f32 to vector<8x16xf32>
    %1304 = arith.mulf %1303, %1302 : vector<8x16xf32>
    %1305 = arith.addf %1299, %1304 : vector<8x16xf32>
    %c60 = arith.constant 60 : index
    %1306 = memref.load %arg6[%c60] : memref<312xf32, #tpu.memory_space<smem>>
    %1307 = vector.extract_strided_slice %68 {offsets = [4, 0, 0], sizes = [1, 8, 16], strides = [1, 1, 1]} : vector<16x8x16xf32> to vector<1x8x16xf32>
    %1308 = vector.shape_cast %1307 : vector<1x8x16xf32> to vector<8x16xf32>
    %1309 = vector.broadcast %1306 : f32 to vector<8x16xf32>
    %1310 = arith.mulf %1309, %1308 : vector<8x16xf32>
    %1311 = arith.addf %1305, %1310 : vector<8x16xf32>
    %c73 = arith.constant 73 : index
    %1312 = memref.load %arg6[%c73] : memref<312xf32, #tpu.memory_space<smem>>
    %1313 = vector.extract_strided_slice %68 {offsets = [5, 0, 0], sizes = [1, 8, 16], strides = [1, 1, 1]} : vector<16x8x16xf32> to vector<1x8x16xf32>
    %1314 = vector.shape_cast %1313 : vector<1x8x16xf32> to vector<8x16xf32>
    %1315 = vector.broadcast %1312 : f32 to vector<8x16xf32>
    %1316 = arith.mulf %1315, %1314 : vector<8x16xf32>
    %1317 = arith.addf %1311, %1316 : vector<8x16xf32>
    %c86 = arith.constant 86 : index
    %1318 = memref.load %arg6[%c86] : memref<312xf32, #tpu.memory_space<smem>>
    %1319 = vector.extract_strided_slice %68 {offsets = [6, 0, 0], sizes = [1, 8, 16], strides = [1, 1, 1]} : vector<16x8x16xf32> to vector<1x8x16xf32>
    %1320 = vector.shape_cast %1319 : vector<1x8x16xf32> to vector<8x16xf32>
    %1321 = vector.broadcast %1318 : f32 to vector<8x16xf32>
    %1322 = arith.mulf %1321, %1320 : vector<8x16xf32>
    %1323 = arith.addf %1317, %1322 : vector<8x16xf32>
    %c99 = arith.constant 99 : index
    %1324 = memref.load %arg6[%c99] : memref<312xf32, #tpu.memory_space<smem>>
    %1325 = vector.extract_strided_slice %68 {offsets = [7, 0, 0], sizes = [1, 8, 16], strides = [1, 1, 1]} : vector<16x8x16xf32> to vector<1x8x16xf32>
    %1326 = vector.shape_cast %1325 : vector<1x8x16xf32> to vector<8x16xf32>
    %1327 = vector.broadcast %1324 : f32 to vector<8x16xf32>
    %1328 = arith.mulf %1327, %1326 : vector<8x16xf32>
    %1329 = arith.addf %1323, %1328 : vector<8x16xf32>
    %c112 = arith.constant 112 : index
    %1330 = memref.load %arg6[%c112] : memref<312xf32, #tpu.memory_space<smem>>
    %1331 = vector.extract_strided_slice %68 {offsets = [8, 0, 0], sizes = [1, 8, 16], strides = [1, 1, 1]} : vector<16x8x16xf32> to vector<1x8x16xf32>
    %1332 = vector.shape_cast %1331 : vector<1x8x16xf32> to vector<8x16xf32>
    %1333 = vector.broadcast %1330 : f32 to vector<8x16xf32>
    %1334 = arith.mulf %1333, %1332 : vector<8x16xf32>
    %1335 = arith.addf %1329, %1334 : vector<8x16xf32>
    %c125 = arith.constant 125 : index
    %1336 = memref.load %arg6[%c125] : memref<312xf32, #tpu.memory_space<smem>>
    %1337 = vector.extract_strided_slice %68 {offsets = [9, 0, 0], sizes = [1, 8, 16], strides = [1, 1, 1]} : vector<16x8x16xf32> to vector<1x8x16xf32>
    %1338 = vector.shape_cast %1337 : vector<1x8x16xf32> to vector<8x16xf32>
    %1339 = vector.broadcast %1336 : f32 to vector<8x16xf32>
    %1340 = arith.mulf %1339, %1338 : vector<8x16xf32>
    %1341 = arith.addf %1335, %1340 : vector<8x16xf32>
    %c138 = arith.constant 138 : index
    %1342 = memref.load %arg6[%c138] : memref<312xf32, #tpu.memory_space<smem>>
    %1343 = vector.extract_strided_slice %68 {offsets = [10, 0, 0], sizes = [1, 8, 16], strides = [1, 1, 1]} : vector<16x8x16xf32> to vector<1x8x16xf32>
    %1344 = vector.shape_cast %1343 : vector<1x8x16xf32> to vector<8x16xf32>
    %1345 = vector.broadcast %1342 : f32 to vector<8x16xf32>
    %1346 = arith.mulf %1345, %1344 : vector<8x16xf32>
    %1347 = arith.addf %1341, %1346 : vector<8x16xf32>
    %c151 = arith.constant 151 : index
    %1348 = memref.load %arg6[%c151] : memref<312xf32, #tpu.memory_space<smem>>
    %1349 = vector.extract_strided_slice %68 {offsets = [11, 0, 0], sizes = [1, 8, 16], strides = [1, 1, 1]} : vector<16x8x16xf32> to vector<1x8x16xf32>
    %1350 = vector.shape_cast %1349 : vector<1x8x16xf32> to vector<8x16xf32>
    %1351 = vector.broadcast %1348 : f32 to vector<8x16xf32>
    %1352 = arith.mulf %1351, %1350 : vector<8x16xf32>
    %1353 = arith.addf %1347, %1352 : vector<8x16xf32>
    %c164 = arith.constant 164 : index
    %1354 = memref.load %arg6[%c164] : memref<312xf32, #tpu.memory_space<smem>>
    %1355 = vector.extract_strided_slice %68 {offsets = [12, 0, 0], sizes = [1, 8, 16], strides = [1, 1, 1]} : vector<16x8x16xf32> to vector<1x8x16xf32>
    %1356 = vector.shape_cast %1355 : vector<1x8x16xf32> to vector<8x16xf32>
    %1357 = vector.broadcast %1354 : f32 to vector<8x16xf32>
    %1358 = arith.mulf %1357, %1356 : vector<8x16xf32>
    %1359 = arith.addf %1353, %1358 : vector<8x16xf32>
    %c177 = arith.constant 177 : index
    %1360 = memref.load %arg6[%c177] : memref<312xf32, #tpu.memory_space<smem>>
    %1361 = vector.extract_strided_slice %68 {offsets = [13, 0, 0], sizes = [1, 8, 16], strides = [1, 1, 1]} : vector<16x8x16xf32> to vector<1x8x16xf32>
    %1362 = vector.shape_cast %1361 : vector<1x8x16xf32> to vector<8x16xf32>
    %1363 = vector.broadcast %1360 : f32 to vector<8x16xf32>
    %1364 = arith.mulf %1363, %1362 : vector<8x16xf32>
    %1365 = arith.addf %1359, %1364 : vector<8x16xf32>
    %c190 = arith.constant 190 : index
    %1366 = memref.load %arg6[%c190] : memref<312xf32, #tpu.memory_space<smem>>
    %1367 = vector.extract_strided_slice %68 {offsets = [14, 0, 0], sizes = [1, 8, 16], strides = [1, 1, 1]} : vector<16x8x16xf32> to vector<1x8x16xf32>
    %1368 = vector.shape_cast %1367 : vector<1x8x16xf32> to vector<8x16xf32>
    %1369 = vector.broadcast %1366 : f32 to vector<8x16xf32>
    %1370 = arith.mulf %1369, %1368 : vector<8x16xf32>
    %1371 = arith.addf %1365, %1370 : vector<8x16xf32>
    %c203 = arith.constant 203 : index
    %1372 = memref.load %arg6[%c203] : memref<312xf32, #tpu.memory_space<smem>>
    %1373 = vector.extract_strided_slice %68 {offsets = [15, 0, 0], sizes = [1, 8, 16], strides = [1, 1, 1]} : vector<16x8x16xf32> to vector<1x8x16xf32>
    %1374 = vector.shape_cast %1373 : vector<1x8x16xf32> to vector<8x16xf32>
    %1375 = vector.broadcast %1372 : f32 to vector<8x16xf32>
    %1376 = arith.mulf %1375, %1374 : vector<8x16xf32>
    %1377 = arith.addf %1371, %1376 : vector<8x16xf32>
    %c216 = arith.constant 216 : index
    %1378 = memref.load %arg6[%c216] : memref<312xf32, #tpu.memory_space<smem>>
    %1379 = vector.extract_strided_slice %69 {offsets = [0, 0, 0], sizes = [1, 8, 16], strides = [1, 1, 1]} : vector<8x8x16xf32> to vector<1x8x16xf32>
    %1380 = vector.shape_cast %1379 : vector<1x8x16xf32> to vector<8x16xf32>
    %1381 = vector.broadcast %1378 : f32 to vector<8x16xf32>
    %1382 = arith.mulf %1381, %1380 : vector<8x16xf32>
    %1383 = arith.addf %1377, %1382 : vector<8x16xf32>
    %c229 = arith.constant 229 : index
    %1384 = memref.load %arg6[%c229] : memref<312xf32, #tpu.memory_space<smem>>
    %1385 = vector.extract_strided_slice %69 {offsets = [1, 0, 0], sizes = [1, 8, 16], strides = [1, 1, 1]} : vector<8x8x16xf32> to vector<1x8x16xf32>
    %1386 = vector.shape_cast %1385 : vector<1x8x16xf32> to vector<8x16xf32>
    %1387 = vector.broadcast %1384 : f32 to vector<8x16xf32>
    %1388 = arith.mulf %1387, %1386 : vector<8x16xf32>
    %1389 = arith.addf %1383, %1388 : vector<8x16xf32>
    %c242 = arith.constant 242 : index
    %1390 = memref.load %arg6[%c242] : memref<312xf32, #tpu.memory_space<smem>>
    %1391 = vector.extract_strided_slice %69 {offsets = [2, 0, 0], sizes = [1, 8, 16], strides = [1, 1, 1]} : vector<8x8x16xf32> to vector<1x8x16xf32>
    %1392 = vector.shape_cast %1391 : vector<1x8x16xf32> to vector<8x16xf32>
    %1393 = vector.broadcast %1390 : f32 to vector<8x16xf32>
    %1394 = arith.mulf %1393, %1392 : vector<8x16xf32>
    %1395 = arith.addf %1389, %1394 : vector<8x16xf32>
    %c255 = arith.constant 255 : index
    %1396 = memref.load %arg6[%c255] : memref<312xf32, #tpu.memory_space<smem>>
    %1397 = vector.extract_strided_slice %69 {offsets = [3, 0, 0], sizes = [1, 8, 16], strides = [1, 1, 1]} : vector<8x8x16xf32> to vector<1x8x16xf32>
    %1398 = vector.shape_cast %1397 : vector<1x8x16xf32> to vector<8x16xf32>
    %1399 = vector.broadcast %1396 : f32 to vector<8x16xf32>
    %1400 = arith.mulf %1399, %1398 : vector<8x16xf32>
    %1401 = arith.addf %1395, %1400 : vector<8x16xf32>
    %c268 = arith.constant 268 : index
    %1402 = memref.load %arg6[%c268] : memref<312xf32, #tpu.memory_space<smem>>
    %1403 = vector.extract_strided_slice %69 {offsets = [4, 0, 0], sizes = [1, 8, 16], strides = [1, 1, 1]} : vector<8x8x16xf32> to vector<1x8x16xf32>
    %1404 = vector.shape_cast %1403 : vector<1x8x16xf32> to vector<8x16xf32>
    %1405 = vector.broadcast %1402 : f32 to vector<8x16xf32>
    %1406 = arith.mulf %1405, %1404 : vector<8x16xf32>
    %1407 = arith.addf %1401, %1406 : vector<8x16xf32>
    %c281 = arith.constant 281 : index
    %1408 = memref.load %arg6[%c281] : memref<312xf32, #tpu.memory_space<smem>>
    %1409 = vector.extract_strided_slice %69 {offsets = [5, 0, 0], sizes = [1, 8, 16], strides = [1, 1, 1]} : vector<8x8x16xf32> to vector<1x8x16xf32>
    %1410 = vector.shape_cast %1409 : vector<1x8x16xf32> to vector<8x16xf32>
    %1411 = vector.broadcast %1408 : f32 to vector<8x16xf32>
    %1412 = arith.mulf %1411, %1410 : vector<8x16xf32>
    %1413 = arith.addf %1407, %1412 : vector<8x16xf32>
    %c294 = arith.constant 294 : index
    %1414 = memref.load %arg6[%c294] : memref<312xf32, #tpu.memory_space<smem>>
    %1415 = vector.extract_strided_slice %69 {offsets = [6, 0, 0], sizes = [1, 8, 16], strides = [1, 1, 1]} : vector<8x8x16xf32> to vector<1x8x16xf32>
    %1416 = vector.shape_cast %1415 : vector<1x8x16xf32> to vector<8x16xf32>
    %1417 = vector.broadcast %1414 : f32 to vector<8x16xf32>
    %1418 = arith.mulf %1417, %1416 : vector<8x16xf32>
    %1419 = arith.addf %1413, %1418 : vector<8x16xf32>
    %c307 = arith.constant 307 : index
    %1420 = memref.load %arg6[%c307] : memref<312xf32, #tpu.memory_space<smem>>
    %1421 = vector.extract_strided_slice %69 {offsets = [7, 0, 0], sizes = [1, 8, 16], strides = [1, 1, 1]} : vector<8x8x16xf32> to vector<1x8x16xf32>
    %1422 = vector.shape_cast %1421 : vector<1x8x16xf32> to vector<8x16xf32>
    %1423 = vector.broadcast %1420 : f32 to vector<8x16xf32>
    %1424 = arith.mulf %1423, %1422 : vector<8x16xf32>
    %1425 = arith.addf %1419, %1424 : vector<8x16xf32>
    %c0_76 = arith.constant 0 : index
    %c8_77 = arith.constant 8 : index
    %c0_78 = arith.constant 0 : index
    %c0_79 = arith.constant 0 : index
    %1426 = vector.load %arg9[%c0_76, %c8_77, %c0_78, %c0_79] : memref<1x13x8x16xf32, #tpu.memory_space<vmem>>, vector<1x1x8x16xf32>
    %1427 = vector.shape_cast %1426 : vector<1x1x8x16xf32> to vector<8x16xf32>
    %1428 = vector.shape_cast %1425 : vector<8x16xf32> to vector<1x1x8x16xf32>
    tpu.vector_store %arg9[%c0_76, %c8_77, %c0_78, %c0_79], %1428 {strides = array<i32>} : memref<1x13x8x16xf32, #tpu.memory_space<vmem>>, vector<1x1x8x16xf32>,
    %cst_80 = arith.constant 0.000000e+00 : f32
    %1429 = vector.broadcast %cst_80 : f32 to vector<8x16xf32>
    %c9 = arith.constant 9 : index
    %1430 = memref.load %arg7[%c9] : memref<13xf32, #tpu.memory_space<smem>>
    %1431 = vector.broadcast %1430 : f32 to vector<8x16xf32>
    %1432 = arith.addf %1429, %1431 : vector<8x16xf32>
    %c9_81 = arith.constant 9 : index
    %1433 = memref.load %arg6[%c9_81] : memref<312xf32, #tpu.memory_space<smem>>
    %1434 = vector.extract_strided_slice %68 {offsets = [0, 0, 0], sizes = [1, 8, 16], strides = [1, 1, 1]} : vector<16x8x16xf32> to vector<1x8x16xf32>
    %1435 = vector.shape_cast %1434 : vector<1x8x16xf32> to vector<8x16xf32>
    %1436 = vector.broadcast %1433 : f32 to vector<8x16xf32>
    %1437 = arith.mulf %1436, %1435 : vector<8x16xf32>
    %1438 = arith.addf %1432, %1437 : vector<8x16xf32>
    %c22 = arith.constant 22 : index
    %1439 = memref.load %arg6[%c22] : memref<312xf32, #tpu.memory_space<smem>>
    %1440 = vector.extract_strided_slice %68 {offsets = [1, 0, 0], sizes = [1, 8, 16], strides = [1, 1, 1]} : vector<16x8x16xf32> to vector<1x8x16xf32>
    %1441 = vector.shape_cast %1440 : vector<1x8x16xf32> to vector<8x16xf32>
    %1442 = vector.broadcast %1439 : f32 to vector<8x16xf32>
    %1443 = arith.mulf %1442, %1441 : vector<8x16xf32>
    %1444 = arith.addf %1438, %1443 : vector<8x16xf32>
    %c35 = arith.constant 35 : index
    %1445 = memref.load %arg6[%c35] : memref<312xf32, #tpu.memory_space<smem>>
    %1446 = vector.extract_strided_slice %68 {offsets = [2, 0, 0], sizes = [1, 8, 16], strides = [1, 1, 1]} : vector<16x8x16xf32> to vector<1x8x16xf32>
    %1447 = vector.shape_cast %1446 : vector<1x8x16xf32> to vector<8x16xf32>
    %1448 = vector.broadcast %1445 : f32 to vector<8x16xf32>
    %1449 = arith.mulf %1448, %1447 : vector<8x16xf32>
    %1450 = arith.addf %1444, %1449 : vector<8x16xf32>
    %c48 = arith.constant 48 : index
    %1451 = memref.load %arg6[%c48] : memref<312xf32, #tpu.memory_space<smem>>
    %1452 = vector.extract_strided_slice %68 {offsets = [3, 0, 0], sizes = [1, 8, 16], strides = [1, 1, 1]} : vector<16x8x16xf32> to vector<1x8x16xf32>
    %1453 = vector.shape_cast %1452 : vector<1x8x16xf32> to vector<8x16xf32>
    %1454 = vector.broadcast %1451 : f32 to vector<8x16xf32>
    %1455 = arith.mulf %1454, %1453 : vector<8x16xf32>
    %1456 = arith.addf %1450, %1455 : vector<8x16xf32>
    %c61 = arith.constant 61 : index
    %1457 = memref.load %arg6[%c61] : memref<312xf32, #tpu.memory_space<smem>>
    %1458 = vector.extract_strided_slice %68 {offsets = [4, 0, 0], sizes = [1, 8, 16], strides = [1, 1, 1]} : vector<16x8x16xf32> to vector<1x8x16xf32>
    %1459 = vector.shape_cast %1458 : vector<1x8x16xf32> to vector<8x16xf32>
    %1460 = vector.broadcast %1457 : f32 to vector<8x16xf32>
    %1461 = arith.mulf %1460, %1459 : vector<8x16xf32>
    %1462 = arith.addf %1456, %1461 : vector<8x16xf32>
    %c74 = arith.constant 74 : index
    %1463 = memref.load %arg6[%c74] : memref<312xf32, #tpu.memory_space<smem>>
    %1464 = vector.extract_strided_slice %68 {offsets = [5, 0, 0], sizes = [1, 8, 16], strides = [1, 1, 1]} : vector<16x8x16xf32> to vector<1x8x16xf32>
    %1465 = vector.shape_cast %1464 : vector<1x8x16xf32> to vector<8x16xf32>
    %1466 = vector.broadcast %1463 : f32 to vector<8x16xf32>
    %1467 = arith.mulf %1466, %1465 : vector<8x16xf32>
    %1468 = arith.addf %1462, %1467 : vector<8x16xf32>
    %c87 = arith.constant 87 : index
    %1469 = memref.load %arg6[%c87] : memref<312xf32, #tpu.memory_space<smem>>
    %1470 = vector.extract_strided_slice %68 {offsets = [6, 0, 0], sizes = [1, 8, 16], strides = [1, 1, 1]} : vector<16x8x16xf32> to vector<1x8x16xf32>
    %1471 = vector.shape_cast %1470 : vector<1x8x16xf32> to vector<8x16xf32>
    %1472 = vector.broadcast %1469 : f32 to vector<8x16xf32>
    %1473 = arith.mulf %1472, %1471 : vector<8x16xf32>
    %1474 = arith.addf %1468, %1473 : vector<8x16xf32>
    %c100 = arith.constant 100 : index
    %1475 = memref.load %arg6[%c100] : memref<312xf32, #tpu.memory_space<smem>>
    %1476 = vector.extract_strided_slice %68 {offsets = [7, 0, 0], sizes = [1, 8, 16], strides = [1, 1, 1]} : vector<16x8x16xf32> to vector<1x8x16xf32>
    %1477 = vector.shape_cast %1476 : vector<1x8x16xf32> to vector<8x16xf32>
    %1478 = vector.broadcast %1475 : f32 to vector<8x16xf32>
    %1479 = arith.mulf %1478, %1477 : vector<8x16xf32>
    %1480 = arith.addf %1474, %1479 : vector<8x16xf32>
    %c113 = arith.constant 113 : index
    %1481 = memref.load %arg6[%c113] : memref<312xf32, #tpu.memory_space<smem>>
    %1482 = vector.extract_strided_slice %68 {offsets = [8, 0, 0], sizes = [1, 8, 16], strides = [1, 1, 1]} : vector<16x8x16xf32> to vector<1x8x16xf32>
    %1483 = vector.shape_cast %1482 : vector<1x8x16xf32> to vector<8x16xf32>
    %1484 = vector.broadcast %1481 : f32 to vector<8x16xf32>
    %1485 = arith.mulf %1484, %1483 : vector<8x16xf32>
    %1486 = arith.addf %1480, %1485 : vector<8x16xf32>
    %c126 = arith.constant 126 : index
    %1487 = memref.load %arg6[%c126] : memref<312xf32, #tpu.memory_space<smem>>
    %1488 = vector.extract_strided_slice %68 {offsets = [9, 0, 0], sizes = [1, 8, 16], strides = [1, 1, 1]} : vector<16x8x16xf32> to vector<1x8x16xf32>
    %1489 = vector.shape_cast %1488 : vector<1x8x16xf32> to vector<8x16xf32>
    %1490 = vector.broadcast %1487 : f32 to vector<8x16xf32>
    %1491 = arith.mulf %1490, %1489 : vector<8x16xf32>
    %1492 = arith.addf %1486, %1491 : vector<8x16xf32>
    %c139 = arith.constant 139 : index
    %1493 = memref.load %arg6[%c139] : memref<312xf32, #tpu.memory_space<smem>>
    %1494 = vector.extract_strided_slice %68 {offsets = [10, 0, 0], sizes = [1, 8, 16], strides = [1, 1, 1]} : vector<16x8x16xf32> to vector<1x8x16xf32>
    %1495 = vector.shape_cast %1494 : vector<1x8x16xf32> to vector<8x16xf32>
    %1496 = vector.broadcast %1493 : f32 to vector<8x16xf32>
    %1497 = arith.mulf %1496, %1495 : vector<8x16xf32>
    %1498 = arith.addf %1492, %1497 : vector<8x16xf32>
    %c152 = arith.constant 152 : index
    %1499 = memref.load %arg6[%c152] : memref<312xf32, #tpu.memory_space<smem>>
    %1500 = vector.extract_strided_slice %68 {offsets = [11, 0, 0], sizes = [1, 8, 16], strides = [1, 1, 1]} : vector<16x8x16xf32> to vector<1x8x16xf32>
    %1501 = vector.shape_cast %1500 : vector<1x8x16xf32> to vector<8x16xf32>
    %1502 = vector.broadcast %1499 : f32 to vector<8x16xf32>
    %1503 = arith.mulf %1502, %1501 : vector<8x16xf32>
    %1504 = arith.addf %1498, %1503 : vector<8x16xf32>
    %c165 = arith.constant 165 : index
    %1505 = memref.load %arg6[%c165] : memref<312xf32, #tpu.memory_space<smem>>
    %1506 = vector.extract_strided_slice %68 {offsets = [12, 0, 0], sizes = [1, 8, 16], strides = [1, 1, 1]} : vector<16x8x16xf32> to vector<1x8x16xf32>
    %1507 = vector.shape_cast %1506 : vector<1x8x16xf32> to vector<8x16xf32>
    %1508 = vector.broadcast %1505 : f32 to vector<8x16xf32>
    %1509 = arith.mulf %1508, %1507 : vector<8x16xf32>
    %1510 = arith.addf %1504, %1509 : vector<8x16xf32>
    %c178 = arith.constant 178 : index
    %1511 = memref.load %arg6[%c178] : memref<312xf32, #tpu.memory_space<smem>>
    %1512 = vector.extract_strided_slice %68 {offsets = [13, 0, 0], sizes = [1, 8, 16], strides = [1, 1, 1]} : vector<16x8x16xf32> to vector<1x8x16xf32>
    %1513 = vector.shape_cast %1512 : vector<1x8x16xf32> to vector<8x16xf32>
    %1514 = vector.broadcast %1511 : f32 to vector<8x16xf32>
    %1515 = arith.mulf %1514, %1513 : vector<8x16xf32>
    %1516 = arith.addf %1510, %1515 : vector<8x16xf32>
    %c191 = arith.constant 191 : index
    %1517 = memref.load %arg6[%c191] : memref<312xf32, #tpu.memory_space<smem>>
    %1518 = vector.extract_strided_slice %68 {offsets = [14, 0, 0], sizes = [1, 8, 16], strides = [1, 1, 1]} : vector<16x8x16xf32> to vector<1x8x16xf32>
    %1519 = vector.shape_cast %1518 : vector<1x8x16xf32> to vector<8x16xf32>
    %1520 = vector.broadcast %1517 : f32 to vector<8x16xf32>
    %1521 = arith.mulf %1520, %1519 : vector<8x16xf32>
    %1522 = arith.addf %1516, %1521 : vector<8x16xf32>
    %c204 = arith.constant 204 : index
    %1523 = memref.load %arg6[%c204] : memref<312xf32, #tpu.memory_space<smem>>
    %1524 = vector.extract_strided_slice %68 {offsets = [15, 0, 0], sizes = [1, 8, 16], strides = [1, 1, 1]} : vector<16x8x16xf32> to vector<1x8x16xf32>
    %1525 = vector.shape_cast %1524 : vector<1x8x16xf32> to vector<8x16xf32>
    %1526 = vector.broadcast %1523 : f32 to vector<8x16xf32>
    %1527 = arith.mulf %1526, %1525 : vector<8x16xf32>
    %1528 = arith.addf %1522, %1527 : vector<8x16xf32>
    %c217 = arith.constant 217 : index
    %1529 = memref.load %arg6[%c217] : memref<312xf32, #tpu.memory_space<smem>>
    %1530 = vector.extract_strided_slice %69 {offsets = [0, 0, 0], sizes = [1, 8, 16], strides = [1, 1, 1]} : vector<8x8x16xf32> to vector<1x8x16xf32>
    %1531 = vector.shape_cast %1530 : vector<1x8x16xf32> to vector<8x16xf32>
    %1532 = vector.broadcast %1529 : f32 to vector<8x16xf32>
    %1533 = arith.mulf %1532, %1531 : vector<8x16xf32>
    %1534 = arith.addf %1528, %1533 : vector<8x16xf32>
    %c230 = arith.constant 230 : index
    %1535 = memref.load %arg6[%c230] : memref<312xf32, #tpu.memory_space<smem>>
    %1536 = vector.extract_strided_slice %69 {offsets = [1, 0, 0], sizes = [1, 8, 16], strides = [1, 1, 1]} : vector<8x8x16xf32> to vector<1x8x16xf32>
    %1537 = vector.shape_cast %1536 : vector<1x8x16xf32> to vector<8x16xf32>
    %1538 = vector.broadcast %1535 : f32 to vector<8x16xf32>
    %1539 = arith.mulf %1538, %1537 : vector<8x16xf32>
    %1540 = arith.addf %1534, %1539 : vector<8x16xf32>
    %c243 = arith.constant 243 : index
    %1541 = memref.load %arg6[%c243] : memref<312xf32, #tpu.memory_space<smem>>
    %1542 = vector.extract_strided_slice %69 {offsets = [2, 0, 0], sizes = [1, 8, 16], strides = [1, 1, 1]} : vector<8x8x16xf32> to vector<1x8x16xf32>
    %1543 = vector.shape_cast %1542 : vector<1x8x16xf32> to vector<8x16xf32>
    %1544 = vector.broadcast %1541 : f32 to vector<8x16xf32>
    %1545 = arith.mulf %1544, %1543 : vector<8x16xf32>
    %1546 = arith.addf %1540, %1545 : vector<8x16xf32>
    %c256 = arith.constant 256 : index
    %1547 = memref.load %arg6[%c256] : memref<312xf32, #tpu.memory_space<smem>>
    %1548 = vector.extract_strided_slice %69 {offsets = [3, 0, 0], sizes = [1, 8, 16], strides = [1, 1, 1]} : vector<8x8x16xf32> to vector<1x8x16xf32>
    %1549 = vector.shape_cast %1548 : vector<1x8x16xf32> to vector<8x16xf32>
    %1550 = vector.broadcast %1547 : f32 to vector<8x16xf32>
    %1551 = arith.mulf %1550, %1549 : vector<8x16xf32>
    %1552 = arith.addf %1546, %1551 : vector<8x16xf32>
    %c269 = arith.constant 269 : index
    %1553 = memref.load %arg6[%c269] : memref<312xf32, #tpu.memory_space<smem>>
    %1554 = vector.extract_strided_slice %69 {offsets = [4, 0, 0], sizes = [1, 8, 16], strides = [1, 1, 1]} : vector<8x8x16xf32> to vector<1x8x16xf32>
    %1555 = vector.shape_cast %1554 : vector<1x8x16xf32> to vector<8x16xf32>
    %1556 = vector.broadcast %1553 : f32 to vector<8x16xf32>
    %1557 = arith.mulf %1556, %1555 : vector<8x16xf32>
    %1558 = arith.addf %1552, %1557 : vector<8x16xf32>
    %c282 = arith.constant 282 : index
    %1559 = memref.load %arg6[%c282] : memref<312xf32, #tpu.memory_space<smem>>
    %1560 = vector.extract_strided_slice %69 {offsets = [5, 0, 0], sizes = [1, 8, 16], strides = [1, 1, 1]} : vector<8x8x16xf32> to vector<1x8x16xf32>
    %1561 = vector.shape_cast %1560 : vector<1x8x16xf32> to vector<8x16xf32>
    %1562 = vector.broadcast %1559 : f32 to vector<8x16xf32>
    %1563 = arith.mulf %1562, %1561 : vector<8x16xf32>
    %1564 = arith.addf %1558, %1563 : vector<8x16xf32>
    %c295 = arith.constant 295 : index
    %1565 = memref.load %arg6[%c295] : memref<312xf32, #tpu.memory_space<smem>>
    %1566 = vector.extract_strided_slice %69 {offsets = [6, 0, 0], sizes = [1, 8, 16], strides = [1, 1, 1]} : vector<8x8x16xf32> to vector<1x8x16xf32>
    %1567 = vector.shape_cast %1566 : vector<1x8x16xf32> to vector<8x16xf32>
    %1568 = vector.broadcast %1565 : f32 to vector<8x16xf32>
    %1569 = arith.mulf %1568, %1567 : vector<8x16xf32>
    %1570 = arith.addf %1564, %1569 : vector<8x16xf32>
    %c308 = arith.constant 308 : index
    %1571 = memref.load %arg6[%c308] : memref<312xf32, #tpu.memory_space<smem>>
    %1572 = vector.extract_strided_slice %69 {offsets = [7, 0, 0], sizes = [1, 8, 16], strides = [1, 1, 1]} : vector<8x8x16xf32> to vector<1x8x16xf32>
    %1573 = vector.shape_cast %1572 : vector<1x8x16xf32> to vector<8x16xf32>
    %1574 = vector.broadcast %1571 : f32 to vector<8x16xf32>
    %1575 = arith.mulf %1574, %1573 : vector<8x16xf32>
    %1576 = arith.addf %1570, %1575 : vector<8x16xf32>
    %c0_82 = arith.constant 0 : index
    %c9_83 = arith.constant 9 : index
    %c0_84 = arith.constant 0 : index
    %c0_85 = arith.constant 0 : index
    %1577 = vector.load %arg9[%c0_82, %c9_83, %c0_84, %c0_85] : memref<1x13x8x16xf32, #tpu.memory_space<vmem>>, vector<1x1x8x16xf32>
    %1578 = vector.shape_cast %1577 : vector<1x1x8x16xf32> to vector<8x16xf32>
    %1579 = vector.shape_cast %1576 : vector<8x16xf32> to vector<1x1x8x16xf32>
    tpu.vector_store %arg9[%c0_82, %c9_83, %c0_84, %c0_85], %1579 {strides = array<i32>} : memref<1x13x8x16xf32, #tpu.memory_space<vmem>>, vector<1x1x8x16xf32>,
    %cst_86 = arith.constant 0.000000e+00 : f32
    %1580 = vector.broadcast %cst_86 : f32 to vector<8x16xf32>
    %c10 = arith.constant 10 : index
    %1581 = memref.load %arg7[%c10] : memref<13xf32, #tpu.memory_space<smem>>
    %1582 = vector.broadcast %1581 : f32 to vector<8x16xf32>
    %1583 = arith.addf %1580, %1582 : vector<8x16xf32>
    %c10_87 = arith.constant 10 : index
    %1584 = memref.load %arg6[%c10_87] : memref<312xf32, #tpu.memory_space<smem>>
    %1585 = vector.extract_strided_slice %68 {offsets = [0, 0, 0], sizes = [1, 8, 16], strides = [1, 1, 1]} : vector<16x8x16xf32> to vector<1x8x16xf32>
    %1586 = vector.shape_cast %1585 : vector<1x8x16xf32> to vector<8x16xf32>
    %1587 = vector.broadcast %1584 : f32 to vector<8x16xf32>
    %1588 = arith.mulf %1587, %1586 : vector<8x16xf32>
    %1589 = arith.addf %1583, %1588 : vector<8x16xf32>
    %c23 = arith.constant 23 : index
    %1590 = memref.load %arg6[%c23] : memref<312xf32, #tpu.memory_space<smem>>
    %1591 = vector.extract_strided_slice %68 {offsets = [1, 0, 0], sizes = [1, 8, 16], strides = [1, 1, 1]} : vector<16x8x16xf32> to vector<1x8x16xf32>
    %1592 = vector.shape_cast %1591 : vector<1x8x16xf32> to vector<8x16xf32>
    %1593 = vector.broadcast %1590 : f32 to vector<8x16xf32>
    %1594 = arith.mulf %1593, %1592 : vector<8x16xf32>
    %1595 = arith.addf %1589, %1594 : vector<8x16xf32>
    %c36 = arith.constant 36 : index
    %1596 = memref.load %arg6[%c36] : memref<312xf32, #tpu.memory_space<smem>>
    %1597 = vector.extract_strided_slice %68 {offsets = [2, 0, 0], sizes = [1, 8, 16], strides = [1, 1, 1]} : vector<16x8x16xf32> to vector<1x8x16xf32>
    %1598 = vector.shape_cast %1597 : vector<1x8x16xf32> to vector<8x16xf32>
    %1599 = vector.broadcast %1596 : f32 to vector<8x16xf32>
    %1600 = arith.mulf %1599, %1598 : vector<8x16xf32>
    %1601 = arith.addf %1595, %1600 : vector<8x16xf32>
    %c49 = arith.constant 49 : index
    %1602 = memref.load %arg6[%c49] : memref<312xf32, #tpu.memory_space<smem>>
    %1603 = vector.extract_strided_slice %68 {offsets = [3, 0, 0], sizes = [1, 8, 16], strides = [1, 1, 1]} : vector<16x8x16xf32> to vector<1x8x16xf32>
    %1604 = vector.shape_cast %1603 : vector<1x8x16xf32> to vector<8x16xf32>
    %1605 = vector.broadcast %1602 : f32 to vector<8x16xf32>
    %1606 = arith.mulf %1605, %1604 : vector<8x16xf32>
    %1607 = arith.addf %1601, %1606 : vector<8x16xf32>
    %c62 = arith.constant 62 : index
    %1608 = memref.load %arg6[%c62] : memref<312xf32, #tpu.memory_space<smem>>
    %1609 = vector.extract_strided_slice %68 {offsets = [4, 0, 0], sizes = [1, 8, 16], strides = [1, 1, 1]} : vector<16x8x16xf32> to vector<1x8x16xf32>
    %1610 = vector.shape_cast %1609 : vector<1x8x16xf32> to vector<8x16xf32>
    %1611 = vector.broadcast %1608 : f32 to vector<8x16xf32>
    %1612 = arith.mulf %1611, %1610 : vector<8x16xf32>
    %1613 = arith.addf %1607, %1612 : vector<8x16xf32>
    %c75 = arith.constant 75 : index
    %1614 = memref.load %arg6[%c75] : memref<312xf32, #tpu.memory_space<smem>>
    %1615 = vector.extract_strided_slice %68 {offsets = [5, 0, 0], sizes = [1, 8, 16], strides = [1, 1, 1]} : vector<16x8x16xf32> to vector<1x8x16xf32>
    %1616 = vector.shape_cast %1615 : vector<1x8x16xf32> to vector<8x16xf32>
    %1617 = vector.broadcast %1614 : f32 to vector<8x16xf32>
    %1618 = arith.mulf %1617, %1616 : vector<8x16xf32>
    %1619 = arith.addf %1613, %1618 : vector<8x16xf32>
    %c88 = arith.constant 88 : index
    %1620 = memref.load %arg6[%c88] : memref<312xf32, #tpu.memory_space<smem>>
    %1621 = vector.extract_strided_slice %68 {offsets = [6, 0, 0], sizes = [1, 8, 16], strides = [1, 1, 1]} : vector<16x8x16xf32> to vector<1x8x16xf32>
    %1622 = vector.shape_cast %1621 : vector<1x8x16xf32> to vector<8x16xf32>
    %1623 = vector.broadcast %1620 : f32 to vector<8x16xf32>
    %1624 = arith.mulf %1623, %1622 : vector<8x16xf32>
    %1625 = arith.addf %1619, %1624 : vector<8x16xf32>
    %c101 = arith.constant 101 : index
    %1626 = memref.load %arg6[%c101] : memref<312xf32, #tpu.memory_space<smem>>
    %1627 = vector.extract_strided_slice %68 {offsets = [7, 0, 0], sizes = [1, 8, 16], strides = [1, 1, 1]} : vector<16x8x16xf32> to vector<1x8x16xf32>
    %1628 = vector.shape_cast %1627 : vector<1x8x16xf32> to vector<8x16xf32>
    %1629 = vector.broadcast %1626 : f32 to vector<8x16xf32>
    %1630 = arith.mulf %1629, %1628 : vector<8x16xf32>
    %1631 = arith.addf %1625, %1630 : vector<8x16xf32>
    %c114 = arith.constant 114 : index
    %1632 = memref.load %arg6[%c114] : memref<312xf32, #tpu.memory_space<smem>>
    %1633 = vector.extract_strided_slice %68 {offsets = [8, 0, 0], sizes = [1, 8, 16], strides = [1, 1, 1]} : vector<16x8x16xf32> to vector<1x8x16xf32>
    %1634 = vector.shape_cast %1633 : vector<1x8x16xf32> to vector<8x16xf32>
    %1635 = vector.broadcast %1632 : f32 to vector<8x16xf32>
    %1636 = arith.mulf %1635, %1634 : vector<8x16xf32>
    %1637 = arith.addf %1631, %1636 : vector<8x16xf32>
    %c127 = arith.constant 127 : index
    %1638 = memref.load %arg6[%c127] : memref<312xf32, #tpu.memory_space<smem>>
    %1639 = vector.extract_strided_slice %68 {offsets = [9, 0, 0], sizes = [1, 8, 16], strides = [1, 1, 1]} : vector<16x8x16xf32> to vector<1x8x16xf32>
    %1640 = vector.shape_cast %1639 : vector<1x8x16xf32> to vector<8x16xf32>
    %1641 = vector.broadcast %1638 : f32 to vector<8x16xf32>
    %1642 = arith.mulf %1641, %1640 : vector<8x16xf32>
    %1643 = arith.addf %1637, %1642 : vector<8x16xf32>
    %c140 = arith.constant 140 : index
    %1644 = memref.load %arg6[%c140] : memref<312xf32, #tpu.memory_space<smem>>
    %1645 = vector.extract_strided_slice %68 {offsets = [10, 0, 0], sizes = [1, 8, 16], strides = [1, 1, 1]} : vector<16x8x16xf32> to vector<1x8x16xf32>
    %1646 = vector.shape_cast %1645 : vector<1x8x16xf32> to vector<8x16xf32>
    %1647 = vector.broadcast %1644 : f32 to vector<8x16xf32>
    %1648 = arith.mulf %1647, %1646 : vector<8x16xf32>
    %1649 = arith.addf %1643, %1648 : vector<8x16xf32>
    %c153 = arith.constant 153 : index
    %1650 = memref.load %arg6[%c153] : memref<312xf32, #tpu.memory_space<smem>>
    %1651 = vector.extract_strided_slice %68 {offsets = [11, 0, 0], sizes = [1, 8, 16], strides = [1, 1, 1]} : vector<16x8x16xf32> to vector<1x8x16xf32>
    %1652 = vector.shape_cast %1651 : vector<1x8x16xf32> to vector<8x16xf32>
    %1653 = vector.broadcast %1650 : f32 to vector<8x16xf32>
    %1654 = arith.mulf %1653, %1652 : vector<8x16xf32>
    %1655 = arith.addf %1649, %1654 : vector<8x16xf32>
    %c166 = arith.constant 166 : index
    %1656 = memref.load %arg6[%c166] : memref<312xf32, #tpu.memory_space<smem>>
    %1657 = vector.extract_strided_slice %68 {offsets = [12, 0, 0], sizes = [1, 8, 16], strides = [1, 1, 1]} : vector<16x8x16xf32> to vector<1x8x16xf32>
    %1658 = vector.shape_cast %1657 : vector<1x8x16xf32> to vector<8x16xf32>
    %1659 = vector.broadcast %1656 : f32 to vector<8x16xf32>
    %1660 = arith.mulf %1659, %1658 : vector<8x16xf32>
    %1661 = arith.addf %1655, %1660 : vector<8x16xf32>
    %c179 = arith.constant 179 : index
    %1662 = memref.load %arg6[%c179] : memref<312xf32, #tpu.memory_space<smem>>
    %1663 = vector.extract_strided_slice %68 {offsets = [13, 0, 0], sizes = [1, 8, 16], strides = [1, 1, 1]} : vector<16x8x16xf32> to vector<1x8x16xf32>
    %1664 = vector.shape_cast %1663 : vector<1x8x16xf32> to vector<8x16xf32>
    %1665 = vector.broadcast %1662 : f32 to vector<8x16xf32>
    %1666 = arith.mulf %1665, %1664 : vector<8x16xf32>
    %1667 = arith.addf %1661, %1666 : vector<8x16xf32>
    %c192 = arith.constant 192 : index
    %1668 = memref.load %arg6[%c192] : memref<312xf32, #tpu.memory_space<smem>>
    %1669 = vector.extract_strided_slice %68 {offsets = [14, 0, 0], sizes = [1, 8, 16], strides = [1, 1, 1]} : vector<16x8x16xf32> to vector<1x8x16xf32>
    %1670 = vector.shape_cast %1669 : vector<1x8x16xf32> to vector<8x16xf32>
    %1671 = vector.broadcast %1668 : f32 to vector<8x16xf32>
    %1672 = arith.mulf %1671, %1670 : vector<8x16xf32>
    %1673 = arith.addf %1667, %1672 : vector<8x16xf32>
    %c205 = arith.constant 205 : index
    %1674 = memref.load %arg6[%c205] : memref<312xf32, #tpu.memory_space<smem>>
    %1675 = vector.extract_strided_slice %68 {offsets = [15, 0, 0], sizes = [1, 8, 16], strides = [1, 1, 1]} : vector<16x8x16xf32> to vector<1x8x16xf32>
    %1676 = vector.shape_cast %1675 : vector<1x8x16xf32> to vector<8x16xf32>
    %1677 = vector.broadcast %1674 : f32 to vector<8x16xf32>
    %1678 = arith.mulf %1677, %1676 : vector<8x16xf32>
    %1679 = arith.addf %1673, %1678 : vector<8x16xf32>
    %c218 = arith.constant 218 : index
    %1680 = memref.load %arg6[%c218] : memref<312xf32, #tpu.memory_space<smem>>
    %1681 = vector.extract_strided_slice %69 {offsets = [0, 0, 0], sizes = [1, 8, 16], strides = [1, 1, 1]} : vector<8x8x16xf32> to vector<1x8x16xf32>
    %1682 = vector.shape_cast %1681 : vector<1x8x16xf32> to vector<8x16xf32>
    %1683 = vector.broadcast %1680 : f32 to vector<8x16xf32>
    %1684 = arith.mulf %1683, %1682 : vector<8x16xf32>
    %1685 = arith.addf %1679, %1684 : vector<8x16xf32>
    %c231 = arith.constant 231 : index
    %1686 = memref.load %arg6[%c231] : memref<312xf32, #tpu.memory_space<smem>>
    %1687 = vector.extract_strided_slice %69 {offsets = [1, 0, 0], sizes = [1, 8, 16], strides = [1, 1, 1]} : vector<8x8x16xf32> to vector<1x8x16xf32>
    %1688 = vector.shape_cast %1687 : vector<1x8x16xf32> to vector<8x16xf32>
    %1689 = vector.broadcast %1686 : f32 to vector<8x16xf32>
    %1690 = arith.mulf %1689, %1688 : vector<8x16xf32>
    %1691 = arith.addf %1685, %1690 : vector<8x16xf32>
    %c244 = arith.constant 244 : index
    %1692 = memref.load %arg6[%c244] : memref<312xf32, #tpu.memory_space<smem>>
    %1693 = vector.extract_strided_slice %69 {offsets = [2, 0, 0], sizes = [1, 8, 16], strides = [1, 1, 1]} : vector<8x8x16xf32> to vector<1x8x16xf32>
    %1694 = vector.shape_cast %1693 : vector<1x8x16xf32> to vector<8x16xf32>
    %1695 = vector.broadcast %1692 : f32 to vector<8x16xf32>
    %1696 = arith.mulf %1695, %1694 : vector<8x16xf32>
    %1697 = arith.addf %1691, %1696 : vector<8x16xf32>
    %c257 = arith.constant 257 : index
    %1698 = memref.load %arg6[%c257] : memref<312xf32, #tpu.memory_space<smem>>
    %1699 = vector.extract_strided_slice %69 {offsets = [3, 0, 0], sizes = [1, 8, 16], strides = [1, 1, 1]} : vector<8x8x16xf32> to vector<1x8x16xf32>
    %1700 = vector.shape_cast %1699 : vector<1x8x16xf32> to vector<8x16xf32>
    %1701 = vector.broadcast %1698 : f32 to vector<8x16xf32>
    %1702 = arith.mulf %1701, %1700 : vector<8x16xf32>
    %1703 = arith.addf %1697, %1702 : vector<8x16xf32>
    %c270 = arith.constant 270 : index
    %1704 = memref.load %arg6[%c270] : memref<312xf32, #tpu.memory_space<smem>>
    %1705 = vector.extract_strided_slice %69 {offsets = [4, 0, 0], sizes = [1, 8, 16], strides = [1, 1, 1]} : vector<8x8x16xf32> to vector<1x8x16xf32>
    %1706 = vector.shape_cast %1705 : vector<1x8x16xf32> to vector<8x16xf32>
    %1707 = vector.broadcast %1704 : f32 to vector<8x16xf32>
    %1708 = arith.mulf %1707, %1706 : vector<8x16xf32>
    %1709 = arith.addf %1703, %1708 : vector<8x16xf32>
    %c283 = arith.constant 283 : index
    %1710 = memref.load %arg6[%c283] : memref<312xf32, #tpu.memory_space<smem>>
    %1711 = vector.extract_strided_slice %69 {offsets = [5, 0, 0], sizes = [1, 8, 16], strides = [1, 1, 1]} : vector<8x8x16xf32> to vector<1x8x16xf32>
    %1712 = vector.shape_cast %1711 : vector<1x8x16xf32> to vector<8x16xf32>
    %1713 = vector.broadcast %1710 : f32 to vector<8x16xf32>
    %1714 = arith.mulf %1713, %1712 : vector<8x16xf32>
    %1715 = arith.addf %1709, %1714 : vector<8x16xf32>
    %c296 = arith.constant 296 : index
    %1716 = memref.load %arg6[%c296] : memref<312xf32, #tpu.memory_space<smem>>
    %1717 = vector.extract_strided_slice %69 {offsets = [6, 0, 0], sizes = [1, 8, 16], strides = [1, 1, 1]} : vector<8x8x16xf32> to vector<1x8x16xf32>
    %1718 = vector.shape_cast %1717 : vector<1x8x16xf32> to vector<8x16xf32>
    %1719 = vector.broadcast %1716 : f32 to vector<8x16xf32>
    %1720 = arith.mulf %1719, %1718 : vector<8x16xf32>
    %1721 = arith.addf %1715, %1720 : vector<8x16xf32>
    %c309 = arith.constant 309 : index
    %1722 = memref.load %arg6[%c309] : memref<312xf32, #tpu.memory_space<smem>>
    %1723 = vector.extract_strided_slice %69 {offsets = [7, 0, 0], sizes = [1, 8, 16], strides = [1, 1, 1]} : vector<8x8x16xf32> to vector<1x8x16xf32>
    %1724 = vector.shape_cast %1723 : vector<1x8x16xf32> to vector<8x16xf32>
    %1725 = vector.broadcast %1722 : f32 to vector<8x16xf32>
    %1726 = arith.mulf %1725, %1724 : vector<8x16xf32>
    %1727 = arith.addf %1721, %1726 : vector<8x16xf32>
    %c0_88 = arith.constant 0 : index
    %c10_89 = arith.constant 10 : index
    %c0_90 = arith.constant 0 : index
    %c0_91 = arith.constant 0 : index
    %1728 = vector.load %arg9[%c0_88, %c10_89, %c0_90, %c0_91] : memref<1x13x8x16xf32, #tpu.memory_space<vmem>>, vector<1x1x8x16xf32>
    %1729 = vector.shape_cast %1728 : vector<1x1x8x16xf32> to vector<8x16xf32>
    %1730 = vector.shape_cast %1727 : vector<8x16xf32> to vector<1x1x8x16xf32>
    tpu.vector_store %arg9[%c0_88, %c10_89, %c0_90, %c0_91], %1730 {strides = array<i32>} : memref<1x13x8x16xf32, #tpu.memory_space<vmem>>, vector<1x1x8x16xf32>,
    %cst_92 = arith.constant 0.000000e+00 : f32
    %1731 = vector.broadcast %cst_92 : f32 to vector<8x16xf32>
    %c11 = arith.constant 11 : index
    %1732 = memref.load %arg7[%c11] : memref<13xf32, #tpu.memory_space<smem>>
    %1733 = vector.broadcast %1732 : f32 to vector<8x16xf32>
    %1734 = arith.addf %1731, %1733 : vector<8x16xf32>
    %c11_93 = arith.constant 11 : index
    %1735 = memref.load %arg6[%c11_93] : memref<312xf32, #tpu.memory_space<smem>>
    %1736 = vector.extract_strided_slice %68 {offsets = [0, 0, 0], sizes = [1, 8, 16], strides = [1, 1, 1]} : vector<16x8x16xf32> to vector<1x8x16xf32>
    %1737 = vector.shape_cast %1736 : vector<1x8x16xf32> to vector<8x16xf32>
    %1738 = vector.broadcast %1735 : f32 to vector<8x16xf32>
    %1739 = arith.mulf %1738, %1737 : vector<8x16xf32>
    %1740 = arith.addf %1734, %1739 : vector<8x16xf32>
    %c24 = arith.constant 24 : index
    %1741 = memref.load %arg6[%c24] : memref<312xf32, #tpu.memory_space<smem>>
    %1742 = vector.extract_strided_slice %68 {offsets = [1, 0, 0], sizes = [1, 8, 16], strides = [1, 1, 1]} : vector<16x8x16xf32> to vector<1x8x16xf32>
    %1743 = vector.shape_cast %1742 : vector<1x8x16xf32> to vector<8x16xf32>
    %1744 = vector.broadcast %1741 : f32 to vector<8x16xf32>
    %1745 = arith.mulf %1744, %1743 : vector<8x16xf32>
    %1746 = arith.addf %1740, %1745 : vector<8x16xf32>
    %c37 = arith.constant 37 : index
    %1747 = memref.load %arg6[%c37] : memref<312xf32, #tpu.memory_space<smem>>
    %1748 = vector.extract_strided_slice %68 {offsets = [2, 0, 0], sizes = [1, 8, 16], strides = [1, 1, 1]} : vector<16x8x16xf32> to vector<1x8x16xf32>
    %1749 = vector.shape_cast %1748 : vector<1x8x16xf32> to vector<8x16xf32>
    %1750 = vector.broadcast %1747 : f32 to vector<8x16xf32>
    %1751 = arith.mulf %1750, %1749 : vector<8x16xf32>
    %1752 = arith.addf %1746, %1751 : vector<8x16xf32>
    %c50 = arith.constant 50 : index
    %1753 = memref.load %arg6[%c50] : memref<312xf32, #tpu.memory_space<smem>>
    %1754 = vector.extract_strided_slice %68 {offsets = [3, 0, 0], sizes = [1, 8, 16], strides = [1, 1, 1]} : vector<16x8x16xf32> to vector<1x8x16xf32>
    %1755 = vector.shape_cast %1754 : vector<1x8x16xf32> to vector<8x16xf32>
    %1756 = vector.broadcast %1753 : f32 to vector<8x16xf32>
    %1757 = arith.mulf %1756, %1755 : vector<8x16xf32>
    %1758 = arith.addf %1752, %1757 : vector<8x16xf32>
    %c63 = arith.constant 63 : index
    %1759 = memref.load %arg6[%c63] : memref<312xf32, #tpu.memory_space<smem>>
    %1760 = vector.extract_strided_slice %68 {offsets = [4, 0, 0], sizes = [1, 8, 16], strides = [1, 1, 1]} : vector<16x8x16xf32> to vector<1x8x16xf32>
    %1761 = vector.shape_cast %1760 : vector<1x8x16xf32> to vector<8x16xf32>
    %1762 = vector.broadcast %1759 : f32 to vector<8x16xf32>
    %1763 = arith.mulf %1762, %1761 : vector<8x16xf32>
    %1764 = arith.addf %1758, %1763 : vector<8x16xf32>
    %c76 = arith.constant 76 : index
    %1765 = memref.load %arg6[%c76] : memref<312xf32, #tpu.memory_space<smem>>
    %1766 = vector.extract_strided_slice %68 {offsets = [5, 0, 0], sizes = [1, 8, 16], strides = [1, 1, 1]} : vector<16x8x16xf32> to vector<1x8x16xf32>
    %1767 = vector.shape_cast %1766 : vector<1x8x16xf32> to vector<8x16xf32>
    %1768 = vector.broadcast %1765 : f32 to vector<8x16xf32>
    %1769 = arith.mulf %1768, %1767 : vector<8x16xf32>
    %1770 = arith.addf %1764, %1769 : vector<8x16xf32>
    %c89 = arith.constant 89 : index
    %1771 = memref.load %arg6[%c89] : memref<312xf32, #tpu.memory_space<smem>>
    %1772 = vector.extract_strided_slice %68 {offsets = [6, 0, 0], sizes = [1, 8, 16], strides = [1, 1, 1]} : vector<16x8x16xf32> to vector<1x8x16xf32>
    %1773 = vector.shape_cast %1772 : vector<1x8x16xf32> to vector<8x16xf32>
    %1774 = vector.broadcast %1771 : f32 to vector<8x16xf32>
    %1775 = arith.mulf %1774, %1773 : vector<8x16xf32>
    %1776 = arith.addf %1770, %1775 : vector<8x16xf32>
    %c102 = arith.constant 102 : index
    %1777 = memref.load %arg6[%c102] : memref<312xf32, #tpu.memory_space<smem>>
    %1778 = vector.extract_strided_slice %68 {offsets = [7, 0, 0], sizes = [1, 8, 16], strides = [1, 1, 1]} : vector<16x8x16xf32> to vector<1x8x16xf32>
    %1779 = vector.shape_cast %1778 : vector<1x8x16xf32> to vector<8x16xf32>
    %1780 = vector.broadcast %1777 : f32 to vector<8x16xf32>
    %1781 = arith.mulf %1780, %1779 : vector<8x16xf32>
    %1782 = arith.addf %1776, %1781 : vector<8x16xf32>
    %c115 = arith.constant 115 : index
    %1783 = memref.load %arg6[%c115] : memref<312xf32, #tpu.memory_space<smem>>
    %1784 = vector.extract_strided_slice %68 {offsets = [8, 0, 0], sizes = [1, 8, 16], strides = [1, 1, 1]} : vector<16x8x16xf32> to vector<1x8x16xf32>
    %1785 = vector.shape_cast %1784 : vector<1x8x16xf32> to vector<8x16xf32>
    %1786 = vector.broadcast %1783 : f32 to vector<8x16xf32>
    %1787 = arith.mulf %1786, %1785 : vector<8x16xf32>
    %1788 = arith.addf %1782, %1787 : vector<8x16xf32>
    %c128 = arith.constant 128 : index
    %1789 = memref.load %arg6[%c128] : memref<312xf32, #tpu.memory_space<smem>>
    %1790 = vector.extract_strided_slice %68 {offsets = [9, 0, 0], sizes = [1, 8, 16], strides = [1, 1, 1]} : vector<16x8x16xf32> to vector<1x8x16xf32>
    %1791 = vector.shape_cast %1790 : vector<1x8x16xf32> to vector<8x16xf32>
    %1792 = vector.broadcast %1789 : f32 to vector<8x16xf32>
    %1793 = arith.mulf %1792, %1791 : vector<8x16xf32>
    %1794 = arith.addf %1788, %1793 : vector<8x16xf32>
    %c141 = arith.constant 141 : index
    %1795 = memref.load %arg6[%c141] : memref<312xf32, #tpu.memory_space<smem>>
    %1796 = vector.extract_strided_slice %68 {offsets = [10, 0, 0], sizes = [1, 8, 16], strides = [1, 1, 1]} : vector<16x8x16xf32> to vector<1x8x16xf32>
    %1797 = vector.shape_cast %1796 : vector<1x8x16xf32> to vector<8x16xf32>
    %1798 = vector.broadcast %1795 : f32 to vector<8x16xf32>
    %1799 = arith.mulf %1798, %1797 : vector<8x16xf32>
    %1800 = arith.addf %1794, %1799 : vector<8x16xf32>
    %c154 = arith.constant 154 : index
    %1801 = memref.load %arg6[%c154] : memref<312xf32, #tpu.memory_space<smem>>
    %1802 = vector.extract_strided_slice %68 {offsets = [11, 0, 0], sizes = [1, 8, 16], strides = [1, 1, 1]} : vector<16x8x16xf32> to vector<1x8x16xf32>
    %1803 = vector.shape_cast %1802 : vector<1x8x16xf32> to vector<8x16xf32>
    %1804 = vector.broadcast %1801 : f32 to vector<8x16xf32>
    %1805 = arith.mulf %1804, %1803 : vector<8x16xf32>
    %1806 = arith.addf %1800, %1805 : vector<8x16xf32>
    %c167 = arith.constant 167 : index
    %1807 = memref.load %arg6[%c167] : memref<312xf32, #tpu.memory_space<smem>>
    %1808 = vector.extract_strided_slice %68 {offsets = [12, 0, 0], sizes = [1, 8, 16], strides = [1, 1, 1]} : vector<16x8x16xf32> to vector<1x8x16xf32>
    %1809 = vector.shape_cast %1808 : vector<1x8x16xf32> to vector<8x16xf32>
    %1810 = vector.broadcast %1807 : f32 to vector<8x16xf32>
    %1811 = arith.mulf %1810, %1809 : vector<8x16xf32>
    %1812 = arith.addf %1806, %1811 : vector<8x16xf32>
    %c180 = arith.constant 180 : index
    %1813 = memref.load %arg6[%c180] : memref<312xf32, #tpu.memory_space<smem>>
    %1814 = vector.extract_strided_slice %68 {offsets = [13, 0, 0], sizes = [1, 8, 16], strides = [1, 1, 1]} : vector<16x8x16xf32> to vector<1x8x16xf32>
    %1815 = vector.shape_cast %1814 : vector<1x8x16xf32> to vector<8x16xf32>
    %1816 = vector.broadcast %1813 : f32 to vector<8x16xf32>
    %1817 = arith.mulf %1816, %1815 : vector<8x16xf32>
    %1818 = arith.addf %1812, %1817 : vector<8x16xf32>
    %c193 = arith.constant 193 : index
    %1819 = memref.load %arg6[%c193] : memref<312xf32, #tpu.memory_space<smem>>
    %1820 = vector.extract_strided_slice %68 {offsets = [14, 0, 0], sizes = [1, 8, 16], strides = [1, 1, 1]} : vector<16x8x16xf32> to vector<1x8x16xf32>
    %1821 = vector.shape_cast %1820 : vector<1x8x16xf32> to vector<8x16xf32>
    %1822 = vector.broadcast %1819 : f32 to vector<8x16xf32>
    %1823 = arith.mulf %1822, %1821 : vector<8x16xf32>
    %1824 = arith.addf %1818, %1823 : vector<8x16xf32>
    %c206 = arith.constant 206 : index
    %1825 = memref.load %arg6[%c206] : memref<312xf32, #tpu.memory_space<smem>>
    %1826 = vector.extract_strided_slice %68 {offsets = [15, 0, 0], sizes = [1, 8, 16], strides = [1, 1, 1]} : vector<16x8x16xf32> to vector<1x8x16xf32>
    %1827 = vector.shape_cast %1826 : vector<1x8x16xf32> to vector<8x16xf32>
    %1828 = vector.broadcast %1825 : f32 to vector<8x16xf32>
    %1829 = arith.mulf %1828, %1827 : vector<8x16xf32>
    %1830 = arith.addf %1824, %1829 : vector<8x16xf32>
    %c219 = arith.constant 219 : index
    %1831 = memref.load %arg6[%c219] : memref<312xf32, #tpu.memory_space<smem>>
    %1832 = vector.extract_strided_slice %69 {offsets = [0, 0, 0], sizes = [1, 8, 16], strides = [1, 1, 1]} : vector<8x8x16xf32> to vector<1x8x16xf32>
    %1833 = vector.shape_cast %1832 : vector<1x8x16xf32> to vector<8x16xf32>
    %1834 = vector.broadcast %1831 : f32 to vector<8x16xf32>
    %1835 = arith.mulf %1834, %1833 : vector<8x16xf32>
    %1836 = arith.addf %1830, %1835 : vector<8x16xf32>
    %c232 = arith.constant 232 : index
    %1837 = memref.load %arg6[%c232] : memref<312xf32, #tpu.memory_space<smem>>
    %1838 = vector.extract_strided_slice %69 {offsets = [1, 0, 0], sizes = [1, 8, 16], strides = [1, 1, 1]} : vector<8x8x16xf32> to vector<1x8x16xf32>
    %1839 = vector.shape_cast %1838 : vector<1x8x16xf32> to vector<8x16xf32>
    %1840 = vector.broadcast %1837 : f32 to vector<8x16xf32>
    %1841 = arith.mulf %1840, %1839 : vector<8x16xf32>
    %1842 = arith.addf %1836, %1841 : vector<8x16xf32>
    %c245 = arith.constant 245 : index
    %1843 = memref.load %arg6[%c245] : memref<312xf32, #tpu.memory_space<smem>>
    %1844 = vector.extract_strided_slice %69 {offsets = [2, 0, 0], sizes = [1, 8, 16], strides = [1, 1, 1]} : vector<8x8x16xf32> to vector<1x8x16xf32>
    %1845 = vector.shape_cast %1844 : vector<1x8x16xf32> to vector<8x16xf32>
    %1846 = vector.broadcast %1843 : f32 to vector<8x16xf32>
    %1847 = arith.mulf %1846, %1845 : vector<8x16xf32>
    %1848 = arith.addf %1842, %1847 : vector<8x16xf32>
    %c258 = arith.constant 258 : index
    %1849 = memref.load %arg6[%c258] : memref<312xf32, #tpu.memory_space<smem>>
    %1850 = vector.extract_strided_slice %69 {offsets = [3, 0, 0], sizes = [1, 8, 16], strides = [1, 1, 1]} : vector<8x8x16xf32> to vector<1x8x16xf32>
    %1851 = vector.shape_cast %1850 : vector<1x8x16xf32> to vector<8x16xf32>
    %1852 = vector.broadcast %1849 : f32 to vector<8x16xf32>
    %1853 = arith.mulf %1852, %1851 : vector<8x16xf32>
    %1854 = arith.addf %1848, %1853 : vector<8x16xf32>
    %c271 = arith.constant 271 : index
    %1855 = memref.load %arg6[%c271] : memref<312xf32, #tpu.memory_space<smem>>
    %1856 = vector.extract_strided_slice %69 {offsets = [4, 0, 0], sizes = [1, 8, 16], strides = [1, 1, 1]} : vector<8x8x16xf32> to vector<1x8x16xf32>
    %1857 = vector.shape_cast %1856 : vector<1x8x16xf32> to vector<8x16xf32>
    %1858 = vector.broadcast %1855 : f32 to vector<8x16xf32>
    %1859 = arith.mulf %1858, %1857 : vector<8x16xf32>
    %1860 = arith.addf %1854, %1859 : vector<8x16xf32>
    %c284 = arith.constant 284 : index
    %1861 = memref.load %arg6[%c284] : memref<312xf32, #tpu.memory_space<smem>>
    %1862 = vector.extract_strided_slice %69 {offsets = [5, 0, 0], sizes = [1, 8, 16], strides = [1, 1, 1]} : vector<8x8x16xf32> to vector<1x8x16xf32>
    %1863 = vector.shape_cast %1862 : vector<1x8x16xf32> to vector<8x16xf32>
    %1864 = vector.broadcast %1861 : f32 to vector<8x16xf32>
    %1865 = arith.mulf %1864, %1863 : vector<8x16xf32>
    %1866 = arith.addf %1860, %1865 : vector<8x16xf32>
    %c297 = arith.constant 297 : index
    %1867 = memref.load %arg6[%c297] : memref<312xf32, #tpu.memory_space<smem>>
    %1868 = vector.extract_strided_slice %69 {offsets = [6, 0, 0], sizes = [1, 8, 16], strides = [1, 1, 1]} : vector<8x8x16xf32> to vector<1x8x16xf32>
    %1869 = vector.shape_cast %1868 : vector<1x8x16xf32> to vector<8x16xf32>
    %1870 = vector.broadcast %1867 : f32 to vector<8x16xf32>
    %1871 = arith.mulf %1870, %1869 : vector<8x16xf32>
    %1872 = arith.addf %1866, %1871 : vector<8x16xf32>
    %c310 = arith.constant 310 : index
    %1873 = memref.load %arg6[%c310] : memref<312xf32, #tpu.memory_space<smem>>
    %1874 = vector.extract_strided_slice %69 {offsets = [7, 0, 0], sizes = [1, 8, 16], strides = [1, 1, 1]} : vector<8x8x16xf32> to vector<1x8x16xf32>
    %1875 = vector.shape_cast %1874 : vector<1x8x16xf32> to vector<8x16xf32>
    %1876 = vector.broadcast %1873 : f32 to vector<8x16xf32>
    %1877 = arith.mulf %1876, %1875 : vector<8x16xf32>
    %1878 = arith.addf %1872, %1877 : vector<8x16xf32>
    %c0_94 = arith.constant 0 : index
    %c11_95 = arith.constant 11 : index
    %c0_96 = arith.constant 0 : index
    %c0_97 = arith.constant 0 : index
    %1879 = vector.load %arg9[%c0_94, %c11_95, %c0_96, %c0_97] : memref<1x13x8x16xf32, #tpu.memory_space<vmem>>, vector<1x1x8x16xf32>
    %1880 = vector.shape_cast %1879 : vector<1x1x8x16xf32> to vector<8x16xf32>
    %1881 = vector.shape_cast %1878 : vector<8x16xf32> to vector<1x1x8x16xf32>
    tpu.vector_store %arg9[%c0_94, %c11_95, %c0_96, %c0_97], %1881 {strides = array<i32>} : memref<1x13x8x16xf32, #tpu.memory_space<vmem>>, vector<1x1x8x16xf32>,
    %cst_98 = arith.constant 0.000000e+00 : f32
    %1882 = vector.broadcast %cst_98 : f32 to vector<8x16xf32>
    %c12 = arith.constant 12 : index
    %1883 = memref.load %arg7[%c12] : memref<13xf32, #tpu.memory_space<smem>>
    %1884 = vector.broadcast %1883 : f32 to vector<8x16xf32>
    %1885 = arith.addf %1882, %1884 : vector<8x16xf32>
    %c12_99 = arith.constant 12 : index
    %1886 = memref.load %arg6[%c12_99] : memref<312xf32, #tpu.memory_space<smem>>
    %1887 = vector.extract_strided_slice %68 {offsets = [0, 0, 0], sizes = [1, 8, 16], strides = [1, 1, 1]} : vector<16x8x16xf32> to vector<1x8x16xf32>
    %1888 = vector.shape_cast %1887 : vector<1x8x16xf32> to vector<8x16xf32>
    %1889 = vector.broadcast %1886 : f32 to vector<8x16xf32>
    %1890 = arith.mulf %1889, %1888 : vector<8x16xf32>
    %1891 = arith.addf %1885, %1890 : vector<8x16xf32>
    %c25 = arith.constant 25 : index
    %1892 = memref.load %arg6[%c25] : memref<312xf32, #tpu.memory_space<smem>>
    %1893 = vector.extract_strided_slice %68 {offsets = [1, 0, 0], sizes = [1, 8, 16], strides = [1, 1, 1]} : vector<16x8x16xf32> to vector<1x8x16xf32>
    %1894 = vector.shape_cast %1893 : vector<1x8x16xf32> to vector<8x16xf32>
    %1895 = vector.broadcast %1892 : f32 to vector<8x16xf32>
    %1896 = arith.mulf %1895, %1894 : vector<8x16xf32>
    %1897 = arith.addf %1891, %1896 : vector<8x16xf32>
    %c38 = arith.constant 38 : index
    %1898 = memref.load %arg6[%c38] : memref<312xf32, #tpu.memory_space<smem>>
    %1899 = vector.extract_strided_slice %68 {offsets = [2, 0, 0], sizes = [1, 8, 16], strides = [1, 1, 1]} : vector<16x8x16xf32> to vector<1x8x16xf32>
    %1900 = vector.shape_cast %1899 : vector<1x8x16xf32> to vector<8x16xf32>
    %1901 = vector.broadcast %1898 : f32 to vector<8x16xf32>
    %1902 = arith.mulf %1901, %1900 : vector<8x16xf32>
    %1903 = arith.addf %1897, %1902 : vector<8x16xf32>
    %c51 = arith.constant 51 : index
    %1904 = memref.load %arg6[%c51] : memref<312xf32, #tpu.memory_space<smem>>
    %1905 = vector.extract_strided_slice %68 {offsets = [3, 0, 0], sizes = [1, 8, 16], strides = [1, 1, 1]} : vector<16x8x16xf32> to vector<1x8x16xf32>
    %1906 = vector.shape_cast %1905 : vector<1x8x16xf32> to vector<8x16xf32>
    %1907 = vector.broadcast %1904 : f32 to vector<8x16xf32>
    %1908 = arith.mulf %1907, %1906 : vector<8x16xf32>
    %1909 = arith.addf %1903, %1908 : vector<8x16xf32>
    %c64 = arith.constant 64 : index
    %1910 = memref.load %arg6[%c64] : memref<312xf32, #tpu.memory_space<smem>>
    %1911 = vector.extract_strided_slice %68 {offsets = [4, 0, 0], sizes = [1, 8, 16], strides = [1, 1, 1]} : vector<16x8x16xf32> to vector<1x8x16xf32>
    %1912 = vector.shape_cast %1911 : vector<1x8x16xf32> to vector<8x16xf32>
    %1913 = vector.broadcast %1910 : f32 to vector<8x16xf32>
    %1914 = arith.mulf %1913, %1912 : vector<8x16xf32>
    %1915 = arith.addf %1909, %1914 : vector<8x16xf32>
    %c77 = arith.constant 77 : index
    %1916 = memref.load %arg6[%c77] : memref<312xf32, #tpu.memory_space<smem>>
    %1917 = vector.extract_strided_slice %68 {offsets = [5, 0, 0], sizes = [1, 8, 16], strides = [1, 1, 1]} : vector<16x8x16xf32> to vector<1x8x16xf32>
    %1918 = vector.shape_cast %1917 : vector<1x8x16xf32> to vector<8x16xf32>
    %1919 = vector.broadcast %1916 : f32 to vector<8x16xf32>
    %1920 = arith.mulf %1919, %1918 : vector<8x16xf32>
    %1921 = arith.addf %1915, %1920 : vector<8x16xf32>
    %c90 = arith.constant 90 : index
    %1922 = memref.load %arg6[%c90] : memref<312xf32, #tpu.memory_space<smem>>
    %1923 = vector.extract_strided_slice %68 {offsets = [6, 0, 0], sizes = [1, 8, 16], strides = [1, 1, 1]} : vector<16x8x16xf32> to vector<1x8x16xf32>
    %1924 = vector.shape_cast %1923 : vector<1x8x16xf32> to vector<8x16xf32>
    %1925 = vector.broadcast %1922 : f32 to vector<8x16xf32>
    %1926 = arith.mulf %1925, %1924 : vector<8x16xf32>
    %1927 = arith.addf %1921, %1926 : vector<8x16xf32>
    %c103 = arith.constant 103 : index
    %1928 = memref.load %arg6[%c103] : memref<312xf32, #tpu.memory_space<smem>>
    %1929 = vector.extract_strided_slice %68 {offsets = [7, 0, 0], sizes = [1, 8, 16], strides = [1, 1, 1]} : vector<16x8x16xf32> to vector<1x8x16xf32>
    %1930 = vector.shape_cast %1929 : vector<1x8x16xf32> to vector<8x16xf32>
    %1931 = vector.broadcast %1928 : f32 to vector<8x16xf32>
    %1932 = arith.mulf %1931, %1930 : vector<8x16xf32>
    %1933 = arith.addf %1927, %1932 : vector<8x16xf32>
    %c116 = arith.constant 116 : index
    %1934 = memref.load %arg6[%c116] : memref<312xf32, #tpu.memory_space<smem>>
    %1935 = vector.extract_strided_slice %68 {offsets = [8, 0, 0], sizes = [1, 8, 16], strides = [1, 1, 1]} : vector<16x8x16xf32> to vector<1x8x16xf32>
    %1936 = vector.shape_cast %1935 : vector<1x8x16xf32> to vector<8x16xf32>
    %1937 = vector.broadcast %1934 : f32 to vector<8x16xf32>
    %1938 = arith.mulf %1937, %1936 : vector<8x16xf32>
    %1939 = arith.addf %1933, %1938 : vector<8x16xf32>
    %c129 = arith.constant 129 : index
    %1940 = memref.load %arg6[%c129] : memref<312xf32, #tpu.memory_space<smem>>
    %1941 = vector.extract_strided_slice %68 {offsets = [9, 0, 0], sizes = [1, 8, 16], strides = [1, 1, 1]} : vector<16x8x16xf32> to vector<1x8x16xf32>
    %1942 = vector.shape_cast %1941 : vector<1x8x16xf32> to vector<8x16xf32>
    %1943 = vector.broadcast %1940 : f32 to vector<8x16xf32>
    %1944 = arith.mulf %1943, %1942 : vector<8x16xf32>
    %1945 = arith.addf %1939, %1944 : vector<8x16xf32>
    %c142 = arith.constant 142 : index
    %1946 = memref.load %arg6[%c142] : memref<312xf32, #tpu.memory_space<smem>>
    %1947 = vector.extract_strided_slice %68 {offsets = [10, 0, 0], sizes = [1, 8, 16], strides = [1, 1, 1]} : vector<16x8x16xf32> to vector<1x8x16xf32>
    %1948 = vector.shape_cast %1947 : vector<1x8x16xf32> to vector<8x16xf32>
    %1949 = vector.broadcast %1946 : f32 to vector<8x16xf32>
    %1950 = arith.mulf %1949, %1948 : vector<8x16xf32>
    %1951 = arith.addf %1945, %1950 : vector<8x16xf32>
    %c155 = arith.constant 155 : index
    %1952 = memref.load %arg6[%c155] : memref<312xf32, #tpu.memory_space<smem>>
    %1953 = vector.extract_strided_slice %68 {offsets = [11, 0, 0], sizes = [1, 8, 16], strides = [1, 1, 1]} : vector<16x8x16xf32> to vector<1x8x16xf32>
    %1954 = vector.shape_cast %1953 : vector<1x8x16xf32> to vector<8x16xf32>
    %1955 = vector.broadcast %1952 : f32 to vector<8x16xf32>
    %1956 = arith.mulf %1955, %1954 : vector<8x16xf32>
    %1957 = arith.addf %1951, %1956 : vector<8x16xf32>
    %c168 = arith.constant 168 : index
    %1958 = memref.load %arg6[%c168] : memref<312xf32, #tpu.memory_space<smem>>
    %1959 = vector.extract_strided_slice %68 {offsets = [12, 0, 0], sizes = [1, 8, 16], strides = [1, 1, 1]} : vector<16x8x16xf32> to vector<1x8x16xf32>
    %1960 = vector.shape_cast %1959 : vector<1x8x16xf32> to vector<8x16xf32>
    %1961 = vector.broadcast %1958 : f32 to vector<8x16xf32>
    %1962 = arith.mulf %1961, %1960 : vector<8x16xf32>
    %1963 = arith.addf %1957, %1962 : vector<8x16xf32>
    %c181 = arith.constant 181 : index
    %1964 = memref.load %arg6[%c181] : memref<312xf32, #tpu.memory_space<smem>>
    %1965 = vector.extract_strided_slice %68 {offsets = [13, 0, 0], sizes = [1, 8, 16], strides = [1, 1, 1]} : vector<16x8x16xf32> to vector<1x8x16xf32>
    %1966 = vector.shape_cast %1965 : vector<1x8x16xf32> to vector<8x16xf32>
    %1967 = vector.broadcast %1964 : f32 to vector<8x16xf32>
    %1968 = arith.mulf %1967, %1966 : vector<8x16xf32>
    %1969 = arith.addf %1963, %1968 : vector<8x16xf32>
    %c194 = arith.constant 194 : index
    %1970 = memref.load %arg6[%c194] : memref<312xf32, #tpu.memory_space<smem>>
    %1971 = vector.extract_strided_slice %68 {offsets = [14, 0, 0], sizes = [1, 8, 16], strides = [1, 1, 1]} : vector<16x8x16xf32> to vector<1x8x16xf32>
    %1972 = vector.shape_cast %1971 : vector<1x8x16xf32> to vector<8x16xf32>
    %1973 = vector.broadcast %1970 : f32 to vector<8x16xf32>
    %1974 = arith.mulf %1973, %1972 : vector<8x16xf32>
    %1975 = arith.addf %1969, %1974 : vector<8x16xf32>
    %c207 = arith.constant 207 : index
    %1976 = memref.load %arg6[%c207] : memref<312xf32, #tpu.memory_space<smem>>
    %1977 = vector.extract_strided_slice %68 {offsets = [15, 0, 0], sizes = [1, 8, 16], strides = [1, 1, 1]} : vector<16x8x16xf32> to vector<1x8x16xf32>
    %1978 = vector.shape_cast %1977 : vector<1x8x16xf32> to vector<8x16xf32>
    %1979 = vector.broadcast %1976 : f32 to vector<8x16xf32>
    %1980 = arith.mulf %1979, %1978 : vector<8x16xf32>
    %1981 = arith.addf %1975, %1980 : vector<8x16xf32>
    %c220 = arith.constant 220 : index
    %1982 = memref.load %arg6[%c220] : memref<312xf32, #tpu.memory_space<smem>>
    %1983 = vector.extract_strided_slice %69 {offsets = [0, 0, 0], sizes = [1, 8, 16], strides = [1, 1, 1]} : vector<8x8x16xf32> to vector<1x8x16xf32>
    %1984 = vector.shape_cast %1983 : vector<1x8x16xf32> to vector<8x16xf32>
    %1985 = vector.broadcast %1982 : f32 to vector<8x16xf32>
    %1986 = arith.mulf %1985, %1984 : vector<8x16xf32>
    %1987 = arith.addf %1981, %1986 : vector<8x16xf32>
    %c233 = arith.constant 233 : index
    %1988 = memref.load %arg6[%c233] : memref<312xf32, #tpu.memory_space<smem>>
    %1989 = vector.extract_strided_slice %69 {offsets = [1, 0, 0], sizes = [1, 8, 16], strides = [1, 1, 1]} : vector<8x8x16xf32> to vector<1x8x16xf32>
    %1990 = vector.shape_cast %1989 : vector<1x8x16xf32> to vector<8x16xf32>
    %1991 = vector.broadcast %1988 : f32 to vector<8x16xf32>
    %1992 = arith.mulf %1991, %1990 : vector<8x16xf32>
    %1993 = arith.addf %1987, %1992 : vector<8x16xf32>
    %c246 = arith.constant 246 : index
    %1994 = memref.load %arg6[%c246] : memref<312xf32, #tpu.memory_space<smem>>
    %1995 = vector.extract_strided_slice %69 {offsets = [2, 0, 0], sizes = [1, 8, 16], strides = [1, 1, 1]} : vector<8x8x16xf32> to vector<1x8x16xf32>
    %1996 = vector.shape_cast %1995 : vector<1x8x16xf32> to vector<8x16xf32>
    %1997 = vector.broadcast %1994 : f32 to vector<8x16xf32>
    %1998 = arith.mulf %1997, %1996 : vector<8x16xf32>
    %1999 = arith.addf %1993, %1998 : vector<8x16xf32>
    %c259 = arith.constant 259 : index
    %2000 = memref.load %arg6[%c259] : memref<312xf32, #tpu.memory_space<smem>>
    %2001 = vector.extract_strided_slice %69 {offsets = [3, 0, 0], sizes = [1, 8, 16], strides = [1, 1, 1]} : vector<8x8x16xf32> to vector<1x8x16xf32>
    %2002 = vector.shape_cast %2001 : vector<1x8x16xf32> to vector<8x16xf32>
    %2003 = vector.broadcast %2000 : f32 to vector<8x16xf32>
    %2004 = arith.mulf %2003, %2002 : vector<8x16xf32>
    %2005 = arith.addf %1999, %2004 : vector<8x16xf32>
    %c272 = arith.constant 272 : index
    %2006 = memref.load %arg6[%c272] : memref<312xf32, #tpu.memory_space<smem>>
    %2007 = vector.extract_strided_slice %69 {offsets = [4, 0, 0], sizes = [1, 8, 16], strides = [1, 1, 1]} : vector<8x8x16xf32> to vector<1x8x16xf32>
    %2008 = vector.shape_cast %2007 : vector<1x8x16xf32> to vector<8x16xf32>
    %2009 = vector.broadcast %2006 : f32 to vector<8x16xf32>
    %2010 = arith.mulf %2009, %2008 : vector<8x16xf32>
    %2011 = arith.addf %2005, %2010 : vector<8x16xf32>
    %c285 = arith.constant 285 : index
    %2012 = memref.load %arg6[%c285] : memref<312xf32, #tpu.memory_space<smem>>
    %2013 = vector.extract_strided_slice %69 {offsets = [5, 0, 0], sizes = [1, 8, 16], strides = [1, 1, 1]} : vector<8x8x16xf32> to vector<1x8x16xf32>
    %2014 = vector.shape_cast %2013 : vector<1x8x16xf32> to vector<8x16xf32>
    %2015 = vector.broadcast %2012 : f32 to vector<8x16xf32>
    %2016 = arith.mulf %2015, %2014 : vector<8x16xf32>
    %2017 = arith.addf %2011, %2016 : vector<8x16xf32>
    %c298 = arith.constant 298 : index
    %2018 = memref.load %arg6[%c298] : memref<312xf32, #tpu.memory_space<smem>>
    %2019 = vector.extract_strided_slice %69 {offsets = [6, 0, 0], sizes = [1, 8, 16], strides = [1, 1, 1]} : vector<8x8x16xf32> to vector<1x8x16xf32>
    %2020 = vector.shape_cast %2019 : vector<1x8x16xf32> to vector<8x16xf32>
    %2021 = vector.broadcast %2018 : f32 to vector<8x16xf32>
    %2022 = arith.mulf %2021, %2020 : vector<8x16xf32>
    %2023 = arith.addf %2017, %2022 : vector<8x16xf32>
    %c311 = arith.constant 311 : index
    %2024 = memref.load %arg6[%c311] : memref<312xf32, #tpu.memory_space<smem>>
    %2025 = vector.extract_strided_slice %69 {offsets = [7, 0, 0], sizes = [1, 8, 16], strides = [1, 1, 1]} : vector<8x8x16xf32> to vector<1x8x16xf32>
    %2026 = vector.shape_cast %2025 : vector<1x8x16xf32> to vector<8x16xf32>
    %2027 = vector.broadcast %2024 : f32 to vector<8x16xf32>
    %2028 = arith.mulf %2027, %2026 : vector<8x16xf32>
    %2029 = arith.addf %2023, %2028 : vector<8x16xf32>
    %c0_100 = arith.constant 0 : index
    %c12_101 = arith.constant 12 : index
    %c0_102 = arith.constant 0 : index
    %c0_103 = arith.constant 0 : index
    %2030 = vector.load %arg9[%c0_100, %c12_101, %c0_102, %c0_103] : memref<1x13x8x16xf32, #tpu.memory_space<vmem>>, vector<1x1x8x16xf32>
    %2031 = vector.shape_cast %2030 : vector<1x1x8x16xf32> to vector<8x16xf32>
    %2032 = vector.shape_cast %2029 : vector<8x16xf32> to vector<1x1x8x16xf32>
    tpu.vector_store %arg9[%c0_100, %c12_101, %c0_102, %c0_103], %2032 {strides = array<i32>} : memref<1x13x8x16xf32, #tpu.memory_space<vmem>>, vector<1x1x8x16xf32>,
    %c0_104 = arith.constant 0 : index
    %c0_105 = arith.constant 0 : index
    %c0_106 = arith.constant 0 : index
    %c0_107 = arith.constant 0 : index
    %2033 = vector.load %arg10[%c0_104, %c0_105, %c0_106, %c0_107] : memref<1x24x8x16xf32, #tpu.memory_space<vmem>>, vector<1x16x8x16xf32>
    %2034 = vector.shape_cast %2033 : vector<1x16x8x16xf32> to vector<16x8x16xf32>
    %2035 = vector.shape_cast %68 : vector<16x8x16xf32> to vector<1x16x8x16xf32>
    tpu.vector_store %arg10[%c0_104, %c0_105, %c0_106, %c0_107], %2035 {strides = array<i32>} : memref<1x24x8x16xf32, #tpu.memory_space<vmem>>, vector<1x16x8x16xf32>,
    %c0_108 = arith.constant 0 : index
    %c16_109 = arith.constant 16 : index
    %c0_110 = arith.constant 0 : index
    %c0_111 = arith.constant 0 : index
    %2036 = vector.load %arg10[%c0_108, %c16_109, %c0_110, %c0_111] : memref<1x24x8x16xf32, #tpu.memory_space<vmem>>, vector<1x8x8x16xf32>
    %2037 = vector.shape_cast %2036 : vector<1x8x8x16xf32> to vector<8x8x16xf32>
    %2038 = vector.shape_cast %69 : vector<8x8x16xf32> to vector<1x8x8x16xf32>
    tpu.vector_store %arg10[%c0_108, %c16_109, %c0_110, %c0_111], %2038 {strides = array<i32>} : memref<1x24x8x16xf32, #tpu.memory_space<vmem>>, vector<1x8x8x16xf32>,
    return
  }
  func.func @transform_0(%arg0: i32, %arg1: i32, %arg2: memref<216xf32, #tpu.memory_space<smem>>, %arg3: memref<8xf32, #tpu.memory_space<smem>>, %arg4: memref<1152xf32, #tpu.memory_space<smem>>, %arg5: memref<16xf32, #tpu.memory_space<smem>>, %arg6: memref<312xf32, #tpu.memory_space<smem>>, %arg7: memref<13xf32, #tpu.memory_space<smem>>) -> (i32, i32, i32, i32, i32) {
    %c0_i32 = arith.constant 0 : i32
    %c0_i32_0 = arith.constant 0 : i32
    %c0_i32_1 = arith.constant 0 : i32
    %c0_i32_2 = arith.constant 0 : i32
    return %arg0, %arg1, %c0_i32, %c0_i32_0, %c0_i32_1 : i32, i32, i32, i32, i32
  }
  func.func @transform_1(%arg0: i32, %arg1: i32, %arg2: memref<216xf32, #tpu.memory_space<smem>>, %arg3: memref<8xf32, #tpu.memory_space<smem>>, %arg4: memref<1152xf32, #tpu.memory_space<smem>>, %arg5: memref<16xf32, #tpu.memory_space<smem>>, %arg6: memref<312xf32, #tpu.memory_space<smem>>, %arg7: memref<13xf32, #tpu.memory_space<smem>>) -> (i32, i32, i32, i32) {
    %c0_i32 = arith.constant 0 : i32
    %c0_i32_0 = arith.constant 0 : i32
    %c0_i32_1 = arith.constant 0 : i32
    return %arg0, %c0_i32, %arg1, %c0_i32_0 : i32, i32, i32, i32
  }
  func.func @transform_2(%arg0: i32, %arg1: i32, %arg2: memref<216xf32, #tpu.memory_space<smem>>, %arg3: memref<8xf32, #tpu.memory_space<smem>>, %arg4: memref<1152xf32, #tpu.memory_space<smem>>, %arg5: memref<16xf32, #tpu.memory_space<smem>>, %arg6: memref<312xf32, #tpu.memory_space<smem>>, %arg7: memref<13xf32, #tpu.memory_space<smem>>) -> (i32, i32, i32, i32) {
    %c0_i32 = arith.constant 0 : i32
    %c0_i32_0 = arith.constant 0 : i32
    %c0_i32_1 = arith.constant 0 : i32
    return %arg0, %c0_i32, %arg1, %c0_i32_0 : i32, i32, i32, i32
  }
}

</mosaic_0001>

<llo_original>
// kernel: wrapped_segmenter_forward.1
$region0: #{wrapped_segmenter_forward.1}
  #allocation0 [shape = 'u32[]', space=smem, size = 0x4, offset = 0x4, fixed_abs, tag = 'smem constant byte address 0x4 - core index']
  #allocation1 [shape = 'u32[72,128]{1,0:T(1,128)}', space=vmem, size = 0x9000, scoped, tag = 'internal scratch']
  #allocation2 [shape = 'f32[8,12,16]{2,1,0:T(8,128)}', space=vmem, size = 0x10000, scoped, tag = 'scratch operand']
  #allocation3 [shape = 'f32[16,8,16]{2,1,0:T(8,128)}', space=vmem, size = 0x10000, scoped, tag = 'scratch operand']
  #allocation4 [shape = 's32[1]{0}', space=sflag, size = 0x4, scoped, tag = 'scoped memory for wrapped_segmenter_forward.1']
  #allocation5 [shape = 'u8[1024]{0}', space=smem, size = 0x400, scoped, tag = 'prefetched SMEM operand 0']
  #allocation6 [shape = 'u8[512]{0}', space=smem, size = 0x200, scoped, tag = 'prefetched SMEM operand 1']
  #allocation7 [shape = 'u8[4608]{0}', space=smem, size = 0x1200, scoped, tag = 'prefetched SMEM operand 2']
  #allocation8 [shape = 'u8[512]{0}', space=smem, size = 0x200, scoped, tag = 'prefetched SMEM operand 3']
  #allocation9 [shape = 'u8[1536]{0}', space=smem, size = 0x600, scoped, tag = 'prefetched SMEM operand 4']
  #allocation10 [shape = 'u8[512]{0}', space=smem, size = 0x200, scoped, tag = 'prefetched SMEM operand 5']
  %s0 = inlined_call_operand.vmem [shape: f32[216], index: 0, kind: input, shape index: {}]
  %s1 = inlined_call_operand.vmem [shape: f32[8], index: 1, kind: input, shape index: {}]
  %s2 = inlined_call_operand.vmem [shape: f32[1152], index: 2, kind: input, shape index: {}]
  %s3 = inlined_call_operand.vmem [shape: f32[16], index: 3, kind: input, shape index: {}]
  %s4 = inlined_call_operand.vmem [shape: f32[312], index: 4, kind: input, shape index: {}]
  %s5 = inlined_call_operand.vmem [shape: f32[13], index: 5, kind: input, shape index: {}]
  %s6 = inlined_call_operand.vmem [shape: f32[2,2,3,14,18], index: 6, kind: input, shape index: {}]
  %s7 = inlined_call_operand.hbm [shape: f32[2,13,16,16], index: 7, kind: output, shape index: {0}]
  %s8 = inlined_call_operand.vmem [shape: f32[2,24,16,16], index: 8, kind: output, shape index: {1}]
  %9 = xla_tuple %s7, %s8
  %s10 = sld [smem:[#allocation0]]
  $region93: #{wrapped_segmenter_forward.1} parent=0
    _
  %s12 = ssub.s32 1, %s10
  %s13 = scalar_select 0, %s12, %s10
  %s15 = sshll.u32 %s0, 4
  %s16 = int_to_ptr.vmem [resolvable:$true] %s15
  %18 = dma.vmem_to_smem %s16, 32, [#allocation5], [#allocation4]
  %s20 = sshll.u32 %s1, 4
  %s21 = int_to_ptr.vmem [resolvable:$true] %s20
  %23 = dma.vmem_to_smem %s21, 16, [#allocation6], [#allocation4]
  %s25 = sshll.u32 %s2, 4
  %s26 = int_to_ptr.vmem [resolvable:$true] %s25
  %28 = dma.vmem_to_smem %s26, 144, [#allocation7], [#allocation4]
  %s30 = sshll.u32 %s3, 4
  %s31 = int_to_ptr.vmem [resolvable:$true] %s30
  %33 = dma.vmem_to_smem %s31, 16, [#allocation8], [#allocation4]
  %s35 = sshll.u32 %s4, 4
  %s36 = int_to_ptr.vmem [resolvable:$true] %s35
  %38 = dma.vmem_to_smem %s36, 48, [#allocation9], [#allocation4]
  %s40 = sshll.u32 %s5, 4
  %s41 = int_to_ptr.vmem [resolvable:$true] %s40
  %43 = dma.vmem_to_smem %s41, 16, [#allocation10], [#allocation4]
  %45 = dma.done [#allocation4], 272
  %46 = sfence
  $region1: #{wrapped_segmenter_forward.1} parent=0
    #allocation11 [shape = 'u8[106496]{0}', space=vmem, size = 0x1a000, scoped, tag = 'output window, operand 0']
    #allocation12 [shape = 's32[2]{0}', space=sflag, size = 0x8, scoped, tag = 'scoped memory for wrapped_segmenter_forward.1']
    #allocation13 [shape = 'u8[196608]{0}', space=vmem, size = 0x30000, scoped, tag = 'output window, operand 1']
    %47 = vsyncpa [#allocation12], 0
    %s48 = scalar_lea.sflag [#allocation12], 1
    %49 = vsyncpa %s48, 0
    loop: start=0, step=1, limit=6
    $region2: #{wrapped_segmenter_forward.1} parent=1 // loop_pre_header
      _
    $region3: #{wrapped_segmenter_forward.1} parent=1 // loop_header
      %s51 = sphi 0, %s55
      %p52 = scmp.ge.s32.totalorder %s51, 6
      %s58 = sphi 0, %s70
      %s59 = sphi 0, %s66
      %s60 = sphi 0, %s58
      %s61 = sphi 0, %s59
      %s62 = sphi 0, %s60
      %s63 = sphi 0, %s61
      %s75 = sphi 0, %s77
      %s78 = sphi 0, %s75
      %s79 = sphi 0, %s78
      %s95 = sphi 0, %s79
      %s103 = sphi 0, %s105
      %s106 = sphi 0, %s103
      %s107 = sphi 0, %s106
      %s123 = sphi 0, %s107
      %s131 = sphi 0, %s133
      %s134 = sphi 0, %s131
      %s135 = sphi 0, %s134
      %s151 = sphi 0, %s135
    $region4: #{wrapped_segmenter_forward.1} parent=1 // loop_header_branch
      %54 = sbr.rel (%p52) target = $region8
    $region5: #{wrapped_segmenter_forward.1} parent=1 // loop_body
      %s56 = ssub.s32 %s51, 1
      %s57 = ssub.s32 %s51, 2
      %s64 = sadd.s32 1, %s59
      %p65 = scmp.ge.s32.totalorder %s64, 2
      %s66 = scalar_select %p65, 0, %s64
      %s67 = sadd.s32 1, %s58
      %s68 = scalar_select %p65, %s67, %s58
      %p69 = scmp.ge.s32.totalorder %s68, 2
      %s70 = scalar_select %p69, 0, %s68
      %s71 = ssub.s32 %s58, %s70
      %s72 = ssub.s32 %s59, %s66
      %s73 = sor.u32 %s71, %s72
      %p74 = scmp.eq.s32.totalorder %s73, 0
      %s76 = sadd.s32 %s75, 1
      %s77 = scalar_select %p74, %s75, %s76
      %p80 = pneg %p74
      %p81 = scmp.eq.s32.totalorder %s51, 3
      %p82 = por %p80, %p81
      %p83 = scmp.ne.s32.totalorder %s75, %s78
      %p84 = scmp.eq.s32.totalorder %s51, 0
      %p85 = por %p83, %p84
      %p86 = scmp.ne.s32.totalorder %s75, %s78
      %p87 = scmp.eq.s32.totalorder %s56, 3
      %p88 = por %p86, %p87
      %p89 = scmp.ne.s32.totalorder %s78, %s79
      %p90 = scmp.eq.s32.totalorder %s56, 0
      %p91 = por %p89, %p90
      %p92 = scmp.ne.s32.totalorder %s78, %s79
      %p93 = scmp.eq.s32.totalorder %s57, 3
      %p94 = por %p92, %p93
      %p96 = scmp.ne.s32.totalorder %s79, %s95
      %p97 = scmp.eq.s32.totalorder %s57, 0
      %p98 = por %p96, %p97
      %s99 = ssub.s32 %s58, %s70
      %s100 = ssub.s32 %s59, %s66
      %s101 = sor.u32 %s99, %s100
      %p102 = scmp.eq.s32.totalorder %s101, 0
      %s104 = sadd.s32 %s103, 1
      %s105 = scalar_select %p102, %s103, %s104
      %p108 = pneg %p102
      %p109 = scmp.eq.s32.totalorder %s51, 3
      %p110 = por %p108, %p109
      %p111 = scmp.ne.s32.totalorder %s103, %s106
      %p112 = scmp.eq.s32.totalorder %s51, 0
      %p113 = por %p111, %p112
      %p114 = scmp.ne.s32.totalorder %s103, %s106
      %p115 = scmp.eq.s32.totalorder %s56, 3
      %p116 = por %p114, %p115
      %p117 = scmp.ne.s32.totalorder %s106, %s107
      %p118 = scmp.eq.s32.totalorder %s56, 0
      %p119 = por %p117, %p118
      %p120 = scmp.ne.s32.totalorder %s106, %s107
      %p121 = scmp.eq.s32.totalorder %s57, 3
      %p122 = por %p120, %p121
      %p124 = scmp.ne.s32.totalorder %s107, %s123
      %p125 = scmp.eq.s32.totalorder %s57, 0
      %p126 = por %p124, %p125
      %s127 = ssub.s32 %s58, %s70
      %s128 = ssub.s32 %s59, %s66
      %s129 = sor.u32 %s127, %s128
      %p130 = scmp.eq.s32.totalorder %s129, 0
      %s132 = sadd.s32 %s131, 1
      %s133 = scalar_select %p130, %s131, %s132
      %p136 = pneg %p130
      %p137 = scmp.eq.s32.totalorder %s51, 3
      %p138 = por %p136, %p137
      %p139 = scmp.ne.s32.totalorder %s131, %s134
      %p140 = scmp.eq.s32.totalorder %s51, 0
      %p141 = por %p139, %p140
      %p142 = scmp.ne.s32.totalorder %s131, %s134
      %p143 = scmp.eq.s32.totalorder %s56, 3
      %p144 = por %p142, %p143
      %p145 = scmp.ne.s32.totalorder %s134, %s135
      %p146 = scmp.eq.s32.totalorder %s56, 0
      %p147 = por %p145, %p146
      %p148 = scmp.ne.s32.totalorder %s134, %s135
      %p149 = scmp.eq.s32.totalorder %s57, 3
      %p150 = por %p148, %p149
      %p152 = scmp.ne.s32.totalorder %s135, %s151
      %p153 = scmp.eq.s32.totalorder %s57, 0
      %p154 = por %p152, %p153
      %p155 = scmp.le.s32.totalorder 1, %s51
      %p156 = scmp.lt.s32.totalorder %s51, 5
      %p157 = pnand %p155, %p156
      %p158 = pneg %p157
      // Predicated region
      $region9: #{wrapped_segmenter_forward.1} parent=5 // pred_check
        _
      $region10: #{wrapped_segmenter_forward.1} parent=5 // pred_check_branch
        %160 = sbr.rel (%p157) target = $region12
      $region11: #{wrapped_segmenter_forward.1} parent=5 // pred_region
        %s161 = ssub.s32 %s51, 1
      $region12: #{wrapped_segmenter_forward.1} parent=5 // pred_fallthru
        _
      %p162 = scmp.lt.s32.totalorder %s51, 4
      // Predicated region
      $region13: #{wrapped_segmenter_forward.1} parent=5 // pred_check
        %p163 = pneg %p162
      $region14: #{wrapped_segmenter_forward.1} parent=5 // pred_check_branch
        %165 = sbr.rel (%p163) target = $region16
      $region15: #{wrapped_segmenter_forward.1} parent=5 // pred_region
        // Predicated region
        $region17: #{wrapped_segmenter_forward.1} parent=15 // pred_check
          %p166 = pneg %p85
        $region18: #{wrapped_segmenter_forward.1} parent=15 // pred_check_branch
          %168 = sbr.rel (%p166) target = $region20
        $region19: #{wrapped_segmenter_forward.1} parent=15 // pred_region
          %p169 = scmp.lt.s32.totalorder %s58, 1
          %s170 = scalar_select %p169, %s58, 1
          %p171 = scmp.lt.s32.totalorder %s59, 1
          %s172 = scalar_select %p171, %s59, 1
          %s173 = smul.addr %s172, 6
          %s174 = smul.addr %s170, 12
          %s175 = sadd.s32 %s173, %s174
          %s176 = smul.addr %s175, 8
          %s177 = scalar_lea.vmem %s6, %s176
        $region20: #{wrapped_segmenter_forward.1} parent=15 // pred_fallthru
          _
      $region16: #{wrapped_segmenter_forward.1} parent=5 // pred_fallthru
        _
      %p178 = scmp.le.s32.totalorder 1, %s51
      %p179 = scmp.lt.s32.totalorder %s51, 5
      %p180 = pnand %p178, %p179
      %p181 = pneg %p180
      // Predicated region
      $region21: #{wrapped_segmenter_forward.1} parent=5 // pred_check
        _
      $region22: #{wrapped_segmenter_forward.1} parent=5 // pred_check_branch
        %183 = sbr.rel (%p180) target = $region24
      $region23: #{wrapped_segmenter_forward.1} parent=5 // pred_region
        %s184 = ssub.s32 %s51, 1
        %p185 = scmp.lt.s32.totalorder %s60, 1
        %s186 = scalar_select %p185, %s60, 1
        %p187 = scmp.lt.s32.totalorder %s61, 1
        %s188 = scalar_select %p187, %s61, 1
        %s189 = smul.addr %s188, 6
        %s190 = smul.addr %s186, 12
        %s191 = sadd.s32 %s189, %s190
        %s192 = smul.addr %s191, 8
        %s193 = scalar_lea.vmem %s6, %s192
        %p194 = pneg %p91
        %p195 = pneg %p88
        %p196 = pneg %p119
        %p197 = pneg %p116
        %s198 = sand.u32 %s106, 1
        %s199 = scalar_lea.sflag [#allocation12], %s198
        %s200 = sand.u32 %s106, 1
        %s201 = smul.addr %s200, 104
        %s202 = scalar_lea.vmem [#allocation11], %s201
        %p203 = pneg %p147
        %p204 = pneg %p144
        %s205 = sand.u32 %s134, 1
        %s206 = sand.u32 %s134, 1
        %s207 = smul.addr %s206, 192
        %s208 = scalar_lea.vmem [#allocation13], %s207
        %p209 = scmp.lt.s32.totalorder %s60, 1
        %s210 = scalar_select %p209, %s60, 1
        %p211 = scmp.lt.s32.totalorder %s61, 1
        %s212 = scalar_select %p211, %s61, 1
        %s213 = smul.addr %s212, 6
        %s214 = smul.addr %s210, 12
        %s215 = sadd.s32 %s213, %s214
        %s216 = smul.addr %s215, 8
        %s217 = scalar_lea.vmem %s6, %s216
        %v218 = vld [vmem:[%s217] sm:$0xff]
        %v219 = vld [vmem:[%s217 + $0x8] sm:$0x3f]
        %v220 = vld [vmem:[%s217 + $0x10] sm:$0xff]
        %v221 = vld [vmem:[%s217 + $0x18] sm:$0x3f]
        %v222 = vld [vmem:[%s217 + $0x20] sm:$0xff]
        %v223 = vld [vmem:[%s217 + $0x28] sm:$0x3f]
        loop: start=0, step=1, limit=8
        $region25: #{wrapped_segmenter_forward.1} parent=23 // loop_pre_header
          _
        $region26: #{wrapped_segmenter_forward.1} parent=23 // loop_header
          %s225 = sphi 0, %s229
          %p226 = scmp.ge.s32.totalorder %s225, 8
        $region27: #{wrapped_segmenter_forward.1} parent=23 // loop_header_branch
          %228 = sbr.rel (%p226) target = $region31
        $region28: #{wrapped_segmenter_forward.1} parent=23 // loop_body
          %s230 = sld [smem:[#allocation6 + %s225]]
          %v231 = vstv %s230
          %v232 = vadd.f32 %v231, 0.0
          %s233 = sld [smem:[#allocation5 + %s225]]
          %v234 = vstv %s233
          %v235 = vmul.f32 %v234, %v218
          %v236 = vmul.f32 %v234, %v219
          %v237 = vadd.f32 %v232, %v235
          %v238 = vadd.f32 %v232, %v236
          %s239 = sadd.s32 %s225, 8
          %s240 = sld [smem:[#allocation5 + %s239]]
          %v241 = vstv %s240
          %v242 = vmul.f32 %v241, %v220
          %v243 = vmul.f32 %v241, %v221
          %v244 = vadd.f32 %v237, %v242
          %v245 = vadd.f32 %v238, %v243
          %s246 = sadd.s32 %s225, 16
          %s247 = sld [smem:[#allocation5 + %s246]]
          %v248 = vstv %s247
          %v249 = vmul.f32 %v248, %v222
          %v250 = vmul.f32 %v248, %v223
          %v251 = vadd.f32 %v244, %v249
          %v252 = vadd.f32 %v245, %v250
          %s253 = sadd.s32 %s225, 24
          %s254 = sld [smem:[#allocation5 + %s253]]
          %v255 = vstv %s254
          %v256 = vmul.f32 %v255, %v218
          %v257 = vmul.f32 %v255, %v219
          %260 = vrot.lane.b32.xlu0 %v256, 127
          %v261 = vpop.permute.xlu0 %260
          %262 = vrot.lane.b32.xlu0 %v257, 127
          %v263 = vpop.permute.xlu0 %262
          %v266 = vadd.f32 %v251, %v261
          %v267 = vadd.f32 %v252, %v263
          %s268 = sadd.s32 %s225, 32
          %s269 = sld [smem:[#allocation5 + %s268]]
          %v270 = vstv %s269
          %v271 = vmul.f32 %v270, %v220
          %v272 = vmul.f32 %v270, %v221
          %275 = vrot.lane.b32.xlu0 %v271, 127
          %v276 = vpop.permute.xlu0 %275
          %277 = vrot.lane.b32.xlu0 %v272, 127
          %v278 = vpop.permute.xlu0 %277
          %v281 = vadd.f32 %v266, %v276
          %v282 = vadd.f32 %v267, %v278
          %s283 = sadd.s32 %s225, 40
          %s284 = sld [smem:[#allocation5 + %s283]]
          %v285 = vstv %s284
          %v286 = vmul.f32 %v285, %v222
          %v287 = vmul.f32 %v285, %v223
          %290 = vrot.lane.b32.xlu0 %v286, 127
          %v291 = vpop.permute.xlu0 %290
          %292 = vrot.lane.b32.xlu0 %v287, 127
          %v293 = vpop.permute.xlu0 %292
          %v296 = vadd.f32 %v281, %v291
          %v297 = vadd.f32 %v282, %v293
          %s298 = sadd.s32 %s225, 48
          %s299 = sld [smem:[#allocation5 + %s298]]
          %v300 = vstv %s299
          %v301 = vmul.f32 %v300, %v218
          %v302 = vmul.f32 %v300, %v219
          %305 = vrot.lane.b32.xlu0 %v301, 126
          %v306 = vpop.permute.xlu0 %305
          %307 = vrot.lane.b32.xlu0 %v302, 126
          %v308 = vpop.permute.xlu0 %307
          %v311 = vadd.f32 %v296, %v306
          %v312 = vadd.f32 %v297, %v308
          %s313 = sadd.s32 %s225, 56
          %s314 = sld [smem:[#allocation5 + %s313]]
          %v315 = vstv %s314
          %v316 = vmul.f32 %v315, %v220
          %v317 = vmul.f32 %v315, %v221
          %320 = vrot.lane.b32.xlu0 %v316, 126
          %v321 = vpop.permute.xlu0 %320
          %322 = vrot.lane.b32.xlu0 %v317, 126
          %v323 = vpop.permute.xlu0 %322
          %v326 = vadd.f32 %v311, %v321
          %v327 = vadd.f32 %v312, %v323
          %s328 = sadd.s32 %s225, 64
          %s329 = sld [smem:[#allocation5 + %s328]]
          %v330 = vstv %s329
          %v331 = vmul.f32 %v330, %v222
          %v332 = vmul.f32 %v330, %v223
          %335 = vrot.lane.b32.xlu0 %v331, 126
          %v336 = vpop.permute.xlu0 %335
          %337 = vrot.lane.b32.xlu0 %v332, 126
          %v338 = vpop.permute.xlu0 %337
          %v341 = vadd.f32 %v326, %v336
          %v342 = vadd.f32 %v327, %v338
          %s343 = sadd.s32 %s225, 72
          %s344 = sld [smem:[#allocation5 + %s343]]
          %v345 = vstv %s344
          %v346 = vmul.f32 %v345, %v218
          %v347 = vmul.f32 %v345, %v219
          %vm350 = vcmask 1046528
          %v351 = vrot.slane %v346, 1
          %v352 = vrot.slane %v347, 1
          %v353 = vsel %vm350, %v351, %v352
          %v356 = vadd.f32 %v341, %v353
          %v357 = vadd.f32 %v342, %v352
          %s358 = sadd.s32 %s225, 80
          %s359 = sld [smem:[#allocation5 + %s358]]
          %v360 = vstv %s359
          %v361 = vmul.f32 %v360, %v220
          %v362 = vmul.f32 %v360, %v221
          %v365 = vrot.slane %v361, 1
          %v366 = vrot.slane %v362, 1
          %v367 = vsel %vm350, %v365, %v366
          %v370 = vadd.f32 %v356, %v367
          %v371 = vadd.f32 %v357, %v366
          %s372 = sadd.s32 %s225, 88
          %s373 = sld [smem:[#allocation5 + %s372]]
          %v374 = vstv %s373
          %v375 = vmul.f32 %v374, %v222
          %v376 = vmul.f32 %v374, %v223
          %v379 = vrot.slane %v375, 1
          %v380 = vrot.slane %v376, 1
          %v381 = vsel %vm350, %v379, %v380
          %v384 = vadd.f32 %v370, %v381
          %v385 = vadd.f32 %v371, %v380
          %s386 = sadd.s32 %s225, 96
          %s387 = sld [smem:[#allocation5 + %s386]]
          %v388 = vstv %s387
          %v389 = vmul.f32 %v388, %v218
          %v390 = vmul.f32 %v388, %v219
          %v393 = vrot.slane %v389, 1
          %v394 = vrot.slane %v390, 1
          %v395 = vsel %vm350, %v393, %v394
          %396 = vrot.lane.b32.xlu0 %v395, 127
          %v397 = vpop.permute.xlu0 %396
          %398 = vrot.lane.b32.xlu0 %v394, 127
          %v399 = vpop.permute.xlu0 %398
          %v402 = vadd.f32 %v384, %v397
          %v403 = vadd.f32 %v385, %v399
          %s404 = sadd.s32 %s225, 104
          %s405 = sld [smem:[#allocation5 + %s404]]
          %v406 = vstv %s405
          %v407 = vmul.f32 %v406, %v220
          %v408 = vmul.f32 %v406, %v221
          %v411 = vrot.slane %v407, 1
          %v412 = vrot.slane %v408, 1
          %v413 = vsel %vm350, %v411, %v412
          %414 = vrot.lane.b32.xlu0 %v413, 127
          %v415 = vpop.permute.xlu0 %414
          %416 = vrot.lane.b32.xlu0 %v412, 127
          %v417 = vpop.permute.xlu0 %416
          %v420 = vadd.f32 %v402, %v415
          %v421 = vadd.f32 %v403, %v417
          %s422 = sadd.s32 %s225, 112
          %s423 = sld [smem:[#allocation5 + %s422]]
          %v424 = vstv %s423
          %v425 = vmul.f32 %v424, %v222
          %v426 = vmul.f32 %v424, %v223
          %v429 = vrot.slane %v425, 1
          %v430 = vrot.slane %v426, 1
          %v431 = vsel %vm350, %v429, %v430
          %432 = vrot.lane.b32.xlu0 %v431, 127
          %v433 = vpop.permute.xlu0 %432
          %434 = vrot.lane.b32.xlu0 %v430, 127
          %v435 = vpop.permute.xlu0 %434
          %v438 = vadd.f32 %v420, %v433
          %v439 = vadd.f32 %v421, %v435
          %s440 = sadd.s32 %s225, 120
          %s441 = sld [smem:[#allocation5 + %s440]]
          %v442 = vstv %s441
          %v443 = vmul.f32 %v442, %v218
          %v444 = vmul.f32 %v442, %v219
          %v447 = vrot.slane %v443, 1
          %v448 = vrot.slane %v444, 1
          %v449 = vsel %vm350, %v447, %v448
          %450 = vrot.lane.b32.xlu0 %v449, 126
          %v451 = vpop.permute.xlu0 %450
          %452 = vrot.lane.b32.xlu0 %v448, 126
          %v453 = vpop.permute.xlu0 %452
          %v456 = vadd.f32 %v438, %v451
          %v457 = vadd.f32 %v439, %v453
          %s458 = sadd.s32 %s225, 128
          %s459 = sld [smem:[#allocation5 + %s458]]
          %v460 = vstv %s459
          %v461 = vmul.f32 %v460, %v220
          %v462 = vmul.f32 %v460, %v221
          %v465 = vrot.slane %v461, 1
          %v466 = vrot.slane %v462, 1
          %v467 = vsel %vm350, %v465, %v466
          %468 = vrot.lane.b32.xlu0 %v467, 126
          %v469 = vpop.permute.xlu0 %468
          %470 = vrot.lane.b32.xlu0 %v466, 126
          %v471 = vpop.permute.xlu0 %470
          %v474 = vadd.f32 %v456, %v469
          %v475 = vadd.f32 %v457, %v471
          %s476 = sadd.s32 %s225, 136
          %s477 = sld [smem:[#allocation5 + %s476]]
          %v478 = vstv %s477
          %v479 = vmul.f32 %v478, %v222
          %v480 = vmul.f32 %v478, %v223
          %v483 = vrot.slane %v479, 1
          %v484 = vrot.slane %v480, 1
          %v485 = vsel %vm350, %v483, %v484
          %486 = vrot.lane.b32.xlu0 %v485, 126
          %v487 = vpop.permute.xlu0 %486
          %488 = vrot.lane.b32.xlu0 %v484, 126
          %v489 = vpop.permute.xlu0 %488
          %v492 = vadd.f32 %v474, %v487
          %v493 = vadd.f32 %v475, %v489
          %s494 = sadd.s32 %s225, 144
          %s495 = sld [smem:[#allocation5 + %s494]]
          %v496 = vstv %s495
          %v497 = vmul.f32 %v496, %v218
          %v498 = vmul.f32 %v496, %v219
          %vm501 = vcmask 1045504
          %v502 = vrot.slane %v497, 2
          %v503 = vrot.slane %v498, 2
          %v504 = vsel %vm501, %v502, %v503
          %v507 = vadd.f32 %v492, %v504
          %v508 = vadd.f32 %v493, %v503
          %s509 = sadd.s32 %s225, 152
          %s510 = sld [smem:[#allocation5 + %s509]]
          %v511 = vstv %s510
          %v512 = vmul.f32 %v511, %v220
          %v513 = vmul.f32 %v511, %v221
          %v516 = vrot.slane %v512, 2
          %v517 = vrot.slane %v513, 2
          %v518 = vsel %vm501, %v516, %v517
          %v521 = vadd.f32 %v507, %v518
          %v522 = vadd.f32 %v508, %v517
          %s523 = sadd.s32 %s225, 160
          %s524 = sld [smem:[#allocation5 + %s523]]
          %v525 = vstv %s524
          %v526 = vmul.f32 %v525, %v222
          %v527 = vmul.f32 %v525, %v223
          %v530 = vrot.slane %v526, 2
          %v531 = vrot.slane %v527, 2
          %v532 = vsel %vm501, %v530, %v531
          %v535 = vadd.f32 %v521, %v532
          %v536 = vadd.f32 %v522, %v531
          %s537 = sadd.s32 %s225, 168
          %s538 = sld [smem:[#allocation5 + %s537]]
          %v539 = vstv %s538
          %v540 = vmul.f32 %v539, %v218
          %v541 = vmul.f32 %v539, %v219
          %v544 = vrot.slane %v540, 2
          %v545 = vrot.slane %v541, 2
          %v546 = vsel %vm501, %v544, %v545
          %547 = vrot.lane.b32.xlu0 %v546, 127
          %v548 = vpop.permute.xlu0 %547
          %549 = vrot.lane.b32.xlu0 %v545, 127
          %v550 = vpop.permute.xlu0 %549
          %v553 = vadd.f32 %v535, %v548
          %v554 = vadd.f32 %v536, %v550
          %s555 = sadd.s32 %s225, 176
          %s556 = sld [smem:[#allocation5 + %s555]]
          %v557 = vstv %s556
          %v558 = vmul.f32 %v557, %v220
          %v559 = vmul.f32 %v557, %v221
          %v562 = vrot.slane %v558, 2
          %v563 = vrot.slane %v559, 2
          %v564 = vsel %vm501, %v562, %v563
          %565 = vrot.lane.b32.xlu0 %v564, 127
          %v566 = vpop.permute.xlu0 %565
          %567 = vrot.lane.b32.xlu0 %v563, 127
          %v568 = vpop.permute.xlu0 %567
          %v571 = vadd.f32 %v553, %v566
          %v572 = vadd.f32 %v554, %v568
          %s573 = sadd.s32 %s225, 184
          %s574 = sld [smem:[#allocation5 + %s573]]
          %v575 = vstv %s574
          %v576 = vmul.f32 %v575, %v222
          %v577 = vmul.f32 %v575, %v223
          %v580 = vrot.slane %v576, 2
          %v581 = vrot.slane %v577, 2
          %v582 = vsel %vm501, %v580, %v581
          %583 = vrot.lane.b32.xlu0 %v582, 127
          %v584 = vpop.permute.xlu0 %583
          %585 = vrot.lane.b32.xlu0 %v581, 127
          %v586 = vpop.permute.xlu0 %585
          %v589 = vadd.f32 %v571, %v584
          %v590 = vadd.f32 %v572, %v586
          %s591 = sadd.s32 %s225, 192
          %s592 = sld [smem:[#allocation5 + %s591]]
          %v593 = vstv %s592
          %v594 = vmul.f32 %v593, %v218
          %v595 = vmul.f32 %v593, %v219
          %v598 = vrot.slane %v594, 2
          %v599 = vrot.slane %v595, 2
          %v600 = vsel %vm501, %v598, %v599
          %601 = vrot.lane.b32.xlu0 %v600, 126
          %v602 = vpop.permute.xlu0 %601
          %603 = vrot.lane.b32.xlu0 %v599, 126
          %v604 = vpop.permute.xlu0 %603
          %v607 = vadd.f32 %v589, %v602
          %v608 = vadd.f32 %v590, %v604
          %s609 = sadd.s32 %s225, 200
          %s610 = sld [smem:[#allocation5 + %s609]]
          %v611 = vstv %s610
          %v612 = vmul.f32 %v611, %v220
          %v613 = vmul.f32 %v611, %v221
          %v616 = vrot.slane %v612, 2
          %v617 = vrot.slane %v613, 2
          %v618 = vsel %vm501, %v616, %v617
          %619 = vrot.lane.b32.xlu0 %v618, 126
          %v620 = vpop.permute.xlu0 %619
          %621 = vrot.lane.b32.xlu0 %v617, 126
          %v622 = vpop.permute.xlu0 %621
          %v625 = vadd.f32 %v607, %v620
          %v626 = vadd.f32 %v608, %v622
          %s627 = sadd.s32 %s225, 208
          %s628 = sld [smem:[#allocation5 + %s627]]
          %v629 = vstv %s628
          %v630 = vmul.f32 %v629, %v222
          %v631 = vmul.f32 %v629, %v223
          %v634 = vrot.slane %v630, 2
          %v635 = vrot.slane %v631, 2
          %v636 = vsel %vm501, %v634, %v635
          %637 = vrot.lane.b32.xlu0 %v636, 126
          %v638 = vpop.permute.xlu0 %637
          %639 = vrot.lane.b32.xlu0 %v635, 126
          %v640 = vpop.permute.xlu0 %639
          %v643 = vadd.f32 %v625, %v638
          %v644 = vadd.f32 %v626, %v640
          %v645 = vmax.f32 %v643, 0.0
          %v646 = vmax.f32 %v644, 0.0
          %s647 = smul.u32 %s225, 16
          %s648 = scalar_lea.vmem [#allocation2], %s647
          %vm649 = vcmask 130048
          %650 = vst.msk [vmem:[%s648] sm:$0xff] %vm649, %v645
          %vm651 = vcmask 125952
          %652 = vst.msk [vmem:[%s648 + $0x8] sm:$0xf] %vm651, %v646
        $region29: #{wrapped_segmenter_forward.1} parent=23 // loop_footer
          %s229 = sadd.s32 1, %s225
        $region30: #{wrapped_segmenter_forward.1} parent=23 // loop_footer_branch
          %224 = sbr.rel target = $region26
        $region31: #{wrapped_segmenter_forward.1} parent=23 // loop_exit
          _
        %v653 = vld [vmem:[#allocation2] sm:$0xff]
        %v654 = vld [vmem:[#allocation2 + $0x8] sm:$0xf]
        %v655 = vld [vmem:[#allocation2 + $0x10] sm:$0xff]
        %v656 = vld [vmem:[#allocation2 + $0x18] sm:$0xf]
        %v657 = vld [vmem:[#allocation2 + $0x20] sm:$0xff]
        %v658 = vld [vmem:[#allocation2 + $0x28] sm:$0xf]
        %v659 = vld [vmem:[#allocation2 + $0x30] sm:$0xff]
        %v660 = vld [vmem:[#allocation2 + $0x38] sm:$0xf]
        %v661 = vld [vmem:[#allocation2 + $0x40] sm:$0xff]
        %v662 = vld [vmem:[#allocation2 + $0x48] sm:$0xf]
        %v663 = vld [vmem:[#allocation2 + $0x50] sm:$0xff]
        %v664 = vld [vmem:[#allocation2 + $0x58] sm:$0xf]
        %v665 = vld [vmem:[#allocation2 + $0x60] sm:$0xff]
        %v666 = vld [vmem:[#allocation2 + $0x68] sm:$0xf]
        %v667 = vld [vmem:[#allocation2 + $0x70] sm:$0xff]
        %v668 = vld [vmem:[#allocation2 + $0x78] sm:$0xf]
        %v669 = vlaneseq
        %v670 = vshrl.u32 %v669, 7
        %v671 = vadd.s32 %v670, 8
        %v672 = vlaneseq
        %v673 = vand.u32 %v672, 127
        %v674 = vand.u32 %v670, 1
        %v675 = vand.u32 %v671, 1
        %vm676 = vcmp.eq.s32.totalorder %v674, 0
        %vm677 = vcmp.eq.s32.totalorder %v675, 0
        %v678 = vand.u32 %v673, 1
        %vm679 = vcmp.eq.s32.totalorder %v678, 0
        %vm696 = vcmask 1046528
        %v697 = vrot.slane %v653, 1
        %v698 = vrot.slane %v654, 1
        %v699 = vsel %vm696, %v697, %v698
        %v700 = vrot.slane %v655, 1
        %v701 = vrot.slane %v656, 1
        %v702 = vsel %vm696, %v700, %v701
        %v703 = vrot.slane %v657, 1
        %v704 = vrot.slane %v658, 1
        %v705 = vsel %vm696, %v703, %v704
        %v706 = vrot.slane %v659, 1
        %v707 = vrot.slane %v660, 1
        %v708 = vsel %vm696, %v706, %v707
        %v709 = vrot.slane %v661, 1
        %v710 = vrot.slane %v662, 1
        %v711 = vsel %vm696, %v709, %v710
        %v712 = vrot.slane %v663, 1
        %v713 = vrot.slane %v664, 1
        %v714 = vsel %vm696, %v712, %v713
        %v715 = vrot.slane %v665, 1
        %v716 = vrot.slane %v666, 1
        %v717 = vsel %vm696, %v715, %v716
        %v718 = vrot.slane %v667, 1
        %v719 = vrot.slane %v668, 1
        %v720 = vsel %vm696, %v718, %v719
        %vm737 = vcmask 1042432
        %v738 = vsel %vm737, %v698, %v654
        %v739 = vsel %vm737, %v701, %v656
        %v740 = vsel %vm737, %v704, %v658
        %v741 = vsel %vm737, %v707, %v660
        %v742 = vsel %vm737, %v710, %v662
        %v743 = vsel %vm737, %v713, %v664
        %v744 = vsel %vm737, %v716, %v666
        %v745 = vsel %vm737, %v719, %v668
        %vm746 = vcmask 1040384
        %v747 = vrot.slane %v653, 7
        %v748 = vrot.slane %v654, 7
        %v749 = vsel %vm746, %v747, %v748
        %v750 = vrot.slane %v655, 7
        %v751 = vrot.slane %v656, 7
        %v752 = vsel %vm746, %v750, %v751
        %v753 = vrot.slane %v657, 7
        %v754 = vrot.slane %v658, 7
        %v755 = vsel %vm746, %v753, %v754
        %v756 = vrot.slane %v659, 7
        %v757 = vrot.slane %v660, 7
        %v758 = vsel %vm746, %v756, %v757
        %v759 = vrot.slane %v661, 7
        %v760 = vrot.slane %v662, 7
        %v761 = vsel %vm746, %v759, %v760
        %v762 = vrot.slane %v663, 7
        %v763 = vrot.slane %v664, 7
        %v764 = vsel %vm746, %v762, %v763
        %v765 = vrot.slane %v665, 7
        %v766 = vrot.slane %v666, 7
        %v767 = vsel %vm746, %v765, %v766
        %v768 = vrot.slane %v667, 7
        %v769 = vrot.slane %v668, 7
        %v770 = vsel %vm746, %v768, %v769
        %v787 = vsel %vm746, %v653, %v747
        %v788 = vsel %vm746, %v655, %v750
        %v789 = vsel %vm746, %v657, %v753
        %v790 = vsel %vm746, %v659, %v756
        %v791 = vsel %vm746, %v661, %v759
        %v792 = vsel %vm746, %v663, %v762
        %v793 = vsel %vm746, %v665, %v765
        %v794 = vsel %vm746, %v667, %v768
        %v795 = vsel %vm676, 1, 0
        %v796 = vsel %vm677, 1, 0
        %vm797 = vcmp.eq.s32.totalorder %v795, 1
        %vm798 = vcmp.eq.s32.totalorder %v796, 1
        %v799 = vsel %vm797, %v699, %v787
        %v800 = vsel %vm798, %v738, %v749
        %v801 = vsel %vm797, %v702, %v788
        %v802 = vsel %vm798, %v739, %v752
        %v803 = vsel %vm797, %v705, %v789
        %v804 = vsel %vm798, %v740, %v755
        %v805 = vsel %vm797, %v708, %v790
        %v806 = vsel %vm798, %v741, %v758
        %v807 = vsel %vm797, %v711, %v791
        %v808 = vsel %vm798, %v742, %v761
        %v809 = vsel %vm797, %v714, %v792
        %v810 = vsel %vm798, %v743, %v764
        %v811 = vsel %vm797, %v717, %v793
        %v812 = vsel %vm798, %v744, %v767
        %v813 = vsel %vm797, %v720, %v794
        %v814 = vsel %vm798, %v745, %v770
        %v815 = vmax.f32 %v653, %v799
        %v816 = vmax.f32 %v654, %v800
        %v817 = vmax.f32 %v655, %v801
        %v818 = vmax.f32 %v656, %v802
        %v819 = vmax.f32 %v657, %v803
        %v820 = vmax.f32 %v658, %v804
        %v821 = vmax.f32 %v659, %v805
        %v822 = vmax.f32 %v660, %v806
        %v823 = vmax.f32 %v661, %v807
        %v824 = vmax.f32 %v662, %v808
        %v825 = vmax.f32 %v663, %v809
        %v826 = vmax.f32 %v664, %v810
        %v827 = vmax.f32 %v665, %v811
        %v828 = vmax.f32 %v666, %v812
        %v829 = vmax.f32 %v667, %v813
        %v830 = vmax.f32 %v668, %v814
        %847 = vrot.lane.b32.xlu0 %v815, 127
        %v848 = vpop.permute.xlu0 %847
        %849 = vrot.lane.b32.xlu0 %v816, 127
        %v850 = vpop.permute.xlu0 %849
        %851 = vrot.lane.b32.xlu0 %v817, 127
        %v852 = vpop.permute.xlu0 %851
        %853 = vrot.lane.b32.xlu0 %v818, 127
        %v854 = vpop.permute.xlu0 %853
        %855 = vrot.lane.b32.xlu0 %v819, 127
        %v856 = vpop.permute.xlu0 %855
        %857 = vrot.lane.b32.xlu0 %v820, 127
        %v858 = vpop.permute.xlu0 %857
        %859 = vrot.lane.b32.xlu0 %v821, 127
        %v860 = vpop.permute.xlu0 %859
        %861 = vrot.lane.b32.xlu0 %v822, 127
        %v862 = vpop.permute.xlu0 %861
        %863 = vrot.lane.b32.xlu0 %v823, 127
        %v864 = vpop.permute.xlu0 %863
        %865 = vrot.lane.b32.xlu0 %v824, 127
        %v866 = vpop.permute.xlu0 %865
        %867 = vrot.lane.b32.xlu0 %v825, 127
        %v868 = vpop.permute.xlu0 %867
        %869 = vrot.lane.b32.xlu0 %v826, 127
        %v870 = vpop.permute.xlu0 %869
        %871 = vrot.lane.b32.xlu0 %v827, 127
        %v872 = vpop.permute.xlu0 %871
        %873 = vrot.lane.b32.xlu0 %v828, 127
        %v874 = vpop.permute.xlu0 %873
        %875 = vrot.lane.b32.xlu0 %v829, 127
        %v876 = vpop.permute.xlu0 %875
        %877 = vrot.lane.b32.xlu0 %v830, 127
        %v878 = vpop.permute.xlu0 %877
        %vm895 = vcmask 121856
        %v896 = vsel %vm895, %v848, %v815
        %v897 = vsel %vm895, %v850, %v816
        %v898 = vsel %vm895, %v852, %v817
        %v899 = vsel %vm895, %v854, %v818
        %v900 = vsel %vm895, %v856, %v819
        %v901 = vsel %vm895, %v858, %v820
        %v902 = vsel %vm895, %v860, %v821
        %v903 = vsel %vm895, %v862, %v822
        %v904 = vsel %vm895, %v864, %v823
        %v905 = vsel %vm895, %v866, %v824
        %v906 = vsel %vm895, %v868, %v825
        %v907 = vsel %vm895, %v870, %v826
        %v908 = vsel %vm895, %v872, %v827
        %v909 = vsel %vm895, %v874, %v828
        %v910 = vsel %vm895, %v876, %v829
        %v911 = vsel %vm895, %v878, %v830
        %912 = vrot.lane.b32.xlu0 %v815, 1
        %v913 = vpop.permute.xlu0 %912
        %914 = vrot.lane.b32.xlu0 %v816, 1
        %v915 = vpop.permute.xlu0 %914
        %916 = vrot.lane.b32.xlu0 %v817, 1
        %v917 = vpop.permute.xlu0 %916
        %918 = vrot.lane.b32.xlu0 %v818, 1
        %v919 = vpop.permute.xlu0 %918
        %920 = vrot.lane.b32.xlu0 %v819, 1
        %v921 = vpop.permute.xlu0 %920
        %922 = vrot.lane.b32.xlu0 %v820, 1
        %v923 = vpop.permute.xlu0 %922
        %924 = vrot.lane.b32.xlu0 %v821, 1
        %v925 = vpop.permute.xlu0 %924
        %926 = vrot.lane.b32.xlu0 %v822, 1
        %v927 = vpop.permute.xlu0 %926
        %928 = vrot.lane.b32.xlu0 %v823, 1
        %v929 = vpop.permute.xlu0 %928
        %930 = vrot.lane.b32.xlu0 %v824, 1
        %v931 = vpop.permute.xlu0 %930
        %932 = vrot.lane.b32.xlu0 %v825, 1
        %v933 = vpop.permute.xlu0 %932
        %934 = vrot.lane.b32.xlu0 %v826, 1
        %v935 = vpop.permute.xlu0 %934
        %936 = vrot.lane.b32.xlu0 %v827, 1
        %v937 = vpop.permute.xlu0 %936
        %938 = vrot.lane.b32.xlu0 %v828, 1
        %v939 = vpop.permute.xlu0 %938
        %940 = vrot.lane.b32.xlu0 %v829, 1
        %v941 = vpop.permute.xlu0 %940
        %942 = vrot.lane.b32.xlu0 %v830, 1
        %v943 = vpop.permute.xlu0 %942
        %vm960 = vcmask 7168
        %v961 = vsel %vm960, %v815, %v913
        %v962 = vsel %vm960, %v816, %v915
        %v963 = vsel %vm960, %v817, %v917
        %v964 = vsel %vm960, %v818, %v919
        %v965 = vsel %vm960, %v819, %v921
        %v966 = vsel %vm960, %v820, %v923
        %v967 = vsel %vm960, %v821, %v925
        %v968 = vsel %vm960, %v822, %v927
        %v969 = vsel %vm960, %v823, %v929
        %v970 = vsel %vm960, %v824, %v931
        %v971 = vsel %vm960, %v825, %v933
        %v972 = vsel %vm960, %v826, %v935
        %v973 = vsel %vm960, %v827, %v937
        %v974 = vsel %vm960, %v828, %v939
        %v975 = vsel %vm960, %v829, %v941
        %v976 = vsel %vm960, %v830, %v943
        %v977 = vsel %vm679, 1, 0
        %vm978 = vcmp.eq.s32.totalorder %v977, 1
        %v979 = vsel %vm978, %v896, %v961
        %v980 = vsel %vm978, %v897, %v962
        %v981 = vsel %vm978, %v898, %v963
        %v982 = vsel %vm978, %v899, %v964
        %v983 = vsel %vm978, %v900, %v965
        %v984 = vsel %vm978, %v901, %v966
        %v985 = vsel %vm978, %v902, %v967
        %v986 = vsel %vm978, %v903, %v968
        %v987 = vsel %vm978, %v904, %v969
        %v988 = vsel %vm978, %v905, %v970
        %v989 = vsel %vm978, %v906, %v971
        %v990 = vsel %vm978, %v907, %v972
        %v991 = vsel %vm978, %v908, %v973
        %v992 = vsel %vm978, %v909, %v974
        %v993 = vsel %vm978, %v910, %v975
        %v994 = vsel %vm978, %v911, %v976
        %v995 = vmax.f32 %v815, %v979
        %v996 = vmax.f32 %v816, %v980
        %v997 = vmax.f32 %v817, %v981
        %v998 = vmax.f32 %v818, %v982
        %v999 = vmax.f32 %v819, %v983
        %v1000 = vmax.f32 %v820, %v984
        %v1001 = vmax.f32 %v821, %v985
        %v1002 = vmax.f32 %v822, %v986
        %v1003 = vmax.f32 %v823, %v987
        %v1004 = vmax.f32 %v824, %v988
        %v1005 = vmax.f32 %v825, %v989
        %v1006 = vmax.f32 %v826, %v990
        %v1007 = vmax.f32 %v827, %v991
        %v1008 = vmax.f32 %v828, %v992
        %v1009 = vmax.f32 %v829, %v993
        %v1010 = vmax.f32 %v830, %v994
        %s1011 = smul.u32 %s61, 8
        %s1012 = ssub.s32 %s1011, 2
        %v1013 = vstv %s1012
        %v1014 = vadd.s32 %v670, %v1013
        %v1015 = vadd.s32 %v671, %v1013
        %vm1016 = vcmp.ge.s32.totalorder %v1014, 0
        %vm1017 = vcmp.ge.s32.totalorder %v1015, 0
        %vm1018 = vcmp.lt.s32.totalorder %v1014, 16
        %vm1019 = vcmp.lt.s32.totalorder %v1015, 16
        %vm1020 = vmand %vm1016, %vm1018
        %vm1021 = vmand %vm1017, %vm1019
        %v1022 = vsel %vm1020, 1, 0
        %v1023 = vsel %vm1021, 1, 0
        %vm1024 = vcmp.eq.s32.totalorder %v1022, 1
        %vm1025 = vcmp.eq.s32.totalorder %v1023, 1
        %v1026 = vsel %vm1024, %v995, 0.0
        %v1027 = vsel %vm1025, %v996, 0.0
        %v1028 = vsel %vm1024, %v997, 0.0
        %v1029 = vsel %vm1025, %v998, 0.0
        %v1030 = vsel %vm1024, %v999, 0.0
        %v1031 = vsel %vm1025, %v1000, 0.0
        %v1032 = vsel %vm1024, %v1001, 0.0
        %v1033 = vsel %vm1025, %v1002, 0.0
        %v1034 = vsel %vm1024, %v1003, 0.0
        %v1035 = vsel %vm1025, %v1004, 0.0
        %v1036 = vsel %vm1024, %v1005, 0.0
        %v1037 = vsel %vm1025, %v1006, 0.0
        %v1038 = vsel %vm1024, %v1007, 0.0
        %v1039 = vsel %vm1025, %v1008, 0.0
        %v1040 = vsel %vm1024, %v1009, 0.0
        %v1041 = vsel %vm1025, %v1010, 0.0
        %1058 = vrot.lane.b32.xlu0 %v1026, 2
        %v1059 = vpop.permute.xlu0 %1058
        %1060 = vrot.lane.b32.xlu0 %v1027, 2
        %v1061 = vpop.permute.xlu0 %1060
        %1062 = vrot.lane.b32.xlu0 %v1028, 2
        %v1063 = vpop.permute.xlu0 %1062
        %1064 = vrot.lane.b32.xlu0 %v1029, 2
        %v1065 = vpop.permute.xlu0 %1064
        %1066 = vrot.lane.b32.xlu0 %v1030, 2
        %v1067 = vpop.permute.xlu0 %1066
        %1068 = vrot.lane.b32.xlu0 %v1031, 2
        %v1069 = vpop.permute.xlu0 %1068
        %1070 = vrot.lane.b32.xlu0 %v1032, 2
        %v1071 = vpop.permute.xlu0 %1070
        %1072 = vrot.lane.b32.xlu0 %v1033, 2
        %v1073 = vpop.permute.xlu0 %1072
        %1074 = vrot.lane.b32.xlu0 %v1034, 2
        %v1075 = vpop.permute.xlu0 %1074
        %1076 = vrot.lane.b32.xlu0 %v1035, 2
        %v1077 = vpop.permute.xlu0 %1076
        %1078 = vrot.lane.b32.xlu0 %v1036, 2
        %v1079 = vpop.permute.xlu0 %1078
        %1080 = vrot.lane.b32.xlu0 %v1037, 2
        %v1081 = vpop.permute.xlu0 %1080
        %1082 = vrot.lane.b32.xlu0 %v1038, 2
        %v1083 = vpop.permute.xlu0 %1082
        %1084 = vrot.lane.b32.xlu0 %v1039, 2
        %v1085 = vpop.permute.xlu0 %1084
        %1086 = vrot.lane.b32.xlu0 %v1040, 2
        %v1087 = vpop.permute.xlu0 %1086
        %1088 = vrot.lane.b32.xlu0 %v1041, 2
        %v1089 = vpop.permute.xlu0 %1088
        %vm1106 = vcmask 15360
        %v1107 = vsel %vm1106, 0.0, %v1059
        %v1108 = vsel %vm1106, 0.0, %v1061
        %v1109 = vsel %vm1106, 0.0, %v1063
        %v1110 = vsel %vm1106, 0.0, %v1065
        %v1111 = vsel %vm1106, 0.0, %v1067
        %v1112 = vsel %vm1106, 0.0, %v1069
        %v1113 = vsel %vm1106, 0.0, %v1071
        %v1114 = vsel %vm1106, 0.0, %v1073
        %v1115 = vsel %vm1106, 0.0, %v1075
        %v1116 = vsel %vm1106, 0.0, %v1077
        %v1117 = vsel %vm1106, 0.0, %v1079
        %v1118 = vsel %vm1106, 0.0, %v1081
        %v1119 = vsel %vm1106, 0.0, %v1083
        %v1120 = vsel %vm1106, 0.0, %v1085
        %v1121 = vsel %vm1106, 0.0, %v1087
        %v1122 = vsel %vm1106, 0.0, %v1089
        %vm1123 = vcmask 146432
        %v1124 = vsel %vm1123, %v1107, 0.0
        %v1125 = vsel %vm1123, %v1108, 0.0
        %v1126 = vsel %vm1123, %v1109, 0.0
        %v1127 = vsel %vm1123, %v1110, 0.0
        %v1128 = vsel %vm1123, %v1111, 0.0
        %v1129 = vsel %vm1123, %v1112, 0.0
        %v1130 = vsel %vm1123, %v1113, 0.0
        %v1131 = vsel %vm1123, %v1114, 0.0
        %v1132 = vsel %vm1123, %v1115, 0.0
        %v1133 = vsel %vm1123, %v1116, 0.0
        %v1134 = vsel %vm1123, %v1117, 0.0
        %v1135 = vsel %vm1123, %v1118, 0.0
        %v1136 = vsel %vm1123, %v1119, 0.0
        %v1137 = vsel %vm1123, %v1120, 0.0
        %v1138 = vsel %vm1123, %v1121, 0.0
        %v1139 = vsel %vm1123, %v1122, 0.0
        loop: start=0, step=1, limit=16
        $region32: #{wrapped_segmenter_forward.1} parent=23 // loop_pre_header
          _
        $region33: #{wrapped_segmenter_forward.1} parent=23 // loop_header
          %s1141 = sphi 0, %s1145
          %p1142 = scmp.ge.s32.totalorder %s1141, 16
        $region34: #{wrapped_segmenter_forward.1} parent=23 // loop_header_branch
          %1144 = sbr.rel (%p1142) target = $region38
        $region35: #{wrapped_segmenter_forward.1} parent=23 // loop_body
          %s1146 = sld [smem:[#allocation8 + %s1141]]
          %v1147 = vstv %s1146
          %v1148 = vadd.f32 %v1147, 0.0
          %s1149 = sld [smem:[#allocation7 + %s1141]]
          %v1150 = vstv %s1149
          %v1151 = vmul.f32 %v1150, %v1124
          %v1152 = vadd.f32 %v1148, %v1151
          %s1153 = sadd.s32 %s1141, 16
          %s1154 = sld [smem:[#allocation7 + %s1153]]
          %v1155 = vstv %s1154
          %v1156 = vmul.f32 %v1155, %v1126
          %v1157 = vadd.f32 %v1152, %v1156
          %s1158 = sadd.s32 %s1141, 32
          %s1159 = sld [smem:[#allocation7 + %s1158]]
          %v1160 = vstv %s1159
          %v1161 = vmul.f32 %v1160, %v1128
          %v1162 = vadd.f32 %v1157, %v1161
          %s1163 = sadd.s32 %s1141, 48
          %s1164 = sld [smem:[#allocation7 + %s1163]]
          %v1165 = vstv %s1164
          %v1166 = vmul.f32 %v1165, %v1130
          %v1167 = vadd.f32 %v1162, %v1166
          %s1168 = sadd.s32 %s1141, 64
          %s1169 = sld [smem:[#allocation7 + %s1168]]
          %v1170 = vstv %s1169
          %v1171 = vmul.f32 %v1170, %v1132
          %v1172 = vadd.f32 %v1167, %v1171
          %s1173 = sadd.s32 %s1141, 80
          %s1174 = sld [smem:[#allocation7 + %s1173]]
          %v1175 = vstv %s1174
          %v1176 = vmul.f32 %v1175, %v1134
          %v1177 = vadd.f32 %v1172, %v1176
          %s1178 = sadd.s32 %s1141, 96
          %s1179 = sld [smem:[#allocation7 + %s1178]]
          %v1180 = vstv %s1179
          %v1181 = vmul.f32 %v1180, %v1136
          %v1182 = vadd.f32 %v1177, %v1181
          %s1183 = sadd.s32 %s1141, 112
          %s1184 = sld [smem:[#allocation7 + %s1183]]
          %v1185 = vstv %s1184
          %v1186 = vmul.f32 %v1185, %v1138
          %v1187 = vadd.f32 %v1182, %v1186
          %s1188 = sadd.s32 %s1141, 128
          %s1189 = sld [smem:[#allocation7 + %s1188]]
          %v1190 = vstv %s1189
          %v1191 = vmul.f32 %v1190, %v1124
          %1193 = vrot.lane.b32.xlu0 %v1191, 126
          %v1194 = vpop.permute.xlu0 %1193
          %v1196 = vadd.f32 %v1187, %v1194
          %s1197 = sadd.s32 %s1141, 144
          %s1198 = sld [smem:[#allocation7 + %s1197]]
          %v1199 = vstv %s1198
          %v1200 = vmul.f32 %v1199, %v1126
          %1202 = vrot.lane.b32.xlu0 %v1200, 126
          %v1203 = vpop.permute.xlu0 %1202
          %v1205 = vadd.f32 %v1196, %v1203
          %s1206 = sadd.s32 %s1141, 160
          %s1207 = sld [smem:[#allocation7 + %s1206]]
          %v1208 = vstv %s1207
          %v1209 = vmul.f32 %v1208, %v1128
          %1211 = vrot.lane.b32.xlu0 %v1209, 126
          %v1212 = vpop.permute.xlu0 %1211
          %v1214 = vadd.f32 %v1205, %v1212
          %s1215 = sadd.s32 %s1141, 176
          %s1216 = sld [smem:[#allocation7 + %s1215]]
          %v1217 = vstv %s1216
          %v1218 = vmul.f32 %v1217, %v1130
          %1220 = vrot.lane.b32.xlu0 %v1218, 126
          %v1221 = vpop.permute.xlu0 %1220
          %v1223 = vadd.f32 %v1214, %v1221
          %s1224 = sadd.s32 %s1141, 192
          %s1225 = sld [smem:[#allocation7 + %s1224]]
          %v1226 = vstv %s1225
          %v1227 = vmul.f32 %v1226, %v1132
          %1229 = vrot.lane.b32.xlu0 %v1227, 126
          %v1230 = vpop.permute.xlu0 %1229
          %v1232 = vadd.f32 %v1223, %v1230
          %s1233 = sadd.s32 %s1141, 208
          %s1234 = sld [smem:[#allocation7 + %s1233]]
          %v1235 = vstv %s1234
          %v1236 = vmul.f32 %v1235, %v1134
          %1238 = vrot.lane.b32.xlu0 %v1236, 126
          %v1239 = vpop.permute.xlu0 %1238
          %v1241 = vadd.f32 %v1232, %v1239
          %s1242 = sadd.s32 %s1141, 224
          %s1243 = sld [smem:[#allocation7 + %s1242]]
          %v1244 = vstv %s1243
          %v1245 = vmul.f32 %v1244, %v1136
          %1247 = vrot.lane.b32.xlu0 %v1245, 126
          %v1248 = vpop.permute.xlu0 %1247
          %v1250 = vadd.f32 %v1241, %v1248
          %s1251 = sadd.s32 %s1141, 240
          %s1252 = sld [smem:[#allocation7 + %s1251]]
          %v1253 = vstv %s1252
          %v1254 = vmul.f32 %v1253, %v1138
          %1256 = vrot.lane.b32.xlu0 %v1254, 126
          %v1257 = vpop.permute.xlu0 %1256
          %v1259 = vadd.f32 %v1250, %v1257
          %s1260 = sadd.s32 %s1141, 256
          %s1261 = sld [smem:[#allocation7 + %s1260]]
          %v1262 = vstv %s1261
          %v1263 = vmul.f32 %v1262, %v1124
          %1265 = vrot.lane.b32.xlu0 %v1263, 124
          %v1266 = vpop.permute.xlu0 %1265
          %v1268 = vadd.f32 %v1259, %v1266
          %s1269 = sadd.s32 %s1141, 272
          %s1270 = sld [smem:[#allocation7 + %s1269]]
          %v1271 = vstv %s1270
          %v1272 = vmul.f32 %v1271, %v1126
          %1274 = vrot.lane.b32.xlu0 %v1272, 124
          %v1275 = vpop.permute.xlu0 %1274
          %v1277 = vadd.f32 %v1268, %v1275
          %s1278 = sadd.s32 %s1141, 288
          %s1279 = sld [smem:[#allocation7 + %s1278]]
          %v1280 = vstv %s1279
          %v1281 = vmul.f32 %v1280, %v1128
          %1283 = vrot.lane.b32.xlu0 %v1281, 124
          %v1284 = vpop.permute.xlu0 %1283
          %v1286 = vadd.f32 %v1277, %v1284
          %s1287 = sadd.s32 %s1141, 304
          %s1288 = sld [smem:[#allocation7 + %s1287]]
          %v1289 = vstv %s1288
          %v1290 = vmul.f32 %v1289, %v1130
          %1292 = vrot.lane.b32.xlu0 %v1290, 124
          %v1293 = vpop.permute.xlu0 %1292
          %v1295 = vadd.f32 %v1286, %v1293
          %s1296 = sadd.s32 %s1141, 320
          %s1297 = sld [smem:[#allocation7 + %s1296]]
          %v1298 = vstv %s1297
          %v1299 = vmul.f32 %v1298, %v1132
          %1301 = vrot.lane.b32.xlu0 %v1299, 124
          %v1302 = vpop.permute.xlu0 %1301
          %v1304 = vadd.f32 %v1295, %v1302
          %s1305 = sadd.s32 %s1141, 336
          %s1306 = sld [smem:[#allocation7 + %s1305]]
          %v1307 = vstv %s1306
          %v1308 = vmul.f32 %v1307, %v1134
          %1310 = vrot.lane.b32.xlu0 %v1308, 124
          %v1311 = vpop.permute.xlu0 %1310
          %v1313 = vadd.f32 %v1304, %v1311
          %s1314 = sadd.s32 %s1141, 352
          %s1315 = sld [smem:[#allocation7 + %s1314]]
          %v1316 = vstv %s1315
          %v1317 = vmul.f32 %v1316, %v1136
          %1319 = vrot.lane.b32.xlu0 %v1317, 124
          %v1320 = vpop.permute.xlu0 %1319
          %v1322 = vadd.f32 %v1313, %v1320
          %s1323 = sadd.s32 %s1141, 368
          %s1324 = sld [smem:[#allocation7 + %s1323]]
          %v1325 = vstv %s1324
          %v1326 = vmul.f32 %v1325, %v1138
          %1328 = vrot.lane.b32.xlu0 %v1326, 124
          %v1329 = vpop.permute.xlu0 %1328
          %v1331 = vadd.f32 %v1322, %v1329
          %s1332 = sadd.s32 %s1141, 384
          %s1333 = sld [smem:[#allocation7 + %s1332]]
          %v1334 = vstv %s1333
          %v1335 = vmul.f32 %v1334, %v1124
          %v1336 = vmul.f32 %v1334, %v1125
          %vm1339 = vcmask 1045504
          %v1340 = vrot.slane %v1335, 2
          %v1341 = vrot.slane %v1336, 2
          %v1342 = vsel %vm1339, %v1340, %v1341
          %v1344 = vadd.f32 %v1331, %v1342
          %s1345 = sadd.s32 %s1141, 400
          %s1346 = sld [smem:[#allocation7 + %s1345]]
          %v1347 = vstv %s1346
          %v1348 = vmul.f32 %v1347, %v1126
          %v1349 = vmul.f32 %v1347, %v1127
          %v1352 = vrot.slane %v1348, 2
          %v1353 = vrot.slane %v1349, 2
          %v1354 = vsel %vm1339, %v1352, %v1353
          %v1356 = vadd.f32 %v1344, %v1354
          %s1357 = sadd.s32 %s1141, 416
          %s1358 = sld [smem:[#allocation7 + %s1357]]
          %v1359 = vstv %s1358
          %v1360 = vmul.f32 %v1359, %v1128
          %v1361 = vmul.f32 %v1359, %v1129
          %v1364 = vrot.slane %v1360, 2
          %v1365 = vrot.slane %v1361, 2
          %v1366 = vsel %vm1339, %v1364, %v1365
          %v1368 = vadd.f32 %v1356, %v1366
          %s1369 = sadd.s32 %s1141, 432
          %s1370 = sld [smem:[#allocation7 + %s1369]]
          %v1371 = vstv %s1370
          %v1372 = vmul.f32 %v1371, %v1130
          %v1373 = vmul.f32 %v1371, %v1131
          %v1376 = vrot.slane %v1372, 2
          %v1377 = vrot.slane %v1373, 2
          %v1378 = vsel %vm1339, %v1376, %v1377
          %v1380 = vadd.f32 %v1368, %v1378
          %s1381 = sadd.s32 %s1141, 448
          %s1382 = sld [smem:[#allocation7 + %s1381]]
          %v1383 = vstv %s1382
          %v1384 = vmul.f32 %v1383, %v1132
          %v1385 = vmul.f32 %v1383, %v1133
          %v1388 = vrot.slane %v1384, 2
          %v1389 = vrot.slane %v1385, 2
          %v1390 = vsel %vm1339, %v1388, %v1389
          %v1392 = vadd.f32 %v1380, %v1390
          %s1393 = sadd.s32 %s1141, 464
          %s1394 = sld [smem:[#allocation7 + %s1393]]
          %v1395 = vstv %s1394
          %v1396 = vmul.f32 %v1395, %v1134
          %v1397 = vmul.f32 %v1395, %v1135
          %v1400 = vrot.slane %v1396, 2
          %v1401 = vrot.slane %v1397, 2
          %v1402 = vsel %vm1339, %v1400, %v1401
          %v1404 = vadd.f32 %v1392, %v1402
          %s1405 = sadd.s32 %s1141, 480
          %s1406 = sld [smem:[#allocation7 + %s1405]]
          %v1407 = vstv %s1406
          %v1408 = vmul.f32 %v1407, %v1136
          %v1409 = vmul.f32 %v1407, %v1137
          %v1412 = vrot.slane %v1408, 2
          %v1413 = vrot.slane %v1409, 2
          %v1414 = vsel %vm1339, %v1412, %v1413
          %v1416 = vadd.f32 %v1404, %v1414
          %s1417 = sadd.s32 %s1141, 496
          %s1418 = sld [smem:[#allocation7 + %s1417]]
          %v1419 = vstv %s1418
          %v1420 = vmul.f32 %v1419, %v1138
          %v1421 = vmul.f32 %v1419, %v1139
          %v1424 = vrot.slane %v1420, 2
          %v1425 = vrot.slane %v1421, 2
          %v1426 = vsel %vm1339, %v1424, %v1425
          %v1428 = vadd.f32 %v1416, %v1426
          %s1429 = sadd.s32 %s1141, 512
          %s1430 = sld [smem:[#allocation7 + %s1429]]
          %v1431 = vstv %s1430
          %v1432 = vmul.f32 %v1431, %v1124
          %v1433 = vmul.f32 %v1431, %v1125
          %v1436 = vrot.slane %v1432, 2
          %v1437 = vrot.slane %v1433, 2
          %v1438 = vsel %vm1339, %v1436, %v1437
          %1439 = vrot.lane.b32.xlu0 %v1438, 126
          %v1440 = vpop.permute.xlu0 %1439
          %v1442 = vadd.f32 %v1428, %v1440
          %s1443 = sadd.s32 %s1141, 528
          %s1444 = sld [smem:[#allocation7 + %s1443]]
          %v1445 = vstv %s1444
          %v1446 = vmul.f32 %v1445, %v1126
          %v1447 = vmul.f32 %v1445, %v1127
          %v1450 = vrot.slane %v1446, 2
          %v1451 = vrot.slane %v1447, 2
          %v1452 = vsel %vm1339, %v1450, %v1451
          %1453 = vrot.lane.b32.xlu0 %v1452, 126
          %v1454 = vpop.permute.xlu0 %1453
          %v1456 = vadd.f32 %v1442, %v1454
          %s1457 = sadd.s32 %s1141, 544
          %s1458 = sld [smem:[#allocation7 + %s1457]]
          %v1459 = vstv %s1458
          %v1460 = vmul.f32 %v1459, %v1128
          %v1461 = vmul.f32 %v1459, %v1129
          %v1464 = vrot.slane %v1460, 2
          %v1465 = vrot.slane %v1461, 2
          %v1466 = vsel %vm1339, %v1464, %v1465
          %1467 = vrot.lane.b32.xlu0 %v1466, 126
          %v1468 = vpop.permute.xlu0 %1467
          %v1470 = vadd.f32 %v1456, %v1468
          %s1471 = sadd.s32 %s1141, 560
          %s1472 = sld [smem:[#allocation7 + %s1471]]
          %v1473 = vstv %s1472
          %v1474 = vmul.f32 %v1473, %v1130
          %v1475 = vmul.f32 %v1473, %v1131
          %v1478 = vrot.slane %v1474, 2
          %v1479 = vrot.slane %v1475, 2
          %v1480 = vsel %vm1339, %v1478, %v1479
          %1481 = vrot.lane.b32.xlu0 %v1480, 126
          %v1482 = vpop.permute.xlu0 %1481
          %v1484 = vadd.f32 %v1470, %v1482
          %s1485 = sadd.s32 %s1141, 576
          %s1486 = sld [smem:[#allocation7 + %s1485]]
          %v1487 = vstv %s1486
          %v1488 = vmul.f32 %v1487, %v1132
          %v1489 = vmul.f32 %v1487, %v1133
          %v1492 = vrot.slane %v1488, 2
          %v1493 = vrot.slane %v1489, 2
          %v1494 = vsel %vm1339, %v1492, %v1493
          %1495 = vrot.lane.b32.xlu0 %v1494, 126
          %v1496 = vpop.permute.xlu0 %1495
          %v1498 = vadd.f32 %v1484, %v1496
          %s1499 = sadd.s32 %s1141, 592
          %s1500 = sld [smem:[#allocation7 + %s1499]]
          %v1501 = vstv %s1500
          %v1502 = vmul.f32 %v1501, %v1134
          %v1503 = vmul.f32 %v1501, %v1135
          %v1506 = vrot.slane %v1502, 2
          %v1507 = vrot.slane %v1503, 2
          %v1508 = vsel %vm1339, %v1506, %v1507
          %1509 = vrot.lane.b32.xlu0 %v1508, 126
          %v1510 = vpop.permute.xlu0 %1509
          %v1512 = vadd.f32 %v1498, %v1510
          %s1513 = sadd.s32 %s1141, 608
          %s1514 = sld [smem:[#allocation7 + %s1513]]
          %v1515 = vstv %s1514
          %v1516 = vmul.f32 %v1515, %v1136
          %v1517 = vmul.f32 %v1515, %v1137
          %v1520 = vrot.slane %v1516, 2
          %v1521 = vrot.slane %v1517, 2
          %v1522 = vsel %vm1339, %v1520, %v1521
          %1523 = vrot.lane.b32.xlu0 %v1522, 126
          %v1524 = vpop.permute.xlu0 %1523
          %v1526 = vadd.f32 %v1512, %v1524
          %s1527 = sadd.s32 %s1141, 624
          %s1528 = sld [smem:[#allocation7 + %s1527]]
          %v1529 = vstv %s1528
          %v1530 = vmul.f32 %v1529, %v1138
          %v1531 = vmul.f32 %v1529, %v1139
          %v1534 = vrot.slane %v1530, 2
          %v1535 = vrot.slane %v1531, 2
          %v1536 = vsel %vm1339, %v1534, %v1535
          %1537 = vrot.lane.b32.xlu0 %v1536, 126
          %v1538 = vpop.permute.xlu0 %1537
          %v1540 = vadd.f32 %v1526, %v1538
          %s1541 = sadd.s32 %s1141, 640
          %s1542 = sld [smem:[#allocation7 + %s1541]]
          %v1543 = vstv %s1542
          %v1544 = vmul.f32 %v1543, %v1124
          %v1545 = vmul.f32 %v1543, %v1125
          %v1548 = vrot.slane %v1544, 2
          %v1549 = vrot.slane %v1545, 2
          %v1550 = vsel %vm1339, %v1548, %v1549
          %1551 = vrot.lane.b32.xlu0 %v1550, 124
          %v1552 = vpop.permute.xlu0 %1551
          %v1554 = vadd.f32 %v1540, %v1552
          %s1555 = sadd.s32 %s1141, 656
          %s1556 = sld [smem:[#allocation7 + %s1555]]
          %v1557 = vstv %s1556
          %v1558 = vmul.f32 %v1557, %v1126
          %v1559 = vmul.f32 %v1557, %v1127
          %v1562 = vrot.slane %v1558, 2
          %v1563 = vrot.slane %v1559, 2
          %v1564 = vsel %vm1339, %v1562, %v1563
          %1565 = vrot.lane.b32.xlu0 %v1564, 124
          %v1566 = vpop.permute.xlu0 %1565
          %v1568 = vadd.f32 %v1554, %v1566
          %s1569 = sadd.s32 %s1141, 672
          %s1570 = sld [smem:[#allocation7 + %s1569]]
          %v1571 = vstv %s1570
          %v1572 = vmul.f32 %v1571, %v1128
          %v1573 = vmul.f32 %v1571, %v1129
          %v1576 = vrot.slane %v1572, 2
          %v1577 = vrot.slane %v1573, 2
          %v1578 = vsel %vm1339, %v1576, %v1577
          %1579 = vrot.lane.b32.xlu0 %v1578, 124
          %v1580 = vpop.permute.xlu0 %1579
          %v1582 = vadd.f32 %v1568, %v1580
          %s1583 = sadd.s32 %s1141, 688
          %s1584 = sld [smem:[#allocation7 + %s1583]]
          %v1585 = vstv %s1584
          %v1586 = vmul.f32 %v1585, %v1130
          %v1587 = vmul.f32 %v1585, %v1131
          %v1590 = vrot.slane %v1586, 2
          %v1591 = vrot.slane %v1587, 2
          %v1592 = vsel %vm1339, %v1590, %v1591
          %1593 = vrot.lane.b32.xlu0 %v1592, 124
          %v1594 = vpop.permute.xlu0 %1593
          %v1596 = vadd.f32 %v1582, %v1594
          %s1597 = sadd.s32 %s1141, 704
          %s1598 = sld [smem:[#allocation7 + %s1597]]
          %v1599 = vstv %s1598
          %v1600 = vmul.f32 %v1599, %v1132
          %v1601 = vmul.f32 %v1599, %v1133
          %v1604 = vrot.slane %v1600, 2
          %v1605 = vrot.slane %v1601, 2
          %v1606 = vsel %vm1339, %v1604, %v1605
          %1607 = vrot.lane.b32.xlu0 %v1606, 124
          %v1608 = vpop.permute.xlu0 %1607
          %v1610 = vadd.f32 %v1596, %v1608
          %s1611 = sadd.s32 %s1141, 720
          %s1612 = sld [smem:[#allocation7 + %s1611]]
          %v1613 = vstv %s1612
          %v1614 = vmul.f32 %v1613, %v1134
          %v1615 = vmul.f32 %v1613, %v1135
          %v1618 = vrot.slane %v1614, 2
          %v1619 = vrot.slane %v1615, 2
          %v1620 = vsel %vm1339, %v1618, %v1619
          %1621 = vrot.lane.b32.xlu0 %v1620, 124
          %v1622 = vpop.permute.xlu0 %1621
          %v1624 = vadd.f32 %v1610, %v1622
          %s1625 = sadd.s32 %s1141, 736
          %s1626 = sld [smem:[#allocation7 + %s1625]]
          %v1627 = vstv %s1626
          %v1628 = vmul.f32 %v1627, %v1136
          %v1629 = vmul.f32 %v1627, %v1137
          %v1632 = vrot.slane %v1628, 2
          %v1633 = vrot.slane %v1629, 2
          %v1634 = vsel %vm1339, %v1632, %v1633
          %1635 = vrot.lane.b32.xlu0 %v1634, 124
          %v1636 = vpop.permute.xlu0 %1635
          %v1638 = vadd.f32 %v1624, %v1636
          %s1639 = sadd.s32 %s1141, 752
          %s1640 = sld [smem:[#allocation7 + %s1639]]
          %v1641 = vstv %s1640
          %v1642 = vmul.f32 %v1641, %v1138
          %v1643 = vmul.f32 %v1641, %v1139
          %v1646 = vrot.slane %v1642, 2
          %v1647 = vrot.slane %v1643, 2
          %v1648 = vsel %vm1339, %v1646, %v1647
          %1649 = vrot.lane.b32.xlu0 %v1648, 124
          %v1650 = vpop.permute.xlu0 %1649
          %v1652 = vadd.f32 %v1638, %v1650
          %s1653 = sadd.s32 %s1141, 768
          %s1654 = sld [smem:[#allocation7 + %s1653]]
          %v1655 = vstv %s1654
          %v1656 = vmul.f32 %v1655, %v1124
          %v1657 = vmul.f32 %v1655, %v1125
          %vm1660 = vcmask 1043456
          %v1661 = vrot.slane %v1656, 4
          %v1662 = vrot.slane %v1657, 4
          %v1663 = vsel %vm1660, %v1661, %v1662
          %v1665 = vadd.f32 %v1652, %v1663
          %s1666 = sadd.s32 %s1141, 784
          %s1667 = sld [smem:[#allocation7 + %s1666]]
          %v1668 = vstv %s1667
          %v1669 = vmul.f32 %v1668, %v1126
          %v1670 = vmul.f32 %v1668, %v1127
          %v1673 = vrot.slane %v1669, 4
          %v1674 = vrot.slane %v1670, 4
          %v1675 = vsel %vm1660, %v1673, %v1674
          %v1677 = vadd.f32 %v1665, %v1675
          %s1678 = sadd.s32 %s1141, 800
          %s1679 = sld [smem:[#allocation7 + %s1678]]
          %v1680 = vstv %s1679
          %v1681 = vmul.f32 %v1680, %v1128
          %v1682 = vmul.f32 %v1680, %v1129
          %v1685 = vrot.slane %v1681, 4
          %v1686 = vrot.slane %v1682, 4
          %v1687 = vsel %vm1660, %v1685, %v1686
          %v1689 = vadd.f32 %v1677, %v1687
          %s1690 = sadd.s32 %s1141, 816
          %s1691 = sld [smem:[#allocation7 + %s1690]]
          %v1692 = vstv %s1691
          %v1693 = vmul.f32 %v1692, %v1130
          %v1694 = vmul.f32 %v1692, %v1131
          %v1697 = vrot.slane %v1693, 4
          %v1698 = vrot.slane %v1694, 4
          %v1699 = vsel %vm1660, %v1697, %v1698
          %v1701 = vadd.f32 %v1689, %v1699
          %s1702 = sadd.s32 %s1141, 832
          %s1703 = sld [smem:[#allocation7 + %s1702]]
          %v1704 = vstv %s1703
          %v1705 = vmul.f32 %v1704, %v1132
          %v1706 = vmul.f32 %v1704, %v1133
          %v1709 = vrot.slane %v1705, 4
          %v1710 = vrot.slane %v1706, 4
          %v1711 = vsel %vm1660, %v1709, %v1710
          %v1713 = vadd.f32 %v1701, %v1711
          %s1714 = sadd.s32 %s1141, 848
          %s1715 = sld [smem:[#allocation7 + %s1714]]
          %v1716 = vstv %s1715
          %v1717 = vmul.f32 %v1716, %v1134
          %v1718 = vmul.f32 %v1716, %v1135
          %v1721 = vrot.slane %v1717, 4
          %v1722 = vrot.slane %v1718, 4
          %v1723 = vsel %vm1660, %v1721, %v1722
          %v1725 = vadd.f32 %v1713, %v1723
          %s1726 = sadd.s32 %s1141, 864
          %s1727 = sld [smem:[#allocation7 + %s1726]]
          %v1728 = vstv %s1727
          %v1729 = vmul.f32 %v1728, %v1136
          %v1730 = vmul.f32 %v1728, %v1137
          %v1733 = vrot.slane %v1729, 4
          %v1734 = vrot.slane %v1730, 4
          %v1735 = vsel %vm1660, %v1733, %v1734
          %v1737 = vadd.f32 %v1725, %v1735
          %s1738 = sadd.s32 %s1141, 880
          %s1739 = sld [smem:[#allocation7 + %s1738]]
          %v1740 = vstv %s1739
          %v1741 = vmul.f32 %v1740, %v1138
          %v1742 = vmul.f32 %v1740, %v1139
          %v1745 = vrot.slane %v1741, 4
          %v1746 = vrot.slane %v1742, 4
          %v1747 = vsel %vm1660, %v1745, %v1746
          %v1749 = vadd.f32 %v1737, %v1747
          %s1750 = sadd.s32 %s1141, 896
          %s1751 = sld [smem:[#allocation7 + %s1750]]
          %v1752 = vstv %s1751
          %v1753 = vmul.f32 %v1752, %v1124
          %v1754 = vmul.f32 %v1752, %v1125
          %v1757 = vrot.slane %v1753, 4
          %v1758 = vrot.slane %v1754, 4
          %v1759 = vsel %vm1660, %v1757, %v1758
          %1760 = vrot.lane.b32.xlu0 %v1759, 126
          %v1761 = vpop.permute.xlu0 %1760
          %v1763 = vadd.f32 %v1749, %v1761
          %s1764 = sadd.s32 %s1141, 912
          %s1765 = sld [smem:[#allocation7 + %s1764]]
          %v1766 = vstv %s1765
          %v1767 = vmul.f32 %v1766, %v1126
          %v1768 = vmul.f32 %v1766, %v1127
          %v1771 = vrot.slane %v1767, 4
          %v1772 = vrot.slane %v1768, 4
          %v1773 = vsel %vm1660, %v1771, %v1772
          %1774 = vrot.lane.b32.xlu0 %v1773, 126
          %v1775 = vpop.permute.xlu0 %1774
          %v1777 = vadd.f32 %v1763, %v1775
          %s1778 = sadd.s32 %s1141, 928
          %s1779 = sld [smem:[#allocation7 + %s1778]]
          %v1780 = vstv %s1779
          %v1781 = vmul.f32 %v1780, %v1128
          %v1782 = vmul.f32 %v1780, %v1129
          %v1785 = vrot.slane %v1781, 4
          %v1786 = vrot.slane %v1782, 4
          %v1787 = vsel %vm1660, %v1785, %v1786
          %1788 = vrot.lane.b32.xlu0 %v1787, 126
          %v1789 = vpop.permute.xlu0 %1788
          %v1791 = vadd.f32 %v1777, %v1789
          %s1792 = sadd.s32 %s1141, 944
          %s1793 = sld [smem:[#allocation7 + %s1792]]
          %v1794 = vstv %s1793
          %v1795 = vmul.f32 %v1794, %v1130
          %v1796 = vmul.f32 %v1794, %v1131
          %v1799 = vrot.slane %v1795, 4
          %v1800 = vrot.slane %v1796, 4
          %v1801 = vsel %vm1660, %v1799, %v1800
          %1802 = vrot.lane.b32.xlu0 %v1801, 126
          %v1803 = vpop.permute.xlu0 %1802
          %v1805 = vadd.f32 %v1791, %v1803
          %s1806 = sadd.s32 %s1141, 960
          %s1807 = sld [smem:[#allocation7 + %s1806]]
          %v1808 = vstv %s1807
          %v1809 = vmul.f32 %v1808, %v1132
          %v1810 = vmul.f32 %v1808, %v1133
          %v1813 = vrot.slane %v1809, 4
          %v1814 = vrot.slane %v1810, 4
          %v1815 = vsel %vm1660, %v1813, %v1814
          %1816 = vrot.lane.b32.xlu0 %v1815, 126
          %v1817 = vpop.permute.xlu0 %1816
          %v1819 = vadd.f32 %v1805, %v1817
          %s1820 = sadd.s32 %s1141, 976
          %s1821 = sld [smem:[#allocation7 + %s1820]]
          %v1822 = vstv %s1821
          %v1823 = vmul.f32 %v1822, %v1134
          %v1824 = vmul.f32 %v1822, %v1135
          %v1827 = vrot.slane %v1823, 4
          %v1828 = vrot.slane %v1824, 4
          %v1829 = vsel %vm1660, %v1827, %v1828
          %1830 = vrot.lane.b32.xlu0 %v1829, 126
          %v1831 = vpop.permute.xlu0 %1830
          %v1833 = vadd.f32 %v1819, %v1831
          %s1834 = sadd.s32 %s1141, 992
          %s1835 = sld [smem:[#allocation7 + %s1834]]
          %v1836 = vstv %s1835
          %v1837 = vmul.f32 %v1836, %v1136
          %v1838 = vmul.f32 %v1836, %v1137
          %v1841 = vrot.slane %v1837, 4
          %v1842 = vrot.slane %v1838, 4
          %v1843 = vsel %vm1660, %v1841, %v1842
          %1844 = vrot.lane.b32.xlu0 %v1843, 126
          %v1845 = vpop.permute.xlu0 %1844
          %v1847 = vadd.f32 %v1833, %v1845
          %s1848 = sadd.s32 %s1141, 1008
          %s1849 = sld [smem:[#allocation7 + %s1848]]
          %v1850 = vstv %s1849
          %v1851 = vmul.f32 %v1850, %v1138
          %v1852 = vmul.f32 %v1850, %v1139
          %v1855 = vrot.slane %v1851, 4
          %v1856 = vrot.slane %v1852, 4
          %v1857 = vsel %vm1660, %v1855, %v1856
          %1858 = vrot.lane.b32.xlu0 %v1857, 126
          %v1859 = vpop.permute.xlu0 %1858
          %v1861 = vadd.f32 %v1847, %v1859
          %s1862 = sadd.s32 %s1141, 1024
          %s1863 = sld [smem:[#allocation7 + %s1862]]
          %v1864 = vstv %s1863
          %v1865 = vmul.f32 %v1864, %v1124
          %v1866 = vmul.f32 %v1864, %v1125
          %v1869 = vrot.slane %v1865, 4
          %v1870 = vrot.slane %v1866, 4
          %v1871 = vsel %vm1660, %v1869, %v1870
          %1872 = vrot.lane.b32.xlu0 %v1871, 124
          %v1873 = vpop.permute.xlu0 %1872
          %v1875 = vadd.f32 %v1861, %v1873
          %s1876 = sadd.s32 %s1141, 1040
          %s1877 = sld [smem:[#allocation7 + %s1876]]
          %v1878 = vstv %s1877
          %v1879 = vmul.f32 %v1878, %v1126
          %v1880 = vmul.f32 %v1878, %v1127
          %v1883 = vrot.slane %v1879, 4
          %v1884 = vrot.slane %v1880, 4
          %v1885 = vsel %vm1660, %v1883, %v1884
          %1886 = vrot.lane.b32.xlu0 %v1885, 124
          %v1887 = vpop.permute.xlu0 %1886
          %v1889 = vadd.f32 %v1875, %v1887
          %s1890 = sadd.s32 %s1141, 1056
          %s1891 = sld [smem:[#allocation7 + %s1890]]
          %v1892 = vstv %s1891
          %v1893 = vmul.f32 %v1892, %v1128
          %v1894 = vmul.f32 %v1892, %v1129
          %v1897 = vrot.slane %v1893, 4
          %v1898 = vrot.slane %v1894, 4
          %v1899 = vsel %vm1660, %v1897, %v1898
          %1900 = vrot.lane.b32.xlu0 %v1899, 124
          %v1901 = vpop.permute.xlu0 %1900
          %v1903 = vadd.f32 %v1889, %v1901
          %s1904 = sadd.s32 %s1141, 1072
          %s1905 = sld [smem:[#allocation7 + %s1904]]
          %v1906 = vstv %s1905
          %v1907 = vmul.f32 %v1906, %v1130
          %v1908 = vmul.f32 %v1906, %v1131
          %v1911 = vrot.slane %v1907, 4
          %v1912 = vrot.slane %v1908, 4
          %v1913 = vsel %vm1660, %v1911, %v1912
          %1914 = vrot.lane.b32.xlu0 %v1913, 124
          %v1915 = vpop.permute.xlu0 %1914
          %v1917 = vadd.f32 %v1903, %v1915
          %s1918 = sadd.s32 %s1141, 1088
          %s1919 = sld [smem:[#allocation7 + %s1918]]
          %v1920 = vstv %s1919
          %v1921 = vmul.f32 %v1920, %v1132
          %v1922 = vmul.f32 %v1920, %v1133
          %v1925 = vrot.slane %v1921, 4
          %v1926 = vrot.slane %v1922, 4
          %v1927 = vsel %vm1660, %v1925, %v1926
          %1928 = vrot.lane.b32.xlu0 %v1927, 124
          %v1929 = vpop.permute.xlu0 %1928
          %v1931 = vadd.f32 %v1917, %v1929
          %s1932 = sadd.s32 %s1141, 1104
          %s1933 = sld [smem:[#allocation7 + %s1932]]
          %v1934 = vstv %s1933
          %v1935 = vmul.f32 %v1934, %v1134
          %v1936 = vmul.f32 %v1934, %v1135
          %v1939 = vrot.slane %v1935, 4
          %v1940 = vrot.slane %v1936, 4
          %v1941 = vsel %vm1660, %v1939, %v1940
          %1942 = vrot.lane.b32.xlu0 %v1941, 124
          %v1943 = vpop.permute.xlu0 %1942
          %v1945 = vadd.f32 %v1931, %v1943
          %s1946 = sadd.s32 %s1141, 1120
          %s1947 = sld [smem:[#allocation7 + %s1946]]
          %v1948 = vstv %s1947
          %v1949 = vmul.f32 %v1948, %v1136
          %v1950 = vmul.f32 %v1948, %v1137
          %v1953 = vrot.slane %v1949, 4
          %v1954 = vrot.slane %v1950, 4
          %v1955 = vsel %vm1660, %v1953, %v1954
          %1956 = vrot.lane.b32.xlu0 %v1955, 124
          %v1957 = vpop.permute.xlu0 %1956
          %v1959 = vadd.f32 %v1945, %v1957
          %s1960 = sadd.s32 %s1141, 1136
          %s1961 = sld [smem:[#allocation7 + %s1960]]
          %v1962 = vstv %s1961
          %v1963 = vmul.f32 %v1962, %v1138
          %v1964 = vmul.f32 %v1962, %v1139
          %v1967 = vrot.slane %v1963, 4
          %v1968 = vrot.slane %v1964, 4
          %v1969 = vsel %vm1660, %v1967, %v1968
          %1970 = vrot.lane.b32.xlu0 %v1969, 124
          %v1971 = vpop.permute.xlu0 %1970
          %v1973 = vadd.f32 %v1959, %v1971
          %v1974 = vmax.f32 %v1973, 0.0
          %s1975 = smul.u32 %s1141, 8
          %s1976 = scalar_lea.vmem [#allocation3], %s1975
          %vm1977 = vcmask 130048
          %1978 = vst.msk [vmem:[%s1976] sm:$0xff] %vm1977, %v1974
        $region36: #{wrapped_segmenter_forward.1} parent=23 // loop_footer
          %s1145 = sadd.s32 1, %s1141
        $region37: #{wrapped_segmenter_forward.1} parent=23 // loop_footer_branch
          %1140 = sbr.rel target = $region33
        $region38: #{wrapped_segmenter_forward.1} parent=23 // loop_exit
          _
        %v1979 = vld [vmem:[#allocation3] sm:$0xff]
        %v1980 = vld [vmem:[#allocation3 + $0x8] sm:$0xff]
        %v1981 = vld [vmem:[#allocation3 + $0x10] sm:$0xff]
        %v1982 = vld [vmem:[#allocation3 + $0x18] sm:$0xff]
        %v1983 = vld [vmem:[#allocation3 + $0x20] sm:$0xff]
        %v1984 = vld [vmem:[#allocation3 + $0x28] sm:$0xff]
        %v1985 = vld [vmem:[#allocation3 + $0x30] sm:$0xff]
        %v1986 = vld [vmem:[#allocation3 + $0x38] sm:$0xff]
        %v1987 = vld [vmem:[#allocation3 + $0x40] sm:$0xff]
        %v1988 = vld [vmem:[#allocation3 + $0x48] sm:$0xff]
        %v1989 = vld [vmem:[#allocation3 + $0x50] sm:$0xff]
        %v1990 = vld [vmem:[#allocation3 + $0x58] sm:$0xff]
        %v1991 = vld [vmem:[#allocation3 + $0x60] sm:$0xff]
        %v1992 = vld [vmem:[#allocation3 + $0x68] sm:$0xff]
        %v1993 = vld [vmem:[#allocation3 + $0x70] sm:$0xff]
        %v1994 = vld [vmem:[#allocation3 + $0x78] sm:$0xff]
        %v1995 = vld [vmem:[#allocation2 + $0x2] sm:$0xff]
        %v1996 = vld [vmem:[#allocation2 + $0x12] sm:$0xff]
        %v1997 = vld [vmem:[#allocation2 + $0x22] sm:$0xff]
        %v1998 = vld [vmem:[#allocation2 + $0x32] sm:$0xff]
        %v1999 = vld [vmem:[#allocation2 + $0x42] sm:$0xff]
        %v2000 = vld [vmem:[#allocation2 + $0x52] sm:$0xff]
        %v2001 = vld [vmem:[#allocation2 + $0x62] sm:$0xff]
        %v2002 = vld [vmem:[#allocation2 + $0x72] sm:$0xff]
        %s2003 = sld [smem:[#allocation10]]
        %v2004 = vstv %s2003
        %v2005 = vadd.f32 %v2004, 0.0
        %s2006 = sld [smem:[#allocation9]]
        %v2007 = vstv %s2006
        %v2008 = vmul.f32 %v2007, %v1979
        %v2009 = vadd.f32 %v2005, %v2008
        %s2010 = sld [smem:[#allocation9 + $0xd]]
        %v2011 = vstv %s2010
        %v2012 = vmul.f32 %v2011, %v1980
        %v2013 = vadd.f32 %v2009, %v2012
        %s2014 = sld [smem:[#allocation9 + $0x1a]]
        %v2015 = vstv %s2014
        %v2016 = vmul.f32 %v2015, %v1981
        %v2017 = vadd.f32 %v2013, %v2016
        %s2018 = sld [smem:[#allocation9 + $0x27]]
        %v2019 = vstv %s2018
        %v2020 = vmul.f32 %v2019, %v1982
        %v2021 = vadd.f32 %v2017, %v2020
        %s2022 = sld [smem:[#allocation9 + $0x34]]
        %v2023 = vstv %s2022
        %v2024 = vmul.f32 %v2023, %v1983
        %v2025 = vadd.f32 %v2021, %v2024
        %s2026 = sld [smem:[#allocation9 + $0x41]]
        %v2027 = vstv %s2026
        %v2028 = vmul.f32 %v2027, %v1984
        %v2029 = vadd.f32 %v2025, %v2028
        %s2030 = sld [smem:[#allocation9 + $0x4e]]
        %v2031 = vstv %s2030
        %v2032 = vmul.f32 %v2031, %v1985
        %v2033 = vadd.f32 %v2029, %v2032
        %s2034 = sld [smem:[#allocation9 + $0x5b]]
        %v2035 = vstv %s2034
        %v2036 = vmul.f32 %v2035, %v1986
        %v2037 = vadd.f32 %v2033, %v2036
        %s2038 = sld [smem:[#allocation9 + $0x68]]
        %v2039 = vstv %s2038
        %v2040 = vmul.f32 %v2039, %v1987
        %v2041 = vadd.f32 %v2037, %v2040
        %s2042 = sld [smem:[#allocation9 + $0x75]]
        %v2043 = vstv %s2042
        %v2044 = vmul.f32 %v2043, %v1988
        %v2045 = vadd.f32 %v2041, %v2044
        %s2046 = sld [smem:[#allocation9 + $0x82]]
        %v2047 = vstv %s2046
        %v2048 = vmul.f32 %v2047, %v1989
        %v2049 = vadd.f32 %v2045, %v2048
        %s2050 = sld [smem:[#allocation9 + $0x8f]]
        %v2051 = vstv %s2050
        %v2052 = vmul.f32 %v2051, %v1990
        %v2053 = vadd.f32 %v2049, %v2052
        %s2054 = sld [smem:[#allocation9 + $0x9c]]
        %v2055 = vstv %s2054
        %v2056 = vmul.f32 %v2055, %v1991
        %v2057 = vadd.f32 %v2053, %v2056
        %s2058 = sld [smem:[#allocation9 + $0xa9]]
        %v2059 = vstv %s2058
        %v2060 = vmul.f32 %v2059, %v1992
        %v2061 = vadd.f32 %v2057, %v2060
        %s2062 = sld [smem:[#allocation9 + $0xb6]]
        %v2063 = vstv %s2062
        %v2064 = vmul.f32 %v2063, %v1993
        %v2065 = vadd.f32 %v2061, %v2064
        %s2066 = sld [smem:[#allocation9 + $0xc3]]
        %v2067 = vstv %s2066
        %v2068 = vmul.f32 %v2067, %v1994
        %v2069 = vadd.f32 %v2065, %v2068
        %s2070 = sld [smem:[#allocation9 + $0xd0]]
        %v2071 = vstv %s2070
        %v2072 = vmul.f32 %v2071, %v1995
        %v2073 = vadd.f32 %v2069, %v2072
        %s2074 = sld [smem:[#allocation9 + $0xdd]]
        %v2075 = vstv %s2074
        %v2076 = vmul.f32 %v2075, %v1996
        %v2077 = vadd.f32 %v2073, %v2076
        %s2078 = sld [smem:[#allocation9 + $0xea]]
        %v2079 = vstv %s2078
        %v2080 = vmul.f32 %v2079, %v1997
        %v2081 = vadd.f32 %v2077, %v2080
        %s2082 = sld [smem:[#allocation9 + $0xf7]]
        %v2083 = vstv %s2082
        %v2084 = vmul.f32 %v2083, %v1998
        %v2085 = vadd.f32 %v2081, %v2084
        %s2086 = sld [smem:[#allocation9 + $0x104]]
        %v2087 = vstv %s2086
        %v2088 = vmul.f32 %v2087, %v1999
        %v2089 = vadd.f32 %v2085, %v2088
        %s2090 = sld [smem:[#allocation9 + $0x111]]
        %v2091 = vstv %s2090
        %v2092 = vmul.f32 %v2091, %v2000
        %v2093 = vadd.f32 %v2089, %v2092
        %s2094 = sld [smem:[#allocation9 + $0x11e]]
        %v2095 = vstv %s2094
        %v2096 = vmul.f32 %v2095, %v2001
        %v2097 = vadd.f32 %v2093, %v2096
        %s2098 = sld [smem:[#allocation9 + $0x12b]]
        %v2099 = vstv %s2098
        %v2100 = vmul.f32 %v2099, %v2002
        %v2101 = vadd.f32 %v2097, %v2100
        %vm2102 = vcmask 130048
        %2103 = vst.msk [vmem:[%s202] sm:$0xff] %vm2102, %v2101
        %s2104 = sld [smem:[#allocation10 + $0x1]]
        %v2105 = vstv %s2104
        %v2106 = vadd.f32 %v2105, 0.0
        %s2107 = sld [smem:[#allocation9 + $0x1]]
        %v2108 = vstv %s2107
        %v2109 = vmul.f32 %v2108, %v1979
        %v2110 = vadd.f32 %v2106, %v2109
        %s2111 = sld [smem:[#allocation9 + $0xe]]
        %v2112 = vstv %s2111
        %v2113 = vmul.f32 %v2112, %v1980
        %v2114 = vadd.f32 %v2110, %v2113
        %s2115 = sld [smem:[#allocation9 + $0x1b]]
        %v2116 = vstv %s2115
        %v2117 = vmul.f32 %v2116, %v1981
        %v2118 = vadd.f32 %v2114, %v2117
        %s2119 = sld [smem:[#allocation9 + $0x28]]
        %v2120 = vstv %s2119
        %v2121 = vmul.f32 %v2120, %v1982
        %v2122 = vadd.f32 %v2118, %v2121
        %s2123 = sld [smem:[#allocation9 + $0x35]]
        %v2124 = vstv %s2123
        %v2125 = vmul.f32 %v2124, %v1983
        %v2126 = vadd.f32 %v2122, %v2125
        %s2127 = sld [smem:[#allocation9 + $0x42]]
        %v2128 = vstv %s2127
        %v2129 = vmul.f32 %v2128, %v1984
        %v2130 = vadd.f32 %v2126, %v2129
        %s2131 = sld [smem:[#allocation9 + $0x4f]]
        %v2132 = vstv %s2131
        %v2133 = vmul.f32 %v2132, %v1985
        %v2134 = vadd.f32 %v2130, %v2133
        %s2135 = sld [smem:[#allocation9 + $0x5c]]
        %v2136 = vstv %s2135
        %v2137 = vmul.f32 %v2136, %v1986
        %v2138 = vadd.f32 %v2134, %v2137
        %s2139 = sld [smem:[#allocation9 + $0x69]]
        %v2140 = vstv %s2139
        %v2141 = vmul.f32 %v2140, %v1987
        %v2142 = vadd.f32 %v2138, %v2141
        %s2143 = sld [smem:[#allocation9 + $0x76]]
        %v2144 = vstv %s2143
        %v2145 = vmul.f32 %v2144, %v1988
        %v2146 = vadd.f32 %v2142, %v2145
        %s2147 = sld [smem:[#allocation9 + $0x83]]
        %v2148 = vstv %s2147
        %v2149 = vmul.f32 %v2148, %v1989
        %v2150 = vadd.f32 %v2146, %v2149
        %s2151 = sld [smem:[#allocation9 + $0x90]]
        %v2152 = vstv %s2151
        %v2153 = vmul.f32 %v2152, %v1990
        %v2154 = vadd.f32 %v2150, %v2153
        %s2155 = sld [smem:[#allocation9 + $0x9d]]
        %v2156 = vstv %s2155
        %v2157 = vmul.f32 %v2156, %v1991
        %v2158 = vadd.f32 %v2154, %v2157
        %s2159 = sld [smem:[#allocation9 + $0xaa]]
        %v2160 = vstv %s2159
        %v2161 = vmul.f32 %v2160, %v1992
        %v2162 = vadd.f32 %v2158, %v2161
        %s2163 = sld [smem:[#allocation9 + $0xb7]]
        %v2164 = vstv %s2163
        %v2165 = vmul.f32 %v2164, %v1993
        %v2166 = vadd.f32 %v2162, %v2165
        %s2167 = sld [smem:[#allocation9 + $0xc4]]
        %v2168 = vstv %s2167
        %v2169 = vmul.f32 %v2168, %v1994
        %v2170 = vadd.f32 %v2166, %v2169
        %s2171 = sld [smem:[#allocation9 + $0xd1]]
        %v2172 = vstv %s2171
        %v2173 = vmul.f32 %v2172, %v1995
        %v2174 = vadd.f32 %v2170, %v2173
        %s2175 = sld [smem:[#allocation9 + $0xde]]
        %v2176 = vstv %s2175
        %v2177 = vmul.f32 %v2176, %v1996
        %v2178 = vadd.f32 %v2174, %v2177
        %s2179 = sld [smem:[#allocation9 + $0xeb]]
        %v2180 = vstv %s2179
        %v2181 = vmul.f32 %v2180, %v1997
        %v2182 = vadd.f32 %v2178, %v2181
        %s2183 = sld [smem:[#allocation9 + $0xf8]]
        %v2184 = vstv %s2183
        %v2185 = vmul.f32 %v2184, %v1998
        %v2186 = vadd.f32 %v2182, %v2185
        %s2187 = sld [smem:[#allocation9 + $0x105]]
        %v2188 = vstv %s2187
        %v2189 = vmul.f32 %v2188, %v1999
        %v2190 = vadd.f32 %v2186, %v2189
        %s2191 = sld [smem:[#allocation9 + $0x112]]
        %v2192 = vstv %s2191
        %v2193 = vmul.f32 %v2192, %v2000
        %v2194 = vadd.f32 %v2190, %v2193
        %s2195 = sld [smem:[#allocation9 + $0x11f]]
        %v2196 = vstv %s2195
        %v2197 = vmul.f32 %v2196, %v2001
        %v2198 = vadd.f32 %v2194, %v2197
        %s2199 = sld [smem:[#allocation9 + $0x12c]]
        %v2200 = vstv %s2199
        %v2201 = vmul.f32 %v2200, %v2002
        %v2202 = vadd.f32 %v2198, %v2201
        %s2203 = scalar_lea.vmem %s202, 8 [#allocation11]
        %2204 = vst.msk [vmem:[%s2203] sm:$0xff] %vm2102, %v2202
        %s2205 = sld [smem:[#allocation10 + $0x2]]
        %v2206 = vstv %s2205
        %v2207 = vadd.f32 %v2206, 0.0
        %s2208 = sld [smem:[#allocation9 + $0x2]]
        %v2209 = vstv %s2208
        %v2210 = vmul.f32 %v2209, %v1979
        %v2211 = vadd.f32 %v2207, %v2210
        %s2212 = sld [smem:[#allocation9 + $0xf]]
        %v2213 = vstv %s2212
        %v2214 = vmul.f32 %v2213, %v1980
        %v2215 = vadd.f32 %v2211, %v2214
        %s2216 = sld [smem:[#allocation9 + $0x1c]]
        %v2217 = vstv %s2216
        %v2218 = vmul.f32 %v2217, %v1981
        %v2219 = vadd.f32 %v2215, %v2218
        %s2220 = sld [smem:[#allocation9 + $0x29]]
        %v2221 = vstv %s2220
        %v2222 = vmul.f32 %v2221, %v1982
        %v2223 = vadd.f32 %v2219, %v2222
        %s2224 = sld [smem:[#allocation9 + $0x36]]
        %v2225 = vstv %s2224
        %v2226 = vmul.f32 %v2225, %v1983
        %v2227 = vadd.f32 %v2223, %v2226
        %s2228 = sld [smem:[#allocation9 + $0x43]]
        %v2229 = vstv %s2228
        %v2230 = vmul.f32 %v2229, %v1984
        %v2231 = vadd.f32 %v2227, %v2230
        %s2232 = sld [smem:[#allocation9 + $0x50]]
        %v2233 = vstv %s2232
        %v2234 = vmul.f32 %v2233, %v1985
        %v2235 = vadd.f32 %v2231, %v2234
        %s2236 = sld [smem:[#allocation9 + $0x5d]]
        %v2237 = vstv %s2236
        %v2238 = vmul.f32 %v2237, %v1986
        %v2239 = vadd.f32 %v2235, %v2238
        %s2240 = sld [smem:[#allocation9 + $0x6a]]
        %v2241 = vstv %s2240
        %v2242 = vmul.f32 %v2241, %v1987
        %v2243 = vadd.f32 %v2239, %v2242
        %s2244 = sld [smem:[#allocation9 + $0x77]]
        %v2245 = vstv %s2244
        %v2246 = vmul.f32 %v2245, %v1988
        %v2247 = vadd.f32 %v2243, %v2246
        %s2248 = sld [smem:[#allocation9 + $0x84]]
        %v2249 = vstv %s2248
        %v2250 = vmul.f32 %v2249, %v1989
        %v2251 = vadd.f32 %v2247, %v2250
        %s2252 = sld [smem:[#allocation9 + $0x91]]
        %v2253 = vstv %s2252
        %v2254 = vmul.f32 %v2253, %v1990
        %v2255 = vadd.f32 %v2251, %v2254
        %s2256 = sld [smem:[#allocation9 + $0x9e]]
        %v2257 = vstv %s2256
        %v2258 = vmul.f32 %v2257, %v1991
        %v2259 = vadd.f32 %v2255, %v2258
        %s2260 = sld [smem:[#allocation9 + $0xab]]
        %v2261 = vstv %s2260
        %v2262 = vmul.f32 %v2261, %v1992
        %v2263 = vadd.f32 %v2259, %v2262
        %s2264 = sld [smem:[#allocation9 + $0xb8]]
        %v2265 = vstv %s2264
        %v2266 = vmul.f32 %v2265, %v1993
        %v2267 = vadd.f32 %v2263, %v2266
        %s2268 = sld [smem:[#allocation9 + $0xc5]]
        %v2269 = vstv %s2268
        %v2270 = vmul.f32 %v2269, %v1994
        %v2271 = vadd.f32 %v2267, %v2270
        %s2272 = sld [smem:[#allocation9 + $0xd2]]
        %v2273 = vstv %s2272
        %v2274 = vmul.f32 %v2273, %v1995
        %v2275 = vadd.f32 %v2271, %v2274
        %s2276 = sld [smem:[#allocation9 + $0xdf]]
        %v2277 = vstv %s2276
        %v2278 = vmul.f32 %v2277, %v1996
        %v2279 = vadd.f32 %v2275, %v2278
        %s2280 = sld [smem:[#allocation9 + $0xec]]
        %v2281 = vstv %s2280
        %v2282 = vmul.f32 %v2281, %v1997
        %v2283 = vadd.f32 %v2279, %v2282
        %s2284 = sld [smem:[#allocation9 + $0xf9]]
        %v2285 = vstv %s2284
        %v2286 = vmul.f32 %v2285, %v1998
        %v2287 = vadd.f32 %v2283, %v2286
        %s2288 = sld [smem:[#allocation9 + $0x106]]
        %v2289 = vstv %s2288
        %v2290 = vmul.f32 %v2289, %v1999
        %v2291 = vadd.f32 %v2287, %v2290
        %s2292 = sld [smem:[#allocation9 + $0x113]]
        %v2293 = vstv %s2292
        %v2294 = vmul.f32 %v2293, %v2000
        %v2295 = vadd.f32 %v2291, %v2294
        %s2296 = sld [smem:[#allocation9 + $0x120]]
        %v2297 = vstv %s2296
        %v2298 = vmul.f32 %v2297, %v2001
        %v2299 = vadd.f32 %v2295, %v2298
        %s2300 = sld [smem:[#allocation9 + $0x12d]]
        %v2301 = vstv %s2300
        %v2302 = vmul.f32 %v2301, %v2002
        %v2303 = vadd.f32 %v2299, %v2302
        %s2304 = scalar_lea.vmem %s202, 16 [#allocation11]
        %2305 = vst.msk [vmem:[%s2304] sm:$0xff] %vm2102, %v2303
        %s2306 = sld [smem:[#allocation10 + $0x3]]
        %v2307 = vstv %s2306
        %v2308 = vadd.f32 %v2307, 0.0
        %s2309 = sld [smem:[#allocation9 + $0x3]]
        %v2310 = vstv %s2309
        %v2311 = vmul.f32 %v2310, %v1979
        %v2312 = vadd.f32 %v2308, %v2311
        %s2313 = sld [smem:[#allocation9 + $0x10]]
        %v2314 = vstv %s2313
        %v2315 = vmul.f32 %v2314, %v1980
        %v2316 = vadd.f32 %v2312, %v2315
        %s2317 = sld [smem:[#allocation9 + $0x1d]]
        %v2318 = vstv %s2317
        %v2319 = vmul.f32 %v2318, %v1981
        %v2320 = vadd.f32 %v2316, %v2319
        %s2321 = sld [smem:[#allocation9 + $0x2a]]
        %v2322 = vstv %s2321
        %v2323 = vmul.f32 %v2322, %v1982
        %v2324 = vadd.f32 %v2320, %v2323
        %s2325 = sld [smem:[#allocation9 + $0x37]]
        %v2326 = vstv %s2325
        %v2327 = vmul.f32 %v2326, %v1983
        %v2328 = vadd.f32 %v2324, %v2327
        %s2329 = sld [smem:[#allocation9 + $0x44]]
        %v2330 = vstv %s2329
        %v2331 = vmul.f32 %v2330, %v1984
        %v2332 = vadd.f32 %v2328, %v2331
        %s2333 = sld [smem:[#allocation9 + $0x51]]
        %v2334 = vstv %s2333
        %v2335 = vmul.f32 %v2334, %v1985
        %v2336 = vadd.f32 %v2332, %v2335
        %s2337 = sld [smem:[#allocation9 + $0x5e]]
        %v2338 = vstv %s2337
        %v2339 = vmul.f32 %v2338, %v1986
        %v2340 = vadd.f32 %v2336, %v2339
        %s2341 = sld [smem:[#allocation9 + $0x6b]]
        %v2342 = vstv %s2341
        %v2343 = vmul.f32 %v2342, %v1987
        %v2344 = vadd.f32 %v2340, %v2343
        %s2345 = sld [smem:[#allocation9 + $0x78]]
        %v2346 = vstv %s2345
        %v2347 = vmul.f32 %v2346, %v1988
        %v2348 = vadd.f32 %v2344, %v2347
        %s2349 = sld [smem:[#allocation9 + $0x85]]
        %v2350 = vstv %s2349
        %v2351 = vmul.f32 %v2350, %v1989
        %v2352 = vadd.f32 %v2348, %v2351
        %s2353 = sld [smem:[#allocation9 + $0x92]]
        %v2354 = vstv %s2353
        %v2355 = vmul.f32 %v2354, %v1990
        %v2356 = vadd.f32 %v2352, %v2355
        %s2357 = sld [smem:[#allocation9 + $0x9f]]
        %v2358 = vstv %s2357
        %v2359 = vmul.f32 %v2358, %v1991
        %v2360 = vadd.f32 %v2356, %v2359
        %s2361 = sld [smem:[#allocation9 + $0xac]]
        %v2362 = vstv %s2361
        %v2363 = vmul.f32 %v2362, %v1992
        %v2364 = vadd.f32 %v2360, %v2363
        %s2365 = sld [smem:[#allocation9 + $0xb9]]
        %v2366 = vstv %s2365
        %v2367 = vmul.f32 %v2366, %v1993
        %v2368 = vadd.f32 %v2364, %v2367
        %s2369 = sld [smem:[#allocation9 + $0xc6]]
        %v2370 = vstv %s2369
        %v2371 = vmul.f32 %v2370, %v1994
        %v2372 = vadd.f32 %v2368, %v2371
        %s2373 = sld [smem:[#allocation9 + $0xd3]]
        %v2374 = vstv %s2373
        %v2375 = vmul.f32 %v2374, %v1995
        %v2376 = vadd.f32 %v2372, %v2375
        %s2377 = sld [smem:[#allocation9 + $0xe0]]
        %v2378 = vstv %s2377
        %v2379 = vmul.f32 %v2378, %v1996
        %v2380 = vadd.f32 %v2376, %v2379
        %s2381 = sld [smem:[#allocation9 + $0xed]]
        %v2382 = vstv %s2381
        %v2383 = vmul.f32 %v2382, %v1997
        %v2384 = vadd.f32 %v2380, %v2383
        %s2385 = sld [smem:[#allocation9 + $0xfa]]
        %v2386 = vstv %s2385
        %v2387 = vmul.f32 %v2386, %v1998
        %v2388 = vadd.f32 %v2384, %v2387
        %s2389 = sld [smem:[#allocation9 + $0x107]]
        %v2390 = vstv %s2389
        %v2391 = vmul.f32 %v2390, %v1999
        %v2392 = vadd.f32 %v2388, %v2391
        %s2393 = sld [smem:[#allocation9 + $0x114]]
        %v2394 = vstv %s2393
        %v2395 = vmul.f32 %v2394, %v2000
        %v2396 = vadd.f32 %v2392, %v2395
        %s2397 = sld [smem:[#allocation9 + $0x121]]
        %v2398 = vstv %s2397
        %v2399 = vmul.f32 %v2398, %v2001
        %v2400 = vadd.f32 %v2396, %v2399
        %s2401 = sld [smem:[#allocation9 + $0x12e]]
        %v2402 = vstv %s2401
        %v2403 = vmul.f32 %v2402, %v2002
        %v2404 = vadd.f32 %v2400, %v2403
        %s2405 = scalar_lea.vmem %s202, 24 [#allocation11]
        %2406 = vst.msk [vmem:[%s2405] sm:$0xff] %vm2102, %v2404
        %s2407 = sld [smem:[#allocation10 + $0x4]]
        %v2408 = vstv %s2407
        %v2409 = vadd.f32 %v2408, 0.0
        %s2410 = sld [smem:[#allocation9 + $0x4]]
        %v2411 = vstv %s2410
        %v2412 = vmul.f32 %v2411, %v1979
        %v2413 = vadd.f32 %v2409, %v2412
        %s2414 = sld [smem:[#allocation9 + $0x11]]
        %v2415 = vstv %s2414
        %v2416 = vmul.f32 %v2415, %v1980
        %v2417 = vadd.f32 %v2413, %v2416
        %s2418 = sld [smem:[#allocation9 + $0x1e]]
        %v2419 = vstv %s2418
        %v2420 = vmul.f32 %v2419, %v1981
        %v2421 = vadd.f32 %v2417, %v2420
        %s2422 = sld [smem:[#allocation9 + $0x2b]]
        %v2423 = vstv %s2422
        %v2424 = vmul.f32 %v2423, %v1982
        %v2425 = vadd.f32 %v2421, %v2424
        %s2426 = sld [smem:[#allocation9 + $0x38]]
        %v2427 = vstv %s2426
        %v2428 = vmul.f32 %v2427, %v1983
        %v2429 = vadd.f32 %v2425, %v2428
        %s2430 = sld [smem:[#allocation9 + $0x45]]
        %v2431 = vstv %s2430
        %v2432 = vmul.f32 %v2431, %v1984
        %v2433 = vadd.f32 %v2429, %v2432
        %s2434 = sld [smem:[#allocation9 + $0x52]]
        %v2435 = vstv %s2434
        %v2436 = vmul.f32 %v2435, %v1985
        %v2437 = vadd.f32 %v2433, %v2436
        %s2438 = sld [smem:[#allocation9 + $0x5f]]
        %v2439 = vstv %s2438
        %v2440 = vmul.f32 %v2439, %v1986
        %v2441 = vadd.f32 %v2437, %v2440
        %s2442 = sld [smem:[#allocation9 + $0x6c]]
        %v2443 = vstv %s2442
        %v2444 = vmul.f32 %v2443, %v1987
        %v2445 = vadd.f32 %v2441, %v2444
        %s2446 = sld [smem:[#allocation9 + $0x79]]
        %v2447 = vstv %s2446
        %v2448 = vmul.f32 %v2447, %v1988
        %v2449 = vadd.f32 %v2445, %v2448
        %s2450 = sld [smem:[#allocation9 + $0x86]]
        %v2451 = vstv %s2450
        %v2452 = vmul.f32 %v2451, %v1989
        %v2453 = vadd.f32 %v2449, %v2452
        %s2454 = sld [smem:[#allocation9 + $0x93]]
        %v2455 = vstv %s2454
        %v2456 = vmul.f32 %v2455, %v1990
        %v2457 = vadd.f32 %v2453, %v2456
        %s2458 = sld [smem:[#allocation9 + $0xa0]]
        %v2459 = vstv %s2458
        %v2460 = vmul.f32 %v2459, %v1991
        %v2461 = vadd.f32 %v2457, %v2460
        %s2462 = sld [smem:[#allocation9 + $0xad]]
        %v2463 = vstv %s2462
        %v2464 = vmul.f32 %v2463, %v1992
        %v2465 = vadd.f32 %v2461, %v2464
        %s2466 = sld [smem:[#allocation9 + $0xba]]
        %v2467 = vstv %s2466
        %v2468 = vmul.f32 %v2467, %v1993
        %v2469 = vadd.f32 %v2465, %v2468
        %s2470 = sld [smem:[#allocation9 + $0xc7]]
        %v2471 = vstv %s2470
        %v2472 = vmul.f32 %v2471, %v1994
        %v2473 = vadd.f32 %v2469, %v2472
        %s2474 = sld [smem:[#allocation9 + $0xd4]]
        %v2475 = vstv %s2474
        %v2476 = vmul.f32 %v2475, %v1995
        %v2477 = vadd.f32 %v2473, %v2476
        %s2478 = sld [smem:[#allocation9 + $0xe1]]
        %v2479 = vstv %s2478
        %v2480 = vmul.f32 %v2479, %v1996
        %v2481 = vadd.f32 %v2477, %v2480
        %s2482 = sld [smem:[#allocation9 + $0xee]]
        %v2483 = vstv %s2482
        %v2484 = vmul.f32 %v2483, %v1997
        %v2485 = vadd.f32 %v2481, %v2484
        %s2486 = sld [smem:[#allocation9 + $0xfb]]
        %v2487 = vstv %s2486
        %v2488 = vmul.f32 %v2487, %v1998
        %v2489 = vadd.f32 %v2485, %v2488
        %s2490 = sld [smem:[#allocation9 + $0x108]]
        %v2491 = vstv %s2490
        %v2492 = vmul.f32 %v2491, %v1999
        %v2493 = vadd.f32 %v2489, %v2492
        %s2494 = sld [smem:[#allocation9 + $0x115]]
        %v2495 = vstv %s2494
        %v2496 = vmul.f32 %v2495, %v2000
        %v2497 = vadd.f32 %v2493, %v2496
        %s2498 = sld [smem:[#allocation9 + $0x122]]
        %v2499 = vstv %s2498
        %v2500 = vmul.f32 %v2499, %v2001
        %v2501 = vadd.f32 %v2497, %v2500
        %s2502 = sld [smem:[#allocation9 + $0x12f]]
        %v2503 = vstv %s2502
        %v2504 = vmul.f32 %v2503, %v2002
        %v2505 = vadd.f32 %v2501, %v2504
        %s2506 = scalar_lea.vmem %s202, 32 [#allocation11]
        %2507 = vst.msk [vmem:[%s2506] sm:$0xff] %vm2102, %v2505
        %s2508 = sld [smem:[#allocation10 + $0x5]]
        %v2509 = vstv %s2508
        %v2510 = vadd.f32 %v2509, 0.0
        %s2511 = sld [smem:[#allocation9 + $0x5]]
        %v2512 = vstv %s2511
        %v2513 = vmul.f32 %v2512, %v1979
        %v2514 = vadd.f32 %v2510, %v2513
        %s2515 = sld [smem:[#allocation9 + $0x12]]
        %v2516 = vstv %s2515
        %v2517 = vmul.f32 %v2516, %v1980
        %v2518 = vadd.f32 %v2514, %v2517
        %s2519 = sld [smem:[#allocation9 + $0x1f]]
        %v2520 = vstv %s2519
        %v2521 = vmul.f32 %v2520, %v1981
        %v2522 = vadd.f32 %v2518, %v2521
        %s2523 = sld [smem:[#allocation9 + $0x2c]]
        %v2524 = vstv %s2523
        %v2525 = vmul.f32 %v2524, %v1982
        %v2526 = vadd.f32 %v2522, %v2525
        %s2527 = sld [smem:[#allocation9 + $0x39]]
        %v2528 = vstv %s2527
        %v2529 = vmul.f32 %v2528, %v1983
        %v2530 = vadd.f32 %v2526, %v2529
        %s2531 = sld [smem:[#allocation9 + $0x46]]
        %v2532 = vstv %s2531
        %v2533 = vmul.f32 %v2532, %v1984
        %v2534 = vadd.f32 %v2530, %v2533
        %s2535 = sld [smem:[#allocation9 + $0x53]]
        %v2536 = vstv %s2535
        %v2537 = vmul.f32 %v2536, %v1985
        %v2538 = vadd.f32 %v2534, %v2537
        %s2539 = sld [smem:[#allocation9 + $0x60]]
        %v2540 = vstv %s2539
        %v2541 = vmul.f32 %v2540, %v1986
        %v2542 = vadd.f32 %v2538, %v2541
        %s2543 = sld [smem:[#allocation9 + $0x6d]]
        %v2544 = vstv %s2543
        %v2545 = vmul.f32 %v2544, %v1987
        %v2546 = vadd.f32 %v2542, %v2545
        %s2547 = sld [smem:[#allocation9 + $0x7a]]
        %v2548 = vstv %s2547
        %v2549 = vmul.f32 %v2548, %v1988
        %v2550 = vadd.f32 %v2546, %v2549
        %s2551 = sld [smem:[#allocation9 + $0x87]]
        %v2552 = vstv %s2551
        %v2553 = vmul.f32 %v2552, %v1989
        %v2554 = vadd.f32 %v2550, %v2553
        %s2555 = sld [smem:[#allocation9 + $0x94]]
        %v2556 = vstv %s2555
        %v2557 = vmul.f32 %v2556, %v1990
        %v2558 = vadd.f32 %v2554, %v2557
        %s2559 = sld [smem:[#allocation9 + $0xa1]]
        %v2560 = vstv %s2559
        %v2561 = vmul.f32 %v2560, %v1991
        %v2562 = vadd.f32 %v2558, %v2561
        %s2563 = sld [smem:[#allocation9 + $0xae]]
        %v2564 = vstv %s2563
        %v2565 = vmul.f32 %v2564, %v1992
        %v2566 = vadd.f32 %v2562, %v2565
        %s2567 = sld [smem:[#allocation9 + $0xbb]]
        %v2568 = vstv %s2567
        %v2569 = vmul.f32 %v2568, %v1993
        %v2570 = vadd.f32 %v2566, %v2569
        %s2571 = sld [smem:[#allocation9 + $0xc8]]
        %v2572 = vstv %s2571
        %v2573 = vmul.f32 %v2572, %v1994
        %v2574 = vadd.f32 %v2570, %v2573
        %s2575 = sld [smem:[#allocation9 + $0xd5]]
        %v2576 = vstv %s2575
        %v2577 = vmul.f32 %v2576, %v1995
        %v2578 = vadd.f32 %v2574, %v2577
        %s2579 = sld [smem:[#allocation9 + $0xe2]]
        %v2580 = vstv %s2579
        %v2581 = vmul.f32 %v2580, %v1996
        %v2582 = vadd.f32 %v2578, %v2581
        %s2583 = sld [smem:[#allocation9 + $0xef]]
        %v2584 = vstv %s2583
        %v2585 = vmul.f32 %v2584, %v1997
        %v2586 = vadd.f32 %v2582, %v2585
        %s2587 = sld [smem:[#allocation9 + $0xfc]]
        %v2588 = vstv %s2587
        %v2589 = vmul.f32 %v2588, %v1998
        %v2590 = vadd.f32 %v2586, %v2589
        %s2591 = sld [smem:[#allocation9 + $0x109]]
        %v2592 = vstv %s2591
        %v2593 = vmul.f32 %v2592, %v1999
        %v2594 = vadd.f32 %v2590, %v2593
        %s2595 = sld [smem:[#allocation9 + $0x116]]
        %v2596 = vstv %s2595
        %v2597 = vmul.f32 %v2596, %v2000
        %v2598 = vadd.f32 %v2594, %v2597
        %s2599 = sld [smem:[#allocation9 + $0x123]]
        %v2600 = vstv %s2599
        %v2601 = vmul.f32 %v2600, %v2001
        %v2602 = vadd.f32 %v2598, %v2601
        %s2603 = sld [smem:[#allocation9 + $0x130]]
        %v2604 = vstv %s2603
        %v2605 = vmul.f32 %v2604, %v2002
        %v2606 = vadd.f32 %v2602, %v2605
        %s2607 = scalar_lea.vmem %s202, 40 [#allocation11]
        %2608 = vst.msk [vmem:[%s2607] sm:$0xff] %vm2102, %v2606
        %s2609 = sld [smem:[#allocation10 + $0x6]]
        %v2610 = vstv %s2609
        %v2611 = vadd.f32 %v2610, 0.0
        %s2612 = sld [smem:[#allocation9 + $0x6]]
        %v2613 = vstv %s2612
        %v2614 = vmul.f32 %v2613, %v1979
        %v2615 = vadd.f32 %v2611, %v2614
        %s2616 = sld [smem:[#allocation9 + $0x13]]
        %v2617 = vstv %s2616
        %v2618 = vmul.f32 %v2617, %v1980
        %v2619 = vadd.f32 %v2615, %v2618
        %s2620 = sld [smem:[#allocation9 + $0x20]]
        %v2621 = vstv %s2620
        %v2622 = vmul.f32 %v2621, %v1981
        %v2623 = vadd.f32 %v2619, %v2622
        %s2624 = sld [smem:[#allocation9 + $0x2d]]
        %v2625 = vstv %s2624
        %v2626 = vmul.f32 %v2625, %v1982
        %v2627 = vadd.f32 %v2623, %v2626
        %s2628 = sld [smem:[#allocation9 + $0x3a]]
        %v2629 = vstv %s2628
        %v2630 = vmul.f32 %v2629, %v1983
        %v2631 = vadd.f32 %v2627, %v2630
        %s2632 = sld [smem:[#allocation9 + $0x47]]
        %v2633 = vstv %s2632
        %v2634 = vmul.f32 %v2633, %v1984
        %v2635 = vadd.f32 %v2631, %v2634
        %s2636 = sld [smem:[#allocation9 + $0x54]]
        %v2637 = vstv %s2636
        %v2638 = vmul.f32 %v2637, %v1985
        %v2639 = vadd.f32 %v2635, %v2638
        %s2640 = sld [smem:[#allocation9 + $0x61]]
        %v2641 = vstv %s2640
        %v2642 = vmul.f32 %v2641, %v1986
        %v2643 = vadd.f32 %v2639, %v2642
        %s2644 = sld [smem:[#allocation9 + $0x6e]]
        %v2645 = vstv %s2644
        %v2646 = vmul.f32 %v2645, %v1987
        %v2647 = vadd.f32 %v2643, %v2646
        %s2648 = sld [smem:[#allocation9 + $0x7b]]
        %v2649 = vstv %s2648
        %v2650 = vmul.f32 %v2649, %v1988
        %v2651 = vadd.f32 %v2647, %v2650
        %s2652 = sld [smem:[#allocation9 + $0x88]]
        %v2653 = vstv %s2652
        %v2654 = vmul.f32 %v2653, %v1989
        %v2655 = vadd.f32 %v2651, %v2654
        %s2656 = sld [smem:[#allocation9 + $0x95]]
        %v2657 = vstv %s2656
        %v2658 = vmul.f32 %v2657, %v1990
        %v2659 = vadd.f32 %v2655, %v2658
        %s2660 = sld [smem:[#allocation9 + $0xa2]]
        %v2661 = vstv %s2660
        %v2662 = vmul.f32 %v2661, %v1991
        %v2663 = vadd.f32 %v2659, %v2662
        %s2664 = sld [smem:[#allocation9 + $0xaf]]
        %v2665 = vstv %s2664
        %v2666 = vmul.f32 %v2665, %v1992
        %v2667 = vadd.f32 %v2663, %v2666
        %s2668 = sld [smem:[#allocation9 + $0xbc]]
        %v2669 = vstv %s2668
        %v2670 = vmul.f32 %v2669, %v1993
        %v2671 = vadd.f32 %v2667, %v2670
        %s2672 = sld [smem:[#allocation9 + $0xc9]]
        %v2673 = vstv %s2672
        %v2674 = vmul.f32 %v2673, %v1994
        %v2675 = vadd.f32 %v2671, %v2674
        %s2676 = sld [smem:[#allocation9 + $0xd6]]
        %v2677 = vstv %s2676
        %v2678 = vmul.f32 %v2677, %v1995
        %v2679 = vadd.f32 %v2675, %v2678
        %s2680 = sld [smem:[#allocation9 + $0xe3]]
        %v2681 = vstv %s2680
        %v2682 = vmul.f32 %v2681, %v1996
        %v2683 = vadd.f32 %v2679, %v2682
        %s2684 = sld [smem:[#allocation9 + $0xf0]]
        %v2685 = vstv %s2684
        %v2686 = vmul.f32 %v2685, %v1997
        %v2687 = vadd.f32 %v2683, %v2686
        %s2688 = sld [smem:[#allocation9 + $0xfd]]
        %v2689 = vstv %s2688
        %v2690 = vmul.f32 %v2689, %v1998
        %v2691 = vadd.f32 %v2687, %v2690
        %s2692 = sld [smem:[#allocation9 + $0x10a]]
        %v2693 = vstv %s2692
        %v2694 = vmul.f32 %v2693, %v1999
        %v2695 = vadd.f32 %v2691, %v2694
        %s2696 = sld [smem:[#allocation9 + $0x117]]
        %v2697 = vstv %s2696
        %v2698 = vmul.f32 %v2697, %v2000
        %v2699 = vadd.f32 %v2695, %v2698
        %s2700 = sld [smem:[#allocation9 + $0x124]]
        %v2701 = vstv %s2700
        %v2702 = vmul.f32 %v2701, %v2001
        %v2703 = vadd.f32 %v2699, %v2702
        %s2704 = sld [smem:[#allocation9 + $0x131]]
        %v2705 = vstv %s2704
        %v2706 = vmul.f32 %v2705, %v2002
        %v2707 = vadd.f32 %v2703, %v2706
        %s2708 = scalar_lea.vmem %s202, 48 [#allocation11]
        %2709 = vst.msk [vmem:[%s2708] sm:$0xff] %vm2102, %v2707
        %s2710 = sld [smem:[#allocation10 + $0x7]]
        %v2711 = vstv %s2710
        %v2712 = vadd.f32 %v2711, 0.0
        %s2713 = sld [smem:[#allocation9 + $0x7]]
        %v2714 = vstv %s2713
        %v2715 = vmul.f32 %v2714, %v1979
        %v2716 = vadd.f32 %v2712, %v2715
        %s2717 = sld [smem:[#allocation9 + $0x14]]
        %v2718 = vstv %s2717
        %v2719 = vmul.f32 %v2718, %v1980
        %v2720 = vadd.f32 %v2716, %v2719
        %s2721 = sld [smem:[#allocation9 + $0x21]]
        %v2722 = vstv %s2721
        %v2723 = vmul.f32 %v2722, %v1981
        %v2724 = vadd.f32 %v2720, %v2723
        %s2725 = sld [smem:[#allocation9 + $0x2e]]
        %v2726 = vstv %s2725
        %v2727 = vmul.f32 %v2726, %v1982
        %v2728 = vadd.f32 %v2724, %v2727
        %s2729 = sld [smem:[#allocation9 + $0x3b]]
        %v2730 = vstv %s2729
        %v2731 = vmul.f32 %v2730, %v1983
        %v2732 = vadd.f32 %v2728, %v2731
        %s2733 = sld [smem:[#allocation9 + $0x48]]
        %v2734 = vstv %s2733
        %v2735 = vmul.f32 %v2734, %v1984
        %v2736 = vadd.f32 %v2732, %v2735
        %s2737 = sld [smem:[#allocation9 + $0x55]]
        %v2738 = vstv %s2737
        %v2739 = vmul.f32 %v2738, %v1985
        %v2740 = vadd.f32 %v2736, %v2739
        %s2741 = sld [smem:[#allocation9 + $0x62]]
        %v2742 = vstv %s2741
        %v2743 = vmul.f32 %v2742, %v1986
        %v2744 = vadd.f32 %v2740, %v2743
        %s2745 = sld [smem:[#allocation9 + $0x6f]]
        %v2746 = vstv %s2745
        %v2747 = vmul.f32 %v2746, %v1987
        %v2748 = vadd.f32 %v2744, %v2747
        %s2749 = sld [smem:[#allocation9 + $0x7c]]
        %v2750 = vstv %s2749
        %v2751 = vmul.f32 %v2750, %v1988
        %v2752 = vadd.f32 %v2748, %v2751
        %s2753 = sld [smem:[#allocation9 + $0x89]]
        %v2754 = vstv %s2753
        %v2755 = vmul.f32 %v2754, %v1989
        %v2756 = vadd.f32 %v2752, %v2755
        %s2757 = sld [smem:[#allocation9 + $0x96]]
        %v2758 = vstv %s2757
        %v2759 = vmul.f32 %v2758, %v1990
        %v2760 = vadd.f32 %v2756, %v2759
        %s2761 = sld [smem:[#allocation9 + $0xa3]]
        %v2762 = vstv %s2761
        %v2763 = vmul.f32 %v2762, %v1991
        %v2764 = vadd.f32 %v2760, %v2763
        %s2765 = sld [smem:[#allocation9 + $0xb0]]
        %v2766 = vstv %s2765
        %v2767 = vmul.f32 %v2766, %v1992
        %v2768 = vadd.f32 %v2764, %v2767
        %s2769 = sld [smem:[#allocation9 + $0xbd]]
        %v2770 = vstv %s2769
        %v2771 = vmul.f32 %v2770, %v1993
        %v2772 = vadd.f32 %v2768, %v2771
        %s2773 = sld [smem:[#allocation9 + $0xca]]
        %v2774 = vstv %s2773
        %v2775 = vmul.f32 %v2774, %v1994
        %v2776 = vadd.f32 %v2772, %v2775
        %s2777 = sld [smem:[#allocation9 + $0xd7]]
        %v2778 = vstv %s2777
        %v2779 = vmul.f32 %v2778, %v1995
        %v2780 = vadd.f32 %v2776, %v2779
        %s2781 = sld [smem:[#allocation9 + $0xe4]]
        %v2782 = vstv %s2781
        %v2783 = vmul.f32 %v2782, %v1996
        %v2784 = vadd.f32 %v2780, %v2783
        %s2785 = sld [smem:[#allocation9 + $0xf1]]
        %v2786 = vstv %s2785
        %v2787 = vmul.f32 %v2786, %v1997
        %v2788 = vadd.f32 %v2784, %v2787
        %s2789 = sld [smem:[#allocation9 + $0xfe]]
        %v2790 = vstv %s2789
        %v2791 = vmul.f32 %v2790, %v1998
        %v2792 = vadd.f32 %v2788, %v2791
        %s2793 = sld [smem:[#allocation9 + $0x10b]]
        %v2794 = vstv %s2793
        %v2795 = vmul.f32 %v2794, %v1999
        %v2796 = vadd.f32 %v2792, %v2795
        %s2797 = sld [smem:[#allocation9 + $0x118]]
        %v2798 = vstv %s2797
        %v2799 = vmul.f32 %v2798, %v2000
        %v2800 = vadd.f32 %v2796, %v2799
        %s2801 = sld [smem:[#allocation9 + $0x125]]
        %v2802 = vstv %s2801
        %v2803 = vmul.f32 %v2802, %v2001
        %v2804 = vadd.f32 %v2800, %v2803
        %s2805 = sld [smem:[#allocation9 + $0x132]]
        %v2806 = vstv %s2805
        %v2807 = vmul.f32 %v2806, %v2002
        %v2808 = vadd.f32 %v2804, %v2807
        %s2809 = scalar_lea.vmem %s202, 56 [#allocation11]
        %2810 = vst.msk [vmem:[%s2809] sm:$0xff] %vm2102, %v2808
        %s2811 = sld [smem:[#allocation10 + $0x8]]
        %v2812 = vstv %s2811
        %v2813 = vadd.f32 %v2812, 0.0
        %s2814 = sld [smem:[#allocation9 + $0x8]]
        %v2815 = vstv %s2814
        %v2816 = vmul.f32 %v2815, %v1979
        %v2817 = vadd.f32 %v2813, %v2816
        %s2818 = sld [smem:[#allocation9 + $0x15]]
        %v2819 = vstv %s2818
        %v2820 = vmul.f32 %v2819, %v1980
        %v2821 = vadd.f32 %v2817, %v2820
        %s2822 = sld [smem:[#allocation9 + $0x22]]
        %v2823 = vstv %s2822
        %v2824 = vmul.f32 %v2823, %v1981
        %v2825 = vadd.f32 %v2821, %v2824
        %s2826 = sld [smem:[#allocation9 + $0x2f]]
        %v2827 = vstv %s2826
        %v2828 = vmul.f32 %v2827, %v1982
        %v2829 = vadd.f32 %v2825, %v2828
        %s2830 = sld [smem:[#allocation9 + $0x3c]]
        %v2831 = vstv %s2830
        %v2832 = vmul.f32 %v2831, %v1983
        %v2833 = vadd.f32 %v2829, %v2832
        %s2834 = sld [smem:[#allocation9 + $0x49]]
        %v2835 = vstv %s2834
        %v2836 = vmul.f32 %v2835, %v1984
        %v2837 = vadd.f32 %v2833, %v2836
        %s2838 = sld [smem:[#allocation9 + $0x56]]
        %v2839 = vstv %s2838
        %v2840 = vmul.f32 %v2839, %v1985
        %v2841 = vadd.f32 %v2837, %v2840
        %s2842 = sld [smem:[#allocation9 + $0x63]]
        %v2843 = vstv %s2842
        %v2844 = vmul.f32 %v2843, %v1986
        %v2845 = vadd.f32 %v2841, %v2844
        %s2846 = sld [smem:[#allocation9 + $0x70]]
        %v2847 = vstv %s2846
        %v2848 = vmul.f32 %v2847, %v1987
        %v2849 = vadd.f32 %v2845, %v2848
        %s2850 = sld [smem:[#allocation9 + $0x7d]]
        %v2851 = vstv %s2850
        %v2852 = vmul.f32 %v2851, %v1988
        %v2853 = vadd.f32 %v2849, %v2852
        %s2854 = sld [smem:[#allocation9 + $0x8a]]
        %v2855 = vstv %s2854
        %v2856 = vmul.f32 %v2855, %v1989
        %v2857 = vadd.f32 %v2853, %v2856
        %s2858 = sld [smem:[#allocation9 + $0x97]]
        %v2859 = vstv %s2858
        %v2860 = vmul.f32 %v2859, %v1990
        %v2861 = vadd.f32 %v2857, %v2860
        %s2862 = sld [smem:[#allocation9 + $0xa4]]
        %v2863 = vstv %s2862
        %v2864 = vmul.f32 %v2863, %v1991
        %v2865 = vadd.f32 %v2861, %v2864
        %s2866 = sld [smem:[#allocation9 + $0xb1]]
        %v2867 = vstv %s2866
        %v2868 = vmul.f32 %v2867, %v1992
        %v2869 = vadd.f32 %v2865, %v2868
        %s2870 = sld [smem:[#allocation9 + $0xbe]]
        %v2871 = vstv %s2870
        %v2872 = vmul.f32 %v2871, %v1993
        %v2873 = vadd.f32 %v2869, %v2872
        %s2874 = sld [smem:[#allocation9 + $0xcb]]
        %v2875 = vstv %s2874
        %v2876 = vmul.f32 %v2875, %v1994
        %v2877 = vadd.f32 %v2873, %v2876
        %s2878 = sld [smem:[#allocation9 + $0xd8]]
        %v2879 = vstv %s2878
        %v2880 = vmul.f32 %v2879, %v1995
        %v2881 = vadd.f32 %v2877, %v2880
        %s2882 = sld [smem:[#allocation9 + $0xe5]]
        %v2883 = vstv %s2882
        %v2884 = vmul.f32 %v2883, %v1996
        %v2885 = vadd.f32 %v2881, %v2884
        %s2886 = sld [smem:[#allocation9 + $0xf2]]
        %v2887 = vstv %s2886
        %v2888 = vmul.f32 %v2887, %v1997
        %v2889 = vadd.f32 %v2885, %v2888
        %s2890 = sld [smem:[#allocation9 + $0xff]]
        %v2891 = vstv %s2890
        %v2892 = vmul.f32 %v2891, %v1998
        %v2893 = vadd.f32 %v2889, %v2892
        %s2894 = sld [smem:[#allocation9 + $0x10c]]
        %v2895 = vstv %s2894
        %v2896 = vmul.f32 %v2895, %v1999
        %v2897 = vadd.f32 %v2893, %v2896
        %s2898 = sld [smem:[#allocation9 + $0x119]]
        %v2899 = vstv %s2898
        %v2900 = vmul.f32 %v2899, %v2000
        %v2901 = vadd.f32 %v2897, %v2900
        %s2902 = sld [smem:[#allocation9 + $0x126]]
        %v2903 = vstv %s2902
        %v2904 = vmul.f32 %v2903, %v2001
        %v2905 = vadd.f32 %v2901, %v2904
        %s2906 = sld [smem:[#allocation9 + $0x133]]
        %v2907 = vstv %s2906
        %v2908 = vmul.f32 %v2907, %v2002
        %v2909 = vadd.f32 %v2905, %v2908
        %s2910 = scalar_lea.vmem %s202, 64 [#allocation11]
        %2911 = vst.msk [vmem:[%s2910] sm:$0xff] %vm2102, %v2909
        %s2912 = sld [smem:[#allocation10 + $0x9]]
        %v2913 = vstv %s2912
        %v2914 = vadd.f32 %v2913, 0.0
        %s2915 = sld [smem:[#allocation9 + $0x9]]
        %v2916 = vstv %s2915
        %v2917 = vmul.f32 %v2916, %v1979
        %v2918 = vadd.f32 %v2914, %v2917
        %s2919 = sld [smem:[#allocation9 + $0x16]]
        %v2920 = vstv %s2919
        %v2921 = vmul.f32 %v2920, %v1980
        %v2922 = vadd.f32 %v2918, %v2921
        %s2923 = sld [smem:[#allocation9 + $0x23]]
        %v2924 = vstv %s2923
        %v2925 = vmul.f32 %v2924, %v1981
        %v2926 = vadd.f32 %v2922, %v2925
        %s2927 = sld [smem:[#allocation9 + $0x30]]
        %v2928 = vstv %s2927
        %v2929 = vmul.f32 %v2928, %v1982
        %v2930 = vadd.f32 %v2926, %v2929
        %s2931 = sld [smem:[#allocation9 + $0x3d]]
        %v2932 = vstv %s2931
        %v2933 = vmul.f32 %v2932, %v1983
        %v2934 = vadd.f32 %v2930, %v2933
        %s2935 = sld [smem:[#allocation9 + $0x4a]]
        %v2936 = vstv %s2935
        %v2937 = vmul.f32 %v2936, %v1984
        %v2938 = vadd.f32 %v2934, %v2937
        %s2939 = sld [smem:[#allocation9 + $0x57]]
        %v2940 = vstv %s2939
        %v2941 = vmul.f32 %v2940, %v1985
        %v2942 = vadd.f32 %v2938, %v2941
        %s2943 = sld [smem:[#allocation9 + $0x64]]
        %v2944 = vstv %s2943
        %v2945 = vmul.f32 %v2944, %v1986
        %v2946 = vadd.f32 %v2942, %v2945
        %s2947 = sld [smem:[#allocation9 + $0x71]]
        %v2948 = vstv %s2947
        %v2949 = vmul.f32 %v2948, %v1987
        %v2950 = vadd.f32 %v2946, %v2949
        %s2951 = sld [smem:[#allocation9 + $0x7e]]
        %v2952 = vstv %s2951
        %v2953 = vmul.f32 %v2952, %v1988
        %v2954 = vadd.f32 %v2950, %v2953
        %s2955 = sld [smem:[#allocation9 + $0x8b]]
        %v2956 = vstv %s2955
        %v2957 = vmul.f32 %v2956, %v1989
        %v2958 = vadd.f32 %v2954, %v2957
        %s2959 = sld [smem:[#allocation9 + $0x98]]
        %v2960 = vstv %s2959
        %v2961 = vmul.f32 %v2960, %v1990
        %v2962 = vadd.f32 %v2958, %v2961
        %s2963 = sld [smem:[#allocation9 + $0xa5]]
        %v2964 = vstv %s2963
        %v2965 = vmul.f32 %v2964, %v1991
        %v2966 = vadd.f32 %v2962, %v2965
        %s2967 = sld [smem:[#allocation9 + $0xb2]]
        %v2968 = vstv %s2967
        %v2969 = vmul.f32 %v2968, %v1992
        %v2970 = vadd.f32 %v2966, %v2969
        %s2971 = sld [smem:[#allocation9 + $0xbf]]
        %v2972 = vstv %s2971
        %v2973 = vmul.f32 %v2972, %v1993
        %v2974 = vadd.f32 %v2970, %v2973
        %s2975 = sld [smem:[#allocation9 + $0xcc]]
        %v2976 = vstv %s2975
        %v2977 = vmul.f32 %v2976, %v1994
        %v2978 = vadd.f32 %v2974, %v2977
        %s2979 = sld [smem:[#allocation9 + $0xd9]]
        %v2980 = vstv %s2979
        %v2981 = vmul.f32 %v2980, %v1995
        %v2982 = vadd.f32 %v2978, %v2981
        %s2983 = sld [smem:[#allocation9 + $0xe6]]
        %v2984 = vstv %s2983
        %v2985 = vmul.f32 %v2984, %v1996
        %v2986 = vadd.f32 %v2982, %v2985
        %s2987 = sld [smem:[#allocation9 + $0xf3]]
        %v2988 = vstv %s2987
        %v2989 = vmul.f32 %v2988, %v1997
        %v2990 = vadd.f32 %v2986, %v2989
        %s2991 = sld [smem:[#allocation9 + $0x100]]
        %v2992 = vstv %s2991
        %v2993 = vmul.f32 %v2992, %v1998
        %v2994 = vadd.f32 %v2990, %v2993
        %s2995 = sld [smem:[#allocation9 + $0x10d]]
        %v2996 = vstv %s2995
        %v2997 = vmul.f32 %v2996, %v1999
        %v2998 = vadd.f32 %v2994, %v2997
        %s2999 = sld [smem:[#allocation9 + $0x11a]]
        %v3000 = vstv %s2999
        %v3001 = vmul.f32 %v3000, %v2000
        %v3002 = vadd.f32 %v2998, %v3001
        %s3003 = sld [smem:[#allocation9 + $0x127]]
        %v3004 = vstv %s3003
        %v3005 = vmul.f32 %v3004, %v2001
        %v3006 = vadd.f32 %v3002, %v3005
        %s3007 = sld [smem:[#allocation9 + $0x134]]
        %v3008 = vstv %s3007
        %v3009 = vmul.f32 %v3008, %v2002
        %v3010 = vadd.f32 %v3006, %v3009
        %s3011 = scalar_lea.vmem %s202, 72 [#allocation11]
        %3012 = vst.msk [vmem:[%s3011] sm:$0xff] %vm2102, %v3010
        %s3013 = sld [smem:[#allocation10 + $0xa]]
        %v3014 = vstv %s3013
        %v3015 = vadd.f32 %v3014, 0.0
        %s3016 = sld [smem:[#allocation9 + $0xa]]
        %v3017 = vstv %s3016
        %v3018 = vmul.f32 %v3017, %v1979
        %v3019 = vadd.f32 %v3015, %v3018
        %s3020 = sld [smem:[#allocation9 + $0x17]]
        %v3021 = vstv %s3020
        %v3022 = vmul.f32 %v3021, %v1980
        %v3023 = vadd.f32 %v3019, %v3022
        %s3024 = sld [smem:[#allocation9 + $0x24]]
        %v3025 = vstv %s3024
        %v3026 = vmul.f32 %v3025, %v1981
        %v3027 = vadd.f32 %v3023, %v3026
        %s3028 = sld [smem:[#allocation9 + $0x31]]
        %v3029 = vstv %s3028
        %v3030 = vmul.f32 %v3029, %v1982
        %v3031 = vadd.f32 %v3027, %v3030
        %s3032 = sld [smem:[#allocation9 + $0x3e]]
        %v3033 = vstv %s3032
        %v3034 = vmul.f32 %v3033, %v1983
        %v3035 = vadd.f32 %v3031, %v3034
        %s3036 = sld [smem:[#allocation9 + $0x4b]]
        %v3037 = vstv %s3036
        %v3038 = vmul.f32 %v3037, %v1984
        %v3039 = vadd.f32 %v3035, %v3038
        %s3040 = sld [smem:[#allocation9 + $0x58]]
        %v3041 = vstv %s3040
        %v3042 = vmul.f32 %v3041, %v1985
        %v3043 = vadd.f32 %v3039, %v3042
        %s3044 = sld [smem:[#allocation9 + $0x65]]
        %v3045 = vstv %s3044
        %v3046 = vmul.f32 %v3045, %v1986
        %v3047 = vadd.f32 %v3043, %v3046
        %s3048 = sld [smem:[#allocation9 + $0x72]]
        %v3049 = vstv %s3048
        %v3050 = vmul.f32 %v3049, %v1987
        %v3051 = vadd.f32 %v3047, %v3050
        %s3052 = sld [smem:[#allocation9 + $0x7f]]
        %v3053 = vstv %s3052
        %v3054 = vmul.f32 %v3053, %v1988
        %v3055 = vadd.f32 %v3051, %v3054
        %s3056 = sld [smem:[#allocation9 + $0x8c]]
        %v3057 = vstv %s3056
        %v3058 = vmul.f32 %v3057, %v1989
        %v3059 = vadd.f32 %v3055, %v3058
        %s3060 = sld [smem:[#allocation9 + $0x99]]
        %v3061 = vstv %s3060
        %v3062 = vmul.f32 %v3061, %v1990
        %v3063 = vadd.f32 %v3059, %v3062
        %s3064 = sld [smem:[#allocation9 + $0xa6]]
        %v3065 = vstv %s3064
        %v3066 = vmul.f32 %v3065, %v1991
        %v3067 = vadd.f32 %v3063, %v3066
        %s3068 = sld [smem:[#allocation9 + $0xb3]]
        %v3069 = vstv %s3068
        %v3070 = vmul.f32 %v3069, %v1992
        %v3071 = vadd.f32 %v3067, %v3070
        %s3072 = sld [smem:[#allocation9 + $0xc0]]
        %v3073 = vstv %s3072
        %v3074 = vmul.f32 %v3073, %v1993
        %v3075 = vadd.f32 %v3071, %v3074
        %s3076 = sld [smem:[#allocation9 + $0xcd]]
        %v3077 = vstv %s3076
        %v3078 = vmul.f32 %v3077, %v1994
        %v3079 = vadd.f32 %v3075, %v3078
        %s3080 = sld [smem:[#allocation9 + $0xda]]
        %v3081 = vstv %s3080
        %v3082 = vmul.f32 %v3081, %v1995
        %v3083 = vadd.f32 %v3079, %v3082
        %s3084 = sld [smem:[#allocation9 + $0xe7]]
        %v3085 = vstv %s3084
        %v3086 = vmul.f32 %v3085, %v1996
        %v3087 = vadd.f32 %v3083, %v3086
        %s3088 = sld [smem:[#allocation9 + $0xf4]]
        %v3089 = vstv %s3088
        %v3090 = vmul.f32 %v3089, %v1997
        %v3091 = vadd.f32 %v3087, %v3090
        %s3092 = sld [smem:[#allocation9 + $0x101]]
        %v3093 = vstv %s3092
        %v3094 = vmul.f32 %v3093, %v1998
        %v3095 = vadd.f32 %v3091, %v3094
        %s3096 = sld [smem:[#allocation9 + $0x10e]]
        %v3097 = vstv %s3096
        %v3098 = vmul.f32 %v3097, %v1999
        %v3099 = vadd.f32 %v3095, %v3098
        %s3100 = sld [smem:[#allocation9 + $0x11b]]
        %v3101 = vstv %s3100
        %v3102 = vmul.f32 %v3101, %v2000
        %v3103 = vadd.f32 %v3099, %v3102
        %s3104 = sld [smem:[#allocation9 + $0x128]]
        %v3105 = vstv %s3104
        %v3106 = vmul.f32 %v3105, %v2001
        %v3107 = vadd.f32 %v3103, %v3106
        %s3108 = sld [smem:[#allocation9 + $0x135]]
        %v3109 = vstv %s3108
        %v3110 = vmul.f32 %v3109, %v2002
        %v3111 = vadd.f32 %v3107, %v3110
        %s3112 = scalar_lea.vmem %s202, 80 [#allocation11]
        %3113 = vst.msk [vmem:[%s3112] sm:$0xff] %vm2102, %v3111
        %s3114 = sld [smem:[#allocation10 + $0xb]]
        %v3115 = vstv %s3114
        %v3116 = vadd.f32 %v3115, 0.0
        %s3117 = sld [smem:[#allocation9 + $0xb]]
        %v3118 = vstv %s3117
        %v3119 = vmul.f32 %v3118, %v1979
        %v3120 = vadd.f32 %v3116, %v3119
        %s3121 = sld [smem:[#allocation9 + $0x18]]
        %v3122 = vstv %s3121
        %v3123 = vmul.f32 %v3122, %v1980
        %v3124 = vadd.f32 %v3120, %v3123
        %s3125 = sld [smem:[#allocation9 + $0x25]]
        %v3126 = vstv %s3125
        %v3127 = vmul.f32 %v3126, %v1981
        %v3128 = vadd.f32 %v3124, %v3127
        %s3129 = sld [smem:[#allocation9 + $0x32]]
        %v3130 = vstv %s3129
        %v3131 = vmul.f32 %v3130, %v1982
        %v3132 = vadd.f32 %v3128, %v3131
        %s3133 = sld [smem:[#allocation9 + $0x3f]]
        %v3134 = vstv %s3133
        %v3135 = vmul.f32 %v3134, %v1983
        %v3136 = vadd.f32 %v3132, %v3135
        %s3137 = sld [smem:[#allocation9 + $0x4c]]
        %v3138 = vstv %s3137
        %v3139 = vmul.f32 %v3138, %v1984
        %v3140 = vadd.f32 %v3136, %v3139
        %s3141 = sld [smem:[#allocation9 + $0x59]]
        %v3142 = vstv %s3141
        %v3143 = vmul.f32 %v3142, %v1985
        %v3144 = vadd.f32 %v3140, %v3143
        %s3145 = sld [smem:[#allocation9 + $0x66]]
        %v3146 = vstv %s3145
        %v3147 = vmul.f32 %v3146, %v1986
        %v3148 = vadd.f32 %v3144, %v3147
        %s3149 = sld [smem:[#allocation9 + $0x73]]
        %v3150 = vstv %s3149
        %v3151 = vmul.f32 %v3150, %v1987
        %v3152 = vadd.f32 %v3148, %v3151
        %s3153 = sld [smem:[#allocation9 + $0x80]]
        %v3154 = vstv %s3153
        %v3155 = vmul.f32 %v3154, %v1988
        %v3156 = vadd.f32 %v3152, %v3155
        %s3157 = sld [smem:[#allocation9 + $0x8d]]
        %v3158 = vstv %s3157
        %v3159 = vmul.f32 %v3158, %v1989
        %v3160 = vadd.f32 %v3156, %v3159
        %s3161 = sld [smem:[#allocation9 + $0x9a]]
        %v3162 = vstv %s3161
        %v3163 = vmul.f32 %v3162, %v1990
        %v3164 = vadd.f32 %v3160, %v3163
        %s3165 = sld [smem:[#allocation9 + $0xa7]]
        %v3166 = vstv %s3165
        %v3167 = vmul.f32 %v3166, %v1991
        %v3168 = vadd.f32 %v3164, %v3167
        %s3169 = sld [smem:[#allocation9 + $0xb4]]
        %v3170 = vstv %s3169
        %v3171 = vmul.f32 %v3170, %v1992
        %v3172 = vadd.f32 %v3168, %v3171
        %s3173 = sld [smem:[#allocation9 + $0xc1]]
        %v3174 = vstv %s3173
        %v3175 = vmul.f32 %v3174, %v1993
        %v3176 = vadd.f32 %v3172, %v3175
        %s3177 = sld [smem:[#allocation9 + $0xce]]
        %v3178 = vstv %s3177
        %v3179 = vmul.f32 %v3178, %v1994
        %v3180 = vadd.f32 %v3176, %v3179
        %s3181 = sld [smem:[#allocation9 + $0xdb]]
        %v3182 = vstv %s3181
        %v3183 = vmul.f32 %v3182, %v1995
        %v3184 = vadd.f32 %v3180, %v3183
        %s3185 = sld [smem:[#allocation9 + $0xe8]]
        %v3186 = vstv %s3185
        %v3187 = vmul.f32 %v3186, %v1996
        %v3188 = vadd.f32 %v3184, %v3187
        %s3189 = sld [smem:[#allocation9 + $0xf5]]
        %v3190 = vstv %s3189
        %v3191 = vmul.f32 %v3190, %v1997
        %v3192 = vadd.f32 %v3188, %v3191
        %s3193 = sld [smem:[#allocation9 + $0x102]]
        %v3194 = vstv %s3193
        %v3195 = vmul.f32 %v3194, %v1998
        %v3196 = vadd.f32 %v3192, %v3195
        %s3197 = sld [smem:[#allocation9 + $0x10f]]
        %v3198 = vstv %s3197
        %v3199 = vmul.f32 %v3198, %v1999
        %v3200 = vadd.f32 %v3196, %v3199
        %s3201 = sld [smem:[#allocation9 + $0x11c]]
        %v3202 = vstv %s3201
        %v3203 = vmul.f32 %v3202, %v2000
        %v3204 = vadd.f32 %v3200, %v3203
        %s3205 = sld [smem:[#allocation9 + $0x129]]
        %v3206 = vstv %s3205
        %v3207 = vmul.f32 %v3206, %v2001
        %v3208 = vadd.f32 %v3204, %v3207
        %s3209 = sld [smem:[#allocation9 + $0x136]]
        %v3210 = vstv %s3209
        %v3211 = vmul.f32 %v3210, %v2002
        %v3212 = vadd.f32 %v3208, %v3211
        %s3213 = scalar_lea.vmem %s202, 88 [#allocation11]
        %3214 = vst.msk [vmem:[%s3213] sm:$0xff] %vm2102, %v3212
        %s3215 = sld [smem:[#allocation10 + $0xc]]
        %v3216 = vstv %s3215
        %v3217 = vadd.f32 %v3216, 0.0
        %s3218 = sld [smem:[#allocation9 + $0xc]]
        %v3219 = vstv %s3218
        %v3220 = vmul.f32 %v3219, %v1979
        %v3221 = vadd.f32 %v3217, %v3220
        %s3222 = sld [smem:[#allocation9 + $0x19]]
        %v3223 = vstv %s3222
        %v3224 = vmul.f32 %v3223, %v1980
        %v3225 = vadd.f32 %v3221, %v3224
        %s3226 = sld [smem:[#allocation9 + $0x26]]
        %v3227 = vstv %s3226
        %v3228 = vmul.f32 %v3227, %v1981
        %v3229 = vadd.f32 %v3225, %v3228
        %s3230 = sld [smem:[#allocation9 + $0x33]]
        %v3231 = vstv %s3230
        %v3232 = vmul.f32 %v3231, %v1982
        %v3233 = vadd.f32 %v3229, %v3232
        %s3234 = sld [smem:[#allocation9 + $0x40]]
        %v3235 = vstv %s3234
        %v3236 = vmul.f32 %v3235, %v1983
        %v3237 = vadd.f32 %v3233, %v3236
        %s3238 = sld [smem:[#allocation9 + $0x4d]]
        %v3239 = vstv %s3238
        %v3240 = vmul.f32 %v3239, %v1984
        %v3241 = vadd.f32 %v3237, %v3240
        %s3242 = sld [smem:[#allocation9 + $0x5a]]
        %v3243 = vstv %s3242
        %v3244 = vmul.f32 %v3243, %v1985
        %v3245 = vadd.f32 %v3241, %v3244
        %s3246 = sld [smem:[#allocation9 + $0x67]]
        %v3247 = vstv %s3246
        %v3248 = vmul.f32 %v3247, %v1986
        %v3249 = vadd.f32 %v3245, %v3248
        %s3250 = sld [smem:[#allocation9 + $0x74]]
        %v3251 = vstv %s3250
        %v3252 = vmul.f32 %v3251, %v1987
        %v3253 = vadd.f32 %v3249, %v3252
        %s3254 = sld [smem:[#allocation9 + $0x81]]
        %v3255 = vstv %s3254
        %v3256 = vmul.f32 %v3255, %v1988
        %v3257 = vadd.f32 %v3253, %v3256
        %s3258 = sld [smem:[#allocation9 + $0x8e]]
        %v3259 = vstv %s3258
        %v3260 = vmul.f32 %v3259, %v1989
        %v3261 = vadd.f32 %v3257, %v3260
        %s3262 = sld [smem:[#allocation9 + $0x9b]]
        %v3263 = vstv %s3262
        %v3264 = vmul.f32 %v3263, %v1990
        %v3265 = vadd.f32 %v3261, %v3264
        %s3266 = sld [smem:[#allocation9 + $0xa8]]
        %v3267 = vstv %s3266
        %v3268 = vmul.f32 %v3267, %v1991
        %v3269 = vadd.f32 %v3265, %v3268
        %s3270 = sld [smem:[#allocation9 + $0xb5]]
        %v3271 = vstv %s3270
        %v3272 = vmul.f32 %v3271, %v1992
        %v3273 = vadd.f32 %v3269, %v3272
        %s3274 = sld [smem:[#allocation9 + $0xc2]]
        %v3275 = vstv %s3274
        %v3276 = vmul.f32 %v3275, %v1993
        %v3277 = vadd.f32 %v3273, %v3276
        %s3278 = sld [smem:[#allocation9 + $0xcf]]
        %v3279 = vstv %s3278
        %v3280 = vmul.f32 %v3279, %v1994
        %v3281 = vadd.f32 %v3277, %v3280
        %s3282 = sld [smem:[#allocation9 + $0xdc]]
        %v3283 = vstv %s3282
        %v3284 = vmul.f32 %v3283, %v1995
        %v3285 = vadd.f32 %v3281, %v3284
        %s3286 = sld [smem:[#allocation9 + $0xe9]]
        %v3287 = vstv %s3286
        %v3288 = vmul.f32 %v3287, %v1996
        %v3289 = vadd.f32 %v3285, %v3288
        %s3290 = sld [smem:[#allocation9 + $0xf6]]
        %v3291 = vstv %s3290
        %v3292 = vmul.f32 %v3291, %v1997
        %v3293 = vadd.f32 %v3289, %v3292
        %s3294 = sld [smem:[#allocation9 + $0x103]]
        %v3295 = vstv %s3294
        %v3296 = vmul.f32 %v3295, %v1998
        %v3297 = vadd.f32 %v3293, %v3296
        %s3298 = sld [smem:[#allocation9 + $0x110]]
        %v3299 = vstv %s3298
        %v3300 = vmul.f32 %v3299, %v1999
        %v3301 = vadd.f32 %v3297, %v3300
        %s3302 = sld [smem:[#allocation9 + $0x11d]]
        %v3303 = vstv %s3302
        %v3304 = vmul.f32 %v3303, %v2000
        %v3305 = vadd.f32 %v3301, %v3304
        %s3306 = sld [smem:[#allocation9 + $0x12a]]
        %v3307 = vstv %s3306
        %v3308 = vmul.f32 %v3307, %v2001
        %v3309 = vadd.f32 %v3305, %v3308
        %s3310 = sld [smem:[#allocation9 + $0x137]]
        %v3311 = vstv %s3310
        %v3312 = vmul.f32 %v3311, %v2002
        %v3313 = vadd.f32 %v3309, %v3312
        %s3314 = scalar_lea.vmem %s202, 96 [#allocation11]
        %3315 = vst.msk [vmem:[%s3314] sm:$0xff] %vm2102, %v3313
        %3316 = vst.msk [vmem:[%s208] sm:$0xff] %vm2102, %v1979
        %3317 = vst.msk [vmem:[%s208 + $0x8] sm:$0xff] %vm2102, %v1980
        %3318 = vst.msk [vmem:[%s208 + $0x10] sm:$0xff] %vm2102, %v1981
        %3319 = vst.msk [vmem:[%s208 + $0x18] sm:$0xff] %vm2102, %v1982
        %3320 = vst.msk [vmem:[%s208 + $0x20] sm:$0xff] %vm2102, %v1983
        %3321 = vst.msk [vmem:[%s208 + $0x28] sm:$0xff] %vm2102, %v1984
        %3322 = vst.msk [vmem:[%s208 + $0x30] sm:$0xff] %vm2102, %v1985
        %3323 = vst.msk [vmem:[%s208 + $0x38] sm:$0xff] %vm2102, %v1986
        %3324 = vst.msk [vmem:[%s208 + $0x40] sm:$0xff] %vm2102, %v1987
        %3325 = vst.msk [vmem:[%s208 + $0x48] sm:$0xff] %vm2102, %v1988
        %3326 = vst.msk [vmem:[%s208 + $0x50] sm:$0xff] %vm2102, %v1989
        %3327 = vst.msk [vmem:[%s208 + $0x58] sm:$0xff] %vm2102, %v1990
        %3328 = vst.msk [vmem:[%s208 + $0x60] sm:$0xff] %vm2102, %v1991
        %3329 = vst.msk [vmem:[%s208 + $0x68] sm:$0xff] %vm2102, %v1992
        %3330 = vst.msk [vmem:[%s208 + $0x70] sm:$0xff] %vm2102, %v1993
        %3331 = vst.msk [vmem:[%s208 + $0x78] sm:$0xff] %vm2102, %v1994
        %s3332 = scalar_lea.vmem %s208, 128 [#allocation13]
        %3333 = vst.msk [vmem:[%s3332] sm:$0xff] %vm2102, %v1995
        %3334 = vst.msk [vmem:[%s3332 + $0x8] sm:$0xff] %vm2102, %v1996
        %3335 = vst.msk [vmem:[%s3332 + $0x10] sm:$0xff] %vm2102, %v1997
        %3336 = vst.msk [vmem:[%s3332 + $0x18] sm:$0xff] %vm2102, %v1998
        %3337 = vst.msk [vmem:[%s3332 + $0x20] sm:$0xff] %vm2102, %v1999
        %3338 = vst.msk [vmem:[%s3332 + $0x28] sm:$0xff] %vm2102, %v2000
        %3339 = vst.msk [vmem:[%s3332 + $0x30] sm:$0xff] %vm2102, %v2001
        %3340 = vst.msk [vmem:[%s3332 + $0x38] sm:$0xff] %vm2102, %v2002
        %s3341 = sand.u32 %s106, 1
        %s3342 = scalar_lea.sflag [#allocation12], %s3341
        %s3343 = sand.u32 %s106, 1
        %s3344 = smul.addr %s3343, 104
        %s3345 = scalar_lea.vmem [#allocation11], %s3344
        %s3346 = sand.u32 %s134, 1
        %s3347 = sand.u32 %s134, 1
        %s3348 = smul.addr %s3347, 192
        %s3349 = scalar_lea.vmem [#allocation13], %s3348
        // Predicated region
        $region39: #{wrapped_segmenter_forward.1} parent=23 // pred_check
          %p3350 = pneg %p116
        $region40: #{wrapped_segmenter_forward.1} parent=23 // pred_check_branch
          %3352 = sbr.rel (%p3350) target = $region42
        $region41: #{wrapped_segmenter_forward.1} parent=23 // pred_region
          %3354 = vsyncadd %s3342, 0
          %s3355 = smul.addr %s60, 26
          %s3356 = sadd.s32 %s61, %s3355
          %s3357 = smul.addr %s3356, 8
          %s3358 = scalar_lea.hbm %s7, %s3357
          %s3359 = sshll.u32 %s3345, 4
          %s3360 = int_to_ptr.vmem [resolvable:$true] %s3359
          %s3361 = sshll.u32 %s3358, 4
          %s3362 = int_to_ptr.hbm [resolvable:$true] %s3361
          %3367 = dma.vmem_to_hbm [thread:$0]  %s3360, 1664, %s3362, %s3342, 128, 256, 8
        $region42: #{wrapped_segmenter_forward.1} parent=23 // pred_fallthru
          _
        // Predicated region
        $region43: #{wrapped_segmenter_forward.1} parent=23 // pred_check
          %p3368 = pneg %p144
        $region44: #{wrapped_segmenter_forward.1} parent=23 // pred_check_branch
          %3370 = sbr.rel (%p3368) target = $region46
        $region45: #{wrapped_segmenter_forward.1} parent=23 // pred_region
          %s3371 = smul.addr %s60, 48
          %s3372 = sadd.s32 %s61, %s3371
          %s3373 = smul.addr %s3372, 8
          %s3374 = scalar_lea.vmem %s8, %s3373
          // Predicated region
          $region47: #{wrapped_segmenter_forward.1} parent=45 // pred_check
            _
          $region48: #{wrapped_segmenter_forward.1} parent=45 // pred_check_branch
            %3376 = sbr.rel (0) target = $region50
          $region49: #{wrapped_segmenter_forward.1} parent=45 // pred_region
            // Predicated region
            $region51: #{wrapped_segmenter_forward.1} parent=49 // pred_check
              _
            $region52: #{wrapped_segmenter_forward.1} parent=49 // pred_check_branch
              %3378 = sbr.rel (0) target = $region54
            $region53: #{wrapped_segmenter_forward.1} parent=49 // pred_region
              // Predicated region
              $region66: #{wrapped_segmenter_forward.1} parent=53 // pred_check
                _
              $region67: #{wrapped_segmenter_forward.1} parent=53 // pred_check_branch
                %3440 = sbr.rel (0) target = $region69
              $region68: #{wrapped_segmenter_forward.1} parent=53 // pred_region
                loop: start=0, step=1, limit=1
                $region70: #{wrapped_segmenter_forward.1} parent=68 // loop_pre_header
                  _
                $region71: #{wrapped_segmenter_forward.1} parent=68 // loop_header
                  %s3442 = sphi 0, %s3446
                  %p3443 = scmp.ge.s32.totalorder %s3442, 1
                  %s3447 = sphi %s3349, %s3349
                  %s3448 = sphi %s3374, %s3374
                $region72: #{wrapped_segmenter_forward.1} parent=68 // loop_header_branch
                  %3445 = sbr.rel (%p3443) target = $region76
                $region73: #{wrapped_segmenter_forward.1} parent=68 // loop_body
                  %v3449 = vld [vmem:[%s3447] sm:$0xff]
                  %3450 = vst [vmem:[%s3448] sm:$0xff] %v3449
                  %v3451 = vld [vmem:[%s3447 + $0x8] sm:$0xff]
                  %3452 = vst [vmem:[%s3448 + $0x10] sm:$0xff] %v3451
                  %v3453 = vld [vmem:[%s3447 + $0x10] sm:$0xff]
                  %3454 = vst [vmem:[%s3448 + $0x20] sm:$0xff] %v3453
                  %v3455 = vld [vmem:[%s3447 + $0x18] sm:$0xff]
                  %3456 = vst [vmem:[%s3448 + $0x30] sm:$0xff] %v3455
                  %v3457 = vld [vmem:[%s3447 + $0x20] sm:$0xff]
                  %3458 = vst [vmem:[%s3448 + $0x40] sm:$0xff] %v3457
                  %v3459 = vld [vmem:[%s3447 + $0x28] sm:$0xff]
                  %3460 = vst [vmem:[%s3448 + $0x50] sm:$0xff] %v3459
                  %v3461 = vld [vmem:[%s3447 + $0x30] sm:$0xff]
                  %3462 = vst [vmem:[%s3448 + $0x60] sm:$0xff] %v3461
                  %v3463 = vld [vmem:[%s3447 + $0x38] sm:$0xff]
                  %3464 = vst [vmem:[%s3448 + $0x70] sm:$0xff] %v3463
                  %v3465 = vld [vmem:[%s3447 + $0x40] sm:$0xff]
                  %3466 = vst [vmem:[%s3448 + $0x80] sm:$0xff] %v3465
                  %v3467 = vld [vmem:[%s3447 + $0x48] sm:$0xff]
                  %3468 = vst [vmem:[%s3448 + $0x90] sm:$0xff] %v3467
                  %v3469 = vld [vmem:[%s3447 + $0x50] sm:$0xff]
                  %3470 = vst [vmem:[%s3448 + $0xa0] sm:$0xff] %v3469
                  %v3471 = vld [vmem:[%s3447 + $0x58] sm:$0xff]
                  %3472 = vst [vmem:[%s3448 + $0xb0] sm:$0xff] %v3471
                  %v3473 = vld [vmem:[%s3447 + $0x60] sm:$0xff]
                  %3474 = vst [vmem:[%s3448 + $0xc0] sm:$0xff] %v3473
                  %v3475 = vld [vmem:[%s3447 + $0x68] sm:$0xff]
                  %3476 = vst [vmem:[%s3448 + $0xd0] sm:$0xff] %v3475
                  %v3477 = vld [vmem:[%s3447 + $0x70] sm:$0xff]
                  %3478 = vst [vmem:[%s3448 + $0xe0] sm:$0xff] %v3477
                  %v3479 = vld [vmem:[%s3447 + $0x78] sm:$0xff]
                  %3480 = vst [vmem:[%s3448 + $0xf0] sm:$0xff] %v3479
                  %v3481 = vld [vmem:[%s3447 + $0x80] sm:$0xff]
                  %3482 = vst [vmem:[%s3448 + $0x100] sm:$0xff] %v3481
                  %v3483 = vld [vmem:[%s3447 + $0x88] sm:$0xff]
                  %3484 = vst [vmem:[%s3448 + $0x110] sm:$0xff] %v3483
                  %v3485 = vld [vmem:[%s3447 + $0x90] sm:$0xff]
                  %3486 = vst [vmem:[%s3448 + $0x120] sm:$0xff] %v3485
                  %v3487 = vld [vmem:[%s3447 + $0x98] sm:$0xff]
                  %3488 = vst [vmem:[%s3448 + $0x130] sm:$0xff] %v3487
                  %v3489 = vld [vmem:[%s3447 + $0xa0] sm:$0xff]
                  %3490 = vst [vmem:[%s3448 + $0x140] sm:$0xff] %v3489
                  %v3491 = vld [vmem:[%s3447 + $0xa8] sm:$0xff]
                  %3492 = vst [vmem:[%s3448 + $0x150] sm:$0xff] %v3491
                  %v3493 = vld [vmem:[%s3447 + $0xb0] sm:$0xff]
                  %3494 = vst [vmem:[%s3448 + $0x160] sm:$0xff] %v3493
                  %v3495 = vld [vmem:[%s3447 + $0xb8] sm:$0xff]
                  %3496 = vst [vmem:[%s3448 + $0x170] sm:$0xff] %v3495
                $region74: #{wrapped_segmenter_forward.1} parent=68 // loop_footer
                  %s3446 = sadd.s32 1, %s3442
                $region75: #{wrapped_segmenter_forward.1} parent=68 // loop_footer_branch
                  %3441 = sbr.rel target = $region71
                $region76: #{wrapped_segmenter_forward.1} parent=68 // loop_exit
                  _
              $region69: #{wrapped_segmenter_forward.1} parent=53 // pred_fallthru
                _
              // Predicated region
              $region77: #{wrapped_segmenter_forward.1} parent=53 // pred_check
                _
              $region78: #{wrapped_segmenter_forward.1} parent=53 // pred_check_branch
                %3498 = sbr.rel target = $region80
              $region79: #{wrapped_segmenter_forward.1} parent=53 // pred_region
                _
              $region80: #{wrapped_segmenter_forward.1} parent=53 // pred_fallthru
                _
            $region54: #{wrapped_segmenter_forward.1} parent=49 // pred_fallthru
              _
            // Predicated region
            $region55: #{wrapped_segmenter_forward.1} parent=49 // pred_check
              _
            $region56: #{wrapped_segmenter_forward.1} parent=49 // pred_check_branch
              %3380 = sbr.rel target = $region58
            $region57: #{wrapped_segmenter_forward.1} parent=49 // pred_region
              %s3382 = ssub.s32 256, 1
              loop: start=0, step=1, limit=1
              $region59: #{wrapped_segmenter_forward.1} parent=57 // loop_pre_header
                _
              $region60: #{wrapped_segmenter_forward.1} parent=57 // loop_header
                %s3384 = sphi 0, %s3388
                %p3385 = scmp.ge.s32.totalorder %s3384, 1
                %s3389 = sphi %s3349, %s3349
                %s3390 = sphi %s3374, %s3374
              $region61: #{wrapped_segmenter_forward.1} parent=57 // loop_header_branch
                %3387 = sbr.rel (%p3385) target = $region65
              $region62: #{wrapped_segmenter_forward.1} parent=57 // loop_body
                %v3391 = vld [vmem:[%s3389] sm:%s3382]
                %3392 = vst [vmem:[%s3390] sm:%s3382] %v3391
                %v3393 = vld [vmem:[%s3389 + $0x8] sm:%s3382]
                %3394 = vst [vmem:[%s3390 + $0x10] sm:%s3382] %v3393
                %v3395 = vld [vmem:[%s3389 + $0x10] sm:%s3382]
                %3396 = vst [vmem:[%s3390 + $0x20] sm:%s3382] %v3395
                %v3397 = vld [vmem:[%s3389 + $0x18] sm:%s3382]
                %3398 = vst [vmem:[%s3390 + $0x30] sm:%s3382] %v3397
                %v3399 = vld [vmem:[%s3389 + $0x20] sm:%s3382]
                %3400 = vst [vmem:[%s3390 + $0x40] sm:%s3382] %v3399
                %v3401 = vld [vmem:[%s3389 + $0x28] sm:%s3382]
                %3402 = vst [vmem:[%s3390 + $0x50] sm:%s3382] %v3401
                %v3403 = vld [vmem:[%s3389 + $0x30] sm:%s3382]
                %3404 = vst [vmem:[%s3390 + $0x60] sm:%s3382] %v3403
                %v3405 = vld [vmem:[%s3389 + $0x38] sm:%s3382]
                %3406 = vst [vmem:[%s3390 + $0x70] sm:%s3382] %v3405
                %v3407 = vld [vmem:[%s3389 + $0x40] sm:%s3382]
                %3408 = vst [vmem:[%s3390 + $0x80] sm:%s3382] %v3407
                %v3409 = vld [vmem:[%s3389 + $0x48] sm:%s3382]
                %3410 = vst [vmem:[%s3390 + $0x90] sm:%s3382] %v3409
                %v3411 = vld [vmem:[%s3389 + $0x50] sm:%s3382]
                %3412 = vst [vmem:[%s3390 + $0xa0] sm:%s3382] %v3411
                %v3413 = vld [vmem:[%s3389 + $0x58] sm:%s3382]
                %3414 = vst [vmem:[%s3390 + $0xb0] sm:%s3382] %v3413
                %v3415 = vld [vmem:[%s3389 + $0x60] sm:%s3382]
                %3416 = vst [vmem:[%s3390 + $0xc0] sm:%s3382] %v3415
                %v3417 = vld [vmem:[%s3389 + $0x68] sm:%s3382]
                %3418 = vst [vmem:[%s3390 + $0xd0] sm:%s3382] %v3417
                %v3419 = vld [vmem:[%s3389 + $0x70] sm:%s3382]
                %3420 = vst [vmem:[%s3390 + $0xe0] sm:%s3382] %v3419
                %v3421 = vld [vmem:[%s3389 + $0x78] sm:%s3382]
                %3422 = vst [vmem:[%s3390 + $0xf0] sm:%s3382] %v3421
                %v3423 = vld [vmem:[%s3389 + $0x80] sm:%s3382]
                %3424 = vst [vmem:[%s3390 + $0x100] sm:%s3382] %v3423
                %v3425 = vld [vmem:[%s3389 + $0x88] sm:%s3382]
                %3426 = vst [vmem:[%s3390 + $0x110] sm:%s3382] %v3425
                %v3427 = vld [vmem:[%s3389 + $0x90] sm:%s3382]
                %3428 = vst [vmem:[%s3390 + $0x120] sm:%s3382] %v3427
                %v3429 = vld [vmem:[%s3389 + $0x98] sm:%s3382]
                %3430 = vst [vmem:[%s3390 + $0x130] sm:%s3382] %v3429
                %v3431 = vld [vmem:[%s3389 + $0xa0] sm:%s3382]
                %3432 = vst [vmem:[%s3390 + $0x140] sm:%s3382] %v3431
                %v3433 = vld [vmem:[%s3389 + $0xa8] sm:%s3382]
                %3434 = vst [vmem:[%s3390 + $0x150] sm:%s3382] %v3433
                %v3435 = vld [vmem:[%s3389 + $0xb0] sm:%s3382]
                %3436 = vst [vmem:[%s3390 + $0x160] sm:%s3382] %v3435
                %v3437 = vld [vmem:[%s3389 + $0xb8] sm:%s3382]
                %3438 = vst [vmem:[%s3390 + $0x170] sm:%s3382] %v3437
              $region63: #{wrapped_segmenter_forward.1} parent=57 // loop_footer
                %s3388 = sadd.s32 1, %s3384
              $region64: #{wrapped_segmenter_forward.1} parent=57 // loop_footer_branch
                %3383 = sbr.rel target = $region60
              $region65: #{wrapped_segmenter_forward.1} parent=57 // loop_exit
                _
            $region58: #{wrapped_segmenter_forward.1} parent=49 // pred_fallthru
              _
          $region50: #{wrapped_segmenter_forward.1} parent=45 // pred_fallthru
            _
          %3499 = vnop
        $region46: #{wrapped_segmenter_forward.1} parent=23 // pred_fallthru
          _
      $region24: #{wrapped_segmenter_forward.1} parent=5 // pred_fallthru
        _
      %p3500 = scmp.le.s32.totalorder 2, %s51
      // Predicated region
      $region81: #{wrapped_segmenter_forward.1} parent=5 // pred_check
        %p3501 = pneg %p3500
      $region82: #{wrapped_segmenter_forward.1} parent=5 // pred_check_branch
        %3503 = sbr.rel (%p3501) target = $region84
      $region83: #{wrapped_segmenter_forward.1} parent=5 // pred_region
        %s3504 = ssub.s32 %s51, 2
        // Predicated region
        $region85: #{wrapped_segmenter_forward.1} parent=83 // pred_check
          %p3505 = pneg %p122
        $region86: #{wrapped_segmenter_forward.1} parent=83 // pred_check_branch
          %3507 = sbr.rel (%p3505) target = $region88
        $region87: #{wrapped_segmenter_forward.1} parent=83 // pred_region
          %s3508 = sand.u32 %s107, 1
          %s3509 = scalar_lea.sflag [#allocation12], %s3508
          %s3510 = sand.u32 %s107, 1
          %s3511 = smul.addr %s3510, 104
          %s3512 = scalar_lea.vmem [#allocation11], %s3511
          %3514 = dma.done %s3509, 1664
        $region88: #{wrapped_segmenter_forward.1} parent=83 // pred_fallthru
          _
        // Predicated region
        $region89: #{wrapped_segmenter_forward.1} parent=83 // pred_check
          %p3515 = pneg %p150
        $region90: #{wrapped_segmenter_forward.1} parent=83 // pred_check_branch
          %3517 = sbr.rel (%p3515) target = $region92
        $region91: #{wrapped_segmenter_forward.1} parent=83 // pred_region
          %s3518 = sand.u32 %s135, 1
          %s3519 = sand.u32 %s135, 1
          %s3520 = smul.addr %s3519, 192
          %s3521 = scalar_lea.vmem [#allocation13], %s3520
        $region92: #{wrapped_segmenter_forward.1} parent=83 // pred_fallthru
          _
      $region84: #{wrapped_segmenter_forward.1} parent=5 // pred_fallthru
        _
    $region6: #{wrapped_segmenter_forward.1} parent=1 // loop_footer
      %s55 = sadd.s32 1, %s51
    $region7: #{wrapped_segmenter_forward.1} parent=1 // loop_footer_branch
      %50 = sbr.rel target = $region3
    $region8: #{wrapped_segmenter_forward.1} parent=1 // loop_exit
      _
    %3522 = vsyncpa [#allocation12], 1
    %s3523 = scalar_lea.sflag [#allocation12], 1
    %3524 = vsyncpa %s3523, 1

</llo_original>
